<compile_context>
chip_gen: v5e
topology: v5e:2x2
jax: 0.10.0
libtpu: 0.0.40
codegen_flags: <defaults>
</compile_context>

<pallas_src>
import jax
import jax.numpy as jnp
from jax.experimental import pallas as pl
from jax.experimental.pallas import tpu as pltpu


def make_conv_block_kernel(S, Wp, HpWp, A, L, c_mid, c_out):
    """Kernel factory closing over the static geometry of the padded flat layout."""

    def kernel(x_ref, w1_ref, b1_ref, w2_ref, b2_ref, mask_ref, out_ref, y1_scr):
        # x_ref   : (Cin_p,  S)   padded-flat input sample
        # w1_ref  : (27, Cmid_p, Cin_p)   BN-folded conv1 weights, tap-major
        # b1_ref  : (Cmid_p, 1)
        # w2_ref  : (27, Cout_p, Cmid_p)  BN-folded conv2 weights, tap-major
        # b2_ref  : (Cout_p, 1)
        # mask_ref: (1, S)  1.0 at interior voxels, 0.0 at padding voxels
        # out_ref : (Cout_p, S)  padded-flat output sample
        # y1_scr  : (Cmid_p, S)  VMEM scratch holding zero-padded relu(bn(conv1))
        mask_core = mask_ref[:, A:A + L]                      # (1, L)

        # ---------------- conv1 (3x3x3) + folded BN + ReLU ----------------
        acc1 = jnp.zeros((c_mid, L), jnp.float32)
        for t in range(27):
            kd, r = divmod(t, 9)
            kh, kw = divmod(r, 3)
            off = (kd - 1) * HpWp + (kh - 1) * Wp + (kw - 1)
            xs = x_ref[:, A + off:A + off + L]                # (Cin_p, L) static slice
            acc1 = acc1 + jnp.dot(w1_ref[t], xs,
                                  preferred_element_type=jnp.float32)
        y1 = jnp.maximum(acc1 + b1_ref[...], 0.0) * mask_core  # (Cmid_p, L)

        # Rebuild the zero-padded layout for layer 2 entirely in VMEM.
        y1_scr[...] = jnp.zeros_like(y1_scr)
        y1_scr[:, A:A + L] = y1

        # ---------------- conv2 (3x3x3) + folded BN + ReLU ----------------
        acc2 = jnp.zeros((c_out, L), jnp.float32)
        for t in range(27):
            kd, r = divmod(t, 9)
            kh, kw = divmod(r, 3)
            off = (kd - 1) * HpWp + (kh - 1) * Wp + (kw - 1)
            ys = y1_scr[:, A + off:A + off + L]               # (Cmid_p, L)
            acc2 = acc2 + jnp.dot(w2_ref[t], ys,
                                  preferred_element_type=jnp.float32)
        y2 = jnp.maximum(acc2 + b2_ref[...], 0.0)

        out_ref[...] = jnp.zeros_like(out_ref)
        out_ref[:, A:A + L] = y2.astype(out_ref.dtype)

    return kernel


def _round_up(x, m):
    return (x + m - 1) // m * m


def fold_bn(w, b, gamma, beta, mean, var, eps=1e-5):
    """Fold conv bias + BatchNorm3d (inference) into effective weight/bias.
    w: (Cout, Cin, 3, 3, 3), b: (Cout,)."""
    scale = gamma / jnp.sqrt(var + eps)                       # (Cout,)
    w_eff = w * scale[:, None, None, None, None]
    b_eff = (b - mean) * scale + beta
    return w_eff, b_eff


def _prep_weight(w_eff, c_out_p, c_in_p):
    """(Cout, Cin, 3, 3, 3) -> (27, Cout_p, Cin_p), tap-major, zero-padded channels."""
    c_out, c_in = w_eff.shape[:2]
    wk = jnp.transpose(w_eff, (2, 3, 4, 0, 1)).reshape(27, c_out, c_in)
    return jnp.pad(wk, ((0, 0), (0, c_out_p - c_out), (0, c_in_p - c_in)))


def _prep_bias(b_eff, c_p):
    return jnp.pad(b_eff, (0, c_p - b_eff.shape[0])).reshape(c_p, 1)


def conv_block(x, params):
    """x: (N, in_ch, D, H, W) float32 (native PyTorch NCDHW layout)."""
    N, Cin, D, H, W = x.shape
    Cmid = params["w1"].shape[0]
    Cout = params["w2"].shape[0]

    Dp, Hp, Wp = D + 2, H + 2, W + 2
    HpWp = Hp * Wp
    S = Dp * HpWp                       # flat padded spatial size (lane axis)
    A = HpWp + Wp + 1                   # flat index of voxel (1,1,1); max |tap offset|
    L = S - 2 * A                       # contiguous "core" range covering all interior voxels

    Cin_p = _round_up(Cin, 8)
    Cmid_p = _round_up(Cmid, 8)
    Cout_p = _round_up(Cout, 8)

    # Fold inference-mode BN into the two convs.
    w1_eff, b1_eff = fold_bn(params["w1"], params["b1"], params["bn1_gamma"],
                             params["bn1_beta"], params["bn1_mean"], params["bn1_var"])
    w2_eff, b2_eff = fold_bn(params["w2"], params["b2"], params["bn2_gamma"],
                             params["bn2_beta"], params["bn2_mean"], params["bn2_var"])

    w1_k = _prep_weight(w1_eff, Cmid_p, Cin_p)
    w2_k = _prep_weight(w2_eff, Cout_p, Cmid_p)
    b1_k = _prep_bias(b1_eff, Cmid_p)
    b2_k = _prep_bias(b2_eff, Cout_p)

    # Native NCDHW: zero-pad spatial dims by 1, pad channels to a sublane multiple,
    # flatten the padded spatial volume onto the lane axis.  No transposes.
    xp = jnp.pad(x.astype(jnp.float32),
                 ((0, 0), (0, Cin_p - Cin), (1, 1), (1, 1), (1, 1))).reshape(N, Cin_p, S)

    # Interior mask in the flat padded layout (1 inside, 0 at padding voxels).
    mask = jnp.pad(jnp.ones((D, H, W), jnp.float32),
                   ((1, 1), (1, 1), (1, 1))).reshape(1, S)

    flops = 2 * N * L * 27 * (Cmid_p * Cin_p + Cout_p * Cmid_p)
    bytes_accessed = 4 * (N * S * (Cin_p + Cout_p)
                          + int(w1_k.size) + int(w2_k.size) + S)

    kernel = make_conv_block_kernel(S, Wp, HpWp, A, L, Cmid_p, Cout_p)

    out_pad = pl.pallas_call(
        kernel,
        out_shape=jax.ShapeDtypeStruct((N, Cout_p, S), jnp.float32),
        grid_spec=pltpu.PrefetchScalarGridSpec(
            num_scalar_prefetch=0,
            grid=(N,),
            in_specs=[
                pl.BlockSpec((None, Cin_p, S), lambda n: (n, 0, 0)),       # x sample
                pl.BlockSpec((27, Cmid_p, Cin_p), lambda n: (0, 0, 0)),    # w1 (resident)
                pl.BlockSpec((Cmid_p, 1), lambda n: (0, 0)),               # b1
                pl.BlockSpec((27, Cout_p, Cmid_p), lambda n: (0, 0, 0)),   # w2 (resident)
                pl.BlockSpec((Cout_p, 1), lambda n: (0, 0)),               # b2
                pl.BlockSpec((1, S), lambda n: (0, 0)),                    # interior mask
            ],
            out_specs=pl.BlockSpec((None, Cout_p, S), lambda n: (n, 0, 0)),
            scratch_shapes=[pltpu.VMEM((Cmid_p, S), jnp.float32)],
        ),
        compiler_params=pltpu.CompilerParams(
            dimension_semantics=("parallel",)),
        cost_estimate=pl.CostEstimate(flops=int(flops), transcendentals=0,
                                      bytes_accessed=int(bytes_accessed)),
    )(xp, w1_k, b1_k, w2_k, b2_k, mask)

    # Padded-flat -> native NCDHW (single cheap slice; padding lanes discarded).
    out = out_pad.reshape(N, Cout_p, Dp, Hp, Wp)[:, :Cout, 1:-1, 1:-1, 1:-1]
    return out


def make_params(key, in_ch, out_ch):
    ks = jax.random.split(key, 8)
    return {
        # Conv3d weights in PyTorch layout (out, in, kd, kh, kw)
        "w1": 0.1 * jax.random.normal(ks[0], (out_ch, in_ch, 3, 3, 3), jnp.float32),
        "b1": 0.1 * jax.random.normal(ks[1], (out_ch,), jnp.float32),
        "w2": 0.1 * jax.random.normal(ks[2], (out_ch, out_ch, 3, 3, 3), jnp.float32),
        "b2": 0.1 * jax.random.normal(ks[3], (out_ch,), jnp.float32),
        # BatchNorm3d, inference mode with fresh running stats (mean=0, var=1);
        # gamma/beta randomized so the BN fold is actually exercised.
        "bn1_gamma": 1.0 + 0.1 * jax.random.normal(ks[4], (out_ch,), jnp.float32),
        "bn1_beta": 0.05 * jax.random.normal(ks[5], (out_ch,), jnp.float32),
        "bn1_mean": jnp.zeros((out_ch,), jnp.float32),
        "bn1_var": jnp.ones((out_ch,), jnp.float32),
        "bn2_gamma": 1.0 + 0.1 * jax.random.normal(ks[6], (out_ch,), jnp.float32),
        "bn2_beta": 0.05 * jax.random.normal(ks[7], (out_ch,), jnp.float32),
        "bn2_mean": jnp.zeros((out_ch,), jnp.float32),
        "bn2_var": jnp.ones((out_ch,), jnp.float32),
    }


def reference_jax(x, params, eps=1e-5):
    """Pure-JAX reference matching the PyTorch forward (inference-mode BN)."""
    def conv_bn_relu(inp, w, b, gamma, beta, mean, var):
        y = jax.lax.conv_general_dilated(
            inp, w, window_strides=(1, 1, 1),
            padding=((1, 1), (1, 1), (1, 1)),
            dimension_numbers=("NCDHW", "OIDHW", "NCDHW"))
        y = y + b[None, :, None, None, None]
        scale = (gamma / jnp.sqrt(var + eps))[None, :, None, None, None]
        y = (y - mean[None, :, None, None, None]) * scale \
            + beta[None, :, None, None, None]
        return jnp.maximum(y, 0.0)

    h = conv_bn_relu(x, params["w1"], params["b1"], params["bn1_gamma"],
                     params["bn1_beta"], params["bn1_mean"], params["bn1_var"])
    return conv_bn_relu(h, params["w2"], params["b2"], params["bn2_gamma"],
                        params["bn2_beta"], params["bn2_mean"], params["bn2_var"])


if __name__ == "__main__":
    key = jax.random.PRNGKey(0)
    k_x, k_p = jax.random.split(key)

    # Small shapes: N=2, in_ch=4, out_ch=8, D=H=W=8
    N, in_ch, out_ch = 2, 4, 8
    D = H = W = 8

    x = jax.random.normal(k_x, (N, in_ch, D, H, W), jnp.float32)
    params = make_params(k_p, in_ch, out_ch)

    out = conv_block(x, params)
    out = jax.block_until_ready(out)

    ref = reference_jax(x, params)
    assert out.shape == ref.shape == (N, out_ch, D, H, W)
    err = jnp.max(jnp.abs(out - ref))
    assert jnp.allclose(out, ref, atol=1e-4, rtol=1e-4), f"mismatch vs reference: {err}"

    print("KERNEL_OK")
</pallas_src>

<mosaic_0001>
module attributes {stable_mosaic.version = 11 : i64} {
  func.func @kernel(%arg0: i32, %arg1: memref<1x8x1000xf32, #tpu.memory_space<vmem>>, %arg2: memref<27x8x8xf32, #tpu.memory_space<vmem>>, %arg3: memref<8x1xf32, #tpu.memory_space<vmem>>, %arg4: memref<27x8x8xf32, #tpu.memory_space<vmem>>, %arg5: memref<8x1xf32, #tpu.memory_space<vmem>>, %arg6: memref<1x1000xf32, #tpu.memory_space<vmem>>, %arg7: memref<1x8x1000xf32, #tpu.memory_space<vmem>>, %arg8: memref<8x1000xf32, #tpu.memory_space<vmem>>) attributes {dimension_semantics = [#tpu.dimension_semantics<parallel>], iteration_bounds = array<i64: 2>, scalar_prefetch = 0 : i64, scratch_operands = 1 : i64, tpu.core_type = #tpu.core_type<tc>, window_params = [{transform_indices = @transform_0, window_bounds = array<i64: 1, 8, 1000>}, {pipeline_mode = #tpu.pipeline_mode<synchronous>, transform_indices = @transform_1, window_bounds = array<i64: 27, 8, 8>}, {pipeline_mode = #tpu.pipeline_mode<synchronous>, transform_indices = @transform_2, window_bounds = array<i64: 8, 1>}, {pipeline_mode = #tpu.pipeline_mode<synchronous>, transform_indices = @transform_3, window_bounds = array<i64: 27, 8, 8>}, {pipeline_mode = #tpu.pipeline_mode<synchronous>, transform_indices = @transform_4, window_bounds = array<i64: 8, 1>}, {pipeline_mode = #tpu.pipeline_mode<synchronous>, transform_indices = @transform_5, window_bounds = array<i64: 1, 1000>}, {transform_indices = @transform_6, window_bounds = array<i64: 1, 8, 1000>}]} {
    %c0 = arith.constant 0 : index
    %c111 = arith.constant 111 : index
    %0 = vector.load %arg6[%c0, %c111] : memref<1x1000xf32, #tpu.memory_space<vmem>>, vector<1x778xf32>
    %cst = arith.constant 0.000000e+00 : f32
    %1 = vector.broadcast %cst : f32 to vector<8x778xf32>
    %c0_0 = arith.constant 0 : index
    %c0_1 = arith.constant 0 : index
    %c0_2 = arith.constant 0 : index
    %2 = vector.load %arg1[%c0_0, %c0_1, %c0_2] : memref<1x8x1000xf32, #tpu.memory_space<vmem>>, vector<1x8x778xf32>
    %3 = vector.shape_cast %2 : vector<1x8x778xf32> to vector<8x778xf32>
    %c0_3 = arith.constant 0 : index
    %c0_4 = arith.constant 0 : index
    %c0_5 = arith.constant 0 : index
    %4 = vector.load %arg2[%c0_3, %c0_4, %c0_5] : memref<27x8x8xf32, #tpu.memory_space<vmem>>, vector<1x8x8xf32>
    %5 = vector.shape_cast %4 : vector<1x8x8xf32> to vector<8x8xf32>
    %cst_6 = arith.constant dense<0.000000e+00> : vector<8x778xf32>
    %6 = tpu.matmul %5, %3, %cst_6 {dimension_numbers = #tpu.dot_dimension_numbers<[1], [0], [0], [1], [0, 0, 1, 1], [], []>} : vector<8x8xf32>, vector<8x778xf32>, vector<8x778xf32> -> vector<8x778xf32>
    %7 = arith.addf %1, %6 : vector<8x778xf32>
    %c0_7 = arith.constant 0 : index
    %c0_8 = arith.constant 0 : index
    %c1 = arith.constant 1 : index
    %8 = vector.load %arg1[%c0_7, %c0_8, %c1] : memref<1x8x1000xf32, #tpu.memory_space<vmem>>, vector<1x8x778xf32>
    %9 = vector.shape_cast %8 : vector<1x8x778xf32> to vector<8x778xf32>
    %c1_9 = arith.constant 1 : index
    %c0_10 = arith.constant 0 : index
    %c0_11 = arith.constant 0 : index
    %10 = vector.load %arg2[%c1_9, %c0_10, %c0_11] : memref<27x8x8xf32, #tpu.memory_space<vmem>>, vector<1x8x8xf32>
    %11 = vector.shape_cast %10 : vector<1x8x8xf32> to vector<8x8xf32>
    %cst_12 = arith.constant dense<0.000000e+00> : vector<8x778xf32>
    %12 = tpu.matmul %11, %9, %cst_12 {dimension_numbers = #tpu.dot_dimension_numbers<[1], [0], [0], [1], [0, 0, 1, 1], [], []>} : vector<8x8xf32>, vector<8x778xf32>, vector<8x778xf32> -> vector<8x778xf32>
    %13 = arith.addf %7, %12 : vector<8x778xf32>
    %c0_13 = arith.constant 0 : index
    %c0_14 = arith.constant 0 : index
    %c2 = arith.constant 2 : index
    %14 = vector.load %arg1[%c0_13, %c0_14, %c2] : memref<1x8x1000xf32, #tpu.memory_space<vmem>>, vector<1x8x778xf32>
    %15 = vector.shape_cast %14 : vector<1x8x778xf32> to vector<8x778xf32>
    %c2_15 = arith.constant 2 : index
    %c0_16 = arith.constant 0 : index
    %c0_17 = arith.constant 0 : index
    %16 = vector.load %arg2[%c2_15, %c0_16, %c0_17] : memref<27x8x8xf32, #tpu.memory_space<vmem>>, vector<1x8x8xf32>
    %17 = vector.shape_cast %16 : vector<1x8x8xf32> to vector<8x8xf32>
    %cst_18 = arith.constant dense<0.000000e+00> : vector<8x778xf32>
    %18 = tpu.matmul %17, %15, %cst_18 {dimension_numbers = #tpu.dot_dimension_numbers<[1], [0], [0], [1], [0, 0, 1, 1], [], []>} : vector<8x8xf32>, vector<8x778xf32>, vector<8x778xf32> -> vector<8x778xf32>
    %19 = arith.addf %13, %18 : vector<8x778xf32>
    %c0_19 = arith.constant 0 : index
    %c0_20 = arith.constant 0 : index
    %c10 = arith.constant 10 : index
    %20 = vector.load %arg1[%c0_19, %c0_20, %c10] : memref<1x8x1000xf32, #tpu.memory_space<vmem>>, vector<1x8x778xf32>
    %21 = vector.shape_cast %20 : vector<1x8x778xf32> to vector<8x778xf32>
    %c3 = arith.constant 3 : index
    %c0_21 = arith.constant 0 : index
    %c0_22 = arith.constant 0 : index
    %22 = vector.load %arg2[%c3, %c0_21, %c0_22] : memref<27x8x8xf32, #tpu.memory_space<vmem>>, vector<1x8x8xf32>
    %23 = vector.shape_cast %22 : vector<1x8x8xf32> to vector<8x8xf32>
    %cst_23 = arith.constant dense<0.000000e+00> : vector<8x778xf32>
    %24 = tpu.matmul %23, %21, %cst_23 {dimension_numbers = #tpu.dot_dimension_numbers<[1], [0], [0], [1], [0, 0, 1, 1], [], []>} : vector<8x8xf32>, vector<8x778xf32>, vector<8x778xf32> -> vector<8x778xf32>
    %25 = arith.addf %19, %24 : vector<8x778xf32>
    %c0_24 = arith.constant 0 : index
    %c0_25 = arith.constant 0 : index
    %c11 = arith.constant 11 : index
    %26 = vector.load %arg1[%c0_24, %c0_25, %c11] : memref<1x8x1000xf32, #tpu.memory_space<vmem>>, vector<1x8x778xf32>
    %27 = vector.shape_cast %26 : vector<1x8x778xf32> to vector<8x778xf32>
    %c4 = arith.constant 4 : index
    %c0_26 = arith.constant 0 : index
    %c0_27 = arith.constant 0 : index
    %28 = vector.load %arg2[%c4, %c0_26, %c0_27] : memref<27x8x8xf32, #tpu.memory_space<vmem>>, vector<1x8x8xf32>
    %29 = vector.shape_cast %28 : vector<1x8x8xf32> to vector<8x8xf32>
    %cst_28 = arith.constant dense<0.000000e+00> : vector<8x778xf32>
    %30 = tpu.matmul %29, %27, %cst_28 {dimension_numbers = #tpu.dot_dimension_numbers<[1], [0], [0], [1], [0, 0, 1, 1], [], []>} : vector<8x8xf32>, vector<8x778xf32>, vector<8x778xf32> -> vector<8x778xf32>
    %31 = arith.addf %25, %30 : vector<8x778xf32>
    %c0_29 = arith.constant 0 : index
    %c0_30 = arith.constant 0 : index
    %c12 = arith.constant 12 : index
    %32 = vector.load %arg1[%c0_29, %c0_30, %c12] : memref<1x8x1000xf32, #tpu.memory_space<vmem>>, vector<1x8x778xf32>
    %33 = vector.shape_cast %32 : vector<1x8x778xf32> to vector<8x778xf32>
    %c5 = arith.constant 5 : index
    %c0_31 = arith.constant 0 : index
    %c0_32 = arith.constant 0 : index
    %34 = vector.load %arg2[%c5, %c0_31, %c0_32] : memref<27x8x8xf32, #tpu.memory_space<vmem>>, vector<1x8x8xf32>
    %35 = vector.shape_cast %34 : vector<1x8x8xf32> to vector<8x8xf32>
    %cst_33 = arith.constant dense<0.000000e+00> : vector<8x778xf32>
    %36 = tpu.matmul %35, %33, %cst_33 {dimension_numbers = #tpu.dot_dimension_numbers<[1], [0], [0], [1], [0, 0, 1, 1], [], []>} : vector<8x8xf32>, vector<8x778xf32>, vector<8x778xf32> -> vector<8x778xf32>
    %37 = arith.addf %31, %36 : vector<8x778xf32>
    %c0_34 = arith.constant 0 : index
    %c0_35 = arith.constant 0 : index
    %c20 = arith.constant 20 : index
    %38 = vector.load %arg1[%c0_34, %c0_35, %c20] : memref<1x8x1000xf32, #tpu.memory_space<vmem>>, vector<1x8x778xf32>
    %39 = vector.shape_cast %38 : vector<1x8x778xf32> to vector<8x778xf32>
    %c6 = arith.constant 6 : index
    %c0_36 = arith.constant 0 : index
    %c0_37 = arith.constant 0 : index
    %40 = vector.load %arg2[%c6, %c0_36, %c0_37] : memref<27x8x8xf32, #tpu.memory_space<vmem>>, vector<1x8x8xf32>
    %41 = vector.shape_cast %40 : vector<1x8x8xf32> to vector<8x8xf32>
    %cst_38 = arith.constant dense<0.000000e+00> : vector<8x778xf32>
    %42 = tpu.matmul %41, %39, %cst_38 {dimension_numbers = #tpu.dot_dimension_numbers<[1], [0], [0], [1], [0, 0, 1, 1], [], []>} : vector<8x8xf32>, vector<8x778xf32>, vector<8x778xf32> -> vector<8x778xf32>
    %43 = arith.addf %37, %42 : vector<8x778xf32>
    %c0_39 = arith.constant 0 : index
    %c0_40 = arith.constant 0 : index
    %c21 = arith.constant 21 : index
    %44 = vector.load %arg1[%c0_39, %c0_40, %c21] : memref<1x8x1000xf32, #tpu.memory_space<vmem>>, vector<1x8x778xf32>
    %45 = vector.shape_cast %44 : vector<1x8x778xf32> to vector<8x778xf32>
    %c7 = arith.constant 7 : index
    %c0_41 = arith.constant 0 : index
    %c0_42 = arith.constant 0 : index
    %46 = vector.load %arg2[%c7, %c0_41, %c0_42] : memref<27x8x8xf32, #tpu.memory_space<vmem>>, vector<1x8x8xf32>
    %47 = vector.shape_cast %46 : vector<1x8x8xf32> to vector<8x8xf32>
    %cst_43 = arith.constant dense<0.000000e+00> : vector<8x778xf32>
    %48 = tpu.matmul %47, %45, %cst_43 {dimension_numbers = #tpu.dot_dimension_numbers<[1], [0], [0], [1], [0, 0, 1, 1], [], []>} : vector<8x8xf32>, vector<8x778xf32>, vector<8x778xf32> -> vector<8x778xf32>
    %49 = arith.addf %43, %48 : vector<8x778xf32>
    %c0_44 = arith.constant 0 : index
    %c0_45 = arith.constant 0 : index
    %c22 = arith.constant 22 : index
    %50 = vector.load %arg1[%c0_44, %c0_45, %c22] : memref<1x8x1000xf32, #tpu.memory_space<vmem>>, vector<1x8x778xf32>
    %51 = vector.shape_cast %50 : vector<1x8x778xf32> to vector<8x778xf32>
    %c8 = arith.constant 8 : index
    %c0_46 = arith.constant 0 : index
    %c0_47 = arith.constant 0 : index
    %52 = vector.load %arg2[%c8, %c0_46, %c0_47] : memref<27x8x8xf32, #tpu.memory_space<vmem>>, vector<1x8x8xf32>
    %53 = vector.shape_cast %52 : vector<1x8x8xf32> to vector<8x8xf32>
    %cst_48 = arith.constant dense<0.000000e+00> : vector<8x778xf32>
    %54 = tpu.matmul %53, %51, %cst_48 {dimension_numbers = #tpu.dot_dimension_numbers<[1], [0], [0], [1], [0, 0, 1, 1], [], []>} : vector<8x8xf32>, vector<8x778xf32>, vector<8x778xf32> -> vector<8x778xf32>
    %55 = arith.addf %49, %54 : vector<8x778xf32>
    %c0_49 = arith.constant 0 : index
    %c0_50 = arith.constant 0 : index
    %c100 = arith.constant 100 : index
    %56 = vector.load %arg1[%c0_49, %c0_50, %c100] : memref<1x8x1000xf32, #tpu.memory_space<vmem>>, vector<1x8x778xf32>
    %57 = vector.shape_cast %56 : vector<1x8x778xf32> to vector<8x778xf32>
    %c9 = arith.constant 9 : index
    %c0_51 = arith.constant 0 : index
    %c0_52 = arith.constant 0 : index
    %58 = vector.load %arg2[%c9, %c0_51, %c0_52] : memref<27x8x8xf32, #tpu.memory_space<vmem>>, vector<1x8x8xf32>
    %59 = vector.shape_cast %58 : vector<1x8x8xf32> to vector<8x8xf32>
    %cst_53 = arith.constant dense<0.000000e+00> : vector<8x778xf32>
    %60 = tpu.matmul %59, %57, %cst_53 {dimension_numbers = #tpu.dot_dimension_numbers<[1], [0], [0], [1], [0, 0, 1, 1], [], []>} : vector<8x8xf32>, vector<8x778xf32>, vector<8x778xf32> -> vector<8x778xf32>
    %61 = arith.addf %55, %60 : vector<8x778xf32>
    %c0_54 = arith.constant 0 : index
    %c0_55 = arith.constant 0 : index
    %c101 = arith.constant 101 : index
    %62 = vector.load %arg1[%c0_54, %c0_55, %c101] : memref<1x8x1000xf32, #tpu.memory_space<vmem>>, vector<1x8x778xf32>
    %63 = vector.shape_cast %62 : vector<1x8x778xf32> to vector<8x778xf32>
    %c10_56 = arith.constant 10 : index
    %c0_57 = arith.constant 0 : index
    %c0_58 = arith.constant 0 : index
    %64 = vector.load %arg2[%c10_56, %c0_57, %c0_58] : memref<27x8x8xf32, #tpu.memory_space<vmem>>, vector<1x8x8xf32>
    %65 = vector.shape_cast %64 : vector<1x8x8xf32> to vector<8x8xf32>
    %cst_59 = arith.constant dense<0.000000e+00> : vector<8x778xf32>
    %66 = tpu.matmul %65, %63, %cst_59 {dimension_numbers = #tpu.dot_dimension_numbers<[1], [0], [0], [1], [0, 0, 1, 1], [], []>} : vector<8x8xf32>, vector<8x778xf32>, vector<8x778xf32> -> vector<8x778xf32>
    %67 = arith.addf %61, %66 : vector<8x778xf32>
    %c0_60 = arith.constant 0 : index
    %c0_61 = arith.constant 0 : index
    %c102 = arith.constant 102 : index
    %68 = vector.load %arg1[%c0_60, %c0_61, %c102] : memref<1x8x1000xf32, #tpu.memory_space<vmem>>, vector<1x8x778xf32>
    %69 = vector.shape_cast %68 : vector<1x8x778xf32> to vector<8x778xf32>
    %c11_62 = arith.constant 11 : index
    %c0_63 = arith.constant 0 : index
    %c0_64 = arith.constant 0 : index
    %70 = vector.load %arg2[%c11_62, %c0_63, %c0_64] : memref<27x8x8xf32, #tpu.memory_space<vmem>>, vector<1x8x8xf32>
    %71 = vector.shape_cast %70 : vector<1x8x8xf32> to vector<8x8xf32>
    %cst_65 = arith.constant dense<0.000000e+00> : vector<8x778xf32>
    %72 = tpu.matmul %71, %69, %cst_65 {dimension_numbers = #tpu.dot_dimension_numbers<[1], [0], [0], [1], [0, 0, 1, 1], [], []>} : vector<8x8xf32>, vector<8x778xf32>, vector<8x778xf32> -> vector<8x778xf32>
    %73 = arith.addf %67, %72 : vector<8x778xf32>
    %c0_66 = arith.constant 0 : index
    %c0_67 = arith.constant 0 : index
    %c110 = arith.constant 110 : index
    %74 = vector.load %arg1[%c0_66, %c0_67, %c110] : memref<1x8x1000xf32, #tpu.memory_space<vmem>>, vector<1x8x778xf32>
    %75 = vector.shape_cast %74 : vector<1x8x778xf32> to vector<8x778xf32>
    %c12_68 = arith.constant 12 : index
    %c0_69 = arith.constant 0 : index
    %c0_70 = arith.constant 0 : index
    %76 = vector.load %arg2[%c12_68, %c0_69, %c0_70] : memref<27x8x8xf32, #tpu.memory_space<vmem>>, vector<1x8x8xf32>
    %77 = vector.shape_cast %76 : vector<1x8x8xf32> to vector<8x8xf32>
    %cst_71 = arith.constant dense<0.000000e+00> : vector<8x778xf32>
    %78 = tpu.matmul %77, %75, %cst_71 {dimension_numbers = #tpu.dot_dimension_numbers<[1], [0], [0], [1], [0, 0, 1, 1], [], []>} : vector<8x8xf32>, vector<8x778xf32>, vector<8x778xf32> -> vector<8x778xf32>
    %79 = arith.addf %73, %78 : vector<8x778xf32>
    %c0_72 = arith.constant 0 : index
    %c0_73 = arith.constant 0 : index
    %c111_74 = arith.constant 111 : index
    %80 = vector.load %arg1[%c0_72, %c0_73, %c111_74] : memref<1x8x1000xf32, #tpu.memory_space<vmem>>, vector<1x8x778xf32>
    %81 = vector.shape_cast %80 : vector<1x8x778xf32> to vector<8x778xf32>
    %c13 = arith.constant 13 : index
    %c0_75 = arith.constant 0 : index
    %c0_76 = arith.constant 0 : index
    %82 = vector.load %arg2[%c13, %c0_75, %c0_76] : memref<27x8x8xf32, #tpu.memory_space<vmem>>, vector<1x8x8xf32>
    %83 = vector.shape_cast %82 : vector<1x8x8xf32> to vector<8x8xf32>
    %cst_77 = arith.constant dense<0.000000e+00> : vector<8x778xf32>
    %84 = tpu.matmul %83, %81, %cst_77 {dimension_numbers = #tpu.dot_dimension_numbers<[1], [0], [0], [1], [0, 0, 1, 1], [], []>} : vector<8x8xf32>, vector<8x778xf32>, vector<8x778xf32> -> vector<8x778xf32>
    %85 = arith.addf %79, %84 : vector<8x778xf32>
    %c0_78 = arith.constant 0 : index
    %c0_79 = arith.constant 0 : index
    %c112 = arith.constant 112 : index
    %86 = vector.load %arg1[%c0_78, %c0_79, %c112] : memref<1x8x1000xf32, #tpu.memory_space<vmem>>, vector<1x8x778xf32>
    %87 = vector.shape_cast %86 : vector<1x8x778xf32> to vector<8x778xf32>
    %c14 = arith.constant 14 : index
    %c0_80 = arith.constant 0 : index
    %c0_81 = arith.constant 0 : index
    %88 = vector.load %arg2[%c14, %c0_80, %c0_81] : memref<27x8x8xf32, #tpu.memory_space<vmem>>, vector<1x8x8xf32>
    %89 = vector.shape_cast %88 : vector<1x8x8xf32> to vector<8x8xf32>
    %cst_82 = arith.constant dense<0.000000e+00> : vector<8x778xf32>
    %90 = tpu.matmul %89, %87, %cst_82 {dimension_numbers = #tpu.dot_dimension_numbers<[1], [0], [0], [1], [0, 0, 1, 1], [], []>} : vector<8x8xf32>, vector<8x778xf32>, vector<8x778xf32> -> vector<8x778xf32>
    %91 = arith.addf %85, %90 : vector<8x778xf32>
    %c0_83 = arith.constant 0 : index
    %c0_84 = arith.constant 0 : index
    %c120 = arith.constant 120 : index
    %92 = vector.load %arg1[%c0_83, %c0_84, %c120] : memref<1x8x1000xf32, #tpu.memory_space<vmem>>, vector<1x8x778xf32>
    %93 = vector.shape_cast %92 : vector<1x8x778xf32> to vector<8x778xf32>
    %c15 = arith.constant 15 : index
    %c0_85 = arith.constant 0 : index
    %c0_86 = arith.constant 0 : index
    %94 = vector.load %arg2[%c15, %c0_85, %c0_86] : memref<27x8x8xf32, #tpu.memory_space<vmem>>, vector<1x8x8xf32>
    %95 = vector.shape_cast %94 : vector<1x8x8xf32> to vector<8x8xf32>
    %cst_87 = arith.constant dense<0.000000e+00> : vector<8x778xf32>
    %96 = tpu.matmul %95, %93, %cst_87 {dimension_numbers = #tpu.dot_dimension_numbers<[1], [0], [0], [1], [0, 0, 1, 1], [], []>} : vector<8x8xf32>, vector<8x778xf32>, vector<8x778xf32> -> vector<8x778xf32>
    %97 = arith.addf %91, %96 : vector<8x778xf32>
    %c0_88 = arith.constant 0 : index
    %c0_89 = arith.constant 0 : index
    %c121 = arith.constant 121 : index
    %98 = vector.load %arg1[%c0_88, %c0_89, %c121] : memref<1x8x1000xf32, #tpu.memory_space<vmem>>, vector<1x8x778xf32>
    %99 = vector.shape_cast %98 : vector<1x8x778xf32> to vector<8x778xf32>
    %c16 = arith.constant 16 : index
    %c0_90 = arith.constant 0 : index
    %c0_91 = arith.constant 0 : index
    %100 = vector.load %arg2[%c16, %c0_90, %c0_91] : memref<27x8x8xf32, #tpu.memory_space<vmem>>, vector<1x8x8xf32>
    %101 = vector.shape_cast %100 : vector<1x8x8xf32> to vector<8x8xf32>
    %cst_92 = arith.constant dense<0.000000e+00> : vector<8x778xf32>
    %102 = tpu.matmul %101, %99, %cst_92 {dimension_numbers = #tpu.dot_dimension_numbers<[1], [0], [0], [1], [0, 0, 1, 1], [], []>} : vector<8x8xf32>, vector<8x778xf32>, vector<8x778xf32> -> vector<8x778xf32>
    %103 = arith.addf %97, %102 : vector<8x778xf32>
    %c0_93 = arith.constant 0 : index
    %c0_94 = arith.constant 0 : index
    %c122 = arith.constant 122 : index
    %104 = vector.load %arg1[%c0_93, %c0_94, %c122] : memref<1x8x1000xf32, #tpu.memory_space<vmem>>, vector<1x8x778xf32>
    %105 = vector.shape_cast %104 : vector<1x8x778xf32> to vector<8x778xf32>
    %c17 = arith.constant 17 : index
    %c0_95 = arith.constant 0 : index
    %c0_96 = arith.constant 0 : index
    %106 = vector.load %arg2[%c17, %c0_95, %c0_96] : memref<27x8x8xf32, #tpu.memory_space<vmem>>, vector<1x8x8xf32>
    %107 = vector.shape_cast %106 : vector<1x8x8xf32> to vector<8x8xf32>
    %cst_97 = arith.constant dense<0.000000e+00> : vector<8x778xf32>
    %108 = tpu.matmul %107, %105, %cst_97 {dimension_numbers = #tpu.dot_dimension_numbers<[1], [0], [0], [1], [0, 0, 1, 1], [], []>} : vector<8x8xf32>, vector<8x778xf32>, vector<8x778xf32> -> vector<8x778xf32>
    %109 = arith.addf %103, %108 : vector<8x778xf32>
    %c0_98 = arith.constant 0 : index
    %c0_99 = arith.constant 0 : index
    %c200 = arith.constant 200 : index
    %110 = vector.load %arg1[%c0_98, %c0_99, %c200] : memref<1x8x1000xf32, #tpu.memory_space<vmem>>, vector<1x8x778xf32>
    %111 = vector.shape_cast %110 : vector<1x8x778xf32> to vector<8x778xf32>
    %c18 = arith.constant 18 : index
    %c0_100 = arith.constant 0 : index
    %c0_101 = arith.constant 0 : index
    %112 = vector.load %arg2[%c18, %c0_100, %c0_101] : memref<27x8x8xf32, #tpu.memory_space<vmem>>, vector<1x8x8xf32>
    %113 = vector.shape_cast %112 : vector<1x8x8xf32> to vector<8x8xf32>
    %cst_102 = arith.constant dense<0.000000e+00> : vector<8x778xf32>
    %114 = tpu.matmul %113, %111, %cst_102 {dimension_numbers = #tpu.dot_dimension_numbers<[1], [0], [0], [1], [0, 0, 1, 1], [], []>} : vector<8x8xf32>, vector<8x778xf32>, vector<8x778xf32> -> vector<8x778xf32>
    %115 = arith.addf %109, %114 : vector<8x778xf32>
    %c0_103 = arith.constant 0 : index
    %c0_104 = arith.constant 0 : index
    %c201 = arith.constant 201 : index
    %116 = vector.load %arg1[%c0_103, %c0_104, %c201] : memref<1x8x1000xf32, #tpu.memory_space<vmem>>, vector<1x8x778xf32>
    %117 = vector.shape_cast %116 : vector<1x8x778xf32> to vector<8x778xf32>
    %c19 = arith.constant 19 : index
    %c0_105 = arith.constant 0 : index
    %c0_106 = arith.constant 0 : index
    %118 = vector.load %arg2[%c19, %c0_105, %c0_106] : memref<27x8x8xf32, #tpu.memory_space<vmem>>, vector<1x8x8xf32>
    %119 = vector.shape_cast %118 : vector<1x8x8xf32> to vector<8x8xf32>
    %cst_107 = arith.constant dense<0.000000e+00> : vector<8x778xf32>
    %120 = tpu.matmul %119, %117, %cst_107 {dimension_numbers = #tpu.dot_dimension_numbers<[1], [0], [0], [1], [0, 0, 1, 1], [], []>} : vector<8x8xf32>, vector<8x778xf32>, vector<8x778xf32> -> vector<8x778xf32>
    %121 = arith.addf %115, %120 : vector<8x778xf32>
    %c0_108 = arith.constant 0 : index
    %c0_109 = arith.constant 0 : index
    %c202 = arith.constant 202 : index
    %122 = vector.load %arg1[%c0_108, %c0_109, %c202] : memref<1x8x1000xf32, #tpu.memory_space<vmem>>, vector<1x8x778xf32>
    %123 = vector.shape_cast %122 : vector<1x8x778xf32> to vector<8x778xf32>
    %c20_110 = arith.constant 20 : index
    %c0_111 = arith.constant 0 : index
    %c0_112 = arith.constant 0 : index
    %124 = vector.load %arg2[%c20_110, %c0_111, %c0_112] : memref<27x8x8xf32, #tpu.memory_space<vmem>>, vector<1x8x8xf32>
    %125 = vector.shape_cast %124 : vector<1x8x8xf32> to vector<8x8xf32>
    %cst_113 = arith.constant dense<0.000000e+00> : vector<8x778xf32>
    %126 = tpu.matmul %125, %123, %cst_113 {dimension_numbers = #tpu.dot_dimension_numbers<[1], [0], [0], [1], [0, 0, 1, 1], [], []>} : vector<8x8xf32>, vector<8x778xf32>, vector<8x778xf32> -> vector<8x778xf32>
    %127 = arith.addf %121, %126 : vector<8x778xf32>
    %c0_114 = arith.constant 0 : index
    %c0_115 = arith.constant 0 : index
    %c210 = arith.constant 210 : index
    %128 = vector.load %arg1[%c0_114, %c0_115, %c210] : memref<1x8x1000xf32, #tpu.memory_space<vmem>>, vector<1x8x778xf32>
    %129 = vector.shape_cast %128 : vector<1x8x778xf32> to vector<8x778xf32>
    %c21_116 = arith.constant 21 : index
    %c0_117 = arith.constant 0 : index
    %c0_118 = arith.constant 0 : index
    %130 = vector.load %arg2[%c21_116, %c0_117, %c0_118] : memref<27x8x8xf32, #tpu.memory_space<vmem>>, vector<1x8x8xf32>
    %131 = vector.shape_cast %130 : vector<1x8x8xf32> to vector<8x8xf32>
    %cst_119 = arith.constant dense<0.000000e+00> : vector<8x778xf32>
    %132 = tpu.matmul %131, %129, %cst_119 {dimension_numbers = #tpu.dot_dimension_numbers<[1], [0], [0], [1], [0, 0, 1, 1], [], []>} : vector<8x8xf32>, vector<8x778xf32>, vector<8x778xf32> -> vector<8x778xf32>
    %133 = arith.addf %127, %132 : vector<8x778xf32>
    %c0_120 = arith.constant 0 : index
    %c0_121 = arith.constant 0 : index
    %c211 = arith.constant 211 : index
    %134 = vector.load %arg1[%c0_120, %c0_121, %c211] : memref<1x8x1000xf32, #tpu.memory_space<vmem>>, vector<1x8x778xf32>
    %135 = vector.shape_cast %134 : vector<1x8x778xf32> to vector<8x778xf32>
    %c22_122 = arith.constant 22 : index
    %c0_123 = arith.constant 0 : index
    %c0_124 = arith.constant 0 : index
    %136 = vector.load %arg2[%c22_122, %c0_123, %c0_124] : memref<27x8x8xf32, #tpu.memory_space<vmem>>, vector<1x8x8xf32>
    %137 = vector.shape_cast %136 : vector<1x8x8xf32> to vector<8x8xf32>
    %cst_125 = arith.constant dense<0.000000e+00> : vector<8x778xf32>
    %138 = tpu.matmul %137, %135, %cst_125 {dimension_numbers = #tpu.dot_dimension_numbers<[1], [0], [0], [1], [0, 0, 1, 1], [], []>} : vector<8x8xf32>, vector<8x778xf32>, vector<8x778xf32> -> vector<8x778xf32>
    %139 = arith.addf %133, %138 : vector<8x778xf32>
    %c0_126 = arith.constant 0 : index
    %c0_127 = arith.constant 0 : index
    %c212 = arith.constant 212 : index
    %140 = vector.load %arg1[%c0_126, %c0_127, %c212] : memref<1x8x1000xf32, #tpu.memory_space<vmem>>, vector<1x8x778xf32>
    %141 = vector.shape_cast %140 : vector<1x8x778xf32> to vector<8x778xf32>
    %c23 = arith.constant 23 : index
    %c0_128 = arith.constant 0 : index
    %c0_129 = arith.constant 0 : index
    %142 = vector.load %arg2[%c23, %c0_128, %c0_129] : memref<27x8x8xf32, #tpu.memory_space<vmem>>, vector<1x8x8xf32>
    %143 = vector.shape_cast %142 : vector<1x8x8xf32> to vector<8x8xf32>
    %cst_130 = arith.constant dense<0.000000e+00> : vector<8x778xf32>
    %144 = tpu.matmul %143, %141, %cst_130 {dimension_numbers = #tpu.dot_dimension_numbers<[1], [0], [0], [1], [0, 0, 1, 1], [], []>} : vector<8x8xf32>, vector<8x778xf32>, vector<8x778xf32> -> vector<8x778xf32>
    %145 = arith.addf %139, %144 : vector<8x778xf32>
    %c0_131 = arith.constant 0 : index
    %c0_132 = arith.constant 0 : index
    %c220 = arith.constant 220 : index
    %146 = vector.load %arg1[%c0_131, %c0_132, %c220] : memref<1x8x1000xf32, #tpu.memory_space<vmem>>, vector<1x8x778xf32>
    %147 = vector.shape_cast %146 : vector<1x8x778xf32> to vector<8x778xf32>
    %c24 = arith.constant 24 : index
    %c0_133 = arith.constant 0 : index
    %c0_134 = arith.constant 0 : index
    %148 = vector.load %arg2[%c24, %c0_133, %c0_134] : memref<27x8x8xf32, #tpu.memory_space<vmem>>, vector<1x8x8xf32>
    %149 = vector.shape_cast %148 : vector<1x8x8xf32> to vector<8x8xf32>
    %cst_135 = arith.constant dense<0.000000e+00> : vector<8x778xf32>
    %150 = tpu.matmul %149, %147, %cst_135 {dimension_numbers = #tpu.dot_dimension_numbers<[1], [0], [0], [1], [0, 0, 1, 1], [], []>} : vector<8x8xf32>, vector<8x778xf32>, vector<8x778xf32> -> vector<8x778xf32>
    %151 = arith.addf %145, %150 : vector<8x778xf32>
    %c0_136 = arith.constant 0 : index
    %c0_137 = arith.constant 0 : index
    %c221 = arith.constant 221 : index
    %152 = vector.load %arg1[%c0_136, %c0_137, %c221] : memref<1x8x1000xf32, #tpu.memory_space<vmem>>, vector<1x8x778xf32>
    %153 = vector.shape_cast %152 : vector<1x8x778xf32> to vector<8x778xf32>
    %c25 = arith.constant 25 : index
    %c0_138 = arith.constant 0 : index
    %c0_139 = arith.constant 0 : index
    %154 = vector.load %arg2[%c25, %c0_138, %c0_139] : memref<27x8x8xf32, #tpu.memory_space<vmem>>, vector<1x8x8xf32>
    %155 = vector.shape_cast %154 : vector<1x8x8xf32> to vector<8x8xf32>
    %cst_140 = arith.constant dense<0.000000e+00> : vector<8x778xf32>
    %156 = tpu.matmul %155, %153, %cst_140 {dimension_numbers = #tpu.dot_dimension_numbers<[1], [0], [0], [1], [0, 0, 1, 1], [], []>} : vector<8x8xf32>, vector<8x778xf32>, vector<8x778xf32> -> vector<8x778xf32>
    %157 = arith.addf %151, %156 : vector<8x778xf32>
    %c0_141 = arith.constant 0 : index
    %c0_142 = arith.constant 0 : index
    %c222 = arith.constant 222 : index
    %158 = vector.load %arg1[%c0_141, %c0_142, %c222] : memref<1x8x1000xf32, #tpu.memory_space<vmem>>, vector<1x8x778xf32>
    %159 = vector.shape_cast %158 : vector<1x8x778xf32> to vector<8x778xf32>
    %c26 = arith.constant 26 : index
    %c0_143 = arith.constant 0 : index
    %c0_144 = arith.constant 0 : index
    %160 = vector.load %arg2[%c26, %c0_143, %c0_144] : memref<27x8x8xf32, #tpu.memory_space<vmem>>, vector<1x8x8xf32>
    %161 = vector.shape_cast %160 : vector<1x8x8xf32> to vector<8x8xf32>
    %cst_145 = arith.constant dense<0.000000e+00> : vector<8x778xf32>
    %162 = tpu.matmul %161, %159, %cst_145 {dimension_numbers = #tpu.dot_dimension_numbers<[1], [0], [0], [1], [0, 0, 1, 1], [], []>} : vector<8x8xf32>, vector<8x778xf32>, vector<8x778xf32> -> vector<8x778xf32>
    %163 = arith.addf %157, %162 : vector<8x778xf32>
    %c0_146 = arith.constant 0 : index
    %c0_147 = arith.constant 0 : index
    %164 = vector.load %arg3[%c0_146, %c0_147] : memref<8x1xf32, #tpu.memory_space<vmem>>, vector<8x1xf32>
    %165 = vector.broadcast %164 : vector<8x1xf32> to vector<8x778xf32>
    %166 = arith.addf %163, %165 : vector<8x778xf32>
    %cst_148 = arith.constant 0.000000e+00 : f32
    %167 = vector.broadcast %cst_148 : f32 to vector<8x778xf32>
    %168 = arith.maximumf %166, %167 : vector<8x778xf32>
    %169 = vector.broadcast %0 : vector<1x778xf32> to vector<8x778xf32>
    %170 = arith.mulf %168, %169 : vector<8x778xf32>
    %cst_149 = arith.constant 0.000000e+00 : f32
    %171 = vector.broadcast %cst_149 : f32 to vector<8x1000xf32>
    %c0_150 = arith.constant 0 : index
    %c0_151 = arith.constant 0 : index
    %172 = vector.load %arg8[%c0_150, %c0_151] : memref<8x1000xf32, #tpu.memory_space<vmem>>, vector<8x1000xf32>
    tpu.vector_store %arg8[%c0_150, %c0_151], %171 {strides = array<i32>} : memref<8x1000xf32, #tpu.memory_space<vmem>>, vector<8x1000xf32>,
    %c0_152 = arith.constant 0 : index
    %c111_153 = arith.constant 111 : index
    %173 = vector.load %arg8[%c0_152, %c111_153] : memref<8x1000xf32, #tpu.memory_space<vmem>>, vector<8x778xf32>
    tpu.vector_store %arg8[%c0_152, %c111_153], %170 {strides = array<i32>} : memref<8x1000xf32, #tpu.memory_space<vmem>>, vector<8x778xf32>,
    %cst_154 = arith.constant 0.000000e+00 : f32
    %174 = vector.broadcast %cst_154 : f32 to vector<8x778xf32>
    %c0_155 = arith.constant 0 : index
    %c0_156 = arith.constant 0 : index
    %175 = vector.load %arg8[%c0_155, %c0_156] : memref<8x1000xf32, #tpu.memory_space<vmem>>, vector<8x778xf32>
    %c0_157 = arith.constant 0 : index
    %c0_158 = arith.constant 0 : index
    %c0_159 = arith.constant 0 : index
    %176 = vector.load %arg4[%c0_157, %c0_158, %c0_159] : memref<27x8x8xf32, #tpu.memory_space<vmem>>, vector<1x8x8xf32>
    %177 = vector.shape_cast %176 : vector<1x8x8xf32> to vector<8x8xf32>
    %cst_160 = arith.constant dense<0.000000e+00> : vector<8x778xf32>
    %178 = tpu.matmul %177, %175, %cst_160 {dimension_numbers = #tpu.dot_dimension_numbers<[1], [0], [0], [1], [0, 0, 1, 1], [], []>} : vector<8x8xf32>, vector<8x778xf32>, vector<8x778xf32> -> vector<8x778xf32>
    %179 = arith.addf %174, %178 : vector<8x778xf32>
    %c0_161 = arith.constant 0 : index
    %c1_162 = arith.constant 1 : index
    %180 = vector.load %arg8[%c0_161, %c1_162] : memref<8x1000xf32, #tpu.memory_space<vmem>>, vector<8x778xf32>
    %c1_163 = arith.constant 1 : index
    %c0_164 = arith.constant 0 : index
    %c0_165 = arith.constant 0 : index
    %181 = vector.load %arg4[%c1_163, %c0_164, %c0_165] : memref<27x8x8xf32, #tpu.memory_space<vmem>>, vector<1x8x8xf32>
    %182 = vector.shape_cast %181 : vector<1x8x8xf32> to vector<8x8xf32>
    %cst_166 = arith.constant dense<0.000000e+00> : vector<8x778xf32>
    %183 = tpu.matmul %182, %180, %cst_166 {dimension_numbers = #tpu.dot_dimension_numbers<[1], [0], [0], [1], [0, 0, 1, 1], [], []>} : vector<8x8xf32>, vector<8x778xf32>, vector<8x778xf32> -> vector<8x778xf32>
    %184 = arith.addf %179, %183 : vector<8x778xf32>
    %c0_167 = arith.constant 0 : index
    %c2_168 = arith.constant 2 : index
    %185 = vector.load %arg8[%c0_167, %c2_168] : memref<8x1000xf32, #tpu.memory_space<vmem>>, vector<8x778xf32>
    %c2_169 = arith.constant 2 : index
    %c0_170 = arith.constant 0 : index
    %c0_171 = arith.constant 0 : index
    %186 = vector.load %arg4[%c2_169, %c0_170, %c0_171] : memref<27x8x8xf32, #tpu.memory_space<vmem>>, vector<1x8x8xf32>
    %187 = vector.shape_cast %186 : vector<1x8x8xf32> to vector<8x8xf32>
    %cst_172 = arith.constant dense<0.000000e+00> : vector<8x778xf32>
    %188 = tpu.matmul %187, %185, %cst_172 {dimension_numbers = #tpu.dot_dimension_numbers<[1], [0], [0], [1], [0, 0, 1, 1], [], []>} : vector<8x8xf32>, vector<8x778xf32>, vector<8x778xf32> -> vector<8x778xf32>
    %189 = arith.addf %184, %188 : vector<8x778xf32>
    %c0_173 = arith.constant 0 : index
    %c10_174 = arith.constant 10 : index
    %190 = vector.load %arg8[%c0_173, %c10_174] : memref<8x1000xf32, #tpu.memory_space<vmem>>, vector<8x778xf32>
    %c3_175 = arith.constant 3 : index
    %c0_176 = arith.constant 0 : index
    %c0_177 = arith.constant 0 : index
    %191 = vector.load %arg4[%c3_175, %c0_176, %c0_177] : memref<27x8x8xf32, #tpu.memory_space<vmem>>, vector<1x8x8xf32>
    %192 = vector.shape_cast %191 : vector<1x8x8xf32> to vector<8x8xf32>
    %cst_178 = arith.constant dense<0.000000e+00> : vector<8x778xf32>
    %193 = tpu.matmul %192, %190, %cst_178 {dimension_numbers = #tpu.dot_dimension_numbers<[1], [0], [0], [1], [0, 0, 1, 1], [], []>} : vector<8x8xf32>, vector<8x778xf32>, vector<8x778xf32> -> vector<8x778xf32>
    %194 = arith.addf %189, %193 : vector<8x778xf32>
    %c0_179 = arith.constant 0 : index
    %c11_180 = arith.constant 11 : index
    %195 = vector.load %arg8[%c0_179, %c11_180] : memref<8x1000xf32, #tpu.memory_space<vmem>>, vector<8x778xf32>
    %c4_181 = arith.constant 4 : index
    %c0_182 = arith.constant 0 : index
    %c0_183 = arith.constant 0 : index
    %196 = vector.load %arg4[%c4_181, %c0_182, %c0_183] : memref<27x8x8xf32, #tpu.memory_space<vmem>>, vector<1x8x8xf32>
    %197 = vector.shape_cast %196 : vector<1x8x8xf32> to vector<8x8xf32>
    %cst_184 = arith.constant dense<0.000000e+00> : vector<8x778xf32>
    %198 = tpu.matmul %197, %195, %cst_184 {dimension_numbers = #tpu.dot_dimension_numbers<[1], [0], [0], [1], [0, 0, 1, 1], [], []>} : vector<8x8xf32>, vector<8x778xf32>, vector<8x778xf32> -> vector<8x778xf32>
    %199 = arith.addf %194, %198 : vector<8x778xf32>
    %c0_185 = arith.constant 0 : index
    %c12_186 = arith.constant 12 : index
    %200 = vector.load %arg8[%c0_185, %c12_186] : memref<8x1000xf32, #tpu.memory_space<vmem>>, vector<8x778xf32>
    %c5_187 = arith.constant 5 : index
    %c0_188 = arith.constant 0 : index
    %c0_189 = arith.constant 0 : index
    %201 = vector.load %arg4[%c5_187, %c0_188, %c0_189] : memref<27x8x8xf32, #tpu.memory_space<vmem>>, vector<1x8x8xf32>
    %202 = vector.shape_cast %201 : vector<1x8x8xf32> to vector<8x8xf32>
    %cst_190 = arith.constant dense<0.000000e+00> : vector<8x778xf32>
    %203 = tpu.matmul %202, %200, %cst_190 {dimension_numbers = #tpu.dot_dimension_numbers<[1], [0], [0], [1], [0, 0, 1, 1], [], []>} : vector<8x8xf32>, vector<8x778xf32>, vector<8x778xf32> -> vector<8x778xf32>
    %204 = arith.addf %199, %203 : vector<8x778xf32>
    %c0_191 = arith.constant 0 : index
    %c20_192 = arith.constant 20 : index
    %205 = vector.load %arg8[%c0_191, %c20_192] : memref<8x1000xf32, #tpu.memory_space<vmem>>, vector<8x778xf32>
    %c6_193 = arith.constant 6 : index
    %c0_194 = arith.constant 0 : index
    %c0_195 = arith.constant 0 : index
    %206 = vector.load %arg4[%c6_193, %c0_194, %c0_195] : memref<27x8x8xf32, #tpu.memory_space<vmem>>, vector<1x8x8xf32>
    %207 = vector.shape_cast %206 : vector<1x8x8xf32> to vector<8x8xf32>
    %cst_196 = arith.constant dense<0.000000e+00> : vector<8x778xf32>
    %208 = tpu.matmul %207, %205, %cst_196 {dimension_numbers = #tpu.dot_dimension_numbers<[1], [0], [0], [1], [0, 0, 1, 1], [], []>} : vector<8x8xf32>, vector<8x778xf32>, vector<8x778xf32> -> vector<8x778xf32>
    %209 = arith.addf %204, %208 : vector<8x778xf32>
    %c0_197 = arith.constant 0 : index
    %c21_198 = arith.constant 21 : index
    %210 = vector.load %arg8[%c0_197, %c21_198] : memref<8x1000xf32, #tpu.memory_space<vmem>>, vector<8x778xf32>
    %c7_199 = arith.constant 7 : index
    %c0_200 = arith.constant 0 : index
    %c0_201 = arith.constant 0 : index
    %211 = vector.load %arg4[%c7_199, %c0_200, %c0_201] : memref<27x8x8xf32, #tpu.memory_space<vmem>>, vector<1x8x8xf32>
    %212 = vector.shape_cast %211 : vector<1x8x8xf32> to vector<8x8xf32>
    %cst_202 = arith.constant dense<0.000000e+00> : vector<8x778xf32>
    %213 = tpu.matmul %212, %210, %cst_202 {dimension_numbers = #tpu.dot_dimension_numbers<[1], [0], [0], [1], [0, 0, 1, 1], [], []>} : vector<8x8xf32>, vector<8x778xf32>, vector<8x778xf32> -> vector<8x778xf32>
    %214 = arith.addf %209, %213 : vector<8x778xf32>
    %c0_203 = arith.constant 0 : index
    %c22_204 = arith.constant 22 : index
    %215 = vector.load %arg8[%c0_203, %c22_204] : memref<8x1000xf32, #tpu.memory_space<vmem>>, vector<8x778xf32>
    %c8_205 = arith.constant 8 : index
    %c0_206 = arith.constant 0 : index
    %c0_207 = arith.constant 0 : index
    %216 = vector.load %arg4[%c8_205, %c0_206, %c0_207] : memref<27x8x8xf32, #tpu.memory_space<vmem>>, vector<1x8x8xf32>
    %217 = vector.shape_cast %216 : vector<1x8x8xf32> to vector<8x8xf32>
    %cst_208 = arith.constant dense<0.000000e+00> : vector<8x778xf32>
    %218 = tpu.matmul %217, %215, %cst_208 {dimension_numbers = #tpu.dot_dimension_numbers<[1], [0], [0], [1], [0, 0, 1, 1], [], []>} : vector<8x8xf32>, vector<8x778xf32>, vector<8x778xf32> -> vector<8x778xf32>
    %219 = arith.addf %214, %218 : vector<8x778xf32>
    %c0_209 = arith.constant 0 : index
    %c100_210 = arith.constant 100 : index
    %220 = vector.load %arg8[%c0_209, %c100_210] : memref<8x1000xf32, #tpu.memory_space<vmem>>, vector<8x778xf32>
    %c9_211 = arith.constant 9 : index
    %c0_212 = arith.constant 0 : index
    %c0_213 = arith.constant 0 : index
    %221 = vector.load %arg4[%c9_211, %c0_212, %c0_213] : memref<27x8x8xf32, #tpu.memory_space<vmem>>, vector<1x8x8xf32>
    %222 = vector.shape_cast %221 : vector<1x8x8xf32> to vector<8x8xf32>
    %cst_214 = arith.constant dense<0.000000e+00> : vector<8x778xf32>
    %223 = tpu.matmul %222, %220, %cst_214 {dimension_numbers = #tpu.dot_dimension_numbers<[1], [0], [0], [1], [0, 0, 1, 1], [], []>} : vector<8x8xf32>, vector<8x778xf32>, vector<8x778xf32> -> vector<8x778xf32>
    %224 = arith.addf %219, %223 : vector<8x778xf32>
    %c0_215 = arith.constant 0 : index
    %c101_216 = arith.constant 101 : index
    %225 = vector.load %arg8[%c0_215, %c101_216] : memref<8x1000xf32, #tpu.memory_space<vmem>>, vector<8x778xf32>
    %c10_217 = arith.constant 10 : index
    %c0_218 = arith.constant 0 : index
    %c0_219 = arith.constant 0 : index
    %226 = vector.load %arg4[%c10_217, %c0_218, %c0_219] : memref<27x8x8xf32, #tpu.memory_space<vmem>>, vector<1x8x8xf32>
    %227 = vector.shape_cast %226 : vector<1x8x8xf32> to vector<8x8xf32>
    %cst_220 = arith.constant dense<0.000000e+00> : vector<8x778xf32>
    %228 = tpu.matmul %227, %225, %cst_220 {dimension_numbers = #tpu.dot_dimension_numbers<[1], [0], [0], [1], [0, 0, 1, 1], [], []>} : vector<8x8xf32>, vector<8x778xf32>, vector<8x778xf32> -> vector<8x778xf32>
    %229 = arith.addf %224, %228 : vector<8x778xf32>
    %c0_221 = arith.constant 0 : index
    %c102_222 = arith.constant 102 : index
    %230 = vector.load %arg8[%c0_221, %c102_222] : memref<8x1000xf32, #tpu.memory_space<vmem>>, vector<8x778xf32>
    %c11_223 = arith.constant 11 : index
    %c0_224 = arith.constant 0 : index
    %c0_225 = arith.constant 0 : index
    %231 = vector.load %arg4[%c11_223, %c0_224, %c0_225] : memref<27x8x8xf32, #tpu.memory_space<vmem>>, vector<1x8x8xf32>
    %232 = vector.shape_cast %231 : vector<1x8x8xf32> to vector<8x8xf32>
    %cst_226 = arith.constant dense<0.000000e+00> : vector<8x778xf32>
    %233 = tpu.matmul %232, %230, %cst_226 {dimension_numbers = #tpu.dot_dimension_numbers<[1], [0], [0], [1], [0, 0, 1, 1], [], []>} : vector<8x8xf32>, vector<8x778xf32>, vector<8x778xf32> -> vector<8x778xf32>
    %234 = arith.addf %229, %233 : vector<8x778xf32>
    %c0_227 = arith.constant 0 : index
    %c110_228 = arith.constant 110 : index
    %235 = vector.load %arg8[%c0_227, %c110_228] : memref<8x1000xf32, #tpu.memory_space<vmem>>, vector<8x778xf32>
    %c12_229 = arith.constant 12 : index
    %c0_230 = arith.constant 0 : index
    %c0_231 = arith.constant 0 : index
    %236 = vector.load %arg4[%c12_229, %c0_230, %c0_231] : memref<27x8x8xf32, #tpu.memory_space<vmem>>, vector<1x8x8xf32>
    %237 = vector.shape_cast %236 : vector<1x8x8xf32> to vector<8x8xf32>
    %cst_232 = arith.constant dense<0.000000e+00> : vector<8x778xf32>
    %238 = tpu.matmul %237, %235, %cst_232 {dimension_numbers = #tpu.dot_dimension_numbers<[1], [0], [0], [1], [0, 0, 1, 1], [], []>} : vector<8x8xf32>, vector<8x778xf32>, vector<8x778xf32> -> vector<8x778xf32>
    %239 = arith.addf %234, %238 : vector<8x778xf32>
    %c0_233 = arith.constant 0 : index
    %c111_234 = arith.constant 111 : index
    %240 = vector.load %arg8[%c0_233, %c111_234] : memref<8x1000xf32, #tpu.memory_space<vmem>>, vector<8x778xf32>
    %c13_235 = arith.constant 13 : index
    %c0_236 = arith.constant 0 : index
    %c0_237 = arith.constant 0 : index
    %241 = vector.load %arg4[%c13_235, %c0_236, %c0_237] : memref<27x8x8xf32, #tpu.memory_space<vmem>>, vector<1x8x8xf32>
    %242 = vector.shape_cast %241 : vector<1x8x8xf32> to vector<8x8xf32>
    %cst_238 = arith.constant dense<0.000000e+00> : vector<8x778xf32>
    %243 = tpu.matmul %242, %240, %cst_238 {dimension_numbers = #tpu.dot_dimension_numbers<[1], [0], [0], [1], [0, 0, 1, 1], [], []>} : vector<8x8xf32>, vector<8x778xf32>, vector<8x778xf32> -> vector<8x778xf32>
    %244 = arith.addf %239, %243 : vector<8x778xf32>
    %c0_239 = arith.constant 0 : index
    %c112_240 = arith.constant 112 : index
    %245 = vector.load %arg8[%c0_239, %c112_240] : memref<8x1000xf32, #tpu.memory_space<vmem>>, vector<8x778xf32>
    %c14_241 = arith.constant 14 : index
    %c0_242 = arith.constant 0 : index
    %c0_243 = arith.constant 0 : index
    %246 = vector.load %arg4[%c14_241, %c0_242, %c0_243] : memref<27x8x8xf32, #tpu.memory_space<vmem>>, vector<1x8x8xf32>
    %247 = vector.shape_cast %246 : vector<1x8x8xf32> to vector<8x8xf32>
    %cst_244 = arith.constant dense<0.000000e+00> : vector<8x778xf32>
    %248 = tpu.matmul %247, %245, %cst_244 {dimension_numbers = #tpu.dot_dimension_numbers<[1], [0], [0], [1], [0, 0, 1, 1], [], []>} : vector<8x8xf32>, vector<8x778xf32>, vector<8x778xf32> -> vector<8x778xf32>
    %249 = arith.addf %244, %248 : vector<8x778xf32>
    %c0_245 = arith.constant 0 : index
    %c120_246 = arith.constant 120 : index
    %250 = vector.load %arg8[%c0_245, %c120_246] : memref<8x1000xf32, #tpu.memory_space<vmem>>, vector<8x778xf32>
    %c15_247 = arith.constant 15 : index
    %c0_248 = arith.constant 0 : index
    %c0_249 = arith.constant 0 : index
    %251 = vector.load %arg4[%c15_247, %c0_248, %c0_249] : memref<27x8x8xf32, #tpu.memory_space<vmem>>, vector<1x8x8xf32>
    %252 = vector.shape_cast %251 : vector<1x8x8xf32> to vector<8x8xf32>
    %cst_250 = arith.constant dense<0.000000e+00> : vector<8x778xf32>
    %253 = tpu.matmul %252, %250, %cst_250 {dimension_numbers = #tpu.dot_dimension_numbers<[1], [0], [0], [1], [0, 0, 1, 1], [], []>} : vector<8x8xf32>, vector<8x778xf32>, vector<8x778xf32> -> vector<8x778xf32>
    %254 = arith.addf %249, %253 : vector<8x778xf32>
    %c0_251 = arith.constant 0 : index
    %c121_252 = arith.constant 121 : index
    %255 = vector.load %arg8[%c0_251, %c121_252] : memref<8x1000xf32, #tpu.memory_space<vmem>>, vector<8x778xf32>
    %c16_253 = arith.constant 16 : index
    %c0_254 = arith.constant 0 : index
    %c0_255 = arith.constant 0 : index
    %256 = vector.load %arg4[%c16_253, %c0_254, %c0_255] : memref<27x8x8xf32, #tpu.memory_space<vmem>>, vector<1x8x8xf32>
    %257 = vector.shape_cast %256 : vector<1x8x8xf32> to vector<8x8xf32>
    %cst_256 = arith.constant dense<0.000000e+00> : vector<8x778xf32>
    %258 = tpu.matmul %257, %255, %cst_256 {dimension_numbers = #tpu.dot_dimension_numbers<[1], [0], [0], [1], [0, 0, 1, 1], [], []>} : vector<8x8xf32>, vector<8x778xf32>, vector<8x778xf32> -> vector<8x778xf32>
    %259 = arith.addf %254, %258 : vector<8x778xf32>
    %c0_257 = arith.constant 0 : index
    %c122_258 = arith.constant 122 : index
    %260 = vector.load %arg8[%c0_257, %c122_258] : memref<8x1000xf32, #tpu.memory_space<vmem>>, vector<8x778xf32>
    %c17_259 = arith.constant 17 : index
    %c0_260 = arith.constant 0 : index
    %c0_261 = arith.constant 0 : index
    %261 = vector.load %arg4[%c17_259, %c0_260, %c0_261] : memref<27x8x8xf32, #tpu.memory_space<vmem>>, vector<1x8x8xf32>
    %262 = vector.shape_cast %261 : vector<1x8x8xf32> to vector<8x8xf32>
    %cst_262 = arith.constant dense<0.000000e+00> : vector<8x778xf32>
    %263 = tpu.matmul %262, %260, %cst_262 {dimension_numbers = #tpu.dot_dimension_numbers<[1], [0], [0], [1], [0, 0, 1, 1], [], []>} : vector<8x8xf32>, vector<8x778xf32>, vector<8x778xf32> -> vector<8x778xf32>
    %264 = arith.addf %259, %263 : vector<8x778xf32>
    %c0_263 = arith.constant 0 : index
    %c200_264 = arith.constant 200 : index
    %265 = vector.load %arg8[%c0_263, %c200_264] : memref<8x1000xf32, #tpu.memory_space<vmem>>, vector<8x778xf32>
    %c18_265 = arith.constant 18 : index
    %c0_266 = arith.constant 0 : index
    %c0_267 = arith.constant 0 : index
    %266 = vector.load %arg4[%c18_265, %c0_266, %c0_267] : memref<27x8x8xf32, #tpu.memory_space<vmem>>, vector<1x8x8xf32>
    %267 = vector.shape_cast %266 : vector<1x8x8xf32> to vector<8x8xf32>
    %cst_268 = arith.constant dense<0.000000e+00> : vector<8x778xf32>
    %268 = tpu.matmul %267, %265, %cst_268 {dimension_numbers = #tpu.dot_dimension_numbers<[1], [0], [0], [1], [0, 0, 1, 1], [], []>} : vector<8x8xf32>, vector<8x778xf32>, vector<8x778xf32> -> vector<8x778xf32>
    %269 = arith.addf %264, %268 : vector<8x778xf32>
    %c0_269 = arith.constant 0 : index
    %c201_270 = arith.constant 201 : index
    %270 = vector.load %arg8[%c0_269, %c201_270] : memref<8x1000xf32, #tpu.memory_space<vmem>>, vector<8x778xf32>
    %c19_271 = arith.constant 19 : index
    %c0_272 = arith.constant 0 : index
    %c0_273 = arith.constant 0 : index
    %271 = vector.load %arg4[%c19_271, %c0_272, %c0_273] : memref<27x8x8xf32, #tpu.memory_space<vmem>>, vector<1x8x8xf32>
    %272 = vector.shape_cast %271 : vector<1x8x8xf32> to vector<8x8xf32>
    %cst_274 = arith.constant dense<0.000000e+00> : vector<8x778xf32>
    %273 = tpu.matmul %272, %270, %cst_274 {dimension_numbers = #tpu.dot_dimension_numbers<[1], [0], [0], [1], [0, 0, 1, 1], [], []>} : vector<8x8xf32>, vector<8x778xf32>, vector<8x778xf32> -> vector<8x778xf32>
    %274 = arith.addf %269, %273 : vector<8x778xf32>
    %c0_275 = arith.constant 0 : index
    %c202_276 = arith.constant 202 : index
    %275 = vector.load %arg8[%c0_275, %c202_276] : memref<8x1000xf32, #tpu.memory_space<vmem>>, vector<8x778xf32>
    %c20_277 = arith.constant 20 : index
    %c0_278 = arith.constant 0 : index
    %c0_279 = arith.constant 0 : index
    %276 = vector.load %arg4[%c20_277, %c0_278, %c0_279] : memref<27x8x8xf32, #tpu.memory_space<vmem>>, vector<1x8x8xf32>
    %277 = vector.shape_cast %276 : vector<1x8x8xf32> to vector<8x8xf32>
    %cst_280 = arith.constant dense<0.000000e+00> : vector<8x778xf32>
    %278 = tpu.matmul %277, %275, %cst_280 {dimension_numbers = #tpu.dot_dimension_numbers<[1], [0], [0], [1], [0, 0, 1, 1], [], []>} : vector<8x8xf32>, vector<8x778xf32>, vector<8x778xf32> -> vector<8x778xf32>
    %279 = arith.addf %274, %278 : vector<8x778xf32>
    %c0_281 = arith.constant 0 : index
    %c210_282 = arith.constant 210 : index
    %280 = vector.load %arg8[%c0_281, %c210_282] : memref<8x1000xf32, #tpu.memory_space<vmem>>, vector<8x778xf32>
    %c21_283 = arith.constant 21 : index
    %c0_284 = arith.constant 0 : index
    %c0_285 = arith.constant 0 : index
    %281 = vector.load %arg4[%c21_283, %c0_284, %c0_285] : memref<27x8x8xf32, #tpu.memory_space<vmem>>, vector<1x8x8xf32>
    %282 = vector.shape_cast %281 : vector<1x8x8xf32> to vector<8x8xf32>
    %cst_286 = arith.constant dense<0.000000e+00> : vector<8x778xf32>
    %283 = tpu.matmul %282, %280, %cst_286 {dimension_numbers = #tpu.dot_dimension_numbers<[1], [0], [0], [1], [0, 0, 1, 1], [], []>} : vector<8x8xf32>, vector<8x778xf32>, vector<8x778xf32> -> vector<8x778xf32>
    %284 = arith.addf %279, %283 : vector<8x778xf32>
    %c0_287 = arith.constant 0 : index
    %c211_288 = arith.constant 211 : index
    %285 = vector.load %arg8[%c0_287, %c211_288] : memref<8x1000xf32, #tpu.memory_space<vmem>>, vector<8x778xf32>
    %c22_289 = arith.constant 22 : index
    %c0_290 = arith.constant 0 : index
    %c0_291 = arith.constant 0 : index
    %286 = vector.load %arg4[%c22_289, %c0_290, %c0_291] : memref<27x8x8xf32, #tpu.memory_space<vmem>>, vector<1x8x8xf32>
    %287 = vector.shape_cast %286 : vector<1x8x8xf32> to vector<8x8xf32>
    %cst_292 = arith.constant dense<0.000000e+00> : vector<8x778xf32>
    %288 = tpu.matmul %287, %285, %cst_292 {dimension_numbers = #tpu.dot_dimension_numbers<[1], [0], [0], [1], [0, 0, 1, 1], [], []>} : vector<8x8xf32>, vector<8x778xf32>, vector<8x778xf32> -> vector<8x778xf32>
    %289 = arith.addf %284, %288 : vector<8x778xf32>
    %c0_293 = arith.constant 0 : index
    %c212_294 = arith.constant 212 : index
    %290 = vector.load %arg8[%c0_293, %c212_294] : memref<8x1000xf32, #tpu.memory_space<vmem>>, vector<8x778xf32>
    %c23_295 = arith.constant 23 : index
    %c0_296 = arith.constant 0 : index
    %c0_297 = arith.constant 0 : index
    %291 = vector.load %arg4[%c23_295, %c0_296, %c0_297] : memref<27x8x8xf32, #tpu.memory_space<vmem>>, vector<1x8x8xf32>
    %292 = vector.shape_cast %291 : vector<1x8x8xf32> to vector<8x8xf32>
    %cst_298 = arith.constant dense<0.000000e+00> : vector<8x778xf32>
    %293 = tpu.matmul %292, %290, %cst_298 {dimension_numbers = #tpu.dot_dimension_numbers<[1], [0], [0], [1], [0, 0, 1, 1], [], []>} : vector<8x8xf32>, vector<8x778xf32>, vector<8x778xf32> -> vector<8x778xf32>
    %294 = arith.addf %289, %293 : vector<8x778xf32>
    %c0_299 = arith.constant 0 : index
    %c220_300 = arith.constant 220 : index
    %295 = vector.load %arg8[%c0_299, %c220_300] : memref<8x1000xf32, #tpu.memory_space<vmem>>, vector<8x778xf32>
    %c24_301 = arith.constant 24 : index
    %c0_302 = arith.constant 0 : index
    %c0_303 = arith.constant 0 : index
    %296 = vector.load %arg4[%c24_301, %c0_302, %c0_303] : memref<27x8x8xf32, #tpu.memory_space<vmem>>, vector<1x8x8xf32>
    %297 = vector.shape_cast %296 : vector<1x8x8xf32> to vector<8x8xf32>
    %cst_304 = arith.constant dense<0.000000e+00> : vector<8x778xf32>
    %298 = tpu.matmul %297, %295, %cst_304 {dimension_numbers = #tpu.dot_dimension_numbers<[1], [0], [0], [1], [0, 0, 1, 1], [], []>} : vector<8x8xf32>, vector<8x778xf32>, vector<8x778xf32> -> vector<8x778xf32>
    %299 = arith.addf %294, %298 : vector<8x778xf32>
    %c0_305 = arith.constant 0 : index
    %c221_306 = arith.constant 221 : index
    %300 = vector.load %arg8[%c0_305, %c221_306] : memref<8x1000xf32, #tpu.memory_space<vmem>>, vector<8x778xf32>
    %c25_307 = arith.constant 25 : index
    %c0_308 = arith.constant 0 : index
    %c0_309 = arith.constant 0 : index
    %301 = vector.load %arg4[%c25_307, %c0_308, %c0_309] : memref<27x8x8xf32, #tpu.memory_space<vmem>>, vector<1x8x8xf32>
    %302 = vector.shape_cast %301 : vector<1x8x8xf32> to vector<8x8xf32>
    %cst_310 = arith.constant dense<0.000000e+00> : vector<8x778xf32>
    %303 = tpu.matmul %302, %300, %cst_310 {dimension_numbers = #tpu.dot_dimension_numbers<[1], [0], [0], [1], [0, 0, 1, 1], [], []>} : vector<8x8xf32>, vector<8x778xf32>, vector<8x778xf32> -> vector<8x778xf32>
    %304 = arith.addf %299, %303 : vector<8x778xf32>
    %c0_311 = arith.constant 0 : index
    %c222_312 = arith.constant 222 : index
    %305 = vector.load %arg8[%c0_311, %c222_312] : memref<8x1000xf32, #tpu.memory_space<vmem>>, vector<8x778xf32>
    %c26_313 = arith.constant 26 : index
    %c0_314 = arith.constant 0 : index
    %c0_315 = arith.constant 0 : index
    %306 = vector.load %arg4[%c26_313, %c0_314, %c0_315] : memref<27x8x8xf32, #tpu.memory_space<vmem>>, vector<1x8x8xf32>
    %307 = vector.shape_cast %306 : vector<1x8x8xf32> to vector<8x8xf32>
    %cst_316 = arith.constant dense<0.000000e+00> : vector<8x778xf32>
    %308 = tpu.matmul %307, %305, %cst_316 {dimension_numbers = #tpu.dot_dimension_numbers<[1], [0], [0], [1], [0, 0, 1, 1], [], []>} : vector<8x8xf32>, vector<8x778xf32>, vector<8x778xf32> -> vector<8x778xf32>
    %309 = arith.addf %304, %308 : vector<8x778xf32>
    %c0_317 = arith.constant 0 : index
    %c0_318 = arith.constant 0 : index
    %310 = vector.load %arg5[%c0_317, %c0_318] : memref<8x1xf32, #tpu.memory_space<vmem>>, vector<8x1xf32>
    %311 = vector.broadcast %310 : vector<8x1xf32> to vector<8x778xf32>
    %312 = arith.addf %309, %311 : vector<8x778xf32>
    %cst_319 = arith.constant 0.000000e+00 : f32
    %313 = vector.broadcast %cst_319 : f32 to vector<8x778xf32>
    %314 = arith.maximumf %312, %313 : vector<8x778xf32>
    %cst_320 = arith.constant 0.000000e+00 : f32
    %315 = vector.broadcast %cst_320 : f32 to vector<8x1000xf32>
    %c0_321 = arith.constant 0 : index
    %c0_322 = arith.constant 0 : index
    %c0_323 = arith.constant 0 : index
    %316 = vector.load %arg7[%c0_321, %c0_322, %c0_323] : memref<1x8x1000xf32, #tpu.memory_space<vmem>>, vector<1x8x1000xf32>
    %317 = vector.shape_cast %316 : vector<1x8x1000xf32> to vector<8x1000xf32>
    %318 = vector.shape_cast %315 : vector<8x1000xf32> to vector<1x8x1000xf32>
    tpu.vector_store %arg7[%c0_321, %c0_322, %c0_323], %318 {strides = array<i32>} : memref<1x8x1000xf32, #tpu.memory_space<vmem>>, vector<1x8x1000xf32>,
    %c0_324 = arith.constant 0 : index
    %c0_325 = arith.constant 0 : index
    %c111_326 = arith.constant 111 : index
    %319 = vector.load %arg7[%c0_324, %c0_325, %c111_326] : memref<1x8x1000xf32, #tpu.memory_space<vmem>>, vector<1x8x778xf32>
    %320 = vector.shape_cast %319 : vector<1x8x778xf32> to vector<8x778xf32>
    %321 = vector.shape_cast %314 : vector<8x778xf32> to vector<1x8x778xf32>
    tpu.vector_store %arg7[%c0_324, %c0_325, %c111_326], %321 {strides = array<i32>} : memref<1x8x1000xf32, #tpu.memory_space<vmem>>, vector<1x8x778xf32>,
    return
  }
  func.func @transform_0(%arg0: i32) -> (i32, i32, i32) {
    %c0_i32 = arith.constant 0 : i32
    %c0_i32_0 = arith.constant 0 : i32
    %c0_i32_1 = arith.constant 0 : i32
    return %arg0, %c0_i32, %c0_i32_0 : i32, i32, i32
  }
  func.func @transform_1(%arg0: i32) -> (i32, i32, i32) {
    %c0_i32 = arith.constant 0 : i32
    %c0_i32_0 = arith.constant 0 : i32
    %c0_i32_1 = arith.constant 0 : i32
    %c0_i32_2 = arith.constant 0 : i32
    return %c0_i32, %c0_i32_0, %c0_i32_1 : i32, i32, i32
  }
  func.func @transform_2(%arg0: i32) -> (i32, i32) {
    %c0_i32 = arith.constant 0 : i32
    %c0_i32_0 = arith.constant 0 : i32
    %c0_i32_1 = arith.constant 0 : i32
    return %c0_i32, %c0_i32_0 : i32, i32
  }
  func.func @transform_3(%arg0: i32) -> (i32, i32, i32) {
    %c0_i32 = arith.constant 0 : i32
    %c0_i32_0 = arith.constant 0 : i32
    %c0_i32_1 = arith.constant 0 : i32
    %c0_i32_2 = arith.constant 0 : i32
    return %c0_i32, %c0_i32_0, %c0_i32_1 : i32, i32, i32
  }
  func.func @transform_4(%arg0: i32) -> (i32, i32) {
    %c0_i32 = arith.constant 0 : i32
    %c0_i32_0 = arith.constant 0 : i32
    %c0_i32_1 = arith.constant 0 : i32
    return %c0_i32, %c0_i32_0 : i32, i32
  }
  func.func @transform_5(%arg0: i32) -> (i32, i32) {
    %c0_i32 = arith.constant 0 : i32
    %c0_i32_0 = arith.constant 0 : i32
    %c0_i32_1 = arith.constant 0 : i32
    return %c0_i32, %c0_i32_0 : i32, i32
  }
  func.func @transform_6(%arg0: i32) -> (i32, i32, i32) {
    %c0_i32 = arith.constant 0 : i32
    %c0_i32_0 = arith.constant 0 : i32
    %c0_i32_1 = arith.constant 0 : i32
    return %arg0, %c0_i32, %c0_i32_0 : i32, i32, i32
  }
}

</mosaic_0001>

<llo_original>
// kernel: tpu_custom_call.1
$region0: #{tpu_custom_call.1}
  #allocation0 [shape = 'u32[]', space=smem, size = 0x4, offset = 0x4, fixed_abs, tag = 'smem constant byte address 0x4 - core index']
  #allocation1 [shape = 'u32[72,128]{1,0:T(1,128)}', space=vmem, size = 0x9000, scoped, tag = 'internal scratch']
  #allocation2 [shape = 'f32[8,1000]{1,0:T(8,128)}', space=vmem, size = 0x8000, scoped, tag = 'scratch operand']
  %s0 = inlined_call_operand.vmem [shape: f32[2,8,1000], index: 0, kind: input, shape index: {}]
  %s1 = inlined_call_operand.vmem [shape: f32[27,8,8], index: 1, kind: input, shape index: {}]
  %s2 = inlined_call_operand.vmem [shape: f32[8,1], index: 2, kind: input, shape index: {}]
  %s3 = inlined_call_operand.vmem [shape: f32[27,8,8], index: 3, kind: input, shape index: {}]
  %s4 = inlined_call_operand.vmem [shape: f32[8,1], index: 4, kind: input, shape index: {}]
  %s5 = inlined_call_operand.vmem [shape: f32[1,1000], index: 5, kind: input, shape index: {}]
  %s6 = inlined_call_operand.hbm [shape: f32[2,8,1000], index: 6, kind: output, shape index: {}]
  %s7 = sld [smem:[#allocation0]]
  $region57: #{tpu_custom_call.1} parent=0
    _
  %s9 = ssub.s32 1, %s7
  %s10 = scalar_select 0, %s9, %s7
  $region1: #{tpu_custom_call.1} parent=0
    #allocation3 [shape = 'u8[65536]{0}', space=vmem, size = 0x10000, scoped, tag = 'output window, operand 0']
    #allocation4 [shape = 's32[2]{0}', space=sflag, size = 0x8, scoped, tag = 'scoped memory for tpu_custom_call.1']
    %11 = vsyncpa [#allocation4], 0
    %s12 = scalar_lea.sflag [#allocation4], 1
    %13 = vsyncpa %s12, 0
    loop: start=0, step=1, limit=4
    $region2: #{tpu_custom_call.1} parent=1 // loop_pre_header
      _
    $region3: #{tpu_custom_call.1} parent=1 // loop_header
      %s15 = sphi 0, %s19
      %p16 = scmp.ge.s32.totalorder %s15, 4
      %s25 = sphi 0, %s27
      %s28 = sphi 0, %s25
      %s29 = sphi 0, %s28
      %s45 = sphi 0, %s29
      %s49 = sphi 0, %s49
      %s51 = sphi 0, %s49
      %s52 = sphi 0, %s51
      %s66 = sphi 0, %s52
      %s70 = sphi 0, %s70
      %s72 = sphi 0, %s70
      %s73 = sphi 0, %s72
      %s87 = sphi 0, %s73
      %s91 = sphi 0, %s91
      %s93 = sphi 0, %s91
      %s94 = sphi 0, %s93
      %s108 = sphi 0, %s94
      %s112 = sphi 0, %s112
      %s114 = sphi 0, %s112
      %s115 = sphi 0, %s114
      %s129 = sphi 0, %s115
      %s133 = sphi 0, %s133
      %s135 = sphi 0, %s133
      %s136 = sphi 0, %s135
      %s150 = sphi 0, %s136
      %s156 = sphi 0, %s158
      %s159 = sphi 0, %s156
      %s160 = sphi 0, %s159
      %s176 = sphi 0, %s160
    $region4: #{tpu_custom_call.1} parent=1 // loop_header_branch
      %18 = sbr.rel (%p16) target = $region8
    $region5: #{tpu_custom_call.1} parent=1 // loop_body
      %s20 = ssub.s32 %s15, 1
      %s21 = ssub.s32 %s15, 2
      %s22 = sadd.s32 %s15, 1
      %s23 = ssub.s32 %s15, %s22
      %p24 = scmp.eq.s32.totalorder %s23, 0
      %s26 = sadd.s32 %s25, 1
      %s27 = scalar_select %p24, %s25, %s26
      %p30 = pneg %p24
      %p31 = scmp.eq.s32.totalorder %s15, 1
      %p32 = por %p30, %p31
      %p33 = scmp.ne.s32.totalorder %s25, %s28
      %p34 = scmp.eq.s32.totalorder %s15, 0
      %p35 = por %p33, %p34
      %p36 = scmp.ne.s32.totalorder %s25, %s28
      %p37 = scmp.eq.s32.totalorder %s20, 1
      %p38 = por %p36, %p37
      %p39 = scmp.ne.s32.totalorder %s28, %s29
      %p40 = scmp.eq.s32.totalorder %s20, 0
      %p41 = por %p39, %p40
      %p42 = scmp.ne.s32.totalorder %s28, %s29
      %p43 = scmp.eq.s32.totalorder %s21, 1
      %p44 = por %p42, %p43
      %p46 = scmp.ne.s32.totalorder %s29, %s45
      %p47 = scmp.eq.s32.totalorder %s21, 0
      %p48 = por %p46, %p47
      %s50 = sadd.s32 %s49, 1
      %p53 = scmp.eq.s32.totalorder %s15, 1
      %p54 = scmp.ne.s32.totalorder %s49, %s51
      %p55 = scmp.eq.s32.totalorder %s15, 0
      %p56 = por %p54, %p55
      %p57 = scmp.ne.s32.totalorder %s49, %s51
      %p58 = scmp.eq.s32.totalorder %s20, 1
      %p59 = por %p57, %p58
      %p60 = scmp.ne.s32.totalorder %s51, %s52
      %p61 = scmp.eq.s32.totalorder %s20, 0
      %p62 = por %p60, %p61
      %p63 = scmp.ne.s32.totalorder %s51, %s52
      %p64 = scmp.eq.s32.totalorder %s21, 1
      %p65 = por %p63, %p64
      %p67 = scmp.ne.s32.totalorder %s52, %s66
      %p68 = scmp.eq.s32.totalorder %s21, 0
      %p69 = por %p67, %p68
      %s71 = sadd.s32 %s70, 1
      %p74 = scmp.eq.s32.totalorder %s15, 1
      %p75 = scmp.ne.s32.totalorder %s70, %s72
      %p76 = scmp.eq.s32.totalorder %s15, 0
      %p77 = por %p75, %p76
      %p78 = scmp.ne.s32.totalorder %s70, %s72
      %p79 = scmp.eq.s32.totalorder %s20, 1
      %p80 = por %p78, %p79
      %p81 = scmp.ne.s32.totalorder %s72, %s73
      %p82 = scmp.eq.s32.totalorder %s20, 0
      %p83 = por %p81, %p82
      %p84 = scmp.ne.s32.totalorder %s72, %s73
      %p85 = scmp.eq.s32.totalorder %s21, 1
      %p86 = por %p84, %p85
      %p88 = scmp.ne.s32.totalorder %s73, %s87
      %p89 = scmp.eq.s32.totalorder %s21, 0
      %p90 = por %p88, %p89
      %s92 = sadd.s32 %s91, 1
      %p95 = scmp.eq.s32.totalorder %s15, 1
      %p96 = scmp.ne.s32.totalorder %s91, %s93
      %p97 = scmp.eq.s32.totalorder %s15, 0
      %p98 = por %p96, %p97
      %p99 = scmp.ne.s32.totalorder %s91, %s93
      %p100 = scmp.eq.s32.totalorder %s20, 1
      %p101 = por %p99, %p100
      %p102 = scmp.ne.s32.totalorder %s93, %s94
      %p103 = scmp.eq.s32.totalorder %s20, 0
      %p104 = por %p102, %p103
      %p105 = scmp.ne.s32.totalorder %s93, %s94
      %p106 = scmp.eq.s32.totalorder %s21, 1
      %p107 = por %p105, %p106
      %p109 = scmp.ne.s32.totalorder %s94, %s108
      %p110 = scmp.eq.s32.totalorder %s21, 0
      %p111 = por %p109, %p110
      %s113 = sadd.s32 %s112, 1
      %p116 = scmp.eq.s32.totalorder %s15, 1
      %p117 = scmp.ne.s32.totalorder %s112, %s114
      %p118 = scmp.eq.s32.totalorder %s15, 0
      %p119 = por %p117, %p118
      %p120 = scmp.ne.s32.totalorder %s112, %s114
      %p121 = scmp.eq.s32.totalorder %s20, 1
      %p122 = por %p120, %p121
      %p123 = scmp.ne.s32.totalorder %s114, %s115
      %p124 = scmp.eq.s32.totalorder %s20, 0
      %p125 = por %p123, %p124
      %p126 = scmp.ne.s32.totalorder %s114, %s115
      %p127 = scmp.eq.s32.totalorder %s21, 1
      %p128 = por %p126, %p127
      %p130 = scmp.ne.s32.totalorder %s115, %s129
      %p131 = scmp.eq.s32.totalorder %s21, 0
      %p132 = por %p130, %p131
      %s134 = sadd.s32 %s133, 1
      %p137 = scmp.eq.s32.totalorder %s15, 1
      %p138 = scmp.ne.s32.totalorder %s133, %s135
      %p139 = scmp.eq.s32.totalorder %s15, 0
      %p140 = por %p138, %p139
      %p141 = scmp.ne.s32.totalorder %s133, %s135
      %p142 = scmp.eq.s32.totalorder %s20, 1
      %p143 = por %p141, %p142
      %p144 = scmp.ne.s32.totalorder %s135, %s136
      %p145 = scmp.eq.s32.totalorder %s20, 0
      %p146 = por %p144, %p145
      %p147 = scmp.ne.s32.totalorder %s135, %s136
      %p148 = scmp.eq.s32.totalorder %s21, 1
      %p149 = por %p147, %p148
      %p151 = scmp.ne.s32.totalorder %s136, %s150
      %p152 = scmp.eq.s32.totalorder %s21, 0
      %p153 = por %p151, %p152
      %s154 = ssub.s32 %s15, %s22
      %p155 = scmp.eq.s32.totalorder %s154, 0
      %s157 = sadd.s32 %s156, 1
      %s158 = scalar_select %p155, %s156, %s157
      %p161 = pneg %p155
      %p162 = scmp.eq.s32.totalorder %s15, 1
      %p163 = por %p161, %p162
      %p164 = scmp.ne.s32.totalorder %s156, %s159
      %p165 = scmp.eq.s32.totalorder %s15, 0
      %p166 = por %p164, %p165
      %p167 = scmp.ne.s32.totalorder %s156, %s159
      %p168 = scmp.eq.s32.totalorder %s20, 1
      %p169 = por %p167, %p168
      %p170 = scmp.ne.s32.totalorder %s159, %s160
      %p171 = scmp.eq.s32.totalorder %s20, 0
      %p172 = por %p170, %p171
      %p173 = scmp.ne.s32.totalorder %s159, %s160
      %p174 = scmp.eq.s32.totalorder %s21, 1
      %p175 = por %p173, %p174
      %p177 = scmp.ne.s32.totalorder %s160, %s176
      %p178 = scmp.eq.s32.totalorder %s21, 0
      %p179 = por %p177, %p178
      %p180 = scmp.le.s32.totalorder 1, %s15
      %p181 = scmp.lt.s32.totalorder %s15, 3
      %p182 = pnand %p180, %p181
      %p183 = pneg %p182
      // Predicated region
      $region9: #{tpu_custom_call.1} parent=5 // pred_check
        _
      $region10: #{tpu_custom_call.1} parent=5 // pred_check_branch
        %185 = sbr.rel (%p182) target = $region12
      $region11: #{tpu_custom_call.1} parent=5 // pred_region
        %s186 = ssub.s32 %s15, 1
        // Predicated region
        $region13: #{tpu_custom_call.1} parent=11 // pred_check
          %p187 = pneg %p62
        $region14: #{tpu_custom_call.1} parent=11 // pred_check_branch
          %189 = sbr.rel (%p187) target = $region16
        $region15: #{tpu_custom_call.1} parent=11 // pred_region
          _
        $region16: #{tpu_custom_call.1} parent=11 // pred_fallthru
          _
        // Predicated region
        $region17: #{tpu_custom_call.1} parent=11 // pred_check
          %p190 = pneg %p83
        $region18: #{tpu_custom_call.1} parent=11 // pred_check_branch
          %192 = sbr.rel (%p190) target = $region20
        $region19: #{tpu_custom_call.1} parent=11 // pred_region
          _
        $region20: #{tpu_custom_call.1} parent=11 // pred_fallthru
          _
        // Predicated region
        $region21: #{tpu_custom_call.1} parent=11 // pred_check
          %p193 = pneg %p104
        $region22: #{tpu_custom_call.1} parent=11 // pred_check_branch
          %195 = sbr.rel (%p193) target = $region24
        $region23: #{tpu_custom_call.1} parent=11 // pred_region
          _
        $region24: #{tpu_custom_call.1} parent=11 // pred_fallthru
          _
        // Predicated region
        $region25: #{tpu_custom_call.1} parent=11 // pred_check
          %p196 = pneg %p125
        $region26: #{tpu_custom_call.1} parent=11 // pred_check_branch
          %198 = sbr.rel (%p196) target = $region28
        $region27: #{tpu_custom_call.1} parent=11 // pred_region
          _
        $region28: #{tpu_custom_call.1} parent=11 // pred_fallthru
          _
        // Predicated region
        $region29: #{tpu_custom_call.1} parent=11 // pred_check
          %p199 = pneg %p146
        $region30: #{tpu_custom_call.1} parent=11 // pred_check_branch
          %201 = sbr.rel (%p199) target = $region32
        $region31: #{tpu_custom_call.1} parent=11 // pred_region
          _
        $region32: #{tpu_custom_call.1} parent=11 // pred_fallthru
          _
      $region12: #{tpu_custom_call.1} parent=5 // pred_fallthru
        _
      %p202 = scmp.lt.s32.totalorder %s15, 2
      // Predicated region
      $region33: #{tpu_custom_call.1} parent=5 // pred_check
        %p203 = pneg %p202
      $region34: #{tpu_custom_call.1} parent=5 // pred_check_branch
        %205 = sbr.rel (%p203) target = $region36
      $region35: #{tpu_custom_call.1} parent=5 // pred_region
        // Predicated region
        $region37: #{tpu_custom_call.1} parent=35 // pred_check
          %p206 = pneg %p35
        $region38: #{tpu_custom_call.1} parent=35 // pred_check_branch
          %208 = sbr.rel (%p206) target = $region40
        $region39: #{tpu_custom_call.1} parent=35 // pred_region
          %p209 = scmp.lt.s32.totalorder %s15, 1
          %s210 = scalar_select %p209, %s15, 1
          %s211 = smul.addr %s210, 8
          %s212 = smul.addr %s211, 8
          %s213 = scalar_lea.vmem %s0, %s212
        $region40: #{tpu_custom_call.1} parent=35 // pred_fallthru
          _
      $region36: #{tpu_custom_call.1} parent=5 // pred_fallthru
        _
      %p214 = scmp.le.s32.totalorder 1, %s15
      %p215 = scmp.lt.s32.totalorder %s15, 3
      %p216 = pnand %p214, %p215
      %p217 = pneg %p216
      // Predicated region
      $region41: #{tpu_custom_call.1} parent=5 // pred_check
        _
      $region42: #{tpu_custom_call.1} parent=5 // pred_check_branch
        %219 = sbr.rel (%p216) target = $region44
      $region43: #{tpu_custom_call.1} parent=5 // pred_region
        %s220 = ssub.s32 %s15, 1
        %p221 = scmp.lt.s32.totalorder %s20, 1
        %s222 = scalar_select %p221, %s20, 1
        %s223 = smul.addr %s222, 8
        %s224 = smul.addr %s223, 8
        %s225 = scalar_lea.vmem %s0, %s224
        %p226 = pneg %p41
        %p227 = pneg %p38
        %p228 = pneg %p62
        %p229 = pneg %p59
        %p230 = pneg %p83
        %p231 = pneg %p80
        %p232 = pneg %p104
        %p233 = pneg %p101
        %p234 = pneg %p125
        %p235 = pneg %p122
        %p236 = pneg %p146
        %p237 = pneg %p143
        %p238 = pneg %p172
        %p239 = pneg %p169
        %s240 = sand.u32 %s159, 1
        %s241 = scalar_lea.sflag [#allocation4], %s240
        %s242 = sand.u32 %s159, 1
        %s243 = smul.addr %s242, 64
        %s244 = scalar_lea.vmem [#allocation3], %s243
        %p245 = scmp.lt.s32.totalorder %s20, 1
        %s246 = scalar_select %p245, %s20, 1
        %s247 = smul.addr %s246, 8
        %s248 = smul.addr %s247, 8
        %s249 = scalar_lea.vmem %s0, %s248
        %v250 = vld [vmem:[%s5] sm:$0x7f]
        %v251 = vld [vmem:[%s249] sm:$0xff]
        %v252 = vld [vmem:[%s249 + $0x8] sm:$0xff]
        %v253 = vld [vmem:[%s249 + $0x10] sm:$0xff]
        %v254 = vld [vmem:[%s249 + $0x18] sm:$0xff]
        %v255 = vld [vmem:[%s249 + $0x20] sm:$0xff]
        %v256 = vld [vmem:[%s249 + $0x28] sm:$0xff]
        %v257 = vld [vmem:[%s249 + $0x30] sm:$0xff]
        %v258 = vld [vmem:[%s1] sm:$0xff]
        %s259 = scalar_lea.vmem %s1, 8
        %v260 = vld [vmem:[%s259] sm:$0xff]
        %268 = vrot.lane.b32.xlu0 %v251, 127
        %v269 = vpop.permute.xlu0 %268
        %270 = vrot.lane.b32.xlu0 %v252, 127
        %v271 = vpop.permute.xlu0 %270
        %272 = vrot.lane.b32.xlu0 %v253, 127
        %v273 = vpop.permute.xlu0 %272
        %274 = vrot.lane.b32.xlu0 %v254, 127
        %v275 = vpop.permute.xlu0 %274
        %276 = vrot.lane.b32.xlu0 %v255, 127
        %v277 = vpop.permute.xlu0 %276
        %278 = vrot.lane.b32.xlu0 %v256, 127
        %v279 = vpop.permute.xlu0 %278
        %280 = vrot.lane.b32.xlu0 %v257, 127
        %v281 = vpop.permute.xlu0 %280
        %vm282 = vcmask 1039360
        %v283 = vsel %vm282, %v269, %v271
        %v284 = vsel %vm282, %v271, %v273
        %v285 = vsel %vm282, %v273, %v275
        %v286 = vsel %vm282, %v275, %v277
        %v287 = vsel %vm282, %v277, %v279
        %v288 = vsel %vm282, %v279, %v281
        %vm296 = vcmask 64512
        %v298 = vsel %vm296, %v260, 0
        %300 = vmatpush.msra.mxu0 0.0
        %301 = vmatpush.msra.mxu0 0.0
        %302 = vmatpush.msra.mxu0 0.0
        %303 = vmatpush.msra.mxu0 0.0
        %304 = vmatpush.msra.mxu0 0.0
        %305 = vmatpush.msra.mxu0 0.0
        %306 = vmatpush.msra.mxu0 0.0
        %307 = vmatpush.msra.mxu0 0.0
        %308 = vmatpush.msra.mxu0 0.0
        %309 = vmatpush.msra.mxu0 0.0
        %310 = vmatpush.msra.mxu0 0.0
        %311 = vmatpush.msra.mxu0 0.0
        %312 = vmatpush.msra.mxu0 0.0
        %313 = vmatpush.msra.mxu0 0.0
        %314 = vmatpush.msra.mxu0 0.0
        %315 = vmatpush.msra.mxu0 %v283
        %316 = vmatmul.f32.gmra.mxu0 %v298
        %v317 = vpop.f32.mrf.mxu0
        %v318 = vadd.f32 0.0, %v317
        %319 = vdwg.mxu0
        %320 = vmatpush.msra.mxu0 0.0
        %321 = vmatpush.msra.mxu0 0.0
        %322 = vmatpush.msra.mxu0 0.0
        %323 = vmatpush.msra.mxu0 0.0
        %324 = vmatpush.msra.mxu0 0.0
        %325 = vmatpush.msra.mxu0 0.0
        %326 = vmatpush.msra.mxu0 0.0
        %327 = vmatpush.msra.mxu0 0.0
        %328 = vmatpush.msra.mxu0 0.0
        %329 = vmatpush.msra.mxu0 0.0
        %330 = vmatpush.msra.mxu0 0.0
        %331 = vmatpush.msra.mxu0 0.0
        %332 = vmatpush.msra.mxu0 0.0
        %333 = vmatpush.msra.mxu0 0.0
        %334 = vmatpush.msra.mxu0 0.0
        %335 = vmatpush.msra.mxu0 %v284
        %336 = vmatmul.f32.gmra.mxu0 %v298
        %v337 = vpop.f32.mrf.mxu0
        %v338 = vadd.f32 0.0, %v337
        %339 = vdwg.mxu0
        %340 = vmatpush.msra.mxu0 0.0
        %341 = vmatpush.msra.mxu0 0.0
        %342 = vmatpush.msra.mxu0 0.0
        %343 = vmatpush.msra.mxu0 0.0
        %344 = vmatpush.msra.mxu0 0.0
        %345 = vmatpush.msra.mxu0 0.0
        %346 = vmatpush.msra.mxu0 0.0
        %347 = vmatpush.msra.mxu0 0.0
        %348 = vmatpush.msra.mxu0 0.0
        %349 = vmatpush.msra.mxu0 0.0
        %350 = vmatpush.msra.mxu0 0.0
        %351 = vmatpush.msra.mxu0 0.0
        %352 = vmatpush.msra.mxu0 0.0
        %353 = vmatpush.msra.mxu0 0.0
        %354 = vmatpush.msra.mxu0 0.0
        %355 = vmatpush.msra.mxu0 %v285
        %356 = vmatmul.f32.gmra.mxu0 %v298
        %v357 = vpop.f32.mrf.mxu0
        %v358 = vadd.f32 0.0, %v357
        %359 = vdwg.mxu0
        %360 = vmatpush.msra.mxu0 0.0
        %361 = vmatpush.msra.mxu0 0.0
        %362 = vmatpush.msra.mxu0 0.0
        %363 = vmatpush.msra.mxu0 0.0
        %364 = vmatpush.msra.mxu0 0.0
        %365 = vmatpush.msra.mxu0 0.0
        %366 = vmatpush.msra.mxu0 0.0
        %367 = vmatpush.msra.mxu0 0.0
        %368 = vmatpush.msra.mxu0 0.0
        %369 = vmatpush.msra.mxu0 0.0
        %370 = vmatpush.msra.mxu0 0.0
        %371 = vmatpush.msra.mxu0 0.0
        %372 = vmatpush.msra.mxu0 0.0
        %373 = vmatpush.msra.mxu0 0.0
        %374 = vmatpush.msra.mxu0 0.0
        %375 = vmatpush.msra.mxu0 %v286
        %376 = vmatmul.f32.gmra.mxu0 %v298
        %v377 = vpop.f32.mrf.mxu0
        %v378 = vadd.f32 0.0, %v377
        %379 = vdwg.mxu0
        %380 = vmatpush.msra.mxu0 0.0
        %381 = vmatpush.msra.mxu0 0.0
        %382 = vmatpush.msra.mxu0 0.0
        %383 = vmatpush.msra.mxu0 0.0
        %384 = vmatpush.msra.mxu0 0.0
        %385 = vmatpush.msra.mxu0 0.0
        %386 = vmatpush.msra.mxu0 0.0
        %387 = vmatpush.msra.mxu0 0.0
        %388 = vmatpush.msra.mxu0 0.0
        %389 = vmatpush.msra.mxu0 0.0
        %390 = vmatpush.msra.mxu0 0.0
        %391 = vmatpush.msra.mxu0 0.0
        %392 = vmatpush.msra.mxu0 0.0
        %393 = vmatpush.msra.mxu0 0.0
        %394 = vmatpush.msra.mxu0 0.0
        %395 = vmatpush.msra.mxu0 %v287
        %396 = vmatmul.f32.gmra.mxu0 %v298
        %v397 = vpop.f32.mrf.mxu0
        %v398 = vadd.f32 0.0, %v397
        %399 = vdwg.mxu0
        %400 = vmatpush.msra.mxu0 0.0
        %401 = vmatpush.msra.mxu0 0.0
        %402 = vmatpush.msra.mxu0 0.0
        %403 = vmatpush.msra.mxu0 0.0
        %404 = vmatpush.msra.mxu0 0.0
        %405 = vmatpush.msra.mxu0 0.0
        %406 = vmatpush.msra.mxu0 0.0
        %407 = vmatpush.msra.mxu0 0.0
        %408 = vmatpush.msra.mxu0 0.0
        %409 = vmatpush.msra.mxu0 0.0
        %410 = vmatpush.msra.mxu0 0.0
        %411 = vmatpush.msra.mxu0 0.0
        %412 = vmatpush.msra.mxu0 0.0
        %413 = vmatpush.msra.mxu0 0.0
        %414 = vmatpush.msra.mxu0 0.0
        %415 = vmatpush.msra.mxu0 %v288
        %416 = vmatmul.f32.gmra.mxu0 %v298
        %v417 = vpop.f32.mrf.mxu0
        %v418 = vadd.f32 0.0, %v417
        %419 = vdwg.mxu0
        %420 = vmatpush.msra.mxu0 0.0
        %421 = vmatpush.msra.mxu0 0.0
        %422 = vmatpush.msra.mxu0 0.0
        %423 = vmatpush.msra.mxu0 0.0
        %424 = vmatpush.msra.mxu0 0.0
        %425 = vmatpush.msra.mxu0 0.0
        %426 = vmatpush.msra.mxu0 0.0
        %427 = vmatpush.msra.mxu0 0.0
        %428 = vmatpush.msra.mxu0 0.0
        %429 = vmatpush.msra.mxu0 0.0
        %430 = vmatpush.msra.mxu0 0.0
        %431 = vmatpush.msra.mxu0 0.0
        %432 = vmatpush.msra.mxu0 0.0
        %433 = vmatpush.msra.mxu0 0.0
        %434 = vmatpush.msra.mxu0 0.0
        %435 = vmatpush.msra.mxu0 %v281
        %436 = vmatmul.f32.gmra.mxu0 %v298
        %v437 = vpop.f32.mrf.mxu0
        %v438 = vadd.f32 0.0, %v437
        %439 = vdwg.mxu0
        %v441 = vsel %vm296, %v258, 0
        %443 = vmatpush.msra.mxu0 0.0
        %444 = vmatpush.msra.mxu0 0.0
        %445 = vmatpush.msra.mxu0 0.0
        %446 = vmatpush.msra.mxu0 0.0
        %447 = vmatpush.msra.mxu0 0.0
        %448 = vmatpush.msra.mxu0 0.0
        %449 = vmatpush.msra.mxu0 0.0
        %450 = vmatpush.msra.mxu0 0.0
        %451 = vmatpush.msra.mxu0 0.0
        %452 = vmatpush.msra.mxu0 0.0
        %453 = vmatpush.msra.mxu0 0.0
        %454 = vmatpush.msra.mxu0 0.0
        %455 = vmatpush.msra.mxu0 0.0
        %456 = vmatpush.msra.mxu0 0.0
        %457 = vmatpush.msra.mxu0 0.0
        %458 = vmatpush.msra.mxu0 %v251
        %459 = vmatmul.f32.gmra.mxu0 %v441
        %v460 = vpop.f32.mrf.mxu0
        %v461 = vadd.f32 %v318, %v460
        %462 = vdwg.mxu0
        %463 = vmatpush.msra.mxu0 0.0
        %464 = vmatpush.msra.mxu0 0.0
        %465 = vmatpush.msra.mxu0 0.0
        %466 = vmatpush.msra.mxu0 0.0
        %467 = vmatpush.msra.mxu0 0.0
        %468 = vmatpush.msra.mxu0 0.0
        %469 = vmatpush.msra.mxu0 0.0
        %470 = vmatpush.msra.mxu0 0.0
        %471 = vmatpush.msra.mxu0 0.0
        %472 = vmatpush.msra.mxu0 0.0
        %473 = vmatpush.msra.mxu0 0.0
        %474 = vmatpush.msra.mxu0 0.0
        %475 = vmatpush.msra.mxu0 0.0
        %476 = vmatpush.msra.mxu0 0.0
        %477 = vmatpush.msra.mxu0 0.0
        %478 = vmatpush.msra.mxu0 %v252
        %479 = vmatmul.f32.gmra.mxu0 %v441
        %v480 = vpop.f32.mrf.mxu0
        %v481 = vadd.f32 %v338, %v480
        %482 = vdwg.mxu0
        %483 = vmatpush.msra.mxu0 0.0
        %484 = vmatpush.msra.mxu0 0.0
        %485 = vmatpush.msra.mxu0 0.0
        %486 = vmatpush.msra.mxu0 0.0
        %487 = vmatpush.msra.mxu0 0.0
        %488 = vmatpush.msra.mxu0 0.0
        %489 = vmatpush.msra.mxu0 0.0
        %490 = vmatpush.msra.mxu0 0.0
        %491 = vmatpush.msra.mxu0 0.0
        %492 = vmatpush.msra.mxu0 0.0
        %493 = vmatpush.msra.mxu0 0.0
        %494 = vmatpush.msra.mxu0 0.0
        %495 = vmatpush.msra.mxu0 0.0
        %496 = vmatpush.msra.mxu0 0.0
        %497 = vmatpush.msra.mxu0 0.0
        %498 = vmatpush.msra.mxu0 %v253
        %499 = vmatmul.f32.gmra.mxu0 %v441
        %v500 = vpop.f32.mrf.mxu0
        %v501 = vadd.f32 %v358, %v500
        %502 = vdwg.mxu0
        %503 = vmatpush.msra.mxu0 0.0
        %504 = vmatpush.msra.mxu0 0.0
        %505 = vmatpush.msra.mxu0 0.0
        %506 = vmatpush.msra.mxu0 0.0
        %507 = vmatpush.msra.mxu0 0.0
        %508 = vmatpush.msra.mxu0 0.0
        %509 = vmatpush.msra.mxu0 0.0
        %510 = vmatpush.msra.mxu0 0.0
        %511 = vmatpush.msra.mxu0 0.0
        %512 = vmatpush.msra.mxu0 0.0
        %513 = vmatpush.msra.mxu0 0.0
        %514 = vmatpush.msra.mxu0 0.0
        %515 = vmatpush.msra.mxu0 0.0
        %516 = vmatpush.msra.mxu0 0.0
        %517 = vmatpush.msra.mxu0 0.0
        %518 = vmatpush.msra.mxu0 %v254
        %519 = vmatmul.f32.gmra.mxu0 %v441
        %v520 = vpop.f32.mrf.mxu0
        %v521 = vadd.f32 %v378, %v520
        %522 = vdwg.mxu0
        %523 = vmatpush.msra.mxu0 0.0
        %524 = vmatpush.msra.mxu0 0.0
        %525 = vmatpush.msra.mxu0 0.0
        %526 = vmatpush.msra.mxu0 0.0
        %527 = vmatpush.msra.mxu0 0.0
        %528 = vmatpush.msra.mxu0 0.0
        %529 = vmatpush.msra.mxu0 0.0
        %530 = vmatpush.msra.mxu0 0.0
        %531 = vmatpush.msra.mxu0 0.0
        %532 = vmatpush.msra.mxu0 0.0
        %533 = vmatpush.msra.mxu0 0.0
        %534 = vmatpush.msra.mxu0 0.0
        %535 = vmatpush.msra.mxu0 0.0
        %536 = vmatpush.msra.mxu0 0.0
        %537 = vmatpush.msra.mxu0 0.0
        %538 = vmatpush.msra.mxu0 %v255
        %539 = vmatmul.f32.gmra.mxu0 %v441
        %v540 = vpop.f32.mrf.mxu0
        %v541 = vadd.f32 %v398, %v540
        %542 = vdwg.mxu0
        %543 = vmatpush.msra.mxu0 0.0
        %544 = vmatpush.msra.mxu0 0.0
        %545 = vmatpush.msra.mxu0 0.0
        %546 = vmatpush.msra.mxu0 0.0
        %547 = vmatpush.msra.mxu0 0.0
        %548 = vmatpush.msra.mxu0 0.0
        %549 = vmatpush.msra.mxu0 0.0
        %550 = vmatpush.msra.mxu0 0.0
        %551 = vmatpush.msra.mxu0 0.0
        %552 = vmatpush.msra.mxu0 0.0
        %553 = vmatpush.msra.mxu0 0.0
        %554 = vmatpush.msra.mxu0 0.0
        %555 = vmatpush.msra.mxu0 0.0
        %556 = vmatpush.msra.mxu0 0.0
        %557 = vmatpush.msra.mxu0 0.0
        %558 = vmatpush.msra.mxu0 %v256
        %559 = vmatmul.f32.gmra.mxu0 %v441
        %v560 = vpop.f32.mrf.mxu0
        %v561 = vadd.f32 %v418, %v560
        %562 = vdwg.mxu0
        %563 = vmatpush.msra.mxu0 0.0
        %564 = vmatpush.msra.mxu0 0.0
        %565 = vmatpush.msra.mxu0 0.0
        %566 = vmatpush.msra.mxu0 0.0
        %567 = vmatpush.msra.mxu0 0.0
        %568 = vmatpush.msra.mxu0 0.0
        %569 = vmatpush.msra.mxu0 0.0
        %570 = vmatpush.msra.mxu0 0.0
        %571 = vmatpush.msra.mxu0 0.0
        %572 = vmatpush.msra.mxu0 0.0
        %573 = vmatpush.msra.mxu0 0.0
        %574 = vmatpush.msra.mxu0 0.0
        %575 = vmatpush.msra.mxu0 0.0
        %576 = vmatpush.msra.mxu0 0.0
        %577 = vmatpush.msra.mxu0 0.0
        %578 = vmatpush.msra.mxu0 %v257
        %579 = vmatmul.f32.gmra.mxu0 %v441
        %v580 = vpop.f32.mrf.mxu0
        %v581 = vadd.f32 %v438, %v580
        %582 = vdwg.mxu0
        %s583 = scalar_lea.vmem %s1, 16
        %v584 = vld [vmem:[%s583] sm:$0xff]
        %585 = vrot.lane.b32.xlu0 %v251, 126
        %v586 = vpop.permute.xlu0 %585
        %587 = vrot.lane.b32.xlu0 %v252, 126
        %v588 = vpop.permute.xlu0 %587
        %589 = vrot.lane.b32.xlu0 %v253, 126
        %v590 = vpop.permute.xlu0 %589
        %591 = vrot.lane.b32.xlu0 %v254, 126
        %v592 = vpop.permute.xlu0 %591
        %593 = vrot.lane.b32.xlu0 %v255, 126
        %v594 = vpop.permute.xlu0 %593
        %595 = vrot.lane.b32.xlu0 %v256, 126
        %v596 = vpop.permute.xlu0 %595
        %597 = vrot.lane.b32.xlu0 %v257, 126
        %v598 = vpop.permute.xlu0 %597
        %vm599 = vcmask 1031168
        %v600 = vsel %vm599, %v586, %v588
        %v601 = vsel %vm599, %v588, %v590
        %v602 = vsel %vm599, %v590, %v592
        %v603 = vsel %vm599, %v592, %v594
        %v604 = vsel %vm599, %v594, %v596
        %v605 = vsel %vm599, %v596, %v598
        %v614 = vsel %vm296, %v584, 0
        %616 = vmatpush.msra.mxu0 0.0
        %617 = vmatpush.msra.mxu0 0.0
        %618 = vmatpush.msra.mxu0 0.0
        %619 = vmatpush.msra.mxu0 0.0
        %620 = vmatpush.msra.mxu0 0.0
        %621 = vmatpush.msra.mxu0 0.0
        %622 = vmatpush.msra.mxu0 0.0
        %623 = vmatpush.msra.mxu0 0.0
        %624 = vmatpush.msra.mxu0 0.0
        %625 = vmatpush.msra.mxu0 0.0
        %626 = vmatpush.msra.mxu0 0.0
        %627 = vmatpush.msra.mxu0 0.0
        %628 = vmatpush.msra.mxu0 0.0
        %629 = vmatpush.msra.mxu0 0.0
        %630 = vmatpush.msra.mxu0 0.0
        %631 = vmatpush.msra.mxu0 %v600
        %632 = vmatmul.f32.gmra.mxu0 %v614
        %v633 = vpop.f32.mrf.mxu0
        %v634 = vadd.f32 0.0, %v633
        %635 = vdwg.mxu0
        %636 = vmatpush.msra.mxu0 0.0
        %637 = vmatpush.msra.mxu0 0.0
        %638 = vmatpush.msra.mxu0 0.0
        %639 = vmatpush.msra.mxu0 0.0
        %640 = vmatpush.msra.mxu0 0.0
        %641 = vmatpush.msra.mxu0 0.0
        %642 = vmatpush.msra.mxu0 0.0
        %643 = vmatpush.msra.mxu0 0.0
        %644 = vmatpush.msra.mxu0 0.0
        %645 = vmatpush.msra.mxu0 0.0
        %646 = vmatpush.msra.mxu0 0.0
        %647 = vmatpush.msra.mxu0 0.0
        %648 = vmatpush.msra.mxu0 0.0
        %649 = vmatpush.msra.mxu0 0.0
        %650 = vmatpush.msra.mxu0 0.0
        %651 = vmatpush.msra.mxu0 %v601
        %652 = vmatmul.f32.gmra.mxu0 %v614
        %v653 = vpop.f32.mrf.mxu0
        %v654 = vadd.f32 0.0, %v653
        %655 = vdwg.mxu0
        %656 = vmatpush.msra.mxu0 0.0
        %657 = vmatpush.msra.mxu0 0.0
        %658 = vmatpush.msra.mxu0 0.0
        %659 = vmatpush.msra.mxu0 0.0
        %660 = vmatpush.msra.mxu0 0.0
        %661 = vmatpush.msra.mxu0 0.0
        %662 = vmatpush.msra.mxu0 0.0
        %663 = vmatpush.msra.mxu0 0.0
        %664 = vmatpush.msra.mxu0 0.0
        %665 = vmatpush.msra.mxu0 0.0
        %666 = vmatpush.msra.mxu0 0.0
        %667 = vmatpush.msra.mxu0 0.0
        %668 = vmatpush.msra.mxu0 0.0
        %669 = vmatpush.msra.mxu0 0.0
        %670 = vmatpush.msra.mxu0 0.0
        %671 = vmatpush.msra.mxu0 %v602
        %672 = vmatmul.f32.gmra.mxu0 %v614
        %v673 = vpop.f32.mrf.mxu0
        %v674 = vadd.f32 0.0, %v673
        %675 = vdwg.mxu0
        %676 = vmatpush.msra.mxu0 0.0
        %677 = vmatpush.msra.mxu0 0.0
        %678 = vmatpush.msra.mxu0 0.0
        %679 = vmatpush.msra.mxu0 0.0
        %680 = vmatpush.msra.mxu0 0.0
        %681 = vmatpush.msra.mxu0 0.0
        %682 = vmatpush.msra.mxu0 0.0
        %683 = vmatpush.msra.mxu0 0.0
        %684 = vmatpush.msra.mxu0 0.0
        %685 = vmatpush.msra.mxu0 0.0
        %686 = vmatpush.msra.mxu0 0.0
        %687 = vmatpush.msra.mxu0 0.0
        %688 = vmatpush.msra.mxu0 0.0
        %689 = vmatpush.msra.mxu0 0.0
        %690 = vmatpush.msra.mxu0 0.0
        %691 = vmatpush.msra.mxu0 %v603
        %692 = vmatmul.f32.gmra.mxu0 %v614
        %v693 = vpop.f32.mrf.mxu0
        %v694 = vadd.f32 0.0, %v693
        %695 = vdwg.mxu0
        %696 = vmatpush.msra.mxu0 0.0
        %697 = vmatpush.msra.mxu0 0.0
        %698 = vmatpush.msra.mxu0 0.0
        %699 = vmatpush.msra.mxu0 0.0
        %700 = vmatpush.msra.mxu0 0.0
        %701 = vmatpush.msra.mxu0 0.0
        %702 = vmatpush.msra.mxu0 0.0
        %703 = vmatpush.msra.mxu0 0.0
        %704 = vmatpush.msra.mxu0 0.0
        %705 = vmatpush.msra.mxu0 0.0
        %706 = vmatpush.msra.mxu0 0.0
        %707 = vmatpush.msra.mxu0 0.0
        %708 = vmatpush.msra.mxu0 0.0
        %709 = vmatpush.msra.mxu0 0.0
        %710 = vmatpush.msra.mxu0 0.0
        %711 = vmatpush.msra.mxu0 %v604
        %712 = vmatmul.f32.gmra.mxu0 %v614
        %v713 = vpop.f32.mrf.mxu0
        %v714 = vadd.f32 0.0, %v713
        %715 = vdwg.mxu0
        %716 = vmatpush.msra.mxu0 0.0
        %717 = vmatpush.msra.mxu0 0.0
        %718 = vmatpush.msra.mxu0 0.0
        %719 = vmatpush.msra.mxu0 0.0
        %720 = vmatpush.msra.mxu0 0.0
        %721 = vmatpush.msra.mxu0 0.0
        %722 = vmatpush.msra.mxu0 0.0
        %723 = vmatpush.msra.mxu0 0.0
        %724 = vmatpush.msra.mxu0 0.0
        %725 = vmatpush.msra.mxu0 0.0
        %726 = vmatpush.msra.mxu0 0.0
        %727 = vmatpush.msra.mxu0 0.0
        %728 = vmatpush.msra.mxu0 0.0
        %729 = vmatpush.msra.mxu0 0.0
        %730 = vmatpush.msra.mxu0 0.0
        %731 = vmatpush.msra.mxu0 %v605
        %732 = vmatmul.f32.gmra.mxu0 %v614
        %v733 = vpop.f32.mrf.mxu0
        %v734 = vadd.f32 0.0, %v733
        %735 = vdwg.mxu0
        %736 = vmatpush.msra.mxu0 0.0
        %737 = vmatpush.msra.mxu0 0.0
        %738 = vmatpush.msra.mxu0 0.0
        %739 = vmatpush.msra.mxu0 0.0
        %740 = vmatpush.msra.mxu0 0.0
        %741 = vmatpush.msra.mxu0 0.0
        %742 = vmatpush.msra.mxu0 0.0
        %743 = vmatpush.msra.mxu0 0.0
        %744 = vmatpush.msra.mxu0 0.0
        %745 = vmatpush.msra.mxu0 0.0
        %746 = vmatpush.msra.mxu0 0.0
        %747 = vmatpush.msra.mxu0 0.0
        %748 = vmatpush.msra.mxu0 0.0
        %749 = vmatpush.msra.mxu0 0.0
        %750 = vmatpush.msra.mxu0 0.0
        %751 = vmatpush.msra.mxu0 %v598
        %752 = vmatmul.f32.gmra.mxu0 %v614
        %v753 = vpop.f32.mrf.mxu0
        %v754 = vadd.f32 0.0, %v753
        %755 = vdwg.mxu0
        %v756 = vadd.f32 %v461, %v634
        %v757 = vadd.f32 %v481, %v654
        %v758 = vadd.f32 %v501, %v674
        %v759 = vadd.f32 %v521, %v694
        %v760 = vadd.f32 %v541, %v714
        %v761 = vadd.f32 %v561, %v734
        %v762 = vadd.f32 %v581, %v754
        %s763 = scalar_lea.vmem %s1, 24
        %v764 = vld [vmem:[%s763] sm:$0xff]
        %765 = vrot.lane.b32.xlu0 %v251, 118
        %v766 = vpop.permute.xlu0 %765
        %767 = vrot.lane.b32.xlu0 %v252, 118
        %v768 = vpop.permute.xlu0 %767
        %769 = vrot.lane.b32.xlu0 %v253, 118
        %v770 = vpop.permute.xlu0 %769
        %771 = vrot.lane.b32.xlu0 %v254, 118
        %v772 = vpop.permute.xlu0 %771
        %773 = vrot.lane.b32.xlu0 %v255, 118
        %v774 = vpop.permute.xlu0 %773
        %775 = vrot.lane.b32.xlu0 %v256, 118
        %v776 = vpop.permute.xlu0 %775
        %777 = vrot.lane.b32.xlu0 %v257, 118
        %v778 = vpop.permute.xlu0 %777
        %vm779 = vcmask 965632
        %v780 = vsel %vm779, %v766, %v768
        %v781 = vsel %vm779, %v768, %v770
        %v782 = vsel %vm779, %v770, %v772
        %v783 = vsel %vm779, %v772, %v774
        %v784 = vsel %vm779, %v774, %v776
        %v785 = vsel %vm779, %v776, %v778
        %v794 = vsel %vm296, %v764, 0
        %796 = vmatpush.msra.mxu0 0.0
        %797 = vmatpush.msra.mxu0 0.0
        %798 = vmatpush.msra.mxu0 0.0
        %799 = vmatpush.msra.mxu0 0.0
        %800 = vmatpush.msra.mxu0 0.0
        %801 = vmatpush.msra.mxu0 0.0
        %802 = vmatpush.msra.mxu0 0.0
        %803 = vmatpush.msra.mxu0 0.0
        %804 = vmatpush.msra.mxu0 0.0
        %805 = vmatpush.msra.mxu0 0.0
        %806 = vmatpush.msra.mxu0 0.0
        %807 = vmatpush.msra.mxu0 0.0
        %808 = vmatpush.msra.mxu0 0.0
        %809 = vmatpush.msra.mxu0 0.0
        %810 = vmatpush.msra.mxu0 0.0
        %811 = vmatpush.msra.mxu0 %v780
        %812 = vmatmul.f32.gmra.mxu0 %v794
        %v813 = vpop.f32.mrf.mxu0
        %v814 = vadd.f32 0.0, %v813
        %815 = vdwg.mxu0
        %816 = vmatpush.msra.mxu0 0.0
        %817 = vmatpush.msra.mxu0 0.0
        %818 = vmatpush.msra.mxu0 0.0
        %819 = vmatpush.msra.mxu0 0.0
        %820 = vmatpush.msra.mxu0 0.0
        %821 = vmatpush.msra.mxu0 0.0
        %822 = vmatpush.msra.mxu0 0.0
        %823 = vmatpush.msra.mxu0 0.0
        %824 = vmatpush.msra.mxu0 0.0
        %825 = vmatpush.msra.mxu0 0.0
        %826 = vmatpush.msra.mxu0 0.0
        %827 = vmatpush.msra.mxu0 0.0
        %828 = vmatpush.msra.mxu0 0.0
        %829 = vmatpush.msra.mxu0 0.0
        %830 = vmatpush.msra.mxu0 0.0
        %831 = vmatpush.msra.mxu0 %v781
        %832 = vmatmul.f32.gmra.mxu0 %v794
        %v833 = vpop.f32.mrf.mxu0
        %v834 = vadd.f32 0.0, %v833
        %835 = vdwg.mxu0
        %836 = vmatpush.msra.mxu0 0.0
        %837 = vmatpush.msra.mxu0 0.0
        %838 = vmatpush.msra.mxu0 0.0
        %839 = vmatpush.msra.mxu0 0.0
        %840 = vmatpush.msra.mxu0 0.0
        %841 = vmatpush.msra.mxu0 0.0
        %842 = vmatpush.msra.mxu0 0.0
        %843 = vmatpush.msra.mxu0 0.0
        %844 = vmatpush.msra.mxu0 0.0
        %845 = vmatpush.msra.mxu0 0.0
        %846 = vmatpush.msra.mxu0 0.0
        %847 = vmatpush.msra.mxu0 0.0
        %848 = vmatpush.msra.mxu0 0.0
        %849 = vmatpush.msra.mxu0 0.0
        %850 = vmatpush.msra.mxu0 0.0
        %851 = vmatpush.msra.mxu0 %v782
        %852 = vmatmul.f32.gmra.mxu0 %v794
        %v853 = vpop.f32.mrf.mxu0
        %v854 = vadd.f32 0.0, %v853
        %855 = vdwg.mxu0
        %856 = vmatpush.msra.mxu0 0.0
        %857 = vmatpush.msra.mxu0 0.0
        %858 = vmatpush.msra.mxu0 0.0
        %859 = vmatpush.msra.mxu0 0.0
        %860 = vmatpush.msra.mxu0 0.0
        %861 = vmatpush.msra.mxu0 0.0
        %862 = vmatpush.msra.mxu0 0.0
        %863 = vmatpush.msra.mxu0 0.0
        %864 = vmatpush.msra.mxu0 0.0
        %865 = vmatpush.msra.mxu0 0.0
        %866 = vmatpush.msra.mxu0 0.0
        %867 = vmatpush.msra.mxu0 0.0
        %868 = vmatpush.msra.mxu0 0.0
        %869 = vmatpush.msra.mxu0 0.0
        %870 = vmatpush.msra.mxu0 0.0
        %871 = vmatpush.msra.mxu0 %v783
        %872 = vmatmul.f32.gmra.mxu0 %v794
        %v873 = vpop.f32.mrf.mxu0
        %v874 = vadd.f32 0.0, %v873
        %875 = vdwg.mxu0
        %876 = vmatpush.msra.mxu0 0.0
        %877 = vmatpush.msra.mxu0 0.0
        %878 = vmatpush.msra.mxu0 0.0
        %879 = vmatpush.msra.mxu0 0.0
        %880 = vmatpush.msra.mxu0 0.0
        %881 = vmatpush.msra.mxu0 0.0
        %882 = vmatpush.msra.mxu0 0.0
        %883 = vmatpush.msra.mxu0 0.0
        %884 = vmatpush.msra.mxu0 0.0
        %885 = vmatpush.msra.mxu0 0.0
        %886 = vmatpush.msra.mxu0 0.0
        %887 = vmatpush.msra.mxu0 0.0
        %888 = vmatpush.msra.mxu0 0.0
        %889 = vmatpush.msra.mxu0 0.0
        %890 = vmatpush.msra.mxu0 0.0
        %891 = vmatpush.msra.mxu0 %v784
        %892 = vmatmul.f32.gmra.mxu0 %v794
        %v893 = vpop.f32.mrf.mxu0
        %v894 = vadd.f32 0.0, %v893
        %895 = vdwg.mxu0
        %896 = vmatpush.msra.mxu0 0.0
        %897 = vmatpush.msra.mxu0 0.0
        %898 = vmatpush.msra.mxu0 0.0
        %899 = vmatpush.msra.mxu0 0.0
        %900 = vmatpush.msra.mxu0 0.0
        %901 = vmatpush.msra.mxu0 0.0
        %902 = vmatpush.msra.mxu0 0.0
        %903 = vmatpush.msra.mxu0 0.0
        %904 = vmatpush.msra.mxu0 0.0
        %905 = vmatpush.msra.mxu0 0.0
        %906 = vmatpush.msra.mxu0 0.0
        %907 = vmatpush.msra.mxu0 0.0
        %908 = vmatpush.msra.mxu0 0.0
        %909 = vmatpush.msra.mxu0 0.0
        %910 = vmatpush.msra.mxu0 0.0
        %911 = vmatpush.msra.mxu0 %v785
        %912 = vmatmul.f32.gmra.mxu0 %v794
        %v913 = vpop.f32.mrf.mxu0
        %v914 = vadd.f32 0.0, %v913
        %915 = vdwg.mxu0
        %916 = vmatpush.msra.mxu0 0.0
        %917 = vmatpush.msra.mxu0 0.0
        %918 = vmatpush.msra.mxu0 0.0
        %919 = vmatpush.msra.mxu0 0.0
        %920 = vmatpush.msra.mxu0 0.0
        %921 = vmatpush.msra.mxu0 0.0
        %922 = vmatpush.msra.mxu0 0.0
        %923 = vmatpush.msra.mxu0 0.0
        %924 = vmatpush.msra.mxu0 0.0
        %925 = vmatpush.msra.mxu0 0.0
        %926 = vmatpush.msra.mxu0 0.0
        %927 = vmatpush.msra.mxu0 0.0
        %928 = vmatpush.msra.mxu0 0.0
        %929 = vmatpush.msra.mxu0 0.0
        %930 = vmatpush.msra.mxu0 0.0
        %931 = vmatpush.msra.mxu0 %v778
        %932 = vmatmul.f32.gmra.mxu0 %v794
        %v933 = vpop.f32.mrf.mxu0
        %v934 = vadd.f32 0.0, %v933
        %935 = vdwg.mxu0
        %v936 = vadd.f32 %v756, %v814
        %v937 = vadd.f32 %v757, %v834
        %v938 = vadd.f32 %v758, %v854
        %v939 = vadd.f32 %v759, %v874
        %v940 = vadd.f32 %v760, %v894
        %v941 = vadd.f32 %v761, %v914
        %v942 = vadd.f32 %v762, %v934
        %s943 = scalar_lea.vmem %s1, 32
        %v944 = vld [vmem:[%s943] sm:$0xff]
        %945 = vrot.lane.b32.xlu0 %v251, 117
        %v946 = vpop.permute.xlu0 %945
        %947 = vrot.lane.b32.xlu0 %v252, 117
        %v948 = vpop.permute.xlu0 %947
        %949 = vrot.lane.b32.xlu0 %v253, 117
        %v950 = vpop.permute.xlu0 %949
        %951 = vrot.lane.b32.xlu0 %v254, 117
        %v952 = vpop.permute.xlu0 %951
        %953 = vrot.lane.b32.xlu0 %v255, 117
        %v954 = vpop.permute.xlu0 %953
        %955 = vrot.lane.b32.xlu0 %v256, 117
        %v956 = vpop.permute.xlu0 %955
        %957 = vrot.lane.b32.xlu0 %v257, 117
        %v958 = vpop.permute.xlu0 %957
        %vm959 = vcmask 957440
        %v960 = vsel %vm959, %v946, %v948
        %v961 = vsel %vm959, %v948, %v950
        %v962 = vsel %vm959, %v950, %v952
        %v963 = vsel %vm959, %v952, %v954
        %v964 = vsel %vm959, %v954, %v956
        %v965 = vsel %vm959, %v956, %v958
        %v974 = vsel %vm296, %v944, 0
        %976 = vmatpush.msra.mxu0 0.0
        %977 = vmatpush.msra.mxu0 0.0
        %978 = vmatpush.msra.mxu0 0.0
        %979 = vmatpush.msra.mxu0 0.0
        %980 = vmatpush.msra.mxu0 0.0
        %981 = vmatpush.msra.mxu0 0.0
        %982 = vmatpush.msra.mxu0 0.0
        %983 = vmatpush.msra.mxu0 0.0
        %984 = vmatpush.msra.mxu0 0.0
        %985 = vmatpush.msra.mxu0 0.0
        %986 = vmatpush.msra.mxu0 0.0
        %987 = vmatpush.msra.mxu0 0.0
        %988 = vmatpush.msra.mxu0 0.0
        %989 = vmatpush.msra.mxu0 0.0
        %990 = vmatpush.msra.mxu0 0.0
        %991 = vmatpush.msra.mxu0 %v960
        %992 = vmatmul.f32.gmra.mxu0 %v974
        %v993 = vpop.f32.mrf.mxu0
        %v994 = vadd.f32 0.0, %v993
        %995 = vdwg.mxu0
        %996 = vmatpush.msra.mxu0 0.0
        %997 = vmatpush.msra.mxu0 0.0
        %998 = vmatpush.msra.mxu0 0.0
        %999 = vmatpush.msra.mxu0 0.0
        %1000 = vmatpush.msra.mxu0 0.0
        %1001 = vmatpush.msra.mxu0 0.0
        %1002 = vmatpush.msra.mxu0 0.0
        %1003 = vmatpush.msra.mxu0 0.0
        %1004 = vmatpush.msra.mxu0 0.0
        %1005 = vmatpush.msra.mxu0 0.0
        %1006 = vmatpush.msra.mxu0 0.0
        %1007 = vmatpush.msra.mxu0 0.0
        %1008 = vmatpush.msra.mxu0 0.0
        %1009 = vmatpush.msra.mxu0 0.0
        %1010 = vmatpush.msra.mxu0 0.0
        %1011 = vmatpush.msra.mxu0 %v961
        %1012 = vmatmul.f32.gmra.mxu0 %v974
        %v1013 = vpop.f32.mrf.mxu0
        %v1014 = vadd.f32 0.0, %v1013
        %1015 = vdwg.mxu0
        %1016 = vmatpush.msra.mxu0 0.0
        %1017 = vmatpush.msra.mxu0 0.0
        %1018 = vmatpush.msra.mxu0 0.0
        %1019 = vmatpush.msra.mxu0 0.0
        %1020 = vmatpush.msra.mxu0 0.0
        %1021 = vmatpush.msra.mxu0 0.0
        %1022 = vmatpush.msra.mxu0 0.0
        %1023 = vmatpush.msra.mxu0 0.0
        %1024 = vmatpush.msra.mxu0 0.0
        %1025 = vmatpush.msra.mxu0 0.0
        %1026 = vmatpush.msra.mxu0 0.0
        %1027 = vmatpush.msra.mxu0 0.0
        %1028 = vmatpush.msra.mxu0 0.0
        %1029 = vmatpush.msra.mxu0 0.0
        %1030 = vmatpush.msra.mxu0 0.0
        %1031 = vmatpush.msra.mxu0 %v962
        %1032 = vmatmul.f32.gmra.mxu0 %v974
        %v1033 = vpop.f32.mrf.mxu0
        %v1034 = vadd.f32 0.0, %v1033
        %1035 = vdwg.mxu0
        %1036 = vmatpush.msra.mxu0 0.0
        %1037 = vmatpush.msra.mxu0 0.0
        %1038 = vmatpush.msra.mxu0 0.0
        %1039 = vmatpush.msra.mxu0 0.0
        %1040 = vmatpush.msra.mxu0 0.0
        %1041 = vmatpush.msra.mxu0 0.0
        %1042 = vmatpush.msra.mxu0 0.0
        %1043 = vmatpush.msra.mxu0 0.0
        %1044 = vmatpush.msra.mxu0 0.0
        %1045 = vmatpush.msra.mxu0 0.0
        %1046 = vmatpush.msra.mxu0 0.0
        %1047 = vmatpush.msra.mxu0 0.0
        %1048 = vmatpush.msra.mxu0 0.0
        %1049 = vmatpush.msra.mxu0 0.0
        %1050 = vmatpush.msra.mxu0 0.0
        %1051 = vmatpush.msra.mxu0 %v963
        %1052 = vmatmul.f32.gmra.mxu0 %v974
        %v1053 = vpop.f32.mrf.mxu0
        %v1054 = vadd.f32 0.0, %v1053
        %1055 = vdwg.mxu0
        %1056 = vmatpush.msra.mxu0 0.0
        %1057 = vmatpush.msra.mxu0 0.0
        %1058 = vmatpush.msra.mxu0 0.0
        %1059 = vmatpush.msra.mxu0 0.0
        %1060 = vmatpush.msra.mxu0 0.0
        %1061 = vmatpush.msra.mxu0 0.0
        %1062 = vmatpush.msra.mxu0 0.0
        %1063 = vmatpush.msra.mxu0 0.0
        %1064 = vmatpush.msra.mxu0 0.0
        %1065 = vmatpush.msra.mxu0 0.0
        %1066 = vmatpush.msra.mxu0 0.0
        %1067 = vmatpush.msra.mxu0 0.0
        %1068 = vmatpush.msra.mxu0 0.0
        %1069 = vmatpush.msra.mxu0 0.0
        %1070 = vmatpush.msra.mxu0 0.0
        %1071 = vmatpush.msra.mxu0 %v964
        %1072 = vmatmul.f32.gmra.mxu0 %v974
        %v1073 = vpop.f32.mrf.mxu0
        %v1074 = vadd.f32 0.0, %v1073
        %1075 = vdwg.mxu0
        %1076 = vmatpush.msra.mxu0 0.0
        %1077 = vmatpush.msra.mxu0 0.0
        %1078 = vmatpush.msra.mxu0 0.0
        %1079 = vmatpush.msra.mxu0 0.0
        %1080 = vmatpush.msra.mxu0 0.0
        %1081 = vmatpush.msra.mxu0 0.0
        %1082 = vmatpush.msra.mxu0 0.0
        %1083 = vmatpush.msra.mxu0 0.0
        %1084 = vmatpush.msra.mxu0 0.0
        %1085 = vmatpush.msra.mxu0 0.0
        %1086 = vmatpush.msra.mxu0 0.0
        %1087 = vmatpush.msra.mxu0 0.0
        %1088 = vmatpush.msra.mxu0 0.0
        %1089 = vmatpush.msra.mxu0 0.0
        %1090 = vmatpush.msra.mxu0 0.0
        %1091 = vmatpush.msra.mxu0 %v965
        %1092 = vmatmul.f32.gmra.mxu0 %v974
        %v1093 = vpop.f32.mrf.mxu0
        %v1094 = vadd.f32 0.0, %v1093
        %1095 = vdwg.mxu0
        %1096 = vmatpush.msra.mxu0 0.0
        %1097 = vmatpush.msra.mxu0 0.0
        %1098 = vmatpush.msra.mxu0 0.0
        %1099 = vmatpush.msra.mxu0 0.0
        %1100 = vmatpush.msra.mxu0 0.0
        %1101 = vmatpush.msra.mxu0 0.0
        %1102 = vmatpush.msra.mxu0 0.0
        %1103 = vmatpush.msra.mxu0 0.0
        %1104 = vmatpush.msra.mxu0 0.0
        %1105 = vmatpush.msra.mxu0 0.0
        %1106 = vmatpush.msra.mxu0 0.0
        %1107 = vmatpush.msra.mxu0 0.0
        %1108 = vmatpush.msra.mxu0 0.0
        %1109 = vmatpush.msra.mxu0 0.0
        %1110 = vmatpush.msra.mxu0 0.0
        %1111 = vmatpush.msra.mxu0 %v958
        %1112 = vmatmul.f32.gmra.mxu0 %v974
        %v1113 = vpop.f32.mrf.mxu0
        %v1114 = vadd.f32 0.0, %v1113
        %1115 = vdwg.mxu0
        %v1116 = vadd.f32 %v936, %v994
        %v1117 = vadd.f32 %v937, %v1014
        %v1118 = vadd.f32 %v938, %v1034
        %v1119 = vadd.f32 %v939, %v1054
        %v1120 = vadd.f32 %v940, %v1074
        %v1121 = vadd.f32 %v941, %v1094
        %v1122 = vadd.f32 %v942, %v1114
        %s1123 = scalar_lea.vmem %s1, 40
        %v1124 = vld [vmem:[%s1123] sm:$0xff]
        %1125 = vrot.lane.b32.xlu0 %v251, 116
        %v1126 = vpop.permute.xlu0 %1125
        %1127 = vrot.lane.b32.xlu0 %v252, 116
        %v1128 = vpop.permute.xlu0 %1127
        %1129 = vrot.lane.b32.xlu0 %v253, 116
        %v1130 = vpop.permute.xlu0 %1129
        %1131 = vrot.lane.b32.xlu0 %v254, 116
        %v1132 = vpop.permute.xlu0 %1131
        %1133 = vrot.lane.b32.xlu0 %v255, 116
        %v1134 = vpop.permute.xlu0 %1133
        %1135 = vrot.lane.b32.xlu0 %v256, 116
        %v1136 = vpop.permute.xlu0 %1135
        %1137 = vrot.lane.b32.xlu0 %v257, 116
        %v1138 = vpop.permute.xlu0 %1137
        %vm1139 = vcmask 949248
        %v1140 = vsel %vm1139, %v1126, %v1128
        %v1141 = vsel %vm1139, %v1128, %v1130
        %v1142 = vsel %vm1139, %v1130, %v1132
        %v1143 = vsel %vm1139, %v1132, %v1134
        %v1144 = vsel %vm1139, %v1134, %v1136
        %v1145 = vsel %vm1139, %v1136, %v1138
        %v1154 = vsel %vm296, %v1124, 0
        %1156 = vmatpush.msra.mxu0 0.0
        %1157 = vmatpush.msra.mxu0 0.0
        %1158 = vmatpush.msra.mxu0 0.0
        %1159 = vmatpush.msra.mxu0 0.0
        %1160 = vmatpush.msra.mxu0 0.0
        %1161 = vmatpush.msra.mxu0 0.0
        %1162 = vmatpush.msra.mxu0 0.0
        %1163 = vmatpush.msra.mxu0 0.0
        %1164 = vmatpush.msra.mxu0 0.0
        %1165 = vmatpush.msra.mxu0 0.0
        %1166 = vmatpush.msra.mxu0 0.0
        %1167 = vmatpush.msra.mxu0 0.0
        %1168 = vmatpush.msra.mxu0 0.0
        %1169 = vmatpush.msra.mxu0 0.0
        %1170 = vmatpush.msra.mxu0 0.0
        %1171 = vmatpush.msra.mxu0 %v1140
        %1172 = vmatmul.f32.gmra.mxu0 %v1154
        %v1173 = vpop.f32.mrf.mxu0
        %v1174 = vadd.f32 0.0, %v1173
        %1175 = vdwg.mxu0
        %1176 = vmatpush.msra.mxu0 0.0
        %1177 = vmatpush.msra.mxu0 0.0
        %1178 = vmatpush.msra.mxu0 0.0
        %1179 = vmatpush.msra.mxu0 0.0
        %1180 = vmatpush.msra.mxu0 0.0
        %1181 = vmatpush.msra.mxu0 0.0
        %1182 = vmatpush.msra.mxu0 0.0
        %1183 = vmatpush.msra.mxu0 0.0
        %1184 = vmatpush.msra.mxu0 0.0
        %1185 = vmatpush.msra.mxu0 0.0
        %1186 = vmatpush.msra.mxu0 0.0
        %1187 = vmatpush.msra.mxu0 0.0
        %1188 = vmatpush.msra.mxu0 0.0
        %1189 = vmatpush.msra.mxu0 0.0
        %1190 = vmatpush.msra.mxu0 0.0
        %1191 = vmatpush.msra.mxu0 %v1141
        %1192 = vmatmul.f32.gmra.mxu0 %v1154
        %v1193 = vpop.f32.mrf.mxu0
        %v1194 = vadd.f32 0.0, %v1193
        %1195 = vdwg.mxu0
        %1196 = vmatpush.msra.mxu0 0.0
        %1197 = vmatpush.msra.mxu0 0.0
        %1198 = vmatpush.msra.mxu0 0.0
        %1199 = vmatpush.msra.mxu0 0.0
        %1200 = vmatpush.msra.mxu0 0.0
        %1201 = vmatpush.msra.mxu0 0.0
        %1202 = vmatpush.msra.mxu0 0.0
        %1203 = vmatpush.msra.mxu0 0.0
        %1204 = vmatpush.msra.mxu0 0.0
        %1205 = vmatpush.msra.mxu0 0.0
        %1206 = vmatpush.msra.mxu0 0.0
        %1207 = vmatpush.msra.mxu0 0.0
        %1208 = vmatpush.msra.mxu0 0.0
        %1209 = vmatpush.msra.mxu0 0.0
        %1210 = vmatpush.msra.mxu0 0.0
        %1211 = vmatpush.msra.mxu0 %v1142
        %1212 = vmatmul.f32.gmra.mxu0 %v1154
        %v1213 = vpop.f32.mrf.mxu0
        %v1214 = vadd.f32 0.0, %v1213
        %1215 = vdwg.mxu0
        %1216 = vmatpush.msra.mxu0 0.0
        %1217 = vmatpush.msra.mxu0 0.0
        %1218 = vmatpush.msra.mxu0 0.0
        %1219 = vmatpush.msra.mxu0 0.0
        %1220 = vmatpush.msra.mxu0 0.0
        %1221 = vmatpush.msra.mxu0 0.0
        %1222 = vmatpush.msra.mxu0 0.0
        %1223 = vmatpush.msra.mxu0 0.0
        %1224 = vmatpush.msra.mxu0 0.0
        %1225 = vmatpush.msra.mxu0 0.0
        %1226 = vmatpush.msra.mxu0 0.0
        %1227 = vmatpush.msra.mxu0 0.0
        %1228 = vmatpush.msra.mxu0 0.0
        %1229 = vmatpush.msra.mxu0 0.0
        %1230 = vmatpush.msra.mxu0 0.0
        %1231 = vmatpush.msra.mxu0 %v1143
        %1232 = vmatmul.f32.gmra.mxu0 %v1154
        %v1233 = vpop.f32.mrf.mxu0
        %v1234 = vadd.f32 0.0, %v1233
        %1235 = vdwg.mxu0
        %1236 = vmatpush.msra.mxu0 0.0
        %1237 = vmatpush.msra.mxu0 0.0
        %1238 = vmatpush.msra.mxu0 0.0
        %1239 = vmatpush.msra.mxu0 0.0
        %1240 = vmatpush.msra.mxu0 0.0
        %1241 = vmatpush.msra.mxu0 0.0
        %1242 = vmatpush.msra.mxu0 0.0
        %1243 = vmatpush.msra.mxu0 0.0
        %1244 = vmatpush.msra.mxu0 0.0
        %1245 = vmatpush.msra.mxu0 0.0
        %1246 = vmatpush.msra.mxu0 0.0
        %1247 = vmatpush.msra.mxu0 0.0
        %1248 = vmatpush.msra.mxu0 0.0
        %1249 = vmatpush.msra.mxu0 0.0
        %1250 = vmatpush.msra.mxu0 0.0
        %1251 = vmatpush.msra.mxu0 %v1144
        %1252 = vmatmul.f32.gmra.mxu0 %v1154
        %v1253 = vpop.f32.mrf.mxu0
        %v1254 = vadd.f32 0.0, %v1253
        %1255 = vdwg.mxu0
        %1256 = vmatpush.msra.mxu0 0.0
        %1257 = vmatpush.msra.mxu0 0.0
        %1258 = vmatpush.msra.mxu0 0.0
        %1259 = vmatpush.msra.mxu0 0.0
        %1260 = vmatpush.msra.mxu0 0.0
        %1261 = vmatpush.msra.mxu0 0.0
        %1262 = vmatpush.msra.mxu0 0.0
        %1263 = vmatpush.msra.mxu0 0.0
        %1264 = vmatpush.msra.mxu0 0.0
        %1265 = vmatpush.msra.mxu0 0.0
        %1266 = vmatpush.msra.mxu0 0.0
        %1267 = vmatpush.msra.mxu0 0.0
        %1268 = vmatpush.msra.mxu0 0.0
        %1269 = vmatpush.msra.mxu0 0.0
        %1270 = vmatpush.msra.mxu0 0.0
        %1271 = vmatpush.msra.mxu0 %v1145
        %1272 = vmatmul.f32.gmra.mxu0 %v1154
        %v1273 = vpop.f32.mrf.mxu0
        %v1274 = vadd.f32 0.0, %v1273
        %1275 = vdwg.mxu0
        %1276 = vmatpush.msra.mxu0 0.0
        %1277 = vmatpush.msra.mxu0 0.0
        %1278 = vmatpush.msra.mxu0 0.0
        %1279 = vmatpush.msra.mxu0 0.0
        %1280 = vmatpush.msra.mxu0 0.0
        %1281 = vmatpush.msra.mxu0 0.0
        %1282 = vmatpush.msra.mxu0 0.0
        %1283 = vmatpush.msra.mxu0 0.0
        %1284 = vmatpush.msra.mxu0 0.0
        %1285 = vmatpush.msra.mxu0 0.0
        %1286 = vmatpush.msra.mxu0 0.0
        %1287 = vmatpush.msra.mxu0 0.0
        %1288 = vmatpush.msra.mxu0 0.0
        %1289 = vmatpush.msra.mxu0 0.0
        %1290 = vmatpush.msra.mxu0 0.0
        %1291 = vmatpush.msra.mxu0 %v1138
        %1292 = vmatmul.f32.gmra.mxu0 %v1154
        %v1293 = vpop.f32.mrf.mxu0
        %v1294 = vadd.f32 0.0, %v1293
        %1295 = vdwg.mxu0
        %v1296 = vadd.f32 %v1116, %v1174
        %v1297 = vadd.f32 %v1117, %v1194
        %v1298 = vadd.f32 %v1118, %v1214
        %v1299 = vadd.f32 %v1119, %v1234
        %v1300 = vadd.f32 %v1120, %v1254
        %v1301 = vadd.f32 %v1121, %v1274
        %v1302 = vadd.f32 %v1122, %v1294
        %s1303 = scalar_lea.vmem %s1, 48
        %v1304 = vld [vmem:[%s1303] sm:$0xff]
        %1305 = vrot.lane.b32.xlu0 %v251, 108
        %v1306 = vpop.permute.xlu0 %1305
        %1307 = vrot.lane.b32.xlu0 %v252, 108
        %v1308 = vpop.permute.xlu0 %1307
        %1309 = vrot.lane.b32.xlu0 %v253, 108
        %v1310 = vpop.permute.xlu0 %1309
        %1311 = vrot.lane.b32.xlu0 %v254, 108
        %v1312 = vpop.permute.xlu0 %1311
        %1313 = vrot.lane.b32.xlu0 %v255, 108
        %v1314 = vpop.permute.xlu0 %1313
        %1315 = vrot.lane.b32.xlu0 %v256, 108
        %v1316 = vpop.permute.xlu0 %1315
        %1317 = vrot.lane.b32.xlu0 %v257, 108
        %v1318 = vpop.permute.xlu0 %1317
        %vm1319 = vcmask 883712
        %v1320 = vsel %vm1319, %v1306, %v1308
        %v1321 = vsel %vm1319, %v1308, %v1310
        %v1322 = vsel %vm1319, %v1310, %v1312
        %v1323 = vsel %vm1319, %v1312, %v1314
        %v1324 = vsel %vm1319, %v1314, %v1316
        %v1325 = vsel %vm1319, %v1316, %v1318
        %v1334 = vsel %vm296, %v1304, 0
        %1336 = vmatpush.msra.mxu0 0.0
        %1337 = vmatpush.msra.mxu0 0.0
        %1338 = vmatpush.msra.mxu0 0.0
        %1339 = vmatpush.msra.mxu0 0.0
        %1340 = vmatpush.msra.mxu0 0.0
        %1341 = vmatpush.msra.mxu0 0.0
        %1342 = vmatpush.msra.mxu0 0.0
        %1343 = vmatpush.msra.mxu0 0.0
        %1344 = vmatpush.msra.mxu0 0.0
        %1345 = vmatpush.msra.mxu0 0.0
        %1346 = vmatpush.msra.mxu0 0.0
        %1347 = vmatpush.msra.mxu0 0.0
        %1348 = vmatpush.msra.mxu0 0.0
        %1349 = vmatpush.msra.mxu0 0.0
        %1350 = vmatpush.msra.mxu0 0.0
        %1351 = vmatpush.msra.mxu0 %v1320
        %1352 = vmatmul.f32.gmra.mxu0 %v1334
        %v1353 = vpop.f32.mrf.mxu0
        %v1354 = vadd.f32 0.0, %v1353
        %1355 = vdwg.mxu0
        %1356 = vmatpush.msra.mxu0 0.0
        %1357 = vmatpush.msra.mxu0 0.0
        %1358 = vmatpush.msra.mxu0 0.0
        %1359 = vmatpush.msra.mxu0 0.0
        %1360 = vmatpush.msra.mxu0 0.0
        %1361 = vmatpush.msra.mxu0 0.0
        %1362 = vmatpush.msra.mxu0 0.0
        %1363 = vmatpush.msra.mxu0 0.0
        %1364 = vmatpush.msra.mxu0 0.0
        %1365 = vmatpush.msra.mxu0 0.0
        %1366 = vmatpush.msra.mxu0 0.0
        %1367 = vmatpush.msra.mxu0 0.0
        %1368 = vmatpush.msra.mxu0 0.0
        %1369 = vmatpush.msra.mxu0 0.0
        %1370 = vmatpush.msra.mxu0 0.0
        %1371 = vmatpush.msra.mxu0 %v1321
        %1372 = vmatmul.f32.gmra.mxu0 %v1334
        %v1373 = vpop.f32.mrf.mxu0
        %v1374 = vadd.f32 0.0, %v1373
        %1375 = vdwg.mxu0
        %1376 = vmatpush.msra.mxu0 0.0
        %1377 = vmatpush.msra.mxu0 0.0
        %1378 = vmatpush.msra.mxu0 0.0
        %1379 = vmatpush.msra.mxu0 0.0
        %1380 = vmatpush.msra.mxu0 0.0
        %1381 = vmatpush.msra.mxu0 0.0
        %1382 = vmatpush.msra.mxu0 0.0
        %1383 = vmatpush.msra.mxu0 0.0
        %1384 = vmatpush.msra.mxu0 0.0
        %1385 = vmatpush.msra.mxu0 0.0
        %1386 = vmatpush.msra.mxu0 0.0
        %1387 = vmatpush.msra.mxu0 0.0
        %1388 = vmatpush.msra.mxu0 0.0
        %1389 = vmatpush.msra.mxu0 0.0
        %1390 = vmatpush.msra.mxu0 0.0
        %1391 = vmatpush.msra.mxu0 %v1322
        %1392 = vmatmul.f32.gmra.mxu0 %v1334
        %v1393 = vpop.f32.mrf.mxu0
        %v1394 = vadd.f32 0.0, %v1393
        %1395 = vdwg.mxu0
        %1396 = vmatpush.msra.mxu0 0.0
        %1397 = vmatpush.msra.mxu0 0.0
        %1398 = vmatpush.msra.mxu0 0.0
        %1399 = vmatpush.msra.mxu0 0.0
        %1400 = vmatpush.msra.mxu0 0.0
        %1401 = vmatpush.msra.mxu0 0.0
        %1402 = vmatpush.msra.mxu0 0.0
        %1403 = vmatpush.msra.mxu0 0.0
        %1404 = vmatpush.msra.mxu0 0.0
        %1405 = vmatpush.msra.mxu0 0.0
        %1406 = vmatpush.msra.mxu0 0.0
        %1407 = vmatpush.msra.mxu0 0.0
        %1408 = vmatpush.msra.mxu0 0.0
        %1409 = vmatpush.msra.mxu0 0.0
        %1410 = vmatpush.msra.mxu0 0.0
        %1411 = vmatpush.msra.mxu0 %v1323
        %1412 = vmatmul.f32.gmra.mxu0 %v1334
        %v1413 = vpop.f32.mrf.mxu0
        %v1414 = vadd.f32 0.0, %v1413
        %1415 = vdwg.mxu0
        %1416 = vmatpush.msra.mxu0 0.0
        %1417 = vmatpush.msra.mxu0 0.0
        %1418 = vmatpush.msra.mxu0 0.0
        %1419 = vmatpush.msra.mxu0 0.0
        %1420 = vmatpush.msra.mxu0 0.0
        %1421 = vmatpush.msra.mxu0 0.0
        %1422 = vmatpush.msra.mxu0 0.0
        %1423 = vmatpush.msra.mxu0 0.0
        %1424 = vmatpush.msra.mxu0 0.0
        %1425 = vmatpush.msra.mxu0 0.0
        %1426 = vmatpush.msra.mxu0 0.0
        %1427 = vmatpush.msra.mxu0 0.0
        %1428 = vmatpush.msra.mxu0 0.0
        %1429 = vmatpush.msra.mxu0 0.0
        %1430 = vmatpush.msra.mxu0 0.0
        %1431 = vmatpush.msra.mxu0 %v1324
        %1432 = vmatmul.f32.gmra.mxu0 %v1334
        %v1433 = vpop.f32.mrf.mxu0
        %v1434 = vadd.f32 0.0, %v1433
        %1435 = vdwg.mxu0
        %1436 = vmatpush.msra.mxu0 0.0
        %1437 = vmatpush.msra.mxu0 0.0
        %1438 = vmatpush.msra.mxu0 0.0
        %1439 = vmatpush.msra.mxu0 0.0
        %1440 = vmatpush.msra.mxu0 0.0
        %1441 = vmatpush.msra.mxu0 0.0
        %1442 = vmatpush.msra.mxu0 0.0
        %1443 = vmatpush.msra.mxu0 0.0
        %1444 = vmatpush.msra.mxu0 0.0
        %1445 = vmatpush.msra.mxu0 0.0
        %1446 = vmatpush.msra.mxu0 0.0
        %1447 = vmatpush.msra.mxu0 0.0
        %1448 = vmatpush.msra.mxu0 0.0
        %1449 = vmatpush.msra.mxu0 0.0
        %1450 = vmatpush.msra.mxu0 0.0
        %1451 = vmatpush.msra.mxu0 %v1325
        %1452 = vmatmul.f32.gmra.mxu0 %v1334
        %v1453 = vpop.f32.mrf.mxu0
        %v1454 = vadd.f32 0.0, %v1453
        %1455 = vdwg.mxu0
        %1456 = vmatpush.msra.mxu0 0.0
        %1457 = vmatpush.msra.mxu0 0.0
        %1458 = vmatpush.msra.mxu0 0.0
        %1459 = vmatpush.msra.mxu0 0.0
        %1460 = vmatpush.msra.mxu0 0.0
        %1461 = vmatpush.msra.mxu0 0.0
        %1462 = vmatpush.msra.mxu0 0.0
        %1463 = vmatpush.msra.mxu0 0.0
        %1464 = vmatpush.msra.mxu0 0.0
        %1465 = vmatpush.msra.mxu0 0.0
        %1466 = vmatpush.msra.mxu0 0.0
        %1467 = vmatpush.msra.mxu0 0.0
        %1468 = vmatpush.msra.mxu0 0.0
        %1469 = vmatpush.msra.mxu0 0.0
        %1470 = vmatpush.msra.mxu0 0.0
        %1471 = vmatpush.msra.mxu0 %v1318
        %1472 = vmatmul.f32.gmra.mxu0 %v1334
        %v1473 = vpop.f32.mrf.mxu0
        %v1474 = vadd.f32 0.0, %v1473
        %1475 = vdwg.mxu0
        %v1476 = vadd.f32 %v1296, %v1354
        %v1477 = vadd.f32 %v1297, %v1374
        %v1478 = vadd.f32 %v1298, %v1394
        %v1479 = vadd.f32 %v1299, %v1414
        %v1480 = vadd.f32 %v1300, %v1434
        %v1481 = vadd.f32 %v1301, %v1454
        %v1482 = vadd.f32 %v1302, %v1474
        %s1483 = scalar_lea.vmem %s1, 56
        %v1484 = vld [vmem:[%s1483] sm:$0xff]
        %1485 = vrot.lane.b32.xlu0 %v251, 107
        %v1486 = vpop.permute.xlu0 %1485
        %1487 = vrot.lane.b32.xlu0 %v252, 107
        %v1488 = vpop.permute.xlu0 %1487
        %1489 = vrot.lane.b32.xlu0 %v253, 107
        %v1490 = vpop.permute.xlu0 %1489
        %1491 = vrot.lane.b32.xlu0 %v254, 107
        %v1492 = vpop.permute.xlu0 %1491
        %1493 = vrot.lane.b32.xlu0 %v255, 107
        %v1494 = vpop.permute.xlu0 %1493
        %1495 = vrot.lane.b32.xlu0 %v256, 107
        %v1496 = vpop.permute.xlu0 %1495
        %1497 = vrot.lane.b32.xlu0 %v257, 107
        %v1498 = vpop.permute.xlu0 %1497
        %vm1499 = vcmask 875520
        %v1500 = vsel %vm1499, %v1486, %v1488
        %v1501 = vsel %vm1499, %v1488, %v1490
        %v1502 = vsel %vm1499, %v1490, %v1492
        %v1503 = vsel %vm1499, %v1492, %v1494
        %v1504 = vsel %vm1499, %v1494, %v1496
        %v1505 = vsel %vm1499, %v1496, %v1498
        %v1514 = vsel %vm296, %v1484, 0
        %1516 = vmatpush.msra.mxu0 0.0
        %1517 = vmatpush.msra.mxu0 0.0
        %1518 = vmatpush.msra.mxu0 0.0
        %1519 = vmatpush.msra.mxu0 0.0
        %1520 = vmatpush.msra.mxu0 0.0
        %1521 = vmatpush.msra.mxu0 0.0
        %1522 = vmatpush.msra.mxu0 0.0
        %1523 = vmatpush.msra.mxu0 0.0
        %1524 = vmatpush.msra.mxu0 0.0
        %1525 = vmatpush.msra.mxu0 0.0
        %1526 = vmatpush.msra.mxu0 0.0
        %1527 = vmatpush.msra.mxu0 0.0
        %1528 = vmatpush.msra.mxu0 0.0
        %1529 = vmatpush.msra.mxu0 0.0
        %1530 = vmatpush.msra.mxu0 0.0
        %1531 = vmatpush.msra.mxu0 %v1500
        %1532 = vmatmul.f32.gmra.mxu0 %v1514
        %v1533 = vpop.f32.mrf.mxu0
        %v1534 = vadd.f32 0.0, %v1533
        %1535 = vdwg.mxu0
        %1536 = vmatpush.msra.mxu0 0.0
        %1537 = vmatpush.msra.mxu0 0.0
        %1538 = vmatpush.msra.mxu0 0.0
        %1539 = vmatpush.msra.mxu0 0.0
        %1540 = vmatpush.msra.mxu0 0.0
        %1541 = vmatpush.msra.mxu0 0.0
        %1542 = vmatpush.msra.mxu0 0.0
        %1543 = vmatpush.msra.mxu0 0.0
        %1544 = vmatpush.msra.mxu0 0.0
        %1545 = vmatpush.msra.mxu0 0.0
        %1546 = vmatpush.msra.mxu0 0.0
        %1547 = vmatpush.msra.mxu0 0.0
        %1548 = vmatpush.msra.mxu0 0.0
        %1549 = vmatpush.msra.mxu0 0.0
        %1550 = vmatpush.msra.mxu0 0.0
        %1551 = vmatpush.msra.mxu0 %v1501
        %1552 = vmatmul.f32.gmra.mxu0 %v1514
        %v1553 = vpop.f32.mrf.mxu0
        %v1554 = vadd.f32 0.0, %v1553
        %1555 = vdwg.mxu0
        %1556 = vmatpush.msra.mxu0 0.0
        %1557 = vmatpush.msra.mxu0 0.0
        %1558 = vmatpush.msra.mxu0 0.0
        %1559 = vmatpush.msra.mxu0 0.0
        %1560 = vmatpush.msra.mxu0 0.0
        %1561 = vmatpush.msra.mxu0 0.0
        %1562 = vmatpush.msra.mxu0 0.0
        %1563 = vmatpush.msra.mxu0 0.0
        %1564 = vmatpush.msra.mxu0 0.0
        %1565 = vmatpush.msra.mxu0 0.0
        %1566 = vmatpush.msra.mxu0 0.0
        %1567 = vmatpush.msra.mxu0 0.0
        %1568 = vmatpush.msra.mxu0 0.0
        %1569 = vmatpush.msra.mxu0 0.0
        %1570 = vmatpush.msra.mxu0 0.0
        %1571 = vmatpush.msra.mxu0 %v1502
        %1572 = vmatmul.f32.gmra.mxu0 %v1514
        %v1573 = vpop.f32.mrf.mxu0
        %v1574 = vadd.f32 0.0, %v1573
        %1575 = vdwg.mxu0
        %1576 = vmatpush.msra.mxu0 0.0
        %1577 = vmatpush.msra.mxu0 0.0
        %1578 = vmatpush.msra.mxu0 0.0
        %1579 = vmatpush.msra.mxu0 0.0
        %1580 = vmatpush.msra.mxu0 0.0
        %1581 = vmatpush.msra.mxu0 0.0
        %1582 = vmatpush.msra.mxu0 0.0
        %1583 = vmatpush.msra.mxu0 0.0
        %1584 = vmatpush.msra.mxu0 0.0
        %1585 = vmatpush.msra.mxu0 0.0
        %1586 = vmatpush.msra.mxu0 0.0
        %1587 = vmatpush.msra.mxu0 0.0
        %1588 = vmatpush.msra.mxu0 0.0
        %1589 = vmatpush.msra.mxu0 0.0
        %1590 = vmatpush.msra.mxu0 0.0
        %1591 = vmatpush.msra.mxu0 %v1503
        %1592 = vmatmul.f32.gmra.mxu0 %v1514
        %v1593 = vpop.f32.mrf.mxu0
        %v1594 = vadd.f32 0.0, %v1593
        %1595 = vdwg.mxu0
        %1596 = vmatpush.msra.mxu0 0.0
        %1597 = vmatpush.msra.mxu0 0.0
        %1598 = vmatpush.msra.mxu0 0.0
        %1599 = vmatpush.msra.mxu0 0.0
        %1600 = vmatpush.msra.mxu0 0.0
        %1601 = vmatpush.msra.mxu0 0.0
        %1602 = vmatpush.msra.mxu0 0.0
        %1603 = vmatpush.msra.mxu0 0.0
        %1604 = vmatpush.msra.mxu0 0.0
        %1605 = vmatpush.msra.mxu0 0.0
        %1606 = vmatpush.msra.mxu0 0.0
        %1607 = vmatpush.msra.mxu0 0.0
        %1608 = vmatpush.msra.mxu0 0.0
        %1609 = vmatpush.msra.mxu0 0.0
        %1610 = vmatpush.msra.mxu0 0.0
        %1611 = vmatpush.msra.mxu0 %v1504
        %1612 = vmatmul.f32.gmra.mxu0 %v1514
        %v1613 = vpop.f32.mrf.mxu0
        %v1614 = vadd.f32 0.0, %v1613
        %1615 = vdwg.mxu0
        %1616 = vmatpush.msra.mxu0 0.0
        %1617 = vmatpush.msra.mxu0 0.0
        %1618 = vmatpush.msra.mxu0 0.0
        %1619 = vmatpush.msra.mxu0 0.0
        %1620 = vmatpush.msra.mxu0 0.0
        %1621 = vmatpush.msra.mxu0 0.0
        %1622 = vmatpush.msra.mxu0 0.0
        %1623 = vmatpush.msra.mxu0 0.0
        %1624 = vmatpush.msra.mxu0 0.0
        %1625 = vmatpush.msra.mxu0 0.0
        %1626 = vmatpush.msra.mxu0 0.0
        %1627 = vmatpush.msra.mxu0 0.0
        %1628 = vmatpush.msra.mxu0 0.0
        %1629 = vmatpush.msra.mxu0 0.0
        %1630 = vmatpush.msra.mxu0 0.0
        %1631 = vmatpush.msra.mxu0 %v1505
        %1632 = vmatmul.f32.gmra.mxu0 %v1514
        %v1633 = vpop.f32.mrf.mxu0
        %v1634 = vadd.f32 0.0, %v1633
        %1635 = vdwg.mxu0
        %1636 = vmatpush.msra.mxu0 0.0
        %1637 = vmatpush.msra.mxu0 0.0
        %1638 = vmatpush.msra.mxu0 0.0
        %1639 = vmatpush.msra.mxu0 0.0
        %1640 = vmatpush.msra.mxu0 0.0
        %1641 = vmatpush.msra.mxu0 0.0
        %1642 = vmatpush.msra.mxu0 0.0
        %1643 = vmatpush.msra.mxu0 0.0
        %1644 = vmatpush.msra.mxu0 0.0
        %1645 = vmatpush.msra.mxu0 0.0
        %1646 = vmatpush.msra.mxu0 0.0
        %1647 = vmatpush.msra.mxu0 0.0
        %1648 = vmatpush.msra.mxu0 0.0
        %1649 = vmatpush.msra.mxu0 0.0
        %1650 = vmatpush.msra.mxu0 0.0
        %1651 = vmatpush.msra.mxu0 %v1498
        %1652 = vmatmul.f32.gmra.mxu0 %v1514
        %v1653 = vpop.f32.mrf.mxu0
        %v1654 = vadd.f32 0.0, %v1653
        %1655 = vdwg.mxu0
        %v1656 = vadd.f32 %v1476, %v1534
        %v1657 = vadd.f32 %v1477, %v1554
        %v1658 = vadd.f32 %v1478, %v1574
        %v1659 = vadd.f32 %v1479, %v1594
        %v1660 = vadd.f32 %v1480, %v1614
        %v1661 = vadd.f32 %v1481, %v1634
        %v1662 = vadd.f32 %v1482, %v1654
        %s1663 = scalar_lea.vmem %s1, 64
        %v1664 = vld [vmem:[%s1663] sm:$0xff]
        %1665 = vrot.lane.b32.xlu0 %v251, 106
        %v1666 = vpop.permute.xlu0 %1665
        %1667 = vrot.lane.b32.xlu0 %v252, 106
        %v1668 = vpop.permute.xlu0 %1667
        %1669 = vrot.lane.b32.xlu0 %v253, 106
        %v1670 = vpop.permute.xlu0 %1669
        %1671 = vrot.lane.b32.xlu0 %v254, 106
        %v1672 = vpop.permute.xlu0 %1671
        %1673 = vrot.lane.b32.xlu0 %v255, 106
        %v1674 = vpop.permute.xlu0 %1673
        %1675 = vrot.lane.b32.xlu0 %v256, 106
        %v1676 = vpop.permute.xlu0 %1675
        %1677 = vrot.lane.b32.xlu0 %v257, 106
        %v1678 = vpop.permute.xlu0 %1677
        %vm1679 = vcmask 867328
        %v1680 = vsel %vm1679, %v1666, %v1668
        %v1681 = vsel %vm1679, %v1668, %v1670
        %v1682 = vsel %vm1679, %v1670, %v1672
        %v1683 = vsel %vm1679, %v1672, %v1674
        %v1684 = vsel %vm1679, %v1674, %v1676
        %v1685 = vsel %vm1679, %v1676, %v1678
        %v1694 = vsel %vm296, %v1664, 0
        %1696 = vmatpush.msra.mxu0 0.0
        %1697 = vmatpush.msra.mxu0 0.0
        %1698 = vmatpush.msra.mxu0 0.0
        %1699 = vmatpush.msra.mxu0 0.0
        %1700 = vmatpush.msra.mxu0 0.0
        %1701 = vmatpush.msra.mxu0 0.0
        %1702 = vmatpush.msra.mxu0 0.0
        %1703 = vmatpush.msra.mxu0 0.0
        %1704 = vmatpush.msra.mxu0 0.0
        %1705 = vmatpush.msra.mxu0 0.0
        %1706 = vmatpush.msra.mxu0 0.0
        %1707 = vmatpush.msra.mxu0 0.0
        %1708 = vmatpush.msra.mxu0 0.0
        %1709 = vmatpush.msra.mxu0 0.0
        %1710 = vmatpush.msra.mxu0 0.0
        %1711 = vmatpush.msra.mxu0 %v1680
        %1712 = vmatmul.f32.gmra.mxu0 %v1694
        %v1713 = vpop.f32.mrf.mxu0
        %v1714 = vadd.f32 0.0, %v1713
        %1715 = vdwg.mxu0
        %1716 = vmatpush.msra.mxu0 0.0
        %1717 = vmatpush.msra.mxu0 0.0
        %1718 = vmatpush.msra.mxu0 0.0
        %1719 = vmatpush.msra.mxu0 0.0
        %1720 = vmatpush.msra.mxu0 0.0
        %1721 = vmatpush.msra.mxu0 0.0
        %1722 = vmatpush.msra.mxu0 0.0
        %1723 = vmatpush.msra.mxu0 0.0
        %1724 = vmatpush.msra.mxu0 0.0
        %1725 = vmatpush.msra.mxu0 0.0
        %1726 = vmatpush.msra.mxu0 0.0
        %1727 = vmatpush.msra.mxu0 0.0
        %1728 = vmatpush.msra.mxu0 0.0
        %1729 = vmatpush.msra.mxu0 0.0
        %1730 = vmatpush.msra.mxu0 0.0
        %1731 = vmatpush.msra.mxu0 %v1681
        %1732 = vmatmul.f32.gmra.mxu0 %v1694
        %v1733 = vpop.f32.mrf.mxu0
        %v1734 = vadd.f32 0.0, %v1733
        %1735 = vdwg.mxu0
        %1736 = vmatpush.msra.mxu0 0.0
        %1737 = vmatpush.msra.mxu0 0.0
        %1738 = vmatpush.msra.mxu0 0.0
        %1739 = vmatpush.msra.mxu0 0.0
        %1740 = vmatpush.msra.mxu0 0.0
        %1741 = vmatpush.msra.mxu0 0.0
        %1742 = vmatpush.msra.mxu0 0.0
        %1743 = vmatpush.msra.mxu0 0.0
        %1744 = vmatpush.msra.mxu0 0.0
        %1745 = vmatpush.msra.mxu0 0.0
        %1746 = vmatpush.msra.mxu0 0.0
        %1747 = vmatpush.msra.mxu0 0.0
        %1748 = vmatpush.msra.mxu0 0.0
        %1749 = vmatpush.msra.mxu0 0.0
        %1750 = vmatpush.msra.mxu0 0.0
        %1751 = vmatpush.msra.mxu0 %v1682
        %1752 = vmatmul.f32.gmra.mxu0 %v1694
        %v1753 = vpop.f32.mrf.mxu0
        %v1754 = vadd.f32 0.0, %v1753
        %1755 = vdwg.mxu0
        %1756 = vmatpush.msra.mxu0 0.0
        %1757 = vmatpush.msra.mxu0 0.0
        %1758 = vmatpush.msra.mxu0 0.0
        %1759 = vmatpush.msra.mxu0 0.0
        %1760 = vmatpush.msra.mxu0 0.0
        %1761 = vmatpush.msra.mxu0 0.0
        %1762 = vmatpush.msra.mxu0 0.0
        %1763 = vmatpush.msra.mxu0 0.0
        %1764 = vmatpush.msra.mxu0 0.0
        %1765 = vmatpush.msra.mxu0 0.0
        %1766 = vmatpush.msra.mxu0 0.0
        %1767 = vmatpush.msra.mxu0 0.0
        %1768 = vmatpush.msra.mxu0 0.0
        %1769 = vmatpush.msra.mxu0 0.0
        %1770 = vmatpush.msra.mxu0 0.0
        %1771 = vmatpush.msra.mxu0 %v1683
        %1772 = vmatmul.f32.gmra.mxu0 %v1694
        %v1773 = vpop.f32.mrf.mxu0
        %v1774 = vadd.f32 0.0, %v1773
        %1775 = vdwg.mxu0
        %1776 = vmatpush.msra.mxu0 0.0
        %1777 = vmatpush.msra.mxu0 0.0
        %1778 = vmatpush.msra.mxu0 0.0
        %1779 = vmatpush.msra.mxu0 0.0
        %1780 = vmatpush.msra.mxu0 0.0
        %1781 = vmatpush.msra.mxu0 0.0
        %1782 = vmatpush.msra.mxu0 0.0
        %1783 = vmatpush.msra.mxu0 0.0
        %1784 = vmatpush.msra.mxu0 0.0
        %1785 = vmatpush.msra.mxu0 0.0
        %1786 = vmatpush.msra.mxu0 0.0
        %1787 = vmatpush.msra.mxu0 0.0
        %1788 = vmatpush.msra.mxu0 0.0
        %1789 = vmatpush.msra.mxu0 0.0
        %1790 = vmatpush.msra.mxu0 0.0
        %1791 = vmatpush.msra.mxu0 %v1684
        %1792 = vmatmul.f32.gmra.mxu0 %v1694
        %v1793 = vpop.f32.mrf.mxu0
        %v1794 = vadd.f32 0.0, %v1793
        %1795 = vdwg.mxu0
        %1796 = vmatpush.msra.mxu0 0.0
        %1797 = vmatpush.msra.mxu0 0.0
        %1798 = vmatpush.msra.mxu0 0.0
        %1799 = vmatpush.msra.mxu0 0.0
        %1800 = vmatpush.msra.mxu0 0.0
        %1801 = vmatpush.msra.mxu0 0.0
        %1802 = vmatpush.msra.mxu0 0.0
        %1803 = vmatpush.msra.mxu0 0.0
        %1804 = vmatpush.msra.mxu0 0.0
        %1805 = vmatpush.msra.mxu0 0.0
        %1806 = vmatpush.msra.mxu0 0.0
        %1807 = vmatpush.msra.mxu0 0.0
        %1808 = vmatpush.msra.mxu0 0.0
        %1809 = vmatpush.msra.mxu0 0.0
        %1810 = vmatpush.msra.mxu0 0.0
        %1811 = vmatpush.msra.mxu0 %v1685
        %1812 = vmatmul.f32.gmra.mxu0 %v1694
        %v1813 = vpop.f32.mrf.mxu0
        %v1814 = vadd.f32 0.0, %v1813
        %1815 = vdwg.mxu0
        %1816 = vmatpush.msra.mxu0 0.0
        %1817 = vmatpush.msra.mxu0 0.0
        %1818 = vmatpush.msra.mxu0 0.0
        %1819 = vmatpush.msra.mxu0 0.0
        %1820 = vmatpush.msra.mxu0 0.0
        %1821 = vmatpush.msra.mxu0 0.0
        %1822 = vmatpush.msra.mxu0 0.0
        %1823 = vmatpush.msra.mxu0 0.0
        %1824 = vmatpush.msra.mxu0 0.0
        %1825 = vmatpush.msra.mxu0 0.0
        %1826 = vmatpush.msra.mxu0 0.0
        %1827 = vmatpush.msra.mxu0 0.0
        %1828 = vmatpush.msra.mxu0 0.0
        %1829 = vmatpush.msra.mxu0 0.0
        %1830 = vmatpush.msra.mxu0 0.0
        %1831 = vmatpush.msra.mxu0 %v1678
        %1832 = vmatmul.f32.gmra.mxu0 %v1694
        %v1833 = vpop.f32.mrf.mxu0
        %v1834 = vadd.f32 0.0, %v1833
        %1835 = vdwg.mxu0
        %v1836 = vadd.f32 %v1656, %v1714
        %v1837 = vadd.f32 %v1657, %v1734
        %v1838 = vadd.f32 %v1658, %v1754
        %v1839 = vadd.f32 %v1659, %v1774
        %v1840 = vadd.f32 %v1660, %v1794
        %v1841 = vadd.f32 %v1661, %v1814
        %v1842 = vadd.f32 %v1662, %v1834
        %s1843 = scalar_lea.vmem %s1, 72
        %v1844 = vld [vmem:[%s1843] sm:$0xff]
        %1845 = vrot.lane.b32.xlu0 %v251, 28
        %v1846 = vpop.permute.xlu0 %1845
        %1847 = vrot.lane.b32.xlu0 %v252, 28
        %v1848 = vpop.permute.xlu0 %1847
        %1849 = vrot.lane.b32.xlu0 %v253, 28
        %v1850 = vpop.permute.xlu0 %1849
        %1851 = vrot.lane.b32.xlu0 %v254, 28
        %v1852 = vpop.permute.xlu0 %1851
        %1853 = vrot.lane.b32.xlu0 %v255, 28
        %v1854 = vpop.permute.xlu0 %1853
        %1855 = vrot.lane.b32.xlu0 %v256, 28
        %v1856 = vpop.permute.xlu0 %1855
        %1857 = vrot.lane.b32.xlu0 %v257, 28
        %v1858 = vpop.permute.xlu0 %1857
        %vm1859 = vcmask 228352
        %v1860 = vsel %vm1859, %v1846, %v1848
        %v1861 = vsel %vm1859, %v1848, %v1850
        %v1862 = vsel %vm1859, %v1850, %v1852
        %v1863 = vsel %vm1859, %v1852, %v1854
        %v1864 = vsel %vm1859, %v1854, %v1856
        %v1865 = vsel %vm1859, %v1856, %v1858
        %v1874 = vsel %vm296, %v1844, 0
        %1876 = vmatpush.msra.mxu0 0.0
        %1877 = vmatpush.msra.mxu0 0.0
        %1878 = vmatpush.msra.mxu0 0.0
        %1879 = vmatpush.msra.mxu0 0.0
        %1880 = vmatpush.msra.mxu0 0.0
        %1881 = vmatpush.msra.mxu0 0.0
        %1882 = vmatpush.msra.mxu0 0.0
        %1883 = vmatpush.msra.mxu0 0.0
        %1884 = vmatpush.msra.mxu0 0.0
        %1885 = vmatpush.msra.mxu0 0.0
        %1886 = vmatpush.msra.mxu0 0.0
        %1887 = vmatpush.msra.mxu0 0.0
        %1888 = vmatpush.msra.mxu0 0.0
        %1889 = vmatpush.msra.mxu0 0.0
        %1890 = vmatpush.msra.mxu0 0.0
        %1891 = vmatpush.msra.mxu0 %v1860
        %1892 = vmatmul.f32.gmra.mxu0 %v1874
        %v1893 = vpop.f32.mrf.mxu0
        %v1894 = vadd.f32 0.0, %v1893
        %1895 = vdwg.mxu0
        %1896 = vmatpush.msra.mxu0 0.0
        %1897 = vmatpush.msra.mxu0 0.0
        %1898 = vmatpush.msra.mxu0 0.0
        %1899 = vmatpush.msra.mxu0 0.0
        %1900 = vmatpush.msra.mxu0 0.0
        %1901 = vmatpush.msra.mxu0 0.0
        %1902 = vmatpush.msra.mxu0 0.0
        %1903 = vmatpush.msra.mxu0 0.0
        %1904 = vmatpush.msra.mxu0 0.0
        %1905 = vmatpush.msra.mxu0 0.0
        %1906 = vmatpush.msra.mxu0 0.0
        %1907 = vmatpush.msra.mxu0 0.0
        %1908 = vmatpush.msra.mxu0 0.0
        %1909 = vmatpush.msra.mxu0 0.0
        %1910 = vmatpush.msra.mxu0 0.0
        %1911 = vmatpush.msra.mxu0 %v1861
        %1912 = vmatmul.f32.gmra.mxu0 %v1874
        %v1913 = vpop.f32.mrf.mxu0
        %v1914 = vadd.f32 0.0, %v1913
        %1915 = vdwg.mxu0
        %1916 = vmatpush.msra.mxu0 0.0
        %1917 = vmatpush.msra.mxu0 0.0
        %1918 = vmatpush.msra.mxu0 0.0
        %1919 = vmatpush.msra.mxu0 0.0
        %1920 = vmatpush.msra.mxu0 0.0
        %1921 = vmatpush.msra.mxu0 0.0
        %1922 = vmatpush.msra.mxu0 0.0
        %1923 = vmatpush.msra.mxu0 0.0
        %1924 = vmatpush.msra.mxu0 0.0
        %1925 = vmatpush.msra.mxu0 0.0
        %1926 = vmatpush.msra.mxu0 0.0
        %1927 = vmatpush.msra.mxu0 0.0
        %1928 = vmatpush.msra.mxu0 0.0
        %1929 = vmatpush.msra.mxu0 0.0
        %1930 = vmatpush.msra.mxu0 0.0
        %1931 = vmatpush.msra.mxu0 %v1862
        %1932 = vmatmul.f32.gmra.mxu0 %v1874
        %v1933 = vpop.f32.mrf.mxu0
        %v1934 = vadd.f32 0.0, %v1933
        %1935 = vdwg.mxu0
        %1936 = vmatpush.msra.mxu0 0.0
        %1937 = vmatpush.msra.mxu0 0.0
        %1938 = vmatpush.msra.mxu0 0.0
        %1939 = vmatpush.msra.mxu0 0.0
        %1940 = vmatpush.msra.mxu0 0.0
        %1941 = vmatpush.msra.mxu0 0.0
        %1942 = vmatpush.msra.mxu0 0.0
        %1943 = vmatpush.msra.mxu0 0.0
        %1944 = vmatpush.msra.mxu0 0.0
        %1945 = vmatpush.msra.mxu0 0.0
        %1946 = vmatpush.msra.mxu0 0.0
        %1947 = vmatpush.msra.mxu0 0.0
        %1948 = vmatpush.msra.mxu0 0.0
        %1949 = vmatpush.msra.mxu0 0.0
        %1950 = vmatpush.msra.mxu0 0.0
        %1951 = vmatpush.msra.mxu0 %v1863
        %1952 = vmatmul.f32.gmra.mxu0 %v1874
        %v1953 = vpop.f32.mrf.mxu0
        %v1954 = vadd.f32 0.0, %v1953
        %1955 = vdwg.mxu0
        %1956 = vmatpush.msra.mxu0 0.0
        %1957 = vmatpush.msra.mxu0 0.0
        %1958 = vmatpush.msra.mxu0 0.0
        %1959 = vmatpush.msra.mxu0 0.0
        %1960 = vmatpush.msra.mxu0 0.0
        %1961 = vmatpush.msra.mxu0 0.0
        %1962 = vmatpush.msra.mxu0 0.0
        %1963 = vmatpush.msra.mxu0 0.0
        %1964 = vmatpush.msra.mxu0 0.0
        %1965 = vmatpush.msra.mxu0 0.0
        %1966 = vmatpush.msra.mxu0 0.0
        %1967 = vmatpush.msra.mxu0 0.0
        %1968 = vmatpush.msra.mxu0 0.0
        %1969 = vmatpush.msra.mxu0 0.0
        %1970 = vmatpush.msra.mxu0 0.0
        %1971 = vmatpush.msra.mxu0 %v1864
        %1972 = vmatmul.f32.gmra.mxu0 %v1874
        %v1973 = vpop.f32.mrf.mxu0
        %v1974 = vadd.f32 0.0, %v1973
        %1975 = vdwg.mxu0
        %1976 = vmatpush.msra.mxu0 0.0
        %1977 = vmatpush.msra.mxu0 0.0
        %1978 = vmatpush.msra.mxu0 0.0
        %1979 = vmatpush.msra.mxu0 0.0
        %1980 = vmatpush.msra.mxu0 0.0
        %1981 = vmatpush.msra.mxu0 0.0
        %1982 = vmatpush.msra.mxu0 0.0
        %1983 = vmatpush.msra.mxu0 0.0
        %1984 = vmatpush.msra.mxu0 0.0
        %1985 = vmatpush.msra.mxu0 0.0
        %1986 = vmatpush.msra.mxu0 0.0
        %1987 = vmatpush.msra.mxu0 0.0
        %1988 = vmatpush.msra.mxu0 0.0
        %1989 = vmatpush.msra.mxu0 0.0
        %1990 = vmatpush.msra.mxu0 0.0
        %1991 = vmatpush.msra.mxu0 %v1865
        %1992 = vmatmul.f32.gmra.mxu0 %v1874
        %v1993 = vpop.f32.mrf.mxu0
        %v1994 = vadd.f32 0.0, %v1993
        %1995 = vdwg.mxu0
        %1996 = vmatpush.msra.mxu0 0.0
        %1997 = vmatpush.msra.mxu0 0.0
        %1998 = vmatpush.msra.mxu0 0.0
        %1999 = vmatpush.msra.mxu0 0.0
        %2000 = vmatpush.msra.mxu0 0.0
        %2001 = vmatpush.msra.mxu0 0.0
        %2002 = vmatpush.msra.mxu0 0.0
        %2003 = vmatpush.msra.mxu0 0.0
        %2004 = vmatpush.msra.mxu0 0.0
        %2005 = vmatpush.msra.mxu0 0.0
        %2006 = vmatpush.msra.mxu0 0.0
        %2007 = vmatpush.msra.mxu0 0.0
        %2008 = vmatpush.msra.mxu0 0.0
        %2009 = vmatpush.msra.mxu0 0.0
        %2010 = vmatpush.msra.mxu0 0.0
        %2011 = vmatpush.msra.mxu0 %v1858
        %2012 = vmatmul.f32.gmra.mxu0 %v1874
        %v2013 = vpop.f32.mrf.mxu0
        %v2014 = vadd.f32 0.0, %v2013
        %2015 = vdwg.mxu0
        %v2016 = vadd.f32 %v1836, %v1894
        %v2017 = vadd.f32 %v1837, %v1914
        %v2018 = vadd.f32 %v1838, %v1934
        %v2019 = vadd.f32 %v1839, %v1954
        %v2020 = vadd.f32 %v1840, %v1974
        %v2021 = vadd.f32 %v1841, %v1994
        %v2022 = vadd.f32 %v1842, %v2014
        %s2023 = scalar_lea.vmem %s1, 80
        %v2024 = vld [vmem:[%s2023] sm:$0xff]
        %2025 = vrot.lane.b32.xlu0 %v251, 27
        %v2026 = vpop.permute.xlu0 %2025
        %2027 = vrot.lane.b32.xlu0 %v252, 27
        %v2028 = vpop.permute.xlu0 %2027
        %2029 = vrot.lane.b32.xlu0 %v253, 27
        %v2030 = vpop.permute.xlu0 %2029
        %2031 = vrot.lane.b32.xlu0 %v254, 27
        %v2032 = vpop.permute.xlu0 %2031
        %2033 = vrot.lane.b32.xlu0 %v255, 27
        %v2034 = vpop.permute.xlu0 %2033
        %2035 = vrot.lane.b32.xlu0 %v256, 27
        %v2036 = vpop.permute.xlu0 %2035
        %2037 = vrot.lane.b32.xlu0 %v257, 27
        %v2038 = vpop.permute.xlu0 %2037
        %vm2039 = vcmask 220160
        %v2040 = vsel %vm2039, %v2026, %v2028
        %v2041 = vsel %vm2039, %v2028, %v2030
        %v2042 = vsel %vm2039, %v2030, %v2032
        %v2043 = vsel %vm2039, %v2032, %v2034
        %v2044 = vsel %vm2039, %v2034, %v2036
        %v2045 = vsel %vm2039, %v2036, %v2038
        %v2054 = vsel %vm296, %v2024, 0
        %2056 = vmatpush.msra.mxu0 0.0
        %2057 = vmatpush.msra.mxu0 0.0
        %2058 = vmatpush.msra.mxu0 0.0
        %2059 = vmatpush.msra.mxu0 0.0
        %2060 = vmatpush.msra.mxu0 0.0
        %2061 = vmatpush.msra.mxu0 0.0
        %2062 = vmatpush.msra.mxu0 0.0
        %2063 = vmatpush.msra.mxu0 0.0
        %2064 = vmatpush.msra.mxu0 0.0
        %2065 = vmatpush.msra.mxu0 0.0
        %2066 = vmatpush.msra.mxu0 0.0
        %2067 = vmatpush.msra.mxu0 0.0
        %2068 = vmatpush.msra.mxu0 0.0
        %2069 = vmatpush.msra.mxu0 0.0
        %2070 = vmatpush.msra.mxu0 0.0
        %2071 = vmatpush.msra.mxu0 %v2040
        %2072 = vmatmul.f32.gmra.mxu0 %v2054
        %v2073 = vpop.f32.mrf.mxu0
        %v2074 = vadd.f32 0.0, %v2073
        %2075 = vdwg.mxu0
        %2076 = vmatpush.msra.mxu0 0.0
        %2077 = vmatpush.msra.mxu0 0.0
        %2078 = vmatpush.msra.mxu0 0.0
        %2079 = vmatpush.msra.mxu0 0.0
        %2080 = vmatpush.msra.mxu0 0.0
        %2081 = vmatpush.msra.mxu0 0.0
        %2082 = vmatpush.msra.mxu0 0.0
        %2083 = vmatpush.msra.mxu0 0.0
        %2084 = vmatpush.msra.mxu0 0.0
        %2085 = vmatpush.msra.mxu0 0.0
        %2086 = vmatpush.msra.mxu0 0.0
        %2087 = vmatpush.msra.mxu0 0.0
        %2088 = vmatpush.msra.mxu0 0.0
        %2089 = vmatpush.msra.mxu0 0.0
        %2090 = vmatpush.msra.mxu0 0.0
        %2091 = vmatpush.msra.mxu0 %v2041
        %2092 = vmatmul.f32.gmra.mxu0 %v2054
        %v2093 = vpop.f32.mrf.mxu0
        %v2094 = vadd.f32 0.0, %v2093
        %2095 = vdwg.mxu0
        %2096 = vmatpush.msra.mxu0 0.0
        %2097 = vmatpush.msra.mxu0 0.0
        %2098 = vmatpush.msra.mxu0 0.0
        %2099 = vmatpush.msra.mxu0 0.0
        %2100 = vmatpush.msra.mxu0 0.0
        %2101 = vmatpush.msra.mxu0 0.0
        %2102 = vmatpush.msra.mxu0 0.0
        %2103 = vmatpush.msra.mxu0 0.0
        %2104 = vmatpush.msra.mxu0 0.0
        %2105 = vmatpush.msra.mxu0 0.0
        %2106 = vmatpush.msra.mxu0 0.0
        %2107 = vmatpush.msra.mxu0 0.0
        %2108 = vmatpush.msra.mxu0 0.0
        %2109 = vmatpush.msra.mxu0 0.0
        %2110 = vmatpush.msra.mxu0 0.0
        %2111 = vmatpush.msra.mxu0 %v2042
        %2112 = vmatmul.f32.gmra.mxu0 %v2054
        %v2113 = vpop.f32.mrf.mxu0
        %v2114 = vadd.f32 0.0, %v2113
        %2115 = vdwg.mxu0
        %2116 = vmatpush.msra.mxu0 0.0
        %2117 = vmatpush.msra.mxu0 0.0
        %2118 = vmatpush.msra.mxu0 0.0
        %2119 = vmatpush.msra.mxu0 0.0
        %2120 = vmatpush.msra.mxu0 0.0
        %2121 = vmatpush.msra.mxu0 0.0
        %2122 = vmatpush.msra.mxu0 0.0
        %2123 = vmatpush.msra.mxu0 0.0
        %2124 = vmatpush.msra.mxu0 0.0
        %2125 = vmatpush.msra.mxu0 0.0
        %2126 = vmatpush.msra.mxu0 0.0
        %2127 = vmatpush.msra.mxu0 0.0
        %2128 = vmatpush.msra.mxu0 0.0
        %2129 = vmatpush.msra.mxu0 0.0
        %2130 = vmatpush.msra.mxu0 0.0
        %2131 = vmatpush.msra.mxu0 %v2043
        %2132 = vmatmul.f32.gmra.mxu0 %v2054
        %v2133 = vpop.f32.mrf.mxu0
        %v2134 = vadd.f32 0.0, %v2133
        %2135 = vdwg.mxu0
        %2136 = vmatpush.msra.mxu0 0.0
        %2137 = vmatpush.msra.mxu0 0.0
        %2138 = vmatpush.msra.mxu0 0.0
        %2139 = vmatpush.msra.mxu0 0.0
        %2140 = vmatpush.msra.mxu0 0.0
        %2141 = vmatpush.msra.mxu0 0.0
        %2142 = vmatpush.msra.mxu0 0.0
        %2143 = vmatpush.msra.mxu0 0.0
        %2144 = vmatpush.msra.mxu0 0.0
        %2145 = vmatpush.msra.mxu0 0.0
        %2146 = vmatpush.msra.mxu0 0.0
        %2147 = vmatpush.msra.mxu0 0.0
        %2148 = vmatpush.msra.mxu0 0.0
        %2149 = vmatpush.msra.mxu0 0.0
        %2150 = vmatpush.msra.mxu0 0.0
        %2151 = vmatpush.msra.mxu0 %v2044
        %2152 = vmatmul.f32.gmra.mxu0 %v2054
        %v2153 = vpop.f32.mrf.mxu0
        %v2154 = vadd.f32 0.0, %v2153
        %2155 = vdwg.mxu0
        %2156 = vmatpush.msra.mxu0 0.0
        %2157 = vmatpush.msra.mxu0 0.0
        %2158 = vmatpush.msra.mxu0 0.0
        %2159 = vmatpush.msra.mxu0 0.0
        %2160 = vmatpush.msra.mxu0 0.0
        %2161 = vmatpush.msra.mxu0 0.0
        %2162 = vmatpush.msra.mxu0 0.0
        %2163 = vmatpush.msra.mxu0 0.0
        %2164 = vmatpush.msra.mxu0 0.0
        %2165 = vmatpush.msra.mxu0 0.0
        %2166 = vmatpush.msra.mxu0 0.0
        %2167 = vmatpush.msra.mxu0 0.0
        %2168 = vmatpush.msra.mxu0 0.0
        %2169 = vmatpush.msra.mxu0 0.0
        %2170 = vmatpush.msra.mxu0 0.0
        %2171 = vmatpush.msra.mxu0 %v2045
        %2172 = vmatmul.f32.gmra.mxu0 %v2054
        %v2173 = vpop.f32.mrf.mxu0
        %v2174 = vadd.f32 0.0, %v2173
        %2175 = vdwg.mxu0
        %2176 = vmatpush.msra.mxu0 0.0
        %2177 = vmatpush.msra.mxu0 0.0
        %2178 = vmatpush.msra.mxu0 0.0
        %2179 = vmatpush.msra.mxu0 0.0
        %2180 = vmatpush.msra.mxu0 0.0
        %2181 = vmatpush.msra.mxu0 0.0
        %2182 = vmatpush.msra.mxu0 0.0
        %2183 = vmatpush.msra.mxu0 0.0
        %2184 = vmatpush.msra.mxu0 0.0
        %2185 = vmatpush.msra.mxu0 0.0
        %2186 = vmatpush.msra.mxu0 0.0
        %2187 = vmatpush.msra.mxu0 0.0
        %2188 = vmatpush.msra.mxu0 0.0
        %2189 = vmatpush.msra.mxu0 0.0
        %2190 = vmatpush.msra.mxu0 0.0
        %2191 = vmatpush.msra.mxu0 %v2038
        %2192 = vmatmul.f32.gmra.mxu0 %v2054
        %v2193 = vpop.f32.mrf.mxu0
        %v2194 = vadd.f32 0.0, %v2193
        %2195 = vdwg.mxu0
        %v2196 = vadd.f32 %v2016, %v2074
        %v2197 = vadd.f32 %v2017, %v2094
        %v2198 = vadd.f32 %v2018, %v2114
        %v2199 = vadd.f32 %v2019, %v2134
        %v2200 = vadd.f32 %v2020, %v2154
        %v2201 = vadd.f32 %v2021, %v2174
        %v2202 = vadd.f32 %v2022, %v2194
        %s2203 = scalar_lea.vmem %s1, 88
        %v2204 = vld [vmem:[%s2203] sm:$0xff]
        %2205 = vrot.lane.b32.xlu0 %v251, 26
        %v2206 = vpop.permute.xlu0 %2205
        %2207 = vrot.lane.b32.xlu0 %v252, 26
        %v2208 = vpop.permute.xlu0 %2207
        %2209 = vrot.lane.b32.xlu0 %v253, 26
        %v2210 = vpop.permute.xlu0 %2209
        %2211 = vrot.lane.b32.xlu0 %v254, 26
        %v2212 = vpop.permute.xlu0 %2211
        %2213 = vrot.lane.b32.xlu0 %v255, 26
        %v2214 = vpop.permute.xlu0 %2213
        %2215 = vrot.lane.b32.xlu0 %v256, 26
        %v2216 = vpop.permute.xlu0 %2215
        %2217 = vrot.lane.b32.xlu0 %v257, 26
        %v2218 = vpop.permute.xlu0 %2217
        %vm2219 = vcmask 211968
        %v2220 = vsel %vm2219, %v2206, %v2208
        %v2221 = vsel %vm2219, %v2208, %v2210
        %v2222 = vsel %vm2219, %v2210, %v2212
        %v2223 = vsel %vm2219, %v2212, %v2214
        %v2224 = vsel %vm2219, %v2214, %v2216
        %v2225 = vsel %vm2219, %v2216, %v2218
        %v2234 = vsel %vm296, %v2204, 0
        %2236 = vmatpush.msra.mxu0 0.0
        %2237 = vmatpush.msra.mxu0 0.0
        %2238 = vmatpush.msra.mxu0 0.0
        %2239 = vmatpush.msra.mxu0 0.0
        %2240 = vmatpush.msra.mxu0 0.0
        %2241 = vmatpush.msra.mxu0 0.0
        %2242 = vmatpush.msra.mxu0 0.0
        %2243 = vmatpush.msra.mxu0 0.0
        %2244 = vmatpush.msra.mxu0 0.0
        %2245 = vmatpush.msra.mxu0 0.0
        %2246 = vmatpush.msra.mxu0 0.0
        %2247 = vmatpush.msra.mxu0 0.0
        %2248 = vmatpush.msra.mxu0 0.0
        %2249 = vmatpush.msra.mxu0 0.0
        %2250 = vmatpush.msra.mxu0 0.0
        %2251 = vmatpush.msra.mxu0 %v2220
        %2252 = vmatmul.f32.gmra.mxu0 %v2234
        %v2253 = vpop.f32.mrf.mxu0
        %v2254 = vadd.f32 0.0, %v2253
        %2255 = vdwg.mxu0
        %2256 = vmatpush.msra.mxu0 0.0
        %2257 = vmatpush.msra.mxu0 0.0
        %2258 = vmatpush.msra.mxu0 0.0
        %2259 = vmatpush.msra.mxu0 0.0
        %2260 = vmatpush.msra.mxu0 0.0
        %2261 = vmatpush.msra.mxu0 0.0
        %2262 = vmatpush.msra.mxu0 0.0
        %2263 = vmatpush.msra.mxu0 0.0
        %2264 = vmatpush.msra.mxu0 0.0
        %2265 = vmatpush.msra.mxu0 0.0
        %2266 = vmatpush.msra.mxu0 0.0
        %2267 = vmatpush.msra.mxu0 0.0
        %2268 = vmatpush.msra.mxu0 0.0
        %2269 = vmatpush.msra.mxu0 0.0
        %2270 = vmatpush.msra.mxu0 0.0
        %2271 = vmatpush.msra.mxu0 %v2221
        %2272 = vmatmul.f32.gmra.mxu0 %v2234
        %v2273 = vpop.f32.mrf.mxu0
        %v2274 = vadd.f32 0.0, %v2273
        %2275 = vdwg.mxu0
        %2276 = vmatpush.msra.mxu0 0.0
        %2277 = vmatpush.msra.mxu0 0.0
        %2278 = vmatpush.msra.mxu0 0.0
        %2279 = vmatpush.msra.mxu0 0.0
        %2280 = vmatpush.msra.mxu0 0.0
        %2281 = vmatpush.msra.mxu0 0.0
        %2282 = vmatpush.msra.mxu0 0.0
        %2283 = vmatpush.msra.mxu0 0.0
        %2284 = vmatpush.msra.mxu0 0.0
        %2285 = vmatpush.msra.mxu0 0.0
        %2286 = vmatpush.msra.mxu0 0.0
        %2287 = vmatpush.msra.mxu0 0.0
        %2288 = vmatpush.msra.mxu0 0.0
        %2289 = vmatpush.msra.mxu0 0.0
        %2290 = vmatpush.msra.mxu0 0.0
        %2291 = vmatpush.msra.mxu0 %v2222
        %2292 = vmatmul.f32.gmra.mxu0 %v2234
        %v2293 = vpop.f32.mrf.mxu0
        %v2294 = vadd.f32 0.0, %v2293
        %2295 = vdwg.mxu0
        %2296 = vmatpush.msra.mxu0 0.0
        %2297 = vmatpush.msra.mxu0 0.0
        %2298 = vmatpush.msra.mxu0 0.0
        %2299 = vmatpush.msra.mxu0 0.0
        %2300 = vmatpush.msra.mxu0 0.0
        %2301 = vmatpush.msra.mxu0 0.0
        %2302 = vmatpush.msra.mxu0 0.0
        %2303 = vmatpush.msra.mxu0 0.0
        %2304 = vmatpush.msra.mxu0 0.0
        %2305 = vmatpush.msra.mxu0 0.0
        %2306 = vmatpush.msra.mxu0 0.0
        %2307 = vmatpush.msra.mxu0 0.0
        %2308 = vmatpush.msra.mxu0 0.0
        %2309 = vmatpush.msra.mxu0 0.0
        %2310 = vmatpush.msra.mxu0 0.0
        %2311 = vmatpush.msra.mxu0 %v2223
        %2312 = vmatmul.f32.gmra.mxu0 %v2234
        %v2313 = vpop.f32.mrf.mxu0
        %v2314 = vadd.f32 0.0, %v2313
        %2315 = vdwg.mxu0
        %2316 = vmatpush.msra.mxu0 0.0
        %2317 = vmatpush.msra.mxu0 0.0
        %2318 = vmatpush.msra.mxu0 0.0
        %2319 = vmatpush.msra.mxu0 0.0
        %2320 = vmatpush.msra.mxu0 0.0
        %2321 = vmatpush.msra.mxu0 0.0
        %2322 = vmatpush.msra.mxu0 0.0
        %2323 = vmatpush.msra.mxu0 0.0
        %2324 = vmatpush.msra.mxu0 0.0
        %2325 = vmatpush.msra.mxu0 0.0
        %2326 = vmatpush.msra.mxu0 0.0
        %2327 = vmatpush.msra.mxu0 0.0
        %2328 = vmatpush.msra.mxu0 0.0
        %2329 = vmatpush.msra.mxu0 0.0
        %2330 = vmatpush.msra.mxu0 0.0
        %2331 = vmatpush.msra.mxu0 %v2224
        %2332 = vmatmul.f32.gmra.mxu0 %v2234
        %v2333 = vpop.f32.mrf.mxu0
        %v2334 = vadd.f32 0.0, %v2333
        %2335 = vdwg.mxu0
        %2336 = vmatpush.msra.mxu0 0.0
        %2337 = vmatpush.msra.mxu0 0.0
        %2338 = vmatpush.msra.mxu0 0.0
        %2339 = vmatpush.msra.mxu0 0.0
        %2340 = vmatpush.msra.mxu0 0.0
        %2341 = vmatpush.msra.mxu0 0.0
        %2342 = vmatpush.msra.mxu0 0.0
        %2343 = vmatpush.msra.mxu0 0.0
        %2344 = vmatpush.msra.mxu0 0.0
        %2345 = vmatpush.msra.mxu0 0.0
        %2346 = vmatpush.msra.mxu0 0.0
        %2347 = vmatpush.msra.mxu0 0.0
        %2348 = vmatpush.msra.mxu0 0.0
        %2349 = vmatpush.msra.mxu0 0.0
        %2350 = vmatpush.msra.mxu0 0.0
        %2351 = vmatpush.msra.mxu0 %v2225
        %2352 = vmatmul.f32.gmra.mxu0 %v2234
        %v2353 = vpop.f32.mrf.mxu0
        %v2354 = vadd.f32 0.0, %v2353
        %2355 = vdwg.mxu0
        %2356 = vmatpush.msra.mxu0 0.0
        %2357 = vmatpush.msra.mxu0 0.0
        %2358 = vmatpush.msra.mxu0 0.0
        %2359 = vmatpush.msra.mxu0 0.0
        %2360 = vmatpush.msra.mxu0 0.0
        %2361 = vmatpush.msra.mxu0 0.0
        %2362 = vmatpush.msra.mxu0 0.0
        %2363 = vmatpush.msra.mxu0 0.0
        %2364 = vmatpush.msra.mxu0 0.0
        %2365 = vmatpush.msra.mxu0 0.0
        %2366 = vmatpush.msra.mxu0 0.0
        %2367 = vmatpush.msra.mxu0 0.0
        %2368 = vmatpush.msra.mxu0 0.0
        %2369 = vmatpush.msra.mxu0 0.0
        %2370 = vmatpush.msra.mxu0 0.0
        %2371 = vmatpush.msra.mxu0 %v2218
        %2372 = vmatmul.f32.gmra.mxu0 %v2234
        %v2373 = vpop.f32.mrf.mxu0
        %v2374 = vadd.f32 0.0, %v2373
        %2375 = vdwg.mxu0
        %v2376 = vadd.f32 %v2196, %v2254
        %v2377 = vadd.f32 %v2197, %v2274
        %v2378 = vadd.f32 %v2198, %v2294
        %v2379 = vadd.f32 %v2199, %v2314
        %v2380 = vadd.f32 %v2200, %v2334
        %v2381 = vadd.f32 %v2201, %v2354
        %v2382 = vadd.f32 %v2202, %v2374
        %s2383 = scalar_lea.vmem %s1, 96
        %v2384 = vld [vmem:[%s2383] sm:$0xff]
        %2385 = vrot.lane.b32.xlu0 %v251, 18
        %v2386 = vpop.permute.xlu0 %2385
        %2387 = vrot.lane.b32.xlu0 %v252, 18
        %v2388 = vpop.permute.xlu0 %2387
        %2389 = vrot.lane.b32.xlu0 %v253, 18
        %v2390 = vpop.permute.xlu0 %2389
        %2391 = vrot.lane.b32.xlu0 %v254, 18
        %v2392 = vpop.permute.xlu0 %2391
        %2393 = vrot.lane.b32.xlu0 %v255, 18
        %v2394 = vpop.permute.xlu0 %2393
        %2395 = vrot.lane.b32.xlu0 %v256, 18
        %v2396 = vpop.permute.xlu0 %2395
        %2397 = vrot.lane.b32.xlu0 %v257, 18
        %v2398 = vpop.permute.xlu0 %2397
        %vm2399 = vcmask 146432
        %v2400 = vsel %vm2399, %v2386, %v2388
        %v2401 = vsel %vm2399, %v2388, %v2390
        %v2402 = vsel %vm2399, %v2390, %v2392
        %v2403 = vsel %vm2399, %v2392, %v2394
        %v2404 = vsel %vm2399, %v2394, %v2396
        %v2405 = vsel %vm2399, %v2396, %v2398
        %v2414 = vsel %vm296, %v2384, 0
        %2416 = vmatpush.msra.mxu0 0.0
        %2417 = vmatpush.msra.mxu0 0.0
        %2418 = vmatpush.msra.mxu0 0.0
        %2419 = vmatpush.msra.mxu0 0.0
        %2420 = vmatpush.msra.mxu0 0.0
        %2421 = vmatpush.msra.mxu0 0.0
        %2422 = vmatpush.msra.mxu0 0.0
        %2423 = vmatpush.msra.mxu0 0.0
        %2424 = vmatpush.msra.mxu0 0.0
        %2425 = vmatpush.msra.mxu0 0.0
        %2426 = vmatpush.msra.mxu0 0.0
        %2427 = vmatpush.msra.mxu0 0.0
        %2428 = vmatpush.msra.mxu0 0.0
        %2429 = vmatpush.msra.mxu0 0.0
        %2430 = vmatpush.msra.mxu0 0.0
        %2431 = vmatpush.msra.mxu0 %v2400
        %2432 = vmatmul.f32.gmra.mxu0 %v2414
        %v2433 = vpop.f32.mrf.mxu0
        %v2434 = vadd.f32 0.0, %v2433
        %2435 = vdwg.mxu0
        %2436 = vmatpush.msra.mxu0 0.0
        %2437 = vmatpush.msra.mxu0 0.0
        %2438 = vmatpush.msra.mxu0 0.0
        %2439 = vmatpush.msra.mxu0 0.0
        %2440 = vmatpush.msra.mxu0 0.0
        %2441 = vmatpush.msra.mxu0 0.0
        %2442 = vmatpush.msra.mxu0 0.0
        %2443 = vmatpush.msra.mxu0 0.0
        %2444 = vmatpush.msra.mxu0 0.0
        %2445 = vmatpush.msra.mxu0 0.0
        %2446 = vmatpush.msra.mxu0 0.0
        %2447 = vmatpush.msra.mxu0 0.0
        %2448 = vmatpush.msra.mxu0 0.0
        %2449 = vmatpush.msra.mxu0 0.0
        %2450 = vmatpush.msra.mxu0 0.0
        %2451 = vmatpush.msra.mxu0 %v2401
        %2452 = vmatmul.f32.gmra.mxu0 %v2414
        %v2453 = vpop.f32.mrf.mxu0
        %v2454 = vadd.f32 0.0, %v2453
        %2455 = vdwg.mxu0
        %2456 = vmatpush.msra.mxu0 0.0
        %2457 = vmatpush.msra.mxu0 0.0
        %2458 = vmatpush.msra.mxu0 0.0
        %2459 = vmatpush.msra.mxu0 0.0
        %2460 = vmatpush.msra.mxu0 0.0
        %2461 = vmatpush.msra.mxu0 0.0
        %2462 = vmatpush.msra.mxu0 0.0
        %2463 = vmatpush.msra.mxu0 0.0
        %2464 = vmatpush.msra.mxu0 0.0
        %2465 = vmatpush.msra.mxu0 0.0
        %2466 = vmatpush.msra.mxu0 0.0
        %2467 = vmatpush.msra.mxu0 0.0
        %2468 = vmatpush.msra.mxu0 0.0
        %2469 = vmatpush.msra.mxu0 0.0
        %2470 = vmatpush.msra.mxu0 0.0
        %2471 = vmatpush.msra.mxu0 %v2402
        %2472 = vmatmul.f32.gmra.mxu0 %v2414
        %v2473 = vpop.f32.mrf.mxu0
        %v2474 = vadd.f32 0.0, %v2473
        %2475 = vdwg.mxu0
        %2476 = vmatpush.msra.mxu0 0.0
        %2477 = vmatpush.msra.mxu0 0.0
        %2478 = vmatpush.msra.mxu0 0.0
        %2479 = vmatpush.msra.mxu0 0.0
        %2480 = vmatpush.msra.mxu0 0.0
        %2481 = vmatpush.msra.mxu0 0.0
        %2482 = vmatpush.msra.mxu0 0.0
        %2483 = vmatpush.msra.mxu0 0.0
        %2484 = vmatpush.msra.mxu0 0.0
        %2485 = vmatpush.msra.mxu0 0.0
        %2486 = vmatpush.msra.mxu0 0.0
        %2487 = vmatpush.msra.mxu0 0.0
        %2488 = vmatpush.msra.mxu0 0.0
        %2489 = vmatpush.msra.mxu0 0.0
        %2490 = vmatpush.msra.mxu0 0.0
        %2491 = vmatpush.msra.mxu0 %v2403
        %2492 = vmatmul.f32.gmra.mxu0 %v2414
        %v2493 = vpop.f32.mrf.mxu0
        %v2494 = vadd.f32 0.0, %v2493
        %2495 = vdwg.mxu0
        %2496 = vmatpush.msra.mxu0 0.0
        %2497 = vmatpush.msra.mxu0 0.0
        %2498 = vmatpush.msra.mxu0 0.0
        %2499 = vmatpush.msra.mxu0 0.0
        %2500 = vmatpush.msra.mxu0 0.0
        %2501 = vmatpush.msra.mxu0 0.0
        %2502 = vmatpush.msra.mxu0 0.0
        %2503 = vmatpush.msra.mxu0 0.0
        %2504 = vmatpush.msra.mxu0 0.0
        %2505 = vmatpush.msra.mxu0 0.0
        %2506 = vmatpush.msra.mxu0 0.0
        %2507 = vmatpush.msra.mxu0 0.0
        %2508 = vmatpush.msra.mxu0 0.0
        %2509 = vmatpush.msra.mxu0 0.0
        %2510 = vmatpush.msra.mxu0 0.0
        %2511 = vmatpush.msra.mxu0 %v2404
        %2512 = vmatmul.f32.gmra.mxu0 %v2414
        %v2513 = vpop.f32.mrf.mxu0
        %v2514 = vadd.f32 0.0, %v2513
        %2515 = vdwg.mxu0
        %2516 = vmatpush.msra.mxu0 0.0
        %2517 = vmatpush.msra.mxu0 0.0
        %2518 = vmatpush.msra.mxu0 0.0
        %2519 = vmatpush.msra.mxu0 0.0
        %2520 = vmatpush.msra.mxu0 0.0
        %2521 = vmatpush.msra.mxu0 0.0
        %2522 = vmatpush.msra.mxu0 0.0
        %2523 = vmatpush.msra.mxu0 0.0
        %2524 = vmatpush.msra.mxu0 0.0
        %2525 = vmatpush.msra.mxu0 0.0
        %2526 = vmatpush.msra.mxu0 0.0
        %2527 = vmatpush.msra.mxu0 0.0
        %2528 = vmatpush.msra.mxu0 0.0
        %2529 = vmatpush.msra.mxu0 0.0
        %2530 = vmatpush.msra.mxu0 0.0
        %2531 = vmatpush.msra.mxu0 %v2405
        %2532 = vmatmul.f32.gmra.mxu0 %v2414
        %v2533 = vpop.f32.mrf.mxu0
        %v2534 = vadd.f32 0.0, %v2533
        %2535 = vdwg.mxu0
        %2536 = vmatpush.msra.mxu0 0.0
        %2537 = vmatpush.msra.mxu0 0.0
        %2538 = vmatpush.msra.mxu0 0.0
        %2539 = vmatpush.msra.mxu0 0.0
        %2540 = vmatpush.msra.mxu0 0.0
        %2541 = vmatpush.msra.mxu0 0.0
        %2542 = vmatpush.msra.mxu0 0.0
        %2543 = vmatpush.msra.mxu0 0.0
        %2544 = vmatpush.msra.mxu0 0.0
        %2545 = vmatpush.msra.mxu0 0.0
        %2546 = vmatpush.msra.mxu0 0.0
        %2547 = vmatpush.msra.mxu0 0.0
        %2548 = vmatpush.msra.mxu0 0.0
        %2549 = vmatpush.msra.mxu0 0.0
        %2550 = vmatpush.msra.mxu0 0.0
        %2551 = vmatpush.msra.mxu0 %v2398
        %2552 = vmatmul.f32.gmra.mxu0 %v2414
        %v2553 = vpop.f32.mrf.mxu0
        %v2554 = vadd.f32 0.0, %v2553
        %2555 = vdwg.mxu0
        %v2556 = vadd.f32 %v2376, %v2434
        %v2557 = vadd.f32 %v2377, %v2454
        %v2558 = vadd.f32 %v2378, %v2474
        %v2559 = vadd.f32 %v2379, %v2494
        %v2560 = vadd.f32 %v2380, %v2514
        %v2561 = vadd.f32 %v2381, %v2534
        %v2562 = vadd.f32 %v2382, %v2554
        %s2563 = scalar_lea.vmem %s1, 104
        %v2564 = vld [vmem:[%s2563] sm:$0xff]
        %2565 = vrot.lane.b32.xlu0 %v251, 17
        %v2566 = vpop.permute.xlu0 %2565
        %2567 = vrot.lane.b32.xlu0 %v252, 17
        %v2568 = vpop.permute.xlu0 %2567
        %2569 = vrot.lane.b32.xlu0 %v253, 17
        %v2570 = vpop.permute.xlu0 %2569
        %2571 = vrot.lane.b32.xlu0 %v254, 17
        %v2572 = vpop.permute.xlu0 %2571
        %2573 = vrot.lane.b32.xlu0 %v255, 17
        %v2574 = vpop.permute.xlu0 %2573
        %2575 = vrot.lane.b32.xlu0 %v256, 17
        %v2576 = vpop.permute.xlu0 %2575
        %2577 = vrot.lane.b32.xlu0 %v257, 17
        %v2578 = vpop.permute.xlu0 %2577
        %vm2579 = vcmask 138240
        %v2580 = vsel %vm2579, %v2566, %v2568
        %v2581 = vsel %vm2579, %v2568, %v2570
        %v2582 = vsel %vm2579, %v2570, %v2572
        %v2583 = vsel %vm2579, %v2572, %v2574
        %v2584 = vsel %vm2579, %v2574, %v2576
        %v2585 = vsel %vm2579, %v2576, %v2578
        %v2594 = vsel %vm296, %v2564, 0
        %2596 = vmatpush.msra.mxu0 0.0
        %2597 = vmatpush.msra.mxu0 0.0
        %2598 = vmatpush.msra.mxu0 0.0
        %2599 = vmatpush.msra.mxu0 0.0
        %2600 = vmatpush.msra.mxu0 0.0
        %2601 = vmatpush.msra.mxu0 0.0
        %2602 = vmatpush.msra.mxu0 0.0
        %2603 = vmatpush.msra.mxu0 0.0
        %2604 = vmatpush.msra.mxu0 0.0
        %2605 = vmatpush.msra.mxu0 0.0
        %2606 = vmatpush.msra.mxu0 0.0
        %2607 = vmatpush.msra.mxu0 0.0
        %2608 = vmatpush.msra.mxu0 0.0
        %2609 = vmatpush.msra.mxu0 0.0
        %2610 = vmatpush.msra.mxu0 0.0
        %2611 = vmatpush.msra.mxu0 %v2580
        %2612 = vmatmul.f32.gmra.mxu0 %v2594
        %v2613 = vpop.f32.mrf.mxu0
        %v2614 = vadd.f32 0.0, %v2613
        %2615 = vdwg.mxu0
        %2616 = vmatpush.msra.mxu0 0.0
        %2617 = vmatpush.msra.mxu0 0.0
        %2618 = vmatpush.msra.mxu0 0.0
        %2619 = vmatpush.msra.mxu0 0.0
        %2620 = vmatpush.msra.mxu0 0.0
        %2621 = vmatpush.msra.mxu0 0.0
        %2622 = vmatpush.msra.mxu0 0.0
        %2623 = vmatpush.msra.mxu0 0.0
        %2624 = vmatpush.msra.mxu0 0.0
        %2625 = vmatpush.msra.mxu0 0.0
        %2626 = vmatpush.msra.mxu0 0.0
        %2627 = vmatpush.msra.mxu0 0.0
        %2628 = vmatpush.msra.mxu0 0.0
        %2629 = vmatpush.msra.mxu0 0.0
        %2630 = vmatpush.msra.mxu0 0.0
        %2631 = vmatpush.msra.mxu0 %v2581
        %2632 = vmatmul.f32.gmra.mxu0 %v2594
        %v2633 = vpop.f32.mrf.mxu0
        %v2634 = vadd.f32 0.0, %v2633
        %2635 = vdwg.mxu0
        %2636 = vmatpush.msra.mxu0 0.0
        %2637 = vmatpush.msra.mxu0 0.0
        %2638 = vmatpush.msra.mxu0 0.0
        %2639 = vmatpush.msra.mxu0 0.0
        %2640 = vmatpush.msra.mxu0 0.0
        %2641 = vmatpush.msra.mxu0 0.0
        %2642 = vmatpush.msra.mxu0 0.0
        %2643 = vmatpush.msra.mxu0 0.0
        %2644 = vmatpush.msra.mxu0 0.0
        %2645 = vmatpush.msra.mxu0 0.0
        %2646 = vmatpush.msra.mxu0 0.0
        %2647 = vmatpush.msra.mxu0 0.0
        %2648 = vmatpush.msra.mxu0 0.0
        %2649 = vmatpush.msra.mxu0 0.0
        %2650 = vmatpush.msra.mxu0 0.0
        %2651 = vmatpush.msra.mxu0 %v2582
        %2652 = vmatmul.f32.gmra.mxu0 %v2594
        %v2653 = vpop.f32.mrf.mxu0
        %v2654 = vadd.f32 0.0, %v2653
        %2655 = vdwg.mxu0
        %2656 = vmatpush.msra.mxu0 0.0
        %2657 = vmatpush.msra.mxu0 0.0
        %2658 = vmatpush.msra.mxu0 0.0
        %2659 = vmatpush.msra.mxu0 0.0
        %2660 = vmatpush.msra.mxu0 0.0
        %2661 = vmatpush.msra.mxu0 0.0
        %2662 = vmatpush.msra.mxu0 0.0
        %2663 = vmatpush.msra.mxu0 0.0
        %2664 = vmatpush.msra.mxu0 0.0
        %2665 = vmatpush.msra.mxu0 0.0
        %2666 = vmatpush.msra.mxu0 0.0
        %2667 = vmatpush.msra.mxu0 0.0
        %2668 = vmatpush.msra.mxu0 0.0
        %2669 = vmatpush.msra.mxu0 0.0
        %2670 = vmatpush.msra.mxu0 0.0
        %2671 = vmatpush.msra.mxu0 %v2583
        %2672 = vmatmul.f32.gmra.mxu0 %v2594
        %v2673 = vpop.f32.mrf.mxu0
        %v2674 = vadd.f32 0.0, %v2673
        %2675 = vdwg.mxu0
        %2676 = vmatpush.msra.mxu0 0.0
        %2677 = vmatpush.msra.mxu0 0.0
        %2678 = vmatpush.msra.mxu0 0.0
        %2679 = vmatpush.msra.mxu0 0.0
        %2680 = vmatpush.msra.mxu0 0.0
        %2681 = vmatpush.msra.mxu0 0.0
        %2682 = vmatpush.msra.mxu0 0.0
        %2683 = vmatpush.msra.mxu0 0.0
        %2684 = vmatpush.msra.mxu0 0.0
        %2685 = vmatpush.msra.mxu0 0.0
        %2686 = vmatpush.msra.mxu0 0.0
        %2687 = vmatpush.msra.mxu0 0.0
        %2688 = vmatpush.msra.mxu0 0.0
        %2689 = vmatpush.msra.mxu0 0.0
        %2690 = vmatpush.msra.mxu0 0.0
        %2691 = vmatpush.msra.mxu0 %v2584
        %2692 = vmatmul.f32.gmra.mxu0 %v2594
        %v2693 = vpop.f32.mrf.mxu0
        %v2694 = vadd.f32 0.0, %v2693
        %2695 = vdwg.mxu0
        %2696 = vmatpush.msra.mxu0 0.0
        %2697 = vmatpush.msra.mxu0 0.0
        %2698 = vmatpush.msra.mxu0 0.0
        %2699 = vmatpush.msra.mxu0 0.0
        %2700 = vmatpush.msra.mxu0 0.0
        %2701 = vmatpush.msra.mxu0 0.0
        %2702 = vmatpush.msra.mxu0 0.0
        %2703 = vmatpush.msra.mxu0 0.0
        %2704 = vmatpush.msra.mxu0 0.0
        %2705 = vmatpush.msra.mxu0 0.0
        %2706 = vmatpush.msra.mxu0 0.0
        %2707 = vmatpush.msra.mxu0 0.0
        %2708 = vmatpush.msra.mxu0 0.0
        %2709 = vmatpush.msra.mxu0 0.0
        %2710 = vmatpush.msra.mxu0 0.0
        %2711 = vmatpush.msra.mxu0 %v2585
        %2712 = vmatmul.f32.gmra.mxu0 %v2594
        %v2713 = vpop.f32.mrf.mxu0
        %v2714 = vadd.f32 0.0, %v2713
        %2715 = vdwg.mxu0
        %2716 = vmatpush.msra.mxu0 0.0
        %2717 = vmatpush.msra.mxu0 0.0
        %2718 = vmatpush.msra.mxu0 0.0
        %2719 = vmatpush.msra.mxu0 0.0
        %2720 = vmatpush.msra.mxu0 0.0
        %2721 = vmatpush.msra.mxu0 0.0
        %2722 = vmatpush.msra.mxu0 0.0
        %2723 = vmatpush.msra.mxu0 0.0
        %2724 = vmatpush.msra.mxu0 0.0
        %2725 = vmatpush.msra.mxu0 0.0
        %2726 = vmatpush.msra.mxu0 0.0
        %2727 = vmatpush.msra.mxu0 0.0
        %2728 = vmatpush.msra.mxu0 0.0
        %2729 = vmatpush.msra.mxu0 0.0
        %2730 = vmatpush.msra.mxu0 0.0
        %2731 = vmatpush.msra.mxu0 %v2578
        %2732 = vmatmul.f32.gmra.mxu0 %v2594
        %v2733 = vpop.f32.mrf.mxu0
        %v2734 = vadd.f32 0.0, %v2733
        %2735 = vdwg.mxu0
        %v2736 = vadd.f32 %v2556, %v2614
        %v2737 = vadd.f32 %v2557, %v2634
        %v2738 = vadd.f32 %v2558, %v2654
        %v2739 = vadd.f32 %v2559, %v2674
        %v2740 = vadd.f32 %v2560, %v2694
        %v2741 = vadd.f32 %v2561, %v2714
        %v2742 = vadd.f32 %v2562, %v2734
        %s2743 = scalar_lea.vmem %s1, 112
        %v2744 = vld [vmem:[%s2743] sm:$0xff]
        %2745 = vrot.lane.b32.xlu0 %v251, 16
        %v2746 = vpop.permute.xlu0 %2745
        %2747 = vrot.lane.b32.xlu0 %v252, 16
        %v2748 = vpop.permute.xlu0 %2747
        %2749 = vrot.lane.b32.xlu0 %v253, 16
        %v2750 = vpop.permute.xlu0 %2749
        %2751 = vrot.lane.b32.xlu0 %v254, 16
        %v2752 = vpop.permute.xlu0 %2751
        %2753 = vrot.lane.b32.xlu0 %v255, 16
        %v2754 = vpop.permute.xlu0 %2753
        %2755 = vrot.lane.b32.xlu0 %v256, 16
        %v2756 = vpop.permute.xlu0 %2755
        %2757 = vrot.lane.b32.xlu0 %v257, 16
        %v2758 = vpop.permute.xlu0 %2757
        %vm2759 = vcmask 130048
        %v2760 = vsel %vm2759, %v2746, %v2748
        %v2761 = vsel %vm2759, %v2748, %v2750
        %v2762 = vsel %vm2759, %v2750, %v2752
        %v2763 = vsel %vm2759, %v2752, %v2754
        %v2764 = vsel %vm2759, %v2754, %v2756
        %v2765 = vsel %vm2759, %v2756, %v2758
        %v2774 = vsel %vm296, %v2744, 0
        %2776 = vmatpush.msra.mxu0 0.0
        %2777 = vmatpush.msra.mxu0 0.0
        %2778 = vmatpush.msra.mxu0 0.0
        %2779 = vmatpush.msra.mxu0 0.0
        %2780 = vmatpush.msra.mxu0 0.0
        %2781 = vmatpush.msra.mxu0 0.0
        %2782 = vmatpush.msra.mxu0 0.0
        %2783 = vmatpush.msra.mxu0 0.0
        %2784 = vmatpush.msra.mxu0 0.0
        %2785 = vmatpush.msra.mxu0 0.0
        %2786 = vmatpush.msra.mxu0 0.0
        %2787 = vmatpush.msra.mxu0 0.0
        %2788 = vmatpush.msra.mxu0 0.0
        %2789 = vmatpush.msra.mxu0 0.0
        %2790 = vmatpush.msra.mxu0 0.0
        %2791 = vmatpush.msra.mxu0 %v2760
        %2792 = vmatmul.f32.gmra.mxu0 %v2774
        %v2793 = vpop.f32.mrf.mxu0
        %v2794 = vadd.f32 0.0, %v2793
        %2795 = vdwg.mxu0
        %2796 = vmatpush.msra.mxu0 0.0
        %2797 = vmatpush.msra.mxu0 0.0
        %2798 = vmatpush.msra.mxu0 0.0
        %2799 = vmatpush.msra.mxu0 0.0
        %2800 = vmatpush.msra.mxu0 0.0
        %2801 = vmatpush.msra.mxu0 0.0
        %2802 = vmatpush.msra.mxu0 0.0
        %2803 = vmatpush.msra.mxu0 0.0
        %2804 = vmatpush.msra.mxu0 0.0
        %2805 = vmatpush.msra.mxu0 0.0
        %2806 = vmatpush.msra.mxu0 0.0
        %2807 = vmatpush.msra.mxu0 0.0
        %2808 = vmatpush.msra.mxu0 0.0
        %2809 = vmatpush.msra.mxu0 0.0
        %2810 = vmatpush.msra.mxu0 0.0
        %2811 = vmatpush.msra.mxu0 %v2761
        %2812 = vmatmul.f32.gmra.mxu0 %v2774
        %v2813 = vpop.f32.mrf.mxu0
        %v2814 = vadd.f32 0.0, %v2813
        %2815 = vdwg.mxu0
        %2816 = vmatpush.msra.mxu0 0.0
        %2817 = vmatpush.msra.mxu0 0.0
        %2818 = vmatpush.msra.mxu0 0.0
        %2819 = vmatpush.msra.mxu0 0.0
        %2820 = vmatpush.msra.mxu0 0.0
        %2821 = vmatpush.msra.mxu0 0.0
        %2822 = vmatpush.msra.mxu0 0.0
        %2823 = vmatpush.msra.mxu0 0.0
        %2824 = vmatpush.msra.mxu0 0.0
        %2825 = vmatpush.msra.mxu0 0.0
        %2826 = vmatpush.msra.mxu0 0.0
        %2827 = vmatpush.msra.mxu0 0.0
        %2828 = vmatpush.msra.mxu0 0.0
        %2829 = vmatpush.msra.mxu0 0.0
        %2830 = vmatpush.msra.mxu0 0.0
        %2831 = vmatpush.msra.mxu0 %v2762
        %2832 = vmatmul.f32.gmra.mxu0 %v2774
        %v2833 = vpop.f32.mrf.mxu0
        %v2834 = vadd.f32 0.0, %v2833
        %2835 = vdwg.mxu0
        %2836 = vmatpush.msra.mxu0 0.0
        %2837 = vmatpush.msra.mxu0 0.0
        %2838 = vmatpush.msra.mxu0 0.0
        %2839 = vmatpush.msra.mxu0 0.0
        %2840 = vmatpush.msra.mxu0 0.0
        %2841 = vmatpush.msra.mxu0 0.0
        %2842 = vmatpush.msra.mxu0 0.0
        %2843 = vmatpush.msra.mxu0 0.0
        %2844 = vmatpush.msra.mxu0 0.0
        %2845 = vmatpush.msra.mxu0 0.0
        %2846 = vmatpush.msra.mxu0 0.0
        %2847 = vmatpush.msra.mxu0 0.0
        %2848 = vmatpush.msra.mxu0 0.0
        %2849 = vmatpush.msra.mxu0 0.0
        %2850 = vmatpush.msra.mxu0 0.0
        %2851 = vmatpush.msra.mxu0 %v2763
        %2852 = vmatmul.f32.gmra.mxu0 %v2774
        %v2853 = vpop.f32.mrf.mxu0
        %v2854 = vadd.f32 0.0, %v2853
        %2855 = vdwg.mxu0
        %2856 = vmatpush.msra.mxu0 0.0
        %2857 = vmatpush.msra.mxu0 0.0
        %2858 = vmatpush.msra.mxu0 0.0
        %2859 = vmatpush.msra.mxu0 0.0
        %2860 = vmatpush.msra.mxu0 0.0
        %2861 = vmatpush.msra.mxu0 0.0
        %2862 = vmatpush.msra.mxu0 0.0
        %2863 = vmatpush.msra.mxu0 0.0
        %2864 = vmatpush.msra.mxu0 0.0
        %2865 = vmatpush.msra.mxu0 0.0
        %2866 = vmatpush.msra.mxu0 0.0
        %2867 = vmatpush.msra.mxu0 0.0
        %2868 = vmatpush.msra.mxu0 0.0
        %2869 = vmatpush.msra.mxu0 0.0
        %2870 = vmatpush.msra.mxu0 0.0
        %2871 = vmatpush.msra.mxu0 %v2764
        %2872 = vmatmul.f32.gmra.mxu0 %v2774
        %v2873 = vpop.f32.mrf.mxu0
        %v2874 = vadd.f32 0.0, %v2873
        %2875 = vdwg.mxu0
        %2876 = vmatpush.msra.mxu0 0.0
        %2877 = vmatpush.msra.mxu0 0.0
        %2878 = vmatpush.msra.mxu0 0.0
        %2879 = vmatpush.msra.mxu0 0.0
        %2880 = vmatpush.msra.mxu0 0.0
        %2881 = vmatpush.msra.mxu0 0.0
        %2882 = vmatpush.msra.mxu0 0.0
        %2883 = vmatpush.msra.mxu0 0.0
        %2884 = vmatpush.msra.mxu0 0.0
        %2885 = vmatpush.msra.mxu0 0.0
        %2886 = vmatpush.msra.mxu0 0.0
        %2887 = vmatpush.msra.mxu0 0.0
        %2888 = vmatpush.msra.mxu0 0.0
        %2889 = vmatpush.msra.mxu0 0.0
        %2890 = vmatpush.msra.mxu0 0.0
        %2891 = vmatpush.msra.mxu0 %v2765
        %2892 = vmatmul.f32.gmra.mxu0 %v2774
        %v2893 = vpop.f32.mrf.mxu0
        %v2894 = vadd.f32 0.0, %v2893
        %2895 = vdwg.mxu0
        %2896 = vmatpush.msra.mxu0 0.0
        %2897 = vmatpush.msra.mxu0 0.0
        %2898 = vmatpush.msra.mxu0 0.0
        %2899 = vmatpush.msra.mxu0 0.0
        %2900 = vmatpush.msra.mxu0 0.0
        %2901 = vmatpush.msra.mxu0 0.0
        %2902 = vmatpush.msra.mxu0 0.0
        %2903 = vmatpush.msra.mxu0 0.0
        %2904 = vmatpush.msra.mxu0 0.0
        %2905 = vmatpush.msra.mxu0 0.0
        %2906 = vmatpush.msra.mxu0 0.0
        %2907 = vmatpush.msra.mxu0 0.0
        %2908 = vmatpush.msra.mxu0 0.0
        %2909 = vmatpush.msra.mxu0 0.0
        %2910 = vmatpush.msra.mxu0 0.0
        %2911 = vmatpush.msra.mxu0 %v2758
        %2912 = vmatmul.f32.gmra.mxu0 %v2774
        %v2913 = vpop.f32.mrf.mxu0
        %v2914 = vadd.f32 0.0, %v2913
        %2915 = vdwg.mxu0
        %v2916 = vadd.f32 %v2736, %v2794
        %v2917 = vadd.f32 %v2737, %v2814
        %v2918 = vadd.f32 %v2738, %v2834
        %v2919 = vadd.f32 %v2739, %v2854
        %v2920 = vadd.f32 %v2740, %v2874
        %v2921 = vadd.f32 %v2741, %v2894
        %v2922 = vadd.f32 %v2742, %v2914
        %v2923 = vld [vmem:[%s249] sm:$0xff]
        %v2924 = vld [vmem:[%s249 + $0x8] sm:$0xff]
        %v2925 = vld [vmem:[%s249 + $0x10] sm:$0xff]
        %v2926 = vld [vmem:[%s249 + $0x18] sm:$0xff]
        %v2927 = vld [vmem:[%s249 + $0x20] sm:$0xff]
        %v2928 = vld [vmem:[%s249 + $0x28] sm:$0xff]
        %v2929 = vld [vmem:[%s249 + $0x30] sm:$0xff]
        %v2930 = vld [vmem:[%s249 + $0x38] sm:$0xff]
        %s2931 = scalar_lea.vmem %s1, 120
        %v2932 = vld [vmem:[%s2931] sm:$0xff]
        %2941 = vrot.lane.b32.xlu0 %v2923, 8
        %v2942 = vpop.permute.xlu0 %2941
        %2943 = vrot.lane.b32.xlu0 %v2924, 8
        %v2944 = vpop.permute.xlu0 %2943
        %2945 = vrot.lane.b32.xlu0 %v2925, 8
        %v2946 = vpop.permute.xlu0 %2945
        %2947 = vrot.lane.b32.xlu0 %v2926, 8
        %v2948 = vpop.permute.xlu0 %2947
        %2949 = vrot.lane.b32.xlu0 %v2927, 8
        %v2950 = vpop.permute.xlu0 %2949
        %2951 = vrot.lane.b32.xlu0 %v2928, 8
        %v2952 = vpop.permute.xlu0 %2951
        %2953 = vrot.lane.b32.xlu0 %v2929, 8
        %v2954 = vpop.permute.xlu0 %2953
        %2955 = vrot.lane.b32.xlu0 %v2930, 8
        %v2956 = vpop.permute.xlu0 %2955
        %v2957 = vsel %vm296, %v2942, %v2944
        %v2958 = vsel %vm296, %v2944, %v2946
        %v2959 = vsel %vm296, %v2946, %v2948
        %v2960 = vsel %vm296, %v2948, %v2950
        %v2961 = vsel %vm296, %v2950, %v2952
        %v2962 = vsel %vm296, %v2952, %v2954
        %v2963 = vsel %vm296, %v2954, %v2956
        %v2972 = vsel %vm296, %v2932, 0
        %2974 = vmatpush.msra.mxu0 0.0
        %2975 = vmatpush.msra.mxu0 0.0
        %2976 = vmatpush.msra.mxu0 0.0
        %2977 = vmatpush.msra.mxu0 0.0
        %2978 = vmatpush.msra.mxu0 0.0
        %2979 = vmatpush.msra.mxu0 0.0
        %2980 = vmatpush.msra.mxu0 0.0
        %2981 = vmatpush.msra.mxu0 0.0
        %2982 = vmatpush.msra.mxu0 0.0
        %2983 = vmatpush.msra.mxu0 0.0
        %2984 = vmatpush.msra.mxu0 0.0
        %2985 = vmatpush.msra.mxu0 0.0
        %2986 = vmatpush.msra.mxu0 0.0
        %2987 = vmatpush.msra.mxu0 0.0
        %2988 = vmatpush.msra.mxu0 0.0
        %2989 = vmatpush.msra.mxu0 %v2957
        %2990 = vmatmul.f32.gmra.mxu0 %v2972
        %v2991 = vpop.f32.mrf.mxu0
        %v2992 = vadd.f32 0.0, %v2991
        %2993 = vdwg.mxu0
        %2994 = vmatpush.msra.mxu0 0.0
        %2995 = vmatpush.msra.mxu0 0.0
        %2996 = vmatpush.msra.mxu0 0.0
        %2997 = vmatpush.msra.mxu0 0.0
        %2998 = vmatpush.msra.mxu0 0.0
        %2999 = vmatpush.msra.mxu0 0.0
        %3000 = vmatpush.msra.mxu0 0.0
        %3001 = vmatpush.msra.mxu0 0.0
        %3002 = vmatpush.msra.mxu0 0.0
        %3003 = vmatpush.msra.mxu0 0.0
        %3004 = vmatpush.msra.mxu0 0.0
        %3005 = vmatpush.msra.mxu0 0.0
        %3006 = vmatpush.msra.mxu0 0.0
        %3007 = vmatpush.msra.mxu0 0.0
        %3008 = vmatpush.msra.mxu0 0.0
        %3009 = vmatpush.msra.mxu0 %v2958
        %3010 = vmatmul.f32.gmra.mxu0 %v2972
        %v3011 = vpop.f32.mrf.mxu0
        %v3012 = vadd.f32 0.0, %v3011
        %3013 = vdwg.mxu0
        %3014 = vmatpush.msra.mxu0 0.0
        %3015 = vmatpush.msra.mxu0 0.0
        %3016 = vmatpush.msra.mxu0 0.0
        %3017 = vmatpush.msra.mxu0 0.0
        %3018 = vmatpush.msra.mxu0 0.0
        %3019 = vmatpush.msra.mxu0 0.0
        %3020 = vmatpush.msra.mxu0 0.0
        %3021 = vmatpush.msra.mxu0 0.0
        %3022 = vmatpush.msra.mxu0 0.0
        %3023 = vmatpush.msra.mxu0 0.0
        %3024 = vmatpush.msra.mxu0 0.0
        %3025 = vmatpush.msra.mxu0 0.0
        %3026 = vmatpush.msra.mxu0 0.0
        %3027 = vmatpush.msra.mxu0 0.0
        %3028 = vmatpush.msra.mxu0 0.0
        %3029 = vmatpush.msra.mxu0 %v2959
        %3030 = vmatmul.f32.gmra.mxu0 %v2972
        %v3031 = vpop.f32.mrf.mxu0
        %v3032 = vadd.f32 0.0, %v3031
        %3033 = vdwg.mxu0
        %3034 = vmatpush.msra.mxu0 0.0
        %3035 = vmatpush.msra.mxu0 0.0
        %3036 = vmatpush.msra.mxu0 0.0
        %3037 = vmatpush.msra.mxu0 0.0
        %3038 = vmatpush.msra.mxu0 0.0
        %3039 = vmatpush.msra.mxu0 0.0
        %3040 = vmatpush.msra.mxu0 0.0
        %3041 = vmatpush.msra.mxu0 0.0
        %3042 = vmatpush.msra.mxu0 0.0
        %3043 = vmatpush.msra.mxu0 0.0
        %3044 = vmatpush.msra.mxu0 0.0
        %3045 = vmatpush.msra.mxu0 0.0
        %3046 = vmatpush.msra.mxu0 0.0
        %3047 = vmatpush.msra.mxu0 0.0
        %3048 = vmatpush.msra.mxu0 0.0
        %3049 = vmatpush.msra.mxu0 %v2960
        %3050 = vmatmul.f32.gmra.mxu0 %v2972
        %v3051 = vpop.f32.mrf.mxu0
        %v3052 = vadd.f32 0.0, %v3051
        %3053 = vdwg.mxu0
        %3054 = vmatpush.msra.mxu0 0.0
        %3055 = vmatpush.msra.mxu0 0.0
        %3056 = vmatpush.msra.mxu0 0.0
        %3057 = vmatpush.msra.mxu0 0.0
        %3058 = vmatpush.msra.mxu0 0.0
        %3059 = vmatpush.msra.mxu0 0.0
        %3060 = vmatpush.msra.mxu0 0.0
        %3061 = vmatpush.msra.mxu0 0.0
        %3062 = vmatpush.msra.mxu0 0.0
        %3063 = vmatpush.msra.mxu0 0.0
        %3064 = vmatpush.msra.mxu0 0.0
        %3065 = vmatpush.msra.mxu0 0.0
        %3066 = vmatpush.msra.mxu0 0.0
        %3067 = vmatpush.msra.mxu0 0.0
        %3068 = vmatpush.msra.mxu0 0.0
        %3069 = vmatpush.msra.mxu0 %v2961
        %3070 = vmatmul.f32.gmra.mxu0 %v2972
        %v3071 = vpop.f32.mrf.mxu0
        %v3072 = vadd.f32 0.0, %v3071
        %3073 = vdwg.mxu0
        %3074 = vmatpush.msra.mxu0 0.0
        %3075 = vmatpush.msra.mxu0 0.0
        %3076 = vmatpush.msra.mxu0 0.0
        %3077 = vmatpush.msra.mxu0 0.0
        %3078 = vmatpush.msra.mxu0 0.0
        %3079 = vmatpush.msra.mxu0 0.0
        %3080 = vmatpush.msra.mxu0 0.0
        %3081 = vmatpush.msra.mxu0 0.0
        %3082 = vmatpush.msra.mxu0 0.0
        %3083 = vmatpush.msra.mxu0 0.0
        %3084 = vmatpush.msra.mxu0 0.0
        %3085 = vmatpush.msra.mxu0 0.0
        %3086 = vmatpush.msra.mxu0 0.0
        %3087 = vmatpush.msra.mxu0 0.0
        %3088 = vmatpush.msra.mxu0 0.0
        %3089 = vmatpush.msra.mxu0 %v2962
        %3090 = vmatmul.f32.gmra.mxu0 %v2972
        %v3091 = vpop.f32.mrf.mxu0
        %v3092 = vadd.f32 0.0, %v3091
        %3093 = vdwg.mxu0
        %3094 = vmatpush.msra.mxu0 0.0
        %3095 = vmatpush.msra.mxu0 0.0
        %3096 = vmatpush.msra.mxu0 0.0
        %3097 = vmatpush.msra.mxu0 0.0
        %3098 = vmatpush.msra.mxu0 0.0
        %3099 = vmatpush.msra.mxu0 0.0
        %3100 = vmatpush.msra.mxu0 0.0
        %3101 = vmatpush.msra.mxu0 0.0
        %3102 = vmatpush.msra.mxu0 0.0
        %3103 = vmatpush.msra.mxu0 0.0
        %3104 = vmatpush.msra.mxu0 0.0
        %3105 = vmatpush.msra.mxu0 0.0
        %3106 = vmatpush.msra.mxu0 0.0
        %3107 = vmatpush.msra.mxu0 0.0
        %3108 = vmatpush.msra.mxu0 0.0
        %3109 = vmatpush.msra.mxu0 %v2963
        %3110 = vmatmul.f32.gmra.mxu0 %v2972
        %v3111 = vpop.f32.mrf.mxu0
        %v3112 = vadd.f32 0.0, %v3111
        %3113 = vdwg.mxu0
        %v3114 = vadd.f32 %v2916, %v2992
        %v3115 = vadd.f32 %v2917, %v3012
        %v3116 = vadd.f32 %v2918, %v3032
        %v3117 = vadd.f32 %v2919, %v3052
        %v3118 = vadd.f32 %v2920, %v3072
        %v3119 = vadd.f32 %v2921, %v3092
        %v3120 = vadd.f32 %v2922, %v3112
        %s3121 = scalar_lea.vmem %s1, 128
        %v3122 = vld [vmem:[%s3121] sm:$0xff]
        %3123 = vrot.lane.b32.xlu0 %v2923, 7
        %v3124 = vpop.permute.xlu0 %3123
        %3125 = vrot.lane.b32.xlu0 %v2924, 7
        %v3126 = vpop.permute.xlu0 %3125
        %3127 = vrot.lane.b32.xlu0 %v2925, 7
        %v3128 = vpop.permute.xlu0 %3127
        %3129 = vrot.lane.b32.xlu0 %v2926, 7
        %v3130 = vpop.permute.xlu0 %3129
        %3131 = vrot.lane.b32.xlu0 %v2927, 7
        %v3132 = vpop.permute.xlu0 %3131
        %3133 = vrot.lane.b32.xlu0 %v2928, 7
        %v3134 = vpop.permute.xlu0 %3133
        %3135 = vrot.lane.b32.xlu0 %v2929, 7
        %v3136 = vpop.permute.xlu0 %3135
        %3137 = vrot.lane.b32.xlu0 %v2930, 7
        %v3138 = vpop.permute.xlu0 %3137
        %vm3139 = vcmask 56320
        %v3140 = vsel %vm3139, %v3124, %v3126
        %v3141 = vsel %vm3139, %v3126, %v3128
        %v3142 = vsel %vm3139, %v3128, %v3130
        %v3143 = vsel %vm3139, %v3130, %v3132
        %v3144 = vsel %vm3139, %v3132, %v3134
        %v3145 = vsel %vm3139, %v3134, %v3136
        %v3146 = vsel %vm3139, %v3136, %v3138
        %v3155 = vsel %vm296, %v3122, 0
        %3157 = vmatpush.msra.mxu0 0.0
        %3158 = vmatpush.msra.mxu0 0.0
        %3159 = vmatpush.msra.mxu0 0.0
        %3160 = vmatpush.msra.mxu0 0.0
        %3161 = vmatpush.msra.mxu0 0.0
        %3162 = vmatpush.msra.mxu0 0.0
        %3163 = vmatpush.msra.mxu0 0.0
        %3164 = vmatpush.msra.mxu0 0.0
        %3165 = vmatpush.msra.mxu0 0.0
        %3166 = vmatpush.msra.mxu0 0.0
        %3167 = vmatpush.msra.mxu0 0.0
        %3168 = vmatpush.msra.mxu0 0.0
        %3169 = vmatpush.msra.mxu0 0.0
        %3170 = vmatpush.msra.mxu0 0.0
        %3171 = vmatpush.msra.mxu0 0.0
        %3172 = vmatpush.msra.mxu0 %v3140
        %3173 = vmatmul.f32.gmra.mxu0 %v3155
        %v3174 = vpop.f32.mrf.mxu0
        %v3175 = vadd.f32 0.0, %v3174
        %3176 = vdwg.mxu0
        %3177 = vmatpush.msra.mxu0 0.0
        %3178 = vmatpush.msra.mxu0 0.0
        %3179 = vmatpush.msra.mxu0 0.0
        %3180 = vmatpush.msra.mxu0 0.0
        %3181 = vmatpush.msra.mxu0 0.0
        %3182 = vmatpush.msra.mxu0 0.0
        %3183 = vmatpush.msra.mxu0 0.0
        %3184 = vmatpush.msra.mxu0 0.0
        %3185 = vmatpush.msra.mxu0 0.0
        %3186 = vmatpush.msra.mxu0 0.0
        %3187 = vmatpush.msra.mxu0 0.0
        %3188 = vmatpush.msra.mxu0 0.0
        %3189 = vmatpush.msra.mxu0 0.0
        %3190 = vmatpush.msra.mxu0 0.0
        %3191 = vmatpush.msra.mxu0 0.0
        %3192 = vmatpush.msra.mxu0 %v3141
        %3193 = vmatmul.f32.gmra.mxu0 %v3155
        %v3194 = vpop.f32.mrf.mxu0
        %v3195 = vadd.f32 0.0, %v3194
        %3196 = vdwg.mxu0
        %3197 = vmatpush.msra.mxu0 0.0
        %3198 = vmatpush.msra.mxu0 0.0
        %3199 = vmatpush.msra.mxu0 0.0
        %3200 = vmatpush.msra.mxu0 0.0
        %3201 = vmatpush.msra.mxu0 0.0
        %3202 = vmatpush.msra.mxu0 0.0
        %3203 = vmatpush.msra.mxu0 0.0
        %3204 = vmatpush.msra.mxu0 0.0
        %3205 = vmatpush.msra.mxu0 0.0
        %3206 = vmatpush.msra.mxu0 0.0
        %3207 = vmatpush.msra.mxu0 0.0
        %3208 = vmatpush.msra.mxu0 0.0
        %3209 = vmatpush.msra.mxu0 0.0
        %3210 = vmatpush.msra.mxu0 0.0
        %3211 = vmatpush.msra.mxu0 0.0
        %3212 = vmatpush.msra.mxu0 %v3142
        %3213 = vmatmul.f32.gmra.mxu0 %v3155
        %v3214 = vpop.f32.mrf.mxu0
        %v3215 = vadd.f32 0.0, %v3214
        %3216 = vdwg.mxu0
        %3217 = vmatpush.msra.mxu0 0.0
        %3218 = vmatpush.msra.mxu0 0.0
        %3219 = vmatpush.msra.mxu0 0.0
        %3220 = vmatpush.msra.mxu0 0.0
        %3221 = vmatpush.msra.mxu0 0.0
        %3222 = vmatpush.msra.mxu0 0.0
        %3223 = vmatpush.msra.mxu0 0.0
        %3224 = vmatpush.msra.mxu0 0.0
        %3225 = vmatpush.msra.mxu0 0.0
        %3226 = vmatpush.msra.mxu0 0.0
        %3227 = vmatpush.msra.mxu0 0.0
        %3228 = vmatpush.msra.mxu0 0.0
        %3229 = vmatpush.msra.mxu0 0.0
        %3230 = vmatpush.msra.mxu0 0.0
        %3231 = vmatpush.msra.mxu0 0.0
        %3232 = vmatpush.msra.mxu0 %v3143
        %3233 = vmatmul.f32.gmra.mxu0 %v3155
        %v3234 = vpop.f32.mrf.mxu0
        %v3235 = vadd.f32 0.0, %v3234
        %3236 = vdwg.mxu0
        %3237 = vmatpush.msra.mxu0 0.0
        %3238 = vmatpush.msra.mxu0 0.0
        %3239 = vmatpush.msra.mxu0 0.0
        %3240 = vmatpush.msra.mxu0 0.0
        %3241 = vmatpush.msra.mxu0 0.0
        %3242 = vmatpush.msra.mxu0 0.0
        %3243 = vmatpush.msra.mxu0 0.0
        %3244 = vmatpush.msra.mxu0 0.0
        %3245 = vmatpush.msra.mxu0 0.0
        %3246 = vmatpush.msra.mxu0 0.0
        %3247 = vmatpush.msra.mxu0 0.0
        %3248 = vmatpush.msra.mxu0 0.0
        %3249 = vmatpush.msra.mxu0 0.0
        %3250 = vmatpush.msra.mxu0 0.0
        %3251 = vmatpush.msra.mxu0 0.0
        %3252 = vmatpush.msra.mxu0 %v3144
        %3253 = vmatmul.f32.gmra.mxu0 %v3155
        %v3254 = vpop.f32.mrf.mxu0
        %v3255 = vadd.f32 0.0, %v3254
        %3256 = vdwg.mxu0
        %3257 = vmatpush.msra.mxu0 0.0
        %3258 = vmatpush.msra.mxu0 0.0
        %3259 = vmatpush.msra.mxu0 0.0
        %3260 = vmatpush.msra.mxu0 0.0
        %3261 = vmatpush.msra.mxu0 0.0
        %3262 = vmatpush.msra.mxu0 0.0
        %3263 = vmatpush.msra.mxu0 0.0
        %3264 = vmatpush.msra.mxu0 0.0
        %3265 = vmatpush.msra.mxu0 0.0
        %3266 = vmatpush.msra.mxu0 0.0
        %3267 = vmatpush.msra.mxu0 0.0
        %3268 = vmatpush.msra.mxu0 0.0
        %3269 = vmatpush.msra.mxu0 0.0
        %3270 = vmatpush.msra.mxu0 0.0
        %3271 = vmatpush.msra.mxu0 0.0
        %3272 = vmatpush.msra.mxu0 %v3145
        %3273 = vmatmul.f32.gmra.mxu0 %v3155
        %v3274 = vpop.f32.mrf.mxu0
        %v3275 = vadd.f32 0.0, %v3274
        %3276 = vdwg.mxu0
        %3277 = vmatpush.msra.mxu0 0.0
        %3278 = vmatpush.msra.mxu0 0.0
        %3279 = vmatpush.msra.mxu0 0.0
        %3280 = vmatpush.msra.mxu0 0.0
        %3281 = vmatpush.msra.mxu0 0.0
        %3282 = vmatpush.msra.mxu0 0.0
        %3283 = vmatpush.msra.mxu0 0.0
        %3284 = vmatpush.msra.mxu0 0.0
        %3285 = vmatpush.msra.mxu0 0.0
        %3286 = vmatpush.msra.mxu0 0.0
        %3287 = vmatpush.msra.mxu0 0.0
        %3288 = vmatpush.msra.mxu0 0.0
        %3289 = vmatpush.msra.mxu0 0.0
        %3290 = vmatpush.msra.mxu0 0.0
        %3291 = vmatpush.msra.mxu0 0.0
        %3292 = vmatpush.msra.mxu0 %v3146
        %3293 = vmatmul.f32.gmra.mxu0 %v3155
        %v3294 = vpop.f32.mrf.mxu0
        %v3295 = vadd.f32 0.0, %v3294
        %3296 = vdwg.mxu0
        %v3297 = vadd.f32 %v3114, %v3175
        %v3298 = vadd.f32 %v3115, %v3195
        %v3299 = vadd.f32 %v3116, %v3215
        %v3300 = vadd.f32 %v3117, %v3235
        %v3301 = vadd.f32 %v3118, %v3255
        %v3302 = vadd.f32 %v3119, %v3275
        %v3303 = vadd.f32 %v3120, %v3295
        %s3304 = scalar_lea.vmem %s1, 136
        %v3305 = vld [vmem:[%s3304] sm:$0xff]
        %3306 = vrot.lane.b32.xlu0 %v2923, 6
        %v3307 = vpop.permute.xlu0 %3306
        %3308 = vrot.lane.b32.xlu0 %v2924, 6
        %v3309 = vpop.permute.xlu0 %3308
        %3310 = vrot.lane.b32.xlu0 %v2925, 6
        %v3311 = vpop.permute.xlu0 %3310
        %3312 = vrot.lane.b32.xlu0 %v2926, 6
        %v3313 = vpop.permute.xlu0 %3312
        %3314 = vrot.lane.b32.xlu0 %v2927, 6
        %v3315 = vpop.permute.xlu0 %3314
        %3316 = vrot.lane.b32.xlu0 %v2928, 6
        %v3317 = vpop.permute.xlu0 %3316
        %3318 = vrot.lane.b32.xlu0 %v2929, 6
        %v3319 = vpop.permute.xlu0 %3318
        %3320 = vrot.lane.b32.xlu0 %v2930, 6
        %v3321 = vpop.permute.xlu0 %3320
        %vm3322 = vcmask 48128
        %v3323 = vsel %vm3322, %v3307, %v3309
        %v3324 = vsel %vm3322, %v3309, %v3311
        %v3325 = vsel %vm3322, %v3311, %v3313
        %v3326 = vsel %vm3322, %v3313, %v3315
        %v3327 = vsel %vm3322, %v3315, %v3317
        %v3328 = vsel %vm3322, %v3317, %v3319
        %v3329 = vsel %vm3322, %v3319, %v3321
        %v3338 = vsel %vm296, %v3305, 0
        %3340 = vmatpush.msra.mxu0 0.0
        %3341 = vmatpush.msra.mxu0 0.0
        %3342 = vmatpush.msra.mxu0 0.0
        %3343 = vmatpush.msra.mxu0 0.0
        %3344 = vmatpush.msra.mxu0 0.0
        %3345 = vmatpush.msra.mxu0 0.0
        %3346 = vmatpush.msra.mxu0 0.0
        %3347 = vmatpush.msra.mxu0 0.0
        %3348 = vmatpush.msra.mxu0 0.0
        %3349 = vmatpush.msra.mxu0 0.0
        %3350 = vmatpush.msra.mxu0 0.0
        %3351 = vmatpush.msra.mxu0 0.0
        %3352 = vmatpush.msra.mxu0 0.0
        %3353 = vmatpush.msra.mxu0 0.0
        %3354 = vmatpush.msra.mxu0 0.0
        %3355 = vmatpush.msra.mxu0 %v3323
        %3356 = vmatmul.f32.gmra.mxu0 %v3338
        %v3357 = vpop.f32.mrf.mxu0
        %v3358 = vadd.f32 0.0, %v3357
        %3359 = vdwg.mxu0
        %3360 = vmatpush.msra.mxu0 0.0
        %3361 = vmatpush.msra.mxu0 0.0
        %3362 = vmatpush.msra.mxu0 0.0
        %3363 = vmatpush.msra.mxu0 0.0
        %3364 = vmatpush.msra.mxu0 0.0
        %3365 = vmatpush.msra.mxu0 0.0
        %3366 = vmatpush.msra.mxu0 0.0
        %3367 = vmatpush.msra.mxu0 0.0
        %3368 = vmatpush.msra.mxu0 0.0
        %3369 = vmatpush.msra.mxu0 0.0
        %3370 = vmatpush.msra.mxu0 0.0
        %3371 = vmatpush.msra.mxu0 0.0
        %3372 = vmatpush.msra.mxu0 0.0
        %3373 = vmatpush.msra.mxu0 0.0
        %3374 = vmatpush.msra.mxu0 0.0
        %3375 = vmatpush.msra.mxu0 %v3324
        %3376 = vmatmul.f32.gmra.mxu0 %v3338
        %v3377 = vpop.f32.mrf.mxu0
        %v3378 = vadd.f32 0.0, %v3377
        %3379 = vdwg.mxu0
        %3380 = vmatpush.msra.mxu0 0.0
        %3381 = vmatpush.msra.mxu0 0.0
        %3382 = vmatpush.msra.mxu0 0.0
        %3383 = vmatpush.msra.mxu0 0.0
        %3384 = vmatpush.msra.mxu0 0.0
        %3385 = vmatpush.msra.mxu0 0.0
        %3386 = vmatpush.msra.mxu0 0.0
        %3387 = vmatpush.msra.mxu0 0.0
        %3388 = vmatpush.msra.mxu0 0.0
        %3389 = vmatpush.msra.mxu0 0.0
        %3390 = vmatpush.msra.mxu0 0.0
        %3391 = vmatpush.msra.mxu0 0.0
        %3392 = vmatpush.msra.mxu0 0.0
        %3393 = vmatpush.msra.mxu0 0.0
        %3394 = vmatpush.msra.mxu0 0.0
        %3395 = vmatpush.msra.mxu0 %v3325
        %3396 = vmatmul.f32.gmra.mxu0 %v3338
        %v3397 = vpop.f32.mrf.mxu0
        %v3398 = vadd.f32 0.0, %v3397
        %3399 = vdwg.mxu0
        %3400 = vmatpush.msra.mxu0 0.0
        %3401 = vmatpush.msra.mxu0 0.0
        %3402 = vmatpush.msra.mxu0 0.0
        %3403 = vmatpush.msra.mxu0 0.0
        %3404 = vmatpush.msra.mxu0 0.0
        %3405 = vmatpush.msra.mxu0 0.0
        %3406 = vmatpush.msra.mxu0 0.0
        %3407 = vmatpush.msra.mxu0 0.0
        %3408 = vmatpush.msra.mxu0 0.0
        %3409 = vmatpush.msra.mxu0 0.0
        %3410 = vmatpush.msra.mxu0 0.0
        %3411 = vmatpush.msra.mxu0 0.0
        %3412 = vmatpush.msra.mxu0 0.0
        %3413 = vmatpush.msra.mxu0 0.0
        %3414 = vmatpush.msra.mxu0 0.0
        %3415 = vmatpush.msra.mxu0 %v3326
        %3416 = vmatmul.f32.gmra.mxu0 %v3338
        %v3417 = vpop.f32.mrf.mxu0
        %v3418 = vadd.f32 0.0, %v3417
        %3419 = vdwg.mxu0
        %3420 = vmatpush.msra.mxu0 0.0
        %3421 = vmatpush.msra.mxu0 0.0
        %3422 = vmatpush.msra.mxu0 0.0
        %3423 = vmatpush.msra.mxu0 0.0
        %3424 = vmatpush.msra.mxu0 0.0
        %3425 = vmatpush.msra.mxu0 0.0
        %3426 = vmatpush.msra.mxu0 0.0
        %3427 = vmatpush.msra.mxu0 0.0
        %3428 = vmatpush.msra.mxu0 0.0
        %3429 = vmatpush.msra.mxu0 0.0
        %3430 = vmatpush.msra.mxu0 0.0
        %3431 = vmatpush.msra.mxu0 0.0
        %3432 = vmatpush.msra.mxu0 0.0
        %3433 = vmatpush.msra.mxu0 0.0
        %3434 = vmatpush.msra.mxu0 0.0
        %3435 = vmatpush.msra.mxu0 %v3327
        %3436 = vmatmul.f32.gmra.mxu0 %v3338
        %v3437 = vpop.f32.mrf.mxu0
        %v3438 = vadd.f32 0.0, %v3437
        %3439 = vdwg.mxu0
        %3440 = vmatpush.msra.mxu0 0.0
        %3441 = vmatpush.msra.mxu0 0.0
        %3442 = vmatpush.msra.mxu0 0.0
        %3443 = vmatpush.msra.mxu0 0.0
        %3444 = vmatpush.msra.mxu0 0.0
        %3445 = vmatpush.msra.mxu0 0.0
        %3446 = vmatpush.msra.mxu0 0.0
        %3447 = vmatpush.msra.mxu0 0.0
        %3448 = vmatpush.msra.mxu0 0.0
        %3449 = vmatpush.msra.mxu0 0.0
        %3450 = vmatpush.msra.mxu0 0.0
        %3451 = vmatpush.msra.mxu0 0.0
        %3452 = vmatpush.msra.mxu0 0.0
        %3453 = vmatpush.msra.mxu0 0.0
        %3454 = vmatpush.msra.mxu0 0.0
        %3455 = vmatpush.msra.mxu0 %v3328
        %3456 = vmatmul.f32.gmra.mxu0 %v3338
        %v3457 = vpop.f32.mrf.mxu0
        %v3458 = vadd.f32 0.0, %v3457
        %3459 = vdwg.mxu0
        %3460 = vmatpush.msra.mxu0 0.0
        %3461 = vmatpush.msra.mxu0 0.0
        %3462 = vmatpush.msra.mxu0 0.0
        %3463 = vmatpush.msra.mxu0 0.0
        %3464 = vmatpush.msra.mxu0 0.0
        %3465 = vmatpush.msra.mxu0 0.0
        %3466 = vmatpush.msra.mxu0 0.0
        %3467 = vmatpush.msra.mxu0 0.0
        %3468 = vmatpush.msra.mxu0 0.0
        %3469 = vmatpush.msra.mxu0 0.0
        %3470 = vmatpush.msra.mxu0 0.0
        %3471 = vmatpush.msra.mxu0 0.0
        %3472 = vmatpush.msra.mxu0 0.0
        %3473 = vmatpush.msra.mxu0 0.0
        %3474 = vmatpush.msra.mxu0 0.0
        %3475 = vmatpush.msra.mxu0 %v3329
        %3476 = vmatmul.f32.gmra.mxu0 %v3338
        %v3477 = vpop.f32.mrf.mxu0
        %v3478 = vadd.f32 0.0, %v3477
        %3479 = vdwg.mxu0
        %v3480 = vadd.f32 %v3297, %v3358
        %v3481 = vadd.f32 %v3298, %v3378
        %v3482 = vadd.f32 %v3299, %v3398
        %v3483 = vadd.f32 %v3300, %v3418
        %v3484 = vadd.f32 %v3301, %v3438
        %v3485 = vadd.f32 %v3302, %v3458
        %v3486 = vadd.f32 %v3303, %v3478
        %s3487 = scalar_lea.vmem %s1, 144
        %v3488 = vld [vmem:[%s3487] sm:$0xff]
        %3489 = vrot.lane.b32.xlu0 %v2924, 56
        %v3490 = vpop.permute.xlu0 %3489
        %3491 = vrot.lane.b32.xlu0 %v2925, 56
        %v3492 = vpop.permute.xlu0 %3491
        %3493 = vrot.lane.b32.xlu0 %v2926, 56
        %v3494 = vpop.permute.xlu0 %3493
        %3495 = vrot.lane.b32.xlu0 %v2927, 56
        %v3496 = vpop.permute.xlu0 %3495
        %3497 = vrot.lane.b32.xlu0 %v2928, 56
        %v3498 = vpop.permute.xlu0 %3497
        %3499 = vrot.lane.b32.xlu0 %v2929, 56
        %v3500 = vpop.permute.xlu0 %3499
        %3501 = vrot.lane.b32.xlu0 %v2930, 56
        %v3502 = vpop.permute.xlu0 %3501
        %vm3503 = vcmask 457728
        %v3504 = vsel %vm3503, %v3490, %v3492
        %v3505 = vsel %vm3503, %v3492, %v3494
        %v3506 = vsel %vm3503, %v3494, %v3496
        %v3507 = vsel %vm3503, %v3496, %v3498
        %v3508 = vsel %vm3503, %v3498, %v3500
        %v3509 = vsel %vm3503, %v3500, %v3502
        %v3518 = vsel %vm296, %v3488, 0
        %3520 = vmatpush.msra.mxu0 0.0
        %3521 = vmatpush.msra.mxu0 0.0
        %3522 = vmatpush.msra.mxu0 0.0
        %3523 = vmatpush.msra.mxu0 0.0
        %3524 = vmatpush.msra.mxu0 0.0
        %3525 = vmatpush.msra.mxu0 0.0
        %3526 = vmatpush.msra.mxu0 0.0
        %3527 = vmatpush.msra.mxu0 0.0
        %3528 = vmatpush.msra.mxu0 0.0
        %3529 = vmatpush.msra.mxu0 0.0
        %3530 = vmatpush.msra.mxu0 0.0
        %3531 = vmatpush.msra.mxu0 0.0
        %3532 = vmatpush.msra.mxu0 0.0
        %3533 = vmatpush.msra.mxu0 0.0
        %3534 = vmatpush.msra.mxu0 0.0
        %3535 = vmatpush.msra.mxu0 %v3504
        %3536 = vmatmul.f32.gmra.mxu0 %v3518
        %v3537 = vpop.f32.mrf.mxu0
        %v3538 = vadd.f32 0.0, %v3537
        %3539 = vdwg.mxu0
        %3540 = vmatpush.msra.mxu0 0.0
        %3541 = vmatpush.msra.mxu0 0.0
        %3542 = vmatpush.msra.mxu0 0.0
        %3543 = vmatpush.msra.mxu0 0.0
        %3544 = vmatpush.msra.mxu0 0.0
        %3545 = vmatpush.msra.mxu0 0.0
        %3546 = vmatpush.msra.mxu0 0.0
        %3547 = vmatpush.msra.mxu0 0.0
        %3548 = vmatpush.msra.mxu0 0.0
        %3549 = vmatpush.msra.mxu0 0.0
        %3550 = vmatpush.msra.mxu0 0.0
        %3551 = vmatpush.msra.mxu0 0.0
        %3552 = vmatpush.msra.mxu0 0.0
        %3553 = vmatpush.msra.mxu0 0.0
        %3554 = vmatpush.msra.mxu0 0.0
        %3555 = vmatpush.msra.mxu0 %v3505
        %3556 = vmatmul.f32.gmra.mxu0 %v3518
        %v3557 = vpop.f32.mrf.mxu0
        %v3558 = vadd.f32 0.0, %v3557
        %3559 = vdwg.mxu0
        %3560 = vmatpush.msra.mxu0 0.0
        %3561 = vmatpush.msra.mxu0 0.0
        %3562 = vmatpush.msra.mxu0 0.0
        %3563 = vmatpush.msra.mxu0 0.0
        %3564 = vmatpush.msra.mxu0 0.0
        %3565 = vmatpush.msra.mxu0 0.0
        %3566 = vmatpush.msra.mxu0 0.0
        %3567 = vmatpush.msra.mxu0 0.0
        %3568 = vmatpush.msra.mxu0 0.0
        %3569 = vmatpush.msra.mxu0 0.0
        %3570 = vmatpush.msra.mxu0 0.0
        %3571 = vmatpush.msra.mxu0 0.0
        %3572 = vmatpush.msra.mxu0 0.0
        %3573 = vmatpush.msra.mxu0 0.0
        %3574 = vmatpush.msra.mxu0 0.0
        %3575 = vmatpush.msra.mxu0 %v3506
        %3576 = vmatmul.f32.gmra.mxu0 %v3518
        %v3577 = vpop.f32.mrf.mxu0
        %v3578 = vadd.f32 0.0, %v3577
        %3579 = vdwg.mxu0
        %3580 = vmatpush.msra.mxu0 0.0
        %3581 = vmatpush.msra.mxu0 0.0
        %3582 = vmatpush.msra.mxu0 0.0
        %3583 = vmatpush.msra.mxu0 0.0
        %3584 = vmatpush.msra.mxu0 0.0
        %3585 = vmatpush.msra.mxu0 0.0
        %3586 = vmatpush.msra.mxu0 0.0
        %3587 = vmatpush.msra.mxu0 0.0
        %3588 = vmatpush.msra.mxu0 0.0
        %3589 = vmatpush.msra.mxu0 0.0
        %3590 = vmatpush.msra.mxu0 0.0
        %3591 = vmatpush.msra.mxu0 0.0
        %3592 = vmatpush.msra.mxu0 0.0
        %3593 = vmatpush.msra.mxu0 0.0
        %3594 = vmatpush.msra.mxu0 0.0
        %3595 = vmatpush.msra.mxu0 %v3507
        %3596 = vmatmul.f32.gmra.mxu0 %v3518
        %v3597 = vpop.f32.mrf.mxu0
        %v3598 = vadd.f32 0.0, %v3597
        %3599 = vdwg.mxu0
        %3600 = vmatpush.msra.mxu0 0.0
        %3601 = vmatpush.msra.mxu0 0.0
        %3602 = vmatpush.msra.mxu0 0.0
        %3603 = vmatpush.msra.mxu0 0.0
        %3604 = vmatpush.msra.mxu0 0.0
        %3605 = vmatpush.msra.mxu0 0.0
        %3606 = vmatpush.msra.mxu0 0.0
        %3607 = vmatpush.msra.mxu0 0.0
        %3608 = vmatpush.msra.mxu0 0.0
        %3609 = vmatpush.msra.mxu0 0.0
        %3610 = vmatpush.msra.mxu0 0.0
        %3611 = vmatpush.msra.mxu0 0.0
        %3612 = vmatpush.msra.mxu0 0.0
        %3613 = vmatpush.msra.mxu0 0.0
        %3614 = vmatpush.msra.mxu0 0.0
        %3615 = vmatpush.msra.mxu0 %v3508
        %3616 = vmatmul.f32.gmra.mxu0 %v3518
        %v3617 = vpop.f32.mrf.mxu0
        %v3618 = vadd.f32 0.0, %v3617
        %3619 = vdwg.mxu0
        %3620 = vmatpush.msra.mxu0 0.0
        %3621 = vmatpush.msra.mxu0 0.0
        %3622 = vmatpush.msra.mxu0 0.0
        %3623 = vmatpush.msra.mxu0 0.0
        %3624 = vmatpush.msra.mxu0 0.0
        %3625 = vmatpush.msra.mxu0 0.0
        %3626 = vmatpush.msra.mxu0 0.0
        %3627 = vmatpush.msra.mxu0 0.0
        %3628 = vmatpush.msra.mxu0 0.0
        %3629 = vmatpush.msra.mxu0 0.0
        %3630 = vmatpush.msra.mxu0 0.0
        %3631 = vmatpush.msra.mxu0 0.0
        %3632 = vmatpush.msra.mxu0 0.0
        %3633 = vmatpush.msra.mxu0 0.0
        %3634 = vmatpush.msra.mxu0 0.0
        %3635 = vmatpush.msra.mxu0 %v3509
        %3636 = vmatmul.f32.gmra.mxu0 %v3518
        %v3637 = vpop.f32.mrf.mxu0
        %v3638 = vadd.f32 0.0, %v3637
        %3639 = vdwg.mxu0
        %3640 = vmatpush.msra.mxu0 0.0
        %3641 = vmatpush.msra.mxu0 0.0
        %3642 = vmatpush.msra.mxu0 0.0
        %3643 = vmatpush.msra.mxu0 0.0
        %3644 = vmatpush.msra.mxu0 0.0
        %3645 = vmatpush.msra.mxu0 0.0
        %3646 = vmatpush.msra.mxu0 0.0
        %3647 = vmatpush.msra.mxu0 0.0
        %3648 = vmatpush.msra.mxu0 0.0
        %3649 = vmatpush.msra.mxu0 0.0
        %3650 = vmatpush.msra.mxu0 0.0
        %3651 = vmatpush.msra.mxu0 0.0
        %3652 = vmatpush.msra.mxu0 0.0
        %3653 = vmatpush.msra.mxu0 0.0
        %3654 = vmatpush.msra.mxu0 0.0
        %3655 = vmatpush.msra.mxu0 %v3502
        %3656 = vmatmul.f32.gmra.mxu0 %v3518
        %v3657 = vpop.f32.mrf.mxu0
        %v3658 = vadd.f32 0.0, %v3657
        %3659 = vdwg.mxu0
        %v3660 = vadd.f32 %v3480, %v3538
        %v3661 = vadd.f32 %v3481, %v3558
        %v3662 = vadd.f32 %v3482, %v3578
        %v3663 = vadd.f32 %v3483, %v3598
        %v3664 = vadd.f32 %v3484, %v3618
        %v3665 = vadd.f32 %v3485, %v3638
        %v3666 = vadd.f32 %v3486, %v3658
        %s3667 = scalar_lea.vmem %s1, 152
        %v3668 = vld [vmem:[%s3667] sm:$0xff]
        %3669 = vrot.lane.b32.xlu0 %v2924, 55
        %v3670 = vpop.permute.xlu0 %3669
        %3671 = vrot.lane.b32.xlu0 %v2925, 55
        %v3672 = vpop.permute.xlu0 %3671
        %3673 = vrot.lane.b32.xlu0 %v2926, 55
        %v3674 = vpop.permute.xlu0 %3673
        %3675 = vrot.lane.b32.xlu0 %v2927, 55
        %v3676 = vpop.permute.xlu0 %3675
        %3677 = vrot.lane.b32.xlu0 %v2928, 55
        %v3678 = vpop.permute.xlu0 %3677
        %3679 = vrot.lane.b32.xlu0 %v2929, 55
        %v3680 = vpop.permute.xlu0 %3679
        %3681 = vrot.lane.b32.xlu0 %v2930, 55
        %v3682 = vpop.permute.xlu0 %3681
        %vm3683 = vcmask 449536
        %v3684 = vsel %vm3683, %v3670, %v3672
        %v3685 = vsel %vm3683, %v3672, %v3674
        %v3686 = vsel %vm3683, %v3674, %v3676
        %v3687 = vsel %vm3683, %v3676, %v3678
        %v3688 = vsel %vm3683, %v3678, %v3680
        %v3689 = vsel %vm3683, %v3680, %v3682
        %v3698 = vsel %vm296, %v3668, 0
        %3700 = vmatpush.msra.mxu0 0.0
        %3701 = vmatpush.msra.mxu0 0.0
        %3702 = vmatpush.msra.mxu0 0.0
        %3703 = vmatpush.msra.mxu0 0.0
        %3704 = vmatpush.msra.mxu0 0.0
        %3705 = vmatpush.msra.mxu0 0.0
        %3706 = vmatpush.msra.mxu0 0.0
        %3707 = vmatpush.msra.mxu0 0.0
        %3708 = vmatpush.msra.mxu0 0.0
        %3709 = vmatpush.msra.mxu0 0.0
        %3710 = vmatpush.msra.mxu0 0.0
        %3711 = vmatpush.msra.mxu0 0.0
        %3712 = vmatpush.msra.mxu0 0.0
        %3713 = vmatpush.msra.mxu0 0.0
        %3714 = vmatpush.msra.mxu0 0.0
        %3715 = vmatpush.msra.mxu0 %v3684
        %3716 = vmatmul.f32.gmra.mxu0 %v3698
        %v3717 = vpop.f32.mrf.mxu0
        %v3718 = vadd.f32 0.0, %v3717
        %3719 = vdwg.mxu0
        %3720 = vmatpush.msra.mxu0 0.0
        %3721 = vmatpush.msra.mxu0 0.0
        %3722 = vmatpush.msra.mxu0 0.0
        %3723 = vmatpush.msra.mxu0 0.0
        %3724 = vmatpush.msra.mxu0 0.0
        %3725 = vmatpush.msra.mxu0 0.0
        %3726 = vmatpush.msra.mxu0 0.0
        %3727 = vmatpush.msra.mxu0 0.0
        %3728 = vmatpush.msra.mxu0 0.0
        %3729 = vmatpush.msra.mxu0 0.0
        %3730 = vmatpush.msra.mxu0 0.0
        %3731 = vmatpush.msra.mxu0 0.0
        %3732 = vmatpush.msra.mxu0 0.0
        %3733 = vmatpush.msra.mxu0 0.0
        %3734 = vmatpush.msra.mxu0 0.0
        %3735 = vmatpush.msra.mxu0 %v3685
        %3736 = vmatmul.f32.gmra.mxu0 %v3698
        %v3737 = vpop.f32.mrf.mxu0
        %v3738 = vadd.f32 0.0, %v3737
        %3739 = vdwg.mxu0
        %3740 = vmatpush.msra.mxu0 0.0
        %3741 = vmatpush.msra.mxu0 0.0
        %3742 = vmatpush.msra.mxu0 0.0
        %3743 = vmatpush.msra.mxu0 0.0
        %3744 = vmatpush.msra.mxu0 0.0
        %3745 = vmatpush.msra.mxu0 0.0
        %3746 = vmatpush.msra.mxu0 0.0
        %3747 = vmatpush.msra.mxu0 0.0
        %3748 = vmatpush.msra.mxu0 0.0
        %3749 = vmatpush.msra.mxu0 0.0
        %3750 = vmatpush.msra.mxu0 0.0
        %3751 = vmatpush.msra.mxu0 0.0
        %3752 = vmatpush.msra.mxu0 0.0
        %3753 = vmatpush.msra.mxu0 0.0
        %3754 = vmatpush.msra.mxu0 0.0
        %3755 = vmatpush.msra.mxu0 %v3686
        %3756 = vmatmul.f32.gmra.mxu0 %v3698
        %v3757 = vpop.f32.mrf.mxu0
        %v3758 = vadd.f32 0.0, %v3757
        %3759 = vdwg.mxu0
        %3760 = vmatpush.msra.mxu0 0.0
        %3761 = vmatpush.msra.mxu0 0.0
        %3762 = vmatpush.msra.mxu0 0.0
        %3763 = vmatpush.msra.mxu0 0.0
        %3764 = vmatpush.msra.mxu0 0.0
        %3765 = vmatpush.msra.mxu0 0.0
        %3766 = vmatpush.msra.mxu0 0.0
        %3767 = vmatpush.msra.mxu0 0.0
        %3768 = vmatpush.msra.mxu0 0.0
        %3769 = vmatpush.msra.mxu0 0.0
        %3770 = vmatpush.msra.mxu0 0.0
        %3771 = vmatpush.msra.mxu0 0.0
        %3772 = vmatpush.msra.mxu0 0.0
        %3773 = vmatpush.msra.mxu0 0.0
        %3774 = vmatpush.msra.mxu0 0.0
        %3775 = vmatpush.msra.mxu0 %v3687
        %3776 = vmatmul.f32.gmra.mxu0 %v3698
        %v3777 = vpop.f32.mrf.mxu0
        %v3778 = vadd.f32 0.0, %v3777
        %3779 = vdwg.mxu0
        %3780 = vmatpush.msra.mxu0 0.0
        %3781 = vmatpush.msra.mxu0 0.0
        %3782 = vmatpush.msra.mxu0 0.0
        %3783 = vmatpush.msra.mxu0 0.0
        %3784 = vmatpush.msra.mxu0 0.0
        %3785 = vmatpush.msra.mxu0 0.0
        %3786 = vmatpush.msra.mxu0 0.0
        %3787 = vmatpush.msra.mxu0 0.0
        %3788 = vmatpush.msra.mxu0 0.0
        %3789 = vmatpush.msra.mxu0 0.0
        %3790 = vmatpush.msra.mxu0 0.0
        %3791 = vmatpush.msra.mxu0 0.0
        %3792 = vmatpush.msra.mxu0 0.0
        %3793 = vmatpush.msra.mxu0 0.0
        %3794 = vmatpush.msra.mxu0 0.0
        %3795 = vmatpush.msra.mxu0 %v3688
        %3796 = vmatmul.f32.gmra.mxu0 %v3698
        %v3797 = vpop.f32.mrf.mxu0
        %v3798 = vadd.f32 0.0, %v3797
        %3799 = vdwg.mxu0
        %3800 = vmatpush.msra.mxu0 0.0
        %3801 = vmatpush.msra.mxu0 0.0
        %3802 = vmatpush.msra.mxu0 0.0
        %3803 = vmatpush.msra.mxu0 0.0
        %3804 = vmatpush.msra.mxu0 0.0
        %3805 = vmatpush.msra.mxu0 0.0
        %3806 = vmatpush.msra.mxu0 0.0
        %3807 = vmatpush.msra.mxu0 0.0
        %3808 = vmatpush.msra.mxu0 0.0
        %3809 = vmatpush.msra.mxu0 0.0
        %3810 = vmatpush.msra.mxu0 0.0
        %3811 = vmatpush.msra.mxu0 0.0
        %3812 = vmatpush.msra.mxu0 0.0
        %3813 = vmatpush.msra.mxu0 0.0
        %3814 = vmatpush.msra.mxu0 0.0
        %3815 = vmatpush.msra.mxu0 %v3689
        %3816 = vmatmul.f32.gmra.mxu0 %v3698
        %v3817 = vpop.f32.mrf.mxu0
        %v3818 = vadd.f32 0.0, %v3817
        %3819 = vdwg.mxu0
        %3820 = vmatpush.msra.mxu0 0.0
        %3821 = vmatpush.msra.mxu0 0.0
        %3822 = vmatpush.msra.mxu0 0.0
        %3823 = vmatpush.msra.mxu0 0.0
        %3824 = vmatpush.msra.mxu0 0.0
        %3825 = vmatpush.msra.mxu0 0.0
        %3826 = vmatpush.msra.mxu0 0.0
        %3827 = vmatpush.msra.mxu0 0.0
        %3828 = vmatpush.msra.mxu0 0.0
        %3829 = vmatpush.msra.mxu0 0.0
        %3830 = vmatpush.msra.mxu0 0.0
        %3831 = vmatpush.msra.mxu0 0.0
        %3832 = vmatpush.msra.mxu0 0.0
        %3833 = vmatpush.msra.mxu0 0.0
        %3834 = vmatpush.msra.mxu0 0.0
        %3835 = vmatpush.msra.mxu0 %v3682
        %3836 = vmatmul.f32.gmra.mxu0 %v3698
        %v3837 = vpop.f32.mrf.mxu0
        %v3838 = vadd.f32 0.0, %v3837
        %3839 = vdwg.mxu0
        %v3840 = vadd.f32 %v3660, %v3718
        %v3841 = vadd.f32 %v3661, %v3738
        %v3842 = vadd.f32 %v3662, %v3758
        %v3843 = vadd.f32 %v3663, %v3778
        %v3844 = vadd.f32 %v3664, %v3798
        %v3845 = vadd.f32 %v3665, %v3818
        %v3846 = vadd.f32 %v3666, %v3838
        %s3847 = scalar_lea.vmem %s1, 160
        %v3848 = vld [vmem:[%s3847] sm:$0xff]
        %3849 = vrot.lane.b32.xlu0 %v2924, 54
        %v3850 = vpop.permute.xlu0 %3849
        %3851 = vrot.lane.b32.xlu0 %v2925, 54
        %v3852 = vpop.permute.xlu0 %3851
        %3853 = vrot.lane.b32.xlu0 %v2926, 54
        %v3854 = vpop.permute.xlu0 %3853
        %3855 = vrot.lane.b32.xlu0 %v2927, 54
        %v3856 = vpop.permute.xlu0 %3855
        %3857 = vrot.lane.b32.xlu0 %v2928, 54
        %v3858 = vpop.permute.xlu0 %3857
        %3859 = vrot.lane.b32.xlu0 %v2929, 54
        %v3860 = vpop.permute.xlu0 %3859
        %3861 = vrot.lane.b32.xlu0 %v2930, 54
        %v3862 = vpop.permute.xlu0 %3861
        %vm3863 = vcmask 441344
        %v3864 = vsel %vm3863, %v3850, %v3852
        %v3865 = vsel %vm3863, %v3852, %v3854
        %v3866 = vsel %vm3863, %v3854, %v3856
        %v3867 = vsel %vm3863, %v3856, %v3858
        %v3868 = vsel %vm3863, %v3858, %v3860
        %v3869 = vsel %vm3863, %v3860, %v3862
        %v3878 = vsel %vm296, %v3848, 0
        %3880 = vmatpush.msra.mxu0 0.0
        %3881 = vmatpush.msra.mxu0 0.0
        %3882 = vmatpush.msra.mxu0 0.0
        %3883 = vmatpush.msra.mxu0 0.0
        %3884 = vmatpush.msra.mxu0 0.0
        %3885 = vmatpush.msra.mxu0 0.0
        %3886 = vmatpush.msra.mxu0 0.0
        %3887 = vmatpush.msra.mxu0 0.0
        %3888 = vmatpush.msra.mxu0 0.0
        %3889 = vmatpush.msra.mxu0 0.0
        %3890 = vmatpush.msra.mxu0 0.0
        %3891 = vmatpush.msra.mxu0 0.0
        %3892 = vmatpush.msra.mxu0 0.0
        %3893 = vmatpush.msra.mxu0 0.0
        %3894 = vmatpush.msra.mxu0 0.0
        %3895 = vmatpush.msra.mxu0 %v3864
        %3896 = vmatmul.f32.gmra.mxu0 %v3878
        %v3897 = vpop.f32.mrf.mxu0
        %v3898 = vadd.f32 0.0, %v3897
        %3899 = vdwg.mxu0
        %3900 = vmatpush.msra.mxu0 0.0
        %3901 = vmatpush.msra.mxu0 0.0
        %3902 = vmatpush.msra.mxu0 0.0
        %3903 = vmatpush.msra.mxu0 0.0
        %3904 = vmatpush.msra.mxu0 0.0
        %3905 = vmatpush.msra.mxu0 0.0
        %3906 = vmatpush.msra.mxu0 0.0
        %3907 = vmatpush.msra.mxu0 0.0
        %3908 = vmatpush.msra.mxu0 0.0
        %3909 = vmatpush.msra.mxu0 0.0
        %3910 = vmatpush.msra.mxu0 0.0
        %3911 = vmatpush.msra.mxu0 0.0
        %3912 = vmatpush.msra.mxu0 0.0
        %3913 = vmatpush.msra.mxu0 0.0
        %3914 = vmatpush.msra.mxu0 0.0
        %3915 = vmatpush.msra.mxu0 %v3865
        %3916 = vmatmul.f32.gmra.mxu0 %v3878
        %v3917 = vpop.f32.mrf.mxu0
        %v3918 = vadd.f32 0.0, %v3917
        %3919 = vdwg.mxu0
        %3920 = vmatpush.msra.mxu0 0.0
        %3921 = vmatpush.msra.mxu0 0.0
        %3922 = vmatpush.msra.mxu0 0.0
        %3923 = vmatpush.msra.mxu0 0.0
        %3924 = vmatpush.msra.mxu0 0.0
        %3925 = vmatpush.msra.mxu0 0.0
        %3926 = vmatpush.msra.mxu0 0.0
        %3927 = vmatpush.msra.mxu0 0.0
        %3928 = vmatpush.msra.mxu0 0.0
        %3929 = vmatpush.msra.mxu0 0.0
        %3930 = vmatpush.msra.mxu0 0.0
        %3931 = vmatpush.msra.mxu0 0.0
        %3932 = vmatpush.msra.mxu0 0.0
        %3933 = vmatpush.msra.mxu0 0.0
        %3934 = vmatpush.msra.mxu0 0.0
        %3935 = vmatpush.msra.mxu0 %v3866
        %3936 = vmatmul.f32.gmra.mxu0 %v3878
        %v3937 = vpop.f32.mrf.mxu0
        %v3938 = vadd.f32 0.0, %v3937
        %3939 = vdwg.mxu0
        %3940 = vmatpush.msra.mxu0 0.0
        %3941 = vmatpush.msra.mxu0 0.0
        %3942 = vmatpush.msra.mxu0 0.0
        %3943 = vmatpush.msra.mxu0 0.0
        %3944 = vmatpush.msra.mxu0 0.0
        %3945 = vmatpush.msra.mxu0 0.0
        %3946 = vmatpush.msra.mxu0 0.0
        %3947 = vmatpush.msra.mxu0 0.0
        %3948 = vmatpush.msra.mxu0 0.0
        %3949 = vmatpush.msra.mxu0 0.0
        %3950 = vmatpush.msra.mxu0 0.0
        %3951 = vmatpush.msra.mxu0 0.0
        %3952 = vmatpush.msra.mxu0 0.0
        %3953 = vmatpush.msra.mxu0 0.0
        %3954 = vmatpush.msra.mxu0 0.0
        %3955 = vmatpush.msra.mxu0 %v3867
        %3956 = vmatmul.f32.gmra.mxu0 %v3878
        %v3957 = vpop.f32.mrf.mxu0
        %v3958 = vadd.f32 0.0, %v3957
        %3959 = vdwg.mxu0
        %3960 = vmatpush.msra.mxu0 0.0
        %3961 = vmatpush.msra.mxu0 0.0
        %3962 = vmatpush.msra.mxu0 0.0
        %3963 = vmatpush.msra.mxu0 0.0
        %3964 = vmatpush.msra.mxu0 0.0
        %3965 = vmatpush.msra.mxu0 0.0
        %3966 = vmatpush.msra.mxu0 0.0
        %3967 = vmatpush.msra.mxu0 0.0
        %3968 = vmatpush.msra.mxu0 0.0
        %3969 = vmatpush.msra.mxu0 0.0
        %3970 = vmatpush.msra.mxu0 0.0
        %3971 = vmatpush.msra.mxu0 0.0
        %3972 = vmatpush.msra.mxu0 0.0
        %3973 = vmatpush.msra.mxu0 0.0
        %3974 = vmatpush.msra.mxu0 0.0
        %3975 = vmatpush.msra.mxu0 %v3868
        %3976 = vmatmul.f32.gmra.mxu0 %v3878
        %v3977 = vpop.f32.mrf.mxu0
        %v3978 = vadd.f32 0.0, %v3977
        %3979 = vdwg.mxu0
        %3980 = vmatpush.msra.mxu0 0.0
        %3981 = vmatpush.msra.mxu0 0.0
        %3982 = vmatpush.msra.mxu0 0.0
        %3983 = vmatpush.msra.mxu0 0.0
        %3984 = vmatpush.msra.mxu0 0.0
        %3985 = vmatpush.msra.mxu0 0.0
        %3986 = vmatpush.msra.mxu0 0.0
        %3987 = vmatpush.msra.mxu0 0.0
        %3988 = vmatpush.msra.mxu0 0.0
        %3989 = vmatpush.msra.mxu0 0.0
        %3990 = vmatpush.msra.mxu0 0.0
        %3991 = vmatpush.msra.mxu0 0.0
        %3992 = vmatpush.msra.mxu0 0.0
        %3993 = vmatpush.msra.mxu0 0.0
        %3994 = vmatpush.msra.mxu0 0.0
        %3995 = vmatpush.msra.mxu0 %v3869
        %3996 = vmatmul.f32.gmra.mxu0 %v3878
        %v3997 = vpop.f32.mrf.mxu0
        %v3998 = vadd.f32 0.0, %v3997
        %3999 = vdwg.mxu0
        %4000 = vmatpush.msra.mxu0 0.0
        %4001 = vmatpush.msra.mxu0 0.0
        %4002 = vmatpush.msra.mxu0 0.0
        %4003 = vmatpush.msra.mxu0 0.0
        %4004 = vmatpush.msra.mxu0 0.0
        %4005 = vmatpush.msra.mxu0 0.0
        %4006 = vmatpush.msra.mxu0 0.0
        %4007 = vmatpush.msra.mxu0 0.0
        %4008 = vmatpush.msra.mxu0 0.0
        %4009 = vmatpush.msra.mxu0 0.0
        %4010 = vmatpush.msra.mxu0 0.0
        %4011 = vmatpush.msra.mxu0 0.0
        %4012 = vmatpush.msra.mxu0 0.0
        %4013 = vmatpush.msra.mxu0 0.0
        %4014 = vmatpush.msra.mxu0 0.0
        %4015 = vmatpush.msra.mxu0 %v3862
        %4016 = vmatmul.f32.gmra.mxu0 %v3878
        %v4017 = vpop.f32.mrf.mxu0
        %v4018 = vadd.f32 0.0, %v4017
        %4019 = vdwg.mxu0
        %v4020 = vadd.f32 %v3840, %v3898
        %v4021 = vadd.f32 %v3841, %v3918
        %v4022 = vadd.f32 %v3842, %v3938
        %v4023 = vadd.f32 %v3843, %v3958
        %v4024 = vadd.f32 %v3844, %v3978
        %v4025 = vadd.f32 %v3845, %v3998
        %v4026 = vadd.f32 %v3846, %v4018
        %s4027 = scalar_lea.vmem %s1, 168
        %v4028 = vld [vmem:[%s4027] sm:$0xff]
        %4029 = vrot.lane.b32.xlu0 %v2924, 46
        %v4030 = vpop.permute.xlu0 %4029
        %4031 = vrot.lane.b32.xlu0 %v2925, 46
        %v4032 = vpop.permute.xlu0 %4031
        %4033 = vrot.lane.b32.xlu0 %v2926, 46
        %v4034 = vpop.permute.xlu0 %4033
        %4035 = vrot.lane.b32.xlu0 %v2927, 46
        %v4036 = vpop.permute.xlu0 %4035
        %4037 = vrot.lane.b32.xlu0 %v2928, 46
        %v4038 = vpop.permute.xlu0 %4037
        %4039 = vrot.lane.b32.xlu0 %v2929, 46
        %v4040 = vpop.permute.xlu0 %4039
        %4041 = vrot.lane.b32.xlu0 %v2930, 46
        %v4042 = vpop.permute.xlu0 %4041
        %vm4043 = vcmask 375808
        %v4044 = vsel %vm4043, %v4030, %v4032
        %v4045 = vsel %vm4043, %v4032, %v4034
        %v4046 = vsel %vm4043, %v4034, %v4036
        %v4047 = vsel %vm4043, %v4036, %v4038
        %v4048 = vsel %vm4043, %v4038, %v4040
        %v4049 = vsel %vm4043, %v4040, %v4042
        %v4058 = vsel %vm296, %v4028, 0
        %4060 = vmatpush.msra.mxu0 0.0
        %4061 = vmatpush.msra.mxu0 0.0
        %4062 = vmatpush.msra.mxu0 0.0
        %4063 = vmatpush.msra.mxu0 0.0
        %4064 = vmatpush.msra.mxu0 0.0
        %4065 = vmatpush.msra.mxu0 0.0
        %4066 = vmatpush.msra.mxu0 0.0
        %4067 = vmatpush.msra.mxu0 0.0
        %4068 = vmatpush.msra.mxu0 0.0
        %4069 = vmatpush.msra.mxu0 0.0
        %4070 = vmatpush.msra.mxu0 0.0
        %4071 = vmatpush.msra.mxu0 0.0
        %4072 = vmatpush.msra.mxu0 0.0
        %4073 = vmatpush.msra.mxu0 0.0
        %4074 = vmatpush.msra.mxu0 0.0
        %4075 = vmatpush.msra.mxu0 %v4044
        %4076 = vmatmul.f32.gmra.mxu0 %v4058
        %v4077 = vpop.f32.mrf.mxu0
        %v4078 = vadd.f32 0.0, %v4077
        %4079 = vdwg.mxu0
        %4080 = vmatpush.msra.mxu0 0.0
        %4081 = vmatpush.msra.mxu0 0.0
        %4082 = vmatpush.msra.mxu0 0.0
        %4083 = vmatpush.msra.mxu0 0.0
        %4084 = vmatpush.msra.mxu0 0.0
        %4085 = vmatpush.msra.mxu0 0.0
        %4086 = vmatpush.msra.mxu0 0.0
        %4087 = vmatpush.msra.mxu0 0.0
        %4088 = vmatpush.msra.mxu0 0.0
        %4089 = vmatpush.msra.mxu0 0.0
        %4090 = vmatpush.msra.mxu0 0.0
        %4091 = vmatpush.msra.mxu0 0.0
        %4092 = vmatpush.msra.mxu0 0.0
        %4093 = vmatpush.msra.mxu0 0.0
        %4094 = vmatpush.msra.mxu0 0.0
        %4095 = vmatpush.msra.mxu0 %v4045
        %4096 = vmatmul.f32.gmra.mxu0 %v4058
        %v4097 = vpop.f32.mrf.mxu0
        %v4098 = vadd.f32 0.0, %v4097
        %4099 = vdwg.mxu0
        %4100 = vmatpush.msra.mxu0 0.0
        %4101 = vmatpush.msra.mxu0 0.0
        %4102 = vmatpush.msra.mxu0 0.0
        %4103 = vmatpush.msra.mxu0 0.0
        %4104 = vmatpush.msra.mxu0 0.0
        %4105 = vmatpush.msra.mxu0 0.0
        %4106 = vmatpush.msra.mxu0 0.0
        %4107 = vmatpush.msra.mxu0 0.0
        %4108 = vmatpush.msra.mxu0 0.0
        %4109 = vmatpush.msra.mxu0 0.0
        %4110 = vmatpush.msra.mxu0 0.0
        %4111 = vmatpush.msra.mxu0 0.0
        %4112 = vmatpush.msra.mxu0 0.0
        %4113 = vmatpush.msra.mxu0 0.0
        %4114 = vmatpush.msra.mxu0 0.0
        %4115 = vmatpush.msra.mxu0 %v4046
        %4116 = vmatmul.f32.gmra.mxu0 %v4058
        %v4117 = vpop.f32.mrf.mxu0
        %v4118 = vadd.f32 0.0, %v4117
        %4119 = vdwg.mxu0
        %4120 = vmatpush.msra.mxu0 0.0
        %4121 = vmatpush.msra.mxu0 0.0
        %4122 = vmatpush.msra.mxu0 0.0
        %4123 = vmatpush.msra.mxu0 0.0
        %4124 = vmatpush.msra.mxu0 0.0
        %4125 = vmatpush.msra.mxu0 0.0
        %4126 = vmatpush.msra.mxu0 0.0
        %4127 = vmatpush.msra.mxu0 0.0
        %4128 = vmatpush.msra.mxu0 0.0
        %4129 = vmatpush.msra.mxu0 0.0
        %4130 = vmatpush.msra.mxu0 0.0
        %4131 = vmatpush.msra.mxu0 0.0
        %4132 = vmatpush.msra.mxu0 0.0
        %4133 = vmatpush.msra.mxu0 0.0
        %4134 = vmatpush.msra.mxu0 0.0
        %4135 = vmatpush.msra.mxu0 %v4047
        %4136 = vmatmul.f32.gmra.mxu0 %v4058
        %v4137 = vpop.f32.mrf.mxu0
        %v4138 = vadd.f32 0.0, %v4137
        %4139 = vdwg.mxu0
        %4140 = vmatpush.msra.mxu0 0.0
        %4141 = vmatpush.msra.mxu0 0.0
        %4142 = vmatpush.msra.mxu0 0.0
        %4143 = vmatpush.msra.mxu0 0.0
        %4144 = vmatpush.msra.mxu0 0.0
        %4145 = vmatpush.msra.mxu0 0.0
        %4146 = vmatpush.msra.mxu0 0.0
        %4147 = vmatpush.msra.mxu0 0.0
        %4148 = vmatpush.msra.mxu0 0.0
        %4149 = vmatpush.msra.mxu0 0.0
        %4150 = vmatpush.msra.mxu0 0.0
        %4151 = vmatpush.msra.mxu0 0.0
        %4152 = vmatpush.msra.mxu0 0.0
        %4153 = vmatpush.msra.mxu0 0.0
        %4154 = vmatpush.msra.mxu0 0.0
        %4155 = vmatpush.msra.mxu0 %v4048
        %4156 = vmatmul.f32.gmra.mxu0 %v4058
        %v4157 = vpop.f32.mrf.mxu0
        %v4158 = vadd.f32 0.0, %v4157
        %4159 = vdwg.mxu0
        %4160 = vmatpush.msra.mxu0 0.0
        %4161 = vmatpush.msra.mxu0 0.0
        %4162 = vmatpush.msra.mxu0 0.0
        %4163 = vmatpush.msra.mxu0 0.0
        %4164 = vmatpush.msra.mxu0 0.0
        %4165 = vmatpush.msra.mxu0 0.0
        %4166 = vmatpush.msra.mxu0 0.0
        %4167 = vmatpush.msra.mxu0 0.0
        %4168 = vmatpush.msra.mxu0 0.0
        %4169 = vmatpush.msra.mxu0 0.0
        %4170 = vmatpush.msra.mxu0 0.0
        %4171 = vmatpush.msra.mxu0 0.0
        %4172 = vmatpush.msra.mxu0 0.0
        %4173 = vmatpush.msra.mxu0 0.0
        %4174 = vmatpush.msra.mxu0 0.0
        %4175 = vmatpush.msra.mxu0 %v4049
        %4176 = vmatmul.f32.gmra.mxu0 %v4058
        %v4177 = vpop.f32.mrf.mxu0
        %v4178 = vadd.f32 0.0, %v4177
        %4179 = vdwg.mxu0
        %4180 = vmatpush.msra.mxu0 0.0
        %4181 = vmatpush.msra.mxu0 0.0
        %4182 = vmatpush.msra.mxu0 0.0
        %4183 = vmatpush.msra.mxu0 0.0
        %4184 = vmatpush.msra.mxu0 0.0
        %4185 = vmatpush.msra.mxu0 0.0
        %4186 = vmatpush.msra.mxu0 0.0
        %4187 = vmatpush.msra.mxu0 0.0
        %4188 = vmatpush.msra.mxu0 0.0
        %4189 = vmatpush.msra.mxu0 0.0
        %4190 = vmatpush.msra.mxu0 0.0
        %4191 = vmatpush.msra.mxu0 0.0
        %4192 = vmatpush.msra.mxu0 0.0
        %4193 = vmatpush.msra.mxu0 0.0
        %4194 = vmatpush.msra.mxu0 0.0
        %4195 = vmatpush.msra.mxu0 %v4042
        %4196 = vmatmul.f32.gmra.mxu0 %v4058
        %v4197 = vpop.f32.mrf.mxu0
        %v4198 = vadd.f32 0.0, %v4197
        %4199 = vdwg.mxu0
        %v4200 = vadd.f32 %v4020, %v4078
        %v4201 = vadd.f32 %v4021, %v4098
        %v4202 = vadd.f32 %v4022, %v4118
        %v4203 = vadd.f32 %v4023, %v4138
        %v4204 = vadd.f32 %v4024, %v4158
        %v4205 = vadd.f32 %v4025, %v4178
        %v4206 = vadd.f32 %v4026, %v4198
        %s4207 = scalar_lea.vmem %s1, 176
        %v4208 = vld [vmem:[%s4207] sm:$0xff]
        %4209 = vrot.lane.b32.xlu0 %v2924, 45
        %v4210 = vpop.permute.xlu0 %4209
        %4211 = vrot.lane.b32.xlu0 %v2925, 45
        %v4212 = vpop.permute.xlu0 %4211
        %4213 = vrot.lane.b32.xlu0 %v2926, 45
        %v4214 = vpop.permute.xlu0 %4213
        %4215 = vrot.lane.b32.xlu0 %v2927, 45
        %v4216 = vpop.permute.xlu0 %4215
        %4217 = vrot.lane.b32.xlu0 %v2928, 45
        %v4218 = vpop.permute.xlu0 %4217
        %4219 = vrot.lane.b32.xlu0 %v2929, 45
        %v4220 = vpop.permute.xlu0 %4219
        %4221 = vrot.lane.b32.xlu0 %v2930, 45
        %v4222 = vpop.permute.xlu0 %4221
        %vm4223 = vcmask 367616
        %v4224 = vsel %vm4223, %v4210, %v4212
        %v4225 = vsel %vm4223, %v4212, %v4214
        %v4226 = vsel %vm4223, %v4214, %v4216
        %v4227 = vsel %vm4223, %v4216, %v4218
        %v4228 = vsel %vm4223, %v4218, %v4220
        %v4229 = vsel %vm4223, %v4220, %v4222
        %v4238 = vsel %vm296, %v4208, 0
        %4240 = vmatpush.msra.mxu0 0.0
        %4241 = vmatpush.msra.mxu0 0.0
        %4242 = vmatpush.msra.mxu0 0.0
        %4243 = vmatpush.msra.mxu0 0.0
        %4244 = vmatpush.msra.mxu0 0.0
        %4245 = vmatpush.msra.mxu0 0.0
        %4246 = vmatpush.msra.mxu0 0.0
        %4247 = vmatpush.msra.mxu0 0.0
        %4248 = vmatpush.msra.mxu0 0.0
        %4249 = vmatpush.msra.mxu0 0.0
        %4250 = vmatpush.msra.mxu0 0.0
        %4251 = vmatpush.msra.mxu0 0.0
        %4252 = vmatpush.msra.mxu0 0.0
        %4253 = vmatpush.msra.mxu0 0.0
        %4254 = vmatpush.msra.mxu0 0.0
        %4255 = vmatpush.msra.mxu0 %v4224
        %4256 = vmatmul.f32.gmra.mxu0 %v4238
        %v4257 = vpop.f32.mrf.mxu0
        %v4258 = vadd.f32 0.0, %v4257
        %4259 = vdwg.mxu0
        %4260 = vmatpush.msra.mxu0 0.0
        %4261 = vmatpush.msra.mxu0 0.0
        %4262 = vmatpush.msra.mxu0 0.0
        %4263 = vmatpush.msra.mxu0 0.0
        %4264 = vmatpush.msra.mxu0 0.0
        %4265 = vmatpush.msra.mxu0 0.0
        %4266 = vmatpush.msra.mxu0 0.0
        %4267 = vmatpush.msra.mxu0 0.0
        %4268 = vmatpush.msra.mxu0 0.0
        %4269 = vmatpush.msra.mxu0 0.0
        %4270 = vmatpush.msra.mxu0 0.0
        %4271 = vmatpush.msra.mxu0 0.0
        %4272 = vmatpush.msra.mxu0 0.0
        %4273 = vmatpush.msra.mxu0 0.0
        %4274 = vmatpush.msra.mxu0 0.0
        %4275 = vmatpush.msra.mxu0 %v4225
        %4276 = vmatmul.f32.gmra.mxu0 %v4238
        %v4277 = vpop.f32.mrf.mxu0
        %v4278 = vadd.f32 0.0, %v4277
        %4279 = vdwg.mxu0
        %4280 = vmatpush.msra.mxu0 0.0
        %4281 = vmatpush.msra.mxu0 0.0
        %4282 = vmatpush.msra.mxu0 0.0
        %4283 = vmatpush.msra.mxu0 0.0
        %4284 = vmatpush.msra.mxu0 0.0
        %4285 = vmatpush.msra.mxu0 0.0
        %4286 = vmatpush.msra.mxu0 0.0
        %4287 = vmatpush.msra.mxu0 0.0
        %4288 = vmatpush.msra.mxu0 0.0
        %4289 = vmatpush.msra.mxu0 0.0
        %4290 = vmatpush.msra.mxu0 0.0
        %4291 = vmatpush.msra.mxu0 0.0
        %4292 = vmatpush.msra.mxu0 0.0
        %4293 = vmatpush.msra.mxu0 0.0
        %4294 = vmatpush.msra.mxu0 0.0
        %4295 = vmatpush.msra.mxu0 %v4226
        %4296 = vmatmul.f32.gmra.mxu0 %v4238
        %v4297 = vpop.f32.mrf.mxu0
        %v4298 = vadd.f32 0.0, %v4297
        %4299 = vdwg.mxu0
        %4300 = vmatpush.msra.mxu0 0.0
        %4301 = vmatpush.msra.mxu0 0.0
        %4302 = vmatpush.msra.mxu0 0.0
        %4303 = vmatpush.msra.mxu0 0.0
        %4304 = vmatpush.msra.mxu0 0.0
        %4305 = vmatpush.msra.mxu0 0.0
        %4306 = vmatpush.msra.mxu0 0.0
        %4307 = vmatpush.msra.mxu0 0.0
        %4308 = vmatpush.msra.mxu0 0.0
        %4309 = vmatpush.msra.mxu0 0.0
        %4310 = vmatpush.msra.mxu0 0.0
        %4311 = vmatpush.msra.mxu0 0.0
        %4312 = vmatpush.msra.mxu0 0.0
        %4313 = vmatpush.msra.mxu0 0.0
        %4314 = vmatpush.msra.mxu0 0.0
        %4315 = vmatpush.msra.mxu0 %v4227
        %4316 = vmatmul.f32.gmra.mxu0 %v4238
        %v4317 = vpop.f32.mrf.mxu0
        %v4318 = vadd.f32 0.0, %v4317
        %4319 = vdwg.mxu0
        %4320 = vmatpush.msra.mxu0 0.0
        %4321 = vmatpush.msra.mxu0 0.0
        %4322 = vmatpush.msra.mxu0 0.0
        %4323 = vmatpush.msra.mxu0 0.0
        %4324 = vmatpush.msra.mxu0 0.0
        %4325 = vmatpush.msra.mxu0 0.0
        %4326 = vmatpush.msra.mxu0 0.0
        %4327 = vmatpush.msra.mxu0 0.0
        %4328 = vmatpush.msra.mxu0 0.0
        %4329 = vmatpush.msra.mxu0 0.0
        %4330 = vmatpush.msra.mxu0 0.0
        %4331 = vmatpush.msra.mxu0 0.0
        %4332 = vmatpush.msra.mxu0 0.0
        %4333 = vmatpush.msra.mxu0 0.0
        %4334 = vmatpush.msra.mxu0 0.0
        %4335 = vmatpush.msra.mxu0 %v4228
        %4336 = vmatmul.f32.gmra.mxu0 %v4238
        %v4337 = vpop.f32.mrf.mxu0
        %v4338 = vadd.f32 0.0, %v4337
        %4339 = vdwg.mxu0
        %4340 = vmatpush.msra.mxu0 0.0
        %4341 = vmatpush.msra.mxu0 0.0
        %4342 = vmatpush.msra.mxu0 0.0
        %4343 = vmatpush.msra.mxu0 0.0
        %4344 = vmatpush.msra.mxu0 0.0
        %4345 = vmatpush.msra.mxu0 0.0
        %4346 = vmatpush.msra.mxu0 0.0
        %4347 = vmatpush.msra.mxu0 0.0
        %4348 = vmatpush.msra.mxu0 0.0
        %4349 = vmatpush.msra.mxu0 0.0
        %4350 = vmatpush.msra.mxu0 0.0
        %4351 = vmatpush.msra.mxu0 0.0
        %4352 = vmatpush.msra.mxu0 0.0
        %4353 = vmatpush.msra.mxu0 0.0
        %4354 = vmatpush.msra.mxu0 0.0
        %4355 = vmatpush.msra.mxu0 %v4229
        %4356 = vmatmul.f32.gmra.mxu0 %v4238
        %v4357 = vpop.f32.mrf.mxu0
        %v4358 = vadd.f32 0.0, %v4357
        %4359 = vdwg.mxu0
        %4360 = vmatpush.msra.mxu0 0.0
        %4361 = vmatpush.msra.mxu0 0.0
        %4362 = vmatpush.msra.mxu0 0.0
        %4363 = vmatpush.msra.mxu0 0.0
        %4364 = vmatpush.msra.mxu0 0.0
        %4365 = vmatpush.msra.mxu0 0.0
        %4366 = vmatpush.msra.mxu0 0.0
        %4367 = vmatpush.msra.mxu0 0.0
        %4368 = vmatpush.msra.mxu0 0.0
        %4369 = vmatpush.msra.mxu0 0.0
        %4370 = vmatpush.msra.mxu0 0.0
        %4371 = vmatpush.msra.mxu0 0.0
        %4372 = vmatpush.msra.mxu0 0.0
        %4373 = vmatpush.msra.mxu0 0.0
        %4374 = vmatpush.msra.mxu0 0.0
        %4375 = vmatpush.msra.mxu0 %v4222
        %4376 = vmatmul.f32.gmra.mxu0 %v4238
        %v4377 = vpop.f32.mrf.mxu0
        %v4378 = vadd.f32 0.0, %v4377
        %4379 = vdwg.mxu0
        %v4380 = vadd.f32 %v4200, %v4258
        %v4381 = vadd.f32 %v4201, %v4278
        %v4382 = vadd.f32 %v4202, %v4298
        %v4383 = vadd.f32 %v4203, %v4318
        %v4384 = vadd.f32 %v4204, %v4338
        %v4385 = vadd.f32 %v4205, %v4358
        %v4386 = vadd.f32 %v4206, %v4378
        %s4387 = scalar_lea.vmem %s1, 184
        %v4388 = vld [vmem:[%s4387] sm:$0xff]
        %4389 = vrot.lane.b32.xlu0 %v2924, 44
        %v4390 = vpop.permute.xlu0 %4389
        %4391 = vrot.lane.b32.xlu0 %v2925, 44
        %v4392 = vpop.permute.xlu0 %4391
        %4393 = vrot.lane.b32.xlu0 %v2926, 44
        %v4394 = vpop.permute.xlu0 %4393
        %4395 = vrot.lane.b32.xlu0 %v2927, 44
        %v4396 = vpop.permute.xlu0 %4395
        %4397 = vrot.lane.b32.xlu0 %v2928, 44
        %v4398 = vpop.permute.xlu0 %4397
        %4399 = vrot.lane.b32.xlu0 %v2929, 44
        %v4400 = vpop.permute.xlu0 %4399
        %4401 = vrot.lane.b32.xlu0 %v2930, 44
        %v4402 = vpop.permute.xlu0 %4401
        %vm4403 = vcmask 359424
        %v4404 = vsel %vm4403, %v4390, %v4392
        %v4405 = vsel %vm4403, %v4392, %v4394
        %v4406 = vsel %vm4403, %v4394, %v4396
        %v4407 = vsel %vm4403, %v4396, %v4398
        %v4408 = vsel %vm4403, %v4398, %v4400
        %v4409 = vsel %vm4403, %v4400, %v4402
        %v4418 = vsel %vm296, %v4388, 0
        %4420 = vmatpush.msra.mxu0 0.0
        %4421 = vmatpush.msra.mxu0 0.0
        %4422 = vmatpush.msra.mxu0 0.0
        %4423 = vmatpush.msra.mxu0 0.0
        %4424 = vmatpush.msra.mxu0 0.0
        %4425 = vmatpush.msra.mxu0 0.0
        %4426 = vmatpush.msra.mxu0 0.0
        %4427 = vmatpush.msra.mxu0 0.0
        %4428 = vmatpush.msra.mxu0 0.0
        %4429 = vmatpush.msra.mxu0 0.0
        %4430 = vmatpush.msra.mxu0 0.0
        %4431 = vmatpush.msra.mxu0 0.0
        %4432 = vmatpush.msra.mxu0 0.0
        %4433 = vmatpush.msra.mxu0 0.0
        %4434 = vmatpush.msra.mxu0 0.0
        %4435 = vmatpush.msra.mxu0 %v4404
        %4436 = vmatmul.f32.gmra.mxu0 %v4418
        %v4437 = vpop.f32.mrf.mxu0
        %v4438 = vadd.f32 0.0, %v4437
        %4439 = vdwg.mxu0
        %4440 = vmatpush.msra.mxu0 0.0
        %4441 = vmatpush.msra.mxu0 0.0
        %4442 = vmatpush.msra.mxu0 0.0
        %4443 = vmatpush.msra.mxu0 0.0
        %4444 = vmatpush.msra.mxu0 0.0
        %4445 = vmatpush.msra.mxu0 0.0
        %4446 = vmatpush.msra.mxu0 0.0
        %4447 = vmatpush.msra.mxu0 0.0
        %4448 = vmatpush.msra.mxu0 0.0
        %4449 = vmatpush.msra.mxu0 0.0
        %4450 = vmatpush.msra.mxu0 0.0
        %4451 = vmatpush.msra.mxu0 0.0
        %4452 = vmatpush.msra.mxu0 0.0
        %4453 = vmatpush.msra.mxu0 0.0
        %4454 = vmatpush.msra.mxu0 0.0
        %4455 = vmatpush.msra.mxu0 %v4405
        %4456 = vmatmul.f32.gmra.mxu0 %v4418
        %v4457 = vpop.f32.mrf.mxu0
        %v4458 = vadd.f32 0.0, %v4457
        %4459 = vdwg.mxu0
        %4460 = vmatpush.msra.mxu0 0.0
        %4461 = vmatpush.msra.mxu0 0.0
        %4462 = vmatpush.msra.mxu0 0.0
        %4463 = vmatpush.msra.mxu0 0.0
        %4464 = vmatpush.msra.mxu0 0.0
        %4465 = vmatpush.msra.mxu0 0.0
        %4466 = vmatpush.msra.mxu0 0.0
        %4467 = vmatpush.msra.mxu0 0.0
        %4468 = vmatpush.msra.mxu0 0.0
        %4469 = vmatpush.msra.mxu0 0.0
        %4470 = vmatpush.msra.mxu0 0.0
        %4471 = vmatpush.msra.mxu0 0.0
        %4472 = vmatpush.msra.mxu0 0.0
        %4473 = vmatpush.msra.mxu0 0.0
        %4474 = vmatpush.msra.mxu0 0.0
        %4475 = vmatpush.msra.mxu0 %v4406
        %4476 = vmatmul.f32.gmra.mxu0 %v4418
        %v4477 = vpop.f32.mrf.mxu0
        %v4478 = vadd.f32 0.0, %v4477
        %4479 = vdwg.mxu0
        %4480 = vmatpush.msra.mxu0 0.0
        %4481 = vmatpush.msra.mxu0 0.0
        %4482 = vmatpush.msra.mxu0 0.0
        %4483 = vmatpush.msra.mxu0 0.0
        %4484 = vmatpush.msra.mxu0 0.0
        %4485 = vmatpush.msra.mxu0 0.0
        %4486 = vmatpush.msra.mxu0 0.0
        %4487 = vmatpush.msra.mxu0 0.0
        %4488 = vmatpush.msra.mxu0 0.0
        %4489 = vmatpush.msra.mxu0 0.0
        %4490 = vmatpush.msra.mxu0 0.0
        %4491 = vmatpush.msra.mxu0 0.0
        %4492 = vmatpush.msra.mxu0 0.0
        %4493 = vmatpush.msra.mxu0 0.0
        %4494 = vmatpush.msra.mxu0 0.0
        %4495 = vmatpush.msra.mxu0 %v4407
        %4496 = vmatmul.f32.gmra.mxu0 %v4418
        %v4497 = vpop.f32.mrf.mxu0
        %v4498 = vadd.f32 0.0, %v4497
        %4499 = vdwg.mxu0
        %4500 = vmatpush.msra.mxu0 0.0
        %4501 = vmatpush.msra.mxu0 0.0
        %4502 = vmatpush.msra.mxu0 0.0
        %4503 = vmatpush.msra.mxu0 0.0
        %4504 = vmatpush.msra.mxu0 0.0
        %4505 = vmatpush.msra.mxu0 0.0
        %4506 = vmatpush.msra.mxu0 0.0
        %4507 = vmatpush.msra.mxu0 0.0
        %4508 = vmatpush.msra.mxu0 0.0
        %4509 = vmatpush.msra.mxu0 0.0
        %4510 = vmatpush.msra.mxu0 0.0
        %4511 = vmatpush.msra.mxu0 0.0
        %4512 = vmatpush.msra.mxu0 0.0
        %4513 = vmatpush.msra.mxu0 0.0
        %4514 = vmatpush.msra.mxu0 0.0
        %4515 = vmatpush.msra.mxu0 %v4408
        %4516 = vmatmul.f32.gmra.mxu0 %v4418
        %v4517 = vpop.f32.mrf.mxu0
        %v4518 = vadd.f32 0.0, %v4517
        %4519 = vdwg.mxu0
        %4520 = vmatpush.msra.mxu0 0.0
        %4521 = vmatpush.msra.mxu0 0.0
        %4522 = vmatpush.msra.mxu0 0.0
        %4523 = vmatpush.msra.mxu0 0.0
        %4524 = vmatpush.msra.mxu0 0.0
        %4525 = vmatpush.msra.mxu0 0.0
        %4526 = vmatpush.msra.mxu0 0.0
        %4527 = vmatpush.msra.mxu0 0.0
        %4528 = vmatpush.msra.mxu0 0.0
        %4529 = vmatpush.msra.mxu0 0.0
        %4530 = vmatpush.msra.mxu0 0.0
        %4531 = vmatpush.msra.mxu0 0.0
        %4532 = vmatpush.msra.mxu0 0.0
        %4533 = vmatpush.msra.mxu0 0.0
        %4534 = vmatpush.msra.mxu0 0.0
        %4535 = vmatpush.msra.mxu0 %v4409
        %4536 = vmatmul.f32.gmra.mxu0 %v4418
        %v4537 = vpop.f32.mrf.mxu0
        %v4538 = vadd.f32 0.0, %v4537
        %4539 = vdwg.mxu0
        %4540 = vmatpush.msra.mxu0 0.0
        %4541 = vmatpush.msra.mxu0 0.0
        %4542 = vmatpush.msra.mxu0 0.0
        %4543 = vmatpush.msra.mxu0 0.0
        %4544 = vmatpush.msra.mxu0 0.0
        %4545 = vmatpush.msra.mxu0 0.0
        %4546 = vmatpush.msra.mxu0 0.0
        %4547 = vmatpush.msra.mxu0 0.0
        %4548 = vmatpush.msra.mxu0 0.0
        %4549 = vmatpush.msra.mxu0 0.0
        %4550 = vmatpush.msra.mxu0 0.0
        %4551 = vmatpush.msra.mxu0 0.0
        %4552 = vmatpush.msra.mxu0 0.0
        %4553 = vmatpush.msra.mxu0 0.0
        %4554 = vmatpush.msra.mxu0 0.0
        %4555 = vmatpush.msra.mxu0 %v4402
        %4556 = vmatmul.f32.gmra.mxu0 %v4418
        %v4557 = vpop.f32.mrf.mxu0
        %v4558 = vadd.f32 0.0, %v4557
        %4559 = vdwg.mxu0
        %v4560 = vadd.f32 %v4380, %v4438
        %v4561 = vadd.f32 %v4381, %v4458
        %v4562 = vadd.f32 %v4382, %v4478
        %v4563 = vadd.f32 %v4383, %v4498
        %v4564 = vadd.f32 %v4384, %v4518
        %v4565 = vadd.f32 %v4385, %v4538
        %v4566 = vadd.f32 %v4386, %v4558
        %s4567 = scalar_lea.vmem %s1, 192
        %v4568 = vld [vmem:[%s4567] sm:$0xff]
        %4569 = vrot.lane.b32.xlu0 %v2924, 36
        %v4570 = vpop.permute.xlu0 %4569
        %4571 = vrot.lane.b32.xlu0 %v2925, 36
        %v4572 = vpop.permute.xlu0 %4571
        %4573 = vrot.lane.b32.xlu0 %v2926, 36
        %v4574 = vpop.permute.xlu0 %4573
        %4575 = vrot.lane.b32.xlu0 %v2927, 36
        %v4576 = vpop.permute.xlu0 %4575
        %4577 = vrot.lane.b32.xlu0 %v2928, 36
        %v4578 = vpop.permute.xlu0 %4577
        %4579 = vrot.lane.b32.xlu0 %v2929, 36
        %v4580 = vpop.permute.xlu0 %4579
        %4581 = vrot.lane.b32.xlu0 %v2930, 36
        %v4582 = vpop.permute.xlu0 %4581
        %vm4583 = vcmask 293888
        %v4584 = vsel %vm4583, %v4570, %v4572
        %v4585 = vsel %vm4583, %v4572, %v4574
        %v4586 = vsel %vm4583, %v4574, %v4576
        %v4587 = vsel %vm4583, %v4576, %v4578
        %v4588 = vsel %vm4583, %v4578, %v4580
        %v4589 = vsel %vm4583, %v4580, %v4582
        %v4598 = vsel %vm296, %v4568, 0
        %4600 = vmatpush.msra.mxu0 0.0
        %4601 = vmatpush.msra.mxu0 0.0
        %4602 = vmatpush.msra.mxu0 0.0
        %4603 = vmatpush.msra.mxu0 0.0
        %4604 = vmatpush.msra.mxu0 0.0
        %4605 = vmatpush.msra.mxu0 0.0
        %4606 = vmatpush.msra.mxu0 0.0
        %4607 = vmatpush.msra.mxu0 0.0
        %4608 = vmatpush.msra.mxu0 0.0
        %4609 = vmatpush.msra.mxu0 0.0
        %4610 = vmatpush.msra.mxu0 0.0
        %4611 = vmatpush.msra.mxu0 0.0
        %4612 = vmatpush.msra.mxu0 0.0
        %4613 = vmatpush.msra.mxu0 0.0
        %4614 = vmatpush.msra.mxu0 0.0
        %4615 = vmatpush.msra.mxu0 %v4584
        %4616 = vmatmul.f32.gmra.mxu0 %v4598
        %v4617 = vpop.f32.mrf.mxu0
        %v4618 = vadd.f32 0.0, %v4617
        %4619 = vdwg.mxu0
        %4620 = vmatpush.msra.mxu0 0.0
        %4621 = vmatpush.msra.mxu0 0.0
        %4622 = vmatpush.msra.mxu0 0.0
        %4623 = vmatpush.msra.mxu0 0.0
        %4624 = vmatpush.msra.mxu0 0.0
        %4625 = vmatpush.msra.mxu0 0.0
        %4626 = vmatpush.msra.mxu0 0.0
        %4627 = vmatpush.msra.mxu0 0.0
        %4628 = vmatpush.msra.mxu0 0.0
        %4629 = vmatpush.msra.mxu0 0.0
        %4630 = vmatpush.msra.mxu0 0.0
        %4631 = vmatpush.msra.mxu0 0.0
        %4632 = vmatpush.msra.mxu0 0.0
        %4633 = vmatpush.msra.mxu0 0.0
        %4634 = vmatpush.msra.mxu0 0.0
        %4635 = vmatpush.msra.mxu0 %v4585
        %4636 = vmatmul.f32.gmra.mxu0 %v4598
        %v4637 = vpop.f32.mrf.mxu0
        %v4638 = vadd.f32 0.0, %v4637
        %4639 = vdwg.mxu0
        %4640 = vmatpush.msra.mxu0 0.0
        %4641 = vmatpush.msra.mxu0 0.0
        %4642 = vmatpush.msra.mxu0 0.0
        %4643 = vmatpush.msra.mxu0 0.0
        %4644 = vmatpush.msra.mxu0 0.0
        %4645 = vmatpush.msra.mxu0 0.0
        %4646 = vmatpush.msra.mxu0 0.0
        %4647 = vmatpush.msra.mxu0 0.0
        %4648 = vmatpush.msra.mxu0 0.0
        %4649 = vmatpush.msra.mxu0 0.0
        %4650 = vmatpush.msra.mxu0 0.0
        %4651 = vmatpush.msra.mxu0 0.0
        %4652 = vmatpush.msra.mxu0 0.0
        %4653 = vmatpush.msra.mxu0 0.0
        %4654 = vmatpush.msra.mxu0 0.0
        %4655 = vmatpush.msra.mxu0 %v4586
        %4656 = vmatmul.f32.gmra.mxu0 %v4598
        %v4657 = vpop.f32.mrf.mxu0
        %v4658 = vadd.f32 0.0, %v4657
        %4659 = vdwg.mxu0
        %4660 = vmatpush.msra.mxu0 0.0
        %4661 = vmatpush.msra.mxu0 0.0
        %4662 = vmatpush.msra.mxu0 0.0
        %4663 = vmatpush.msra.mxu0 0.0
        %4664 = vmatpush.msra.mxu0 0.0
        %4665 = vmatpush.msra.mxu0 0.0
        %4666 = vmatpush.msra.mxu0 0.0
        %4667 = vmatpush.msra.mxu0 0.0
        %4668 = vmatpush.msra.mxu0 0.0
        %4669 = vmatpush.msra.mxu0 0.0
        %4670 = vmatpush.msra.mxu0 0.0
        %4671 = vmatpush.msra.mxu0 0.0
        %4672 = vmatpush.msra.mxu0 0.0
        %4673 = vmatpush.msra.mxu0 0.0
        %4674 = vmatpush.msra.mxu0 0.0
        %4675 = vmatpush.msra.mxu0 %v4587
        %4676 = vmatmul.f32.gmra.mxu0 %v4598
        %v4677 = vpop.f32.mrf.mxu0
        %v4678 = vadd.f32 0.0, %v4677
        %4679 = vdwg.mxu0
        %4680 = vmatpush.msra.mxu0 0.0
        %4681 = vmatpush.msra.mxu0 0.0
        %4682 = vmatpush.msra.mxu0 0.0
        %4683 = vmatpush.msra.mxu0 0.0
        %4684 = vmatpush.msra.mxu0 0.0
        %4685 = vmatpush.msra.mxu0 0.0
        %4686 = vmatpush.msra.mxu0 0.0
        %4687 = vmatpush.msra.mxu0 0.0
        %4688 = vmatpush.msra.mxu0 0.0
        %4689 = vmatpush.msra.mxu0 0.0
        %4690 = vmatpush.msra.mxu0 0.0
        %4691 = vmatpush.msra.mxu0 0.0
        %4692 = vmatpush.msra.mxu0 0.0
        %4693 = vmatpush.msra.mxu0 0.0
        %4694 = vmatpush.msra.mxu0 0.0
        %4695 = vmatpush.msra.mxu0 %v4588
        %4696 = vmatmul.f32.gmra.mxu0 %v4598
        %v4697 = vpop.f32.mrf.mxu0
        %v4698 = vadd.f32 0.0, %v4697
        %4699 = vdwg.mxu0
        %4700 = vmatpush.msra.mxu0 0.0
        %4701 = vmatpush.msra.mxu0 0.0
        %4702 = vmatpush.msra.mxu0 0.0
        %4703 = vmatpush.msra.mxu0 0.0
        %4704 = vmatpush.msra.mxu0 0.0
        %4705 = vmatpush.msra.mxu0 0.0
        %4706 = vmatpush.msra.mxu0 0.0
        %4707 = vmatpush.msra.mxu0 0.0
        %4708 = vmatpush.msra.mxu0 0.0
        %4709 = vmatpush.msra.mxu0 0.0
        %4710 = vmatpush.msra.mxu0 0.0
        %4711 = vmatpush.msra.mxu0 0.0
        %4712 = vmatpush.msra.mxu0 0.0
        %4713 = vmatpush.msra.mxu0 0.0
        %4714 = vmatpush.msra.mxu0 0.0
        %4715 = vmatpush.msra.mxu0 %v4589
        %4716 = vmatmul.f32.gmra.mxu0 %v4598
        %v4717 = vpop.f32.mrf.mxu0
        %v4718 = vadd.f32 0.0, %v4717
        %4719 = vdwg.mxu0
        %4720 = vmatpush.msra.mxu0 0.0
        %4721 = vmatpush.msra.mxu0 0.0
        %4722 = vmatpush.msra.mxu0 0.0
        %4723 = vmatpush.msra.mxu0 0.0
        %4724 = vmatpush.msra.mxu0 0.0
        %4725 = vmatpush.msra.mxu0 0.0
        %4726 = vmatpush.msra.mxu0 0.0
        %4727 = vmatpush.msra.mxu0 0.0
        %4728 = vmatpush.msra.mxu0 0.0
        %4729 = vmatpush.msra.mxu0 0.0
        %4730 = vmatpush.msra.mxu0 0.0
        %4731 = vmatpush.msra.mxu0 0.0
        %4732 = vmatpush.msra.mxu0 0.0
        %4733 = vmatpush.msra.mxu0 0.0
        %4734 = vmatpush.msra.mxu0 0.0
        %4735 = vmatpush.msra.mxu0 %v4582
        %4736 = vmatmul.f32.gmra.mxu0 %v4598
        %v4737 = vpop.f32.mrf.mxu0
        %v4738 = vadd.f32 0.0, %v4737
        %4739 = vdwg.mxu0
        %v4740 = vadd.f32 %v4560, %v4618
        %v4741 = vadd.f32 %v4561, %v4638
        %v4742 = vadd.f32 %v4562, %v4658
        %v4743 = vadd.f32 %v4563, %v4678
        %v4744 = vadd.f32 %v4564, %v4698
        %v4745 = vadd.f32 %v4565, %v4718
        %v4746 = vadd.f32 %v4566, %v4738
        %s4747 = scalar_lea.vmem %s1, 200
        %v4748 = vld [vmem:[%s4747] sm:$0xff]
        %4749 = vrot.lane.b32.xlu0 %v2924, 35
        %v4750 = vpop.permute.xlu0 %4749
        %4751 = vrot.lane.b32.xlu0 %v2925, 35
        %v4752 = vpop.permute.xlu0 %4751
        %4753 = vrot.lane.b32.xlu0 %v2926, 35
        %v4754 = vpop.permute.xlu0 %4753
        %4755 = vrot.lane.b32.xlu0 %v2927, 35
        %v4756 = vpop.permute.xlu0 %4755
        %4757 = vrot.lane.b32.xlu0 %v2928, 35
        %v4758 = vpop.permute.xlu0 %4757
        %4759 = vrot.lane.b32.xlu0 %v2929, 35
        %v4760 = vpop.permute.xlu0 %4759
        %4761 = vrot.lane.b32.xlu0 %v2930, 35
        %v4762 = vpop.permute.xlu0 %4761
        %vm4763 = vcmask 285696
        %v4764 = vsel %vm4763, %v4750, %v4752
        %v4765 = vsel %vm4763, %v4752, %v4754
        %v4766 = vsel %vm4763, %v4754, %v4756
        %v4767 = vsel %vm4763, %v4756, %v4758
        %v4768 = vsel %vm4763, %v4758, %v4760
        %v4769 = vsel %vm4763, %v4760, %v4762
        %v4778 = vsel %vm296, %v4748, 0
        %4780 = vmatpush.msra.mxu0 0.0
        %4781 = vmatpush.msra.mxu0 0.0
        %4782 = vmatpush.msra.mxu0 0.0
        %4783 = vmatpush.msra.mxu0 0.0
        %4784 = vmatpush.msra.mxu0 0.0
        %4785 = vmatpush.msra.mxu0 0.0
        %4786 = vmatpush.msra.mxu0 0.0
        %4787 = vmatpush.msra.mxu0 0.0
        %4788 = vmatpush.msra.mxu0 0.0
        %4789 = vmatpush.msra.mxu0 0.0
        %4790 = vmatpush.msra.mxu0 0.0
        %4791 = vmatpush.msra.mxu0 0.0
        %4792 = vmatpush.msra.mxu0 0.0
        %4793 = vmatpush.msra.mxu0 0.0
        %4794 = vmatpush.msra.mxu0 0.0
        %4795 = vmatpush.msra.mxu0 %v4764
        %4796 = vmatmul.f32.gmra.mxu0 %v4778
        %v4797 = vpop.f32.mrf.mxu0
        %v4798 = vadd.f32 0.0, %v4797
        %4799 = vdwg.mxu0
        %4800 = vmatpush.msra.mxu0 0.0
        %4801 = vmatpush.msra.mxu0 0.0
        %4802 = vmatpush.msra.mxu0 0.0
        %4803 = vmatpush.msra.mxu0 0.0
        %4804 = vmatpush.msra.mxu0 0.0
        %4805 = vmatpush.msra.mxu0 0.0
        %4806 = vmatpush.msra.mxu0 0.0
        %4807 = vmatpush.msra.mxu0 0.0
        %4808 = vmatpush.msra.mxu0 0.0
        %4809 = vmatpush.msra.mxu0 0.0
        %4810 = vmatpush.msra.mxu0 0.0
        %4811 = vmatpush.msra.mxu0 0.0
        %4812 = vmatpush.msra.mxu0 0.0
        %4813 = vmatpush.msra.mxu0 0.0
        %4814 = vmatpush.msra.mxu0 0.0
        %4815 = vmatpush.msra.mxu0 %v4765
        %4816 = vmatmul.f32.gmra.mxu0 %v4778
        %v4817 = vpop.f32.mrf.mxu0
        %v4818 = vadd.f32 0.0, %v4817
        %4819 = vdwg.mxu0
        %4820 = vmatpush.msra.mxu0 0.0
        %4821 = vmatpush.msra.mxu0 0.0
        %4822 = vmatpush.msra.mxu0 0.0
        %4823 = vmatpush.msra.mxu0 0.0
        %4824 = vmatpush.msra.mxu0 0.0
        %4825 = vmatpush.msra.mxu0 0.0
        %4826 = vmatpush.msra.mxu0 0.0
        %4827 = vmatpush.msra.mxu0 0.0
        %4828 = vmatpush.msra.mxu0 0.0
        %4829 = vmatpush.msra.mxu0 0.0
        %4830 = vmatpush.msra.mxu0 0.0
        %4831 = vmatpush.msra.mxu0 0.0
        %4832 = vmatpush.msra.mxu0 0.0
        %4833 = vmatpush.msra.mxu0 0.0
        %4834 = vmatpush.msra.mxu0 0.0
        %4835 = vmatpush.msra.mxu0 %v4766
        %4836 = vmatmul.f32.gmra.mxu0 %v4778
        %v4837 = vpop.f32.mrf.mxu0
        %v4838 = vadd.f32 0.0, %v4837
        %4839 = vdwg.mxu0
        %4840 = vmatpush.msra.mxu0 0.0
        %4841 = vmatpush.msra.mxu0 0.0
        %4842 = vmatpush.msra.mxu0 0.0
        %4843 = vmatpush.msra.mxu0 0.0
        %4844 = vmatpush.msra.mxu0 0.0
        %4845 = vmatpush.msra.mxu0 0.0
        %4846 = vmatpush.msra.mxu0 0.0
        %4847 = vmatpush.msra.mxu0 0.0
        %4848 = vmatpush.msra.mxu0 0.0
        %4849 = vmatpush.msra.mxu0 0.0
        %4850 = vmatpush.msra.mxu0 0.0
        %4851 = vmatpush.msra.mxu0 0.0
        %4852 = vmatpush.msra.mxu0 0.0
        %4853 = vmatpush.msra.mxu0 0.0
        %4854 = vmatpush.msra.mxu0 0.0
        %4855 = vmatpush.msra.mxu0 %v4767
        %4856 = vmatmul.f32.gmra.mxu0 %v4778
        %v4857 = vpop.f32.mrf.mxu0
        %v4858 = vadd.f32 0.0, %v4857
        %4859 = vdwg.mxu0
        %4860 = vmatpush.msra.mxu0 0.0
        %4861 = vmatpush.msra.mxu0 0.0
        %4862 = vmatpush.msra.mxu0 0.0
        %4863 = vmatpush.msra.mxu0 0.0
        %4864 = vmatpush.msra.mxu0 0.0
        %4865 = vmatpush.msra.mxu0 0.0
        %4866 = vmatpush.msra.mxu0 0.0
        %4867 = vmatpush.msra.mxu0 0.0
        %4868 = vmatpush.msra.mxu0 0.0
        %4869 = vmatpush.msra.mxu0 0.0
        %4870 = vmatpush.msra.mxu0 0.0
        %4871 = vmatpush.msra.mxu0 0.0
        %4872 = vmatpush.msra.mxu0 0.0
        %4873 = vmatpush.msra.mxu0 0.0
        %4874 = vmatpush.msra.mxu0 0.0
        %4875 = vmatpush.msra.mxu0 %v4768
        %4876 = vmatmul.f32.gmra.mxu0 %v4778
        %v4877 = vpop.f32.mrf.mxu0
        %v4878 = vadd.f32 0.0, %v4877
        %4879 = vdwg.mxu0
        %4880 = vmatpush.msra.mxu0 0.0
        %4881 = vmatpush.msra.mxu0 0.0
        %4882 = vmatpush.msra.mxu0 0.0
        %4883 = vmatpush.msra.mxu0 0.0
        %4884 = vmatpush.msra.mxu0 0.0
        %4885 = vmatpush.msra.mxu0 0.0
        %4886 = vmatpush.msra.mxu0 0.0
        %4887 = vmatpush.msra.mxu0 0.0
        %4888 = vmatpush.msra.mxu0 0.0
        %4889 = vmatpush.msra.mxu0 0.0
        %4890 = vmatpush.msra.mxu0 0.0
        %4891 = vmatpush.msra.mxu0 0.0
        %4892 = vmatpush.msra.mxu0 0.0
        %4893 = vmatpush.msra.mxu0 0.0
        %4894 = vmatpush.msra.mxu0 0.0
        %4895 = vmatpush.msra.mxu0 %v4769
        %4896 = vmatmul.f32.gmra.mxu0 %v4778
        %v4897 = vpop.f32.mrf.mxu0
        %v4898 = vadd.f32 0.0, %v4897
        %4899 = vdwg.mxu0
        %4900 = vmatpush.msra.mxu0 0.0
        %4901 = vmatpush.msra.mxu0 0.0
        %4902 = vmatpush.msra.mxu0 0.0
        %4903 = vmatpush.msra.mxu0 0.0
        %4904 = vmatpush.msra.mxu0 0.0
        %4905 = vmatpush.msra.mxu0 0.0
        %4906 = vmatpush.msra.mxu0 0.0
        %4907 = vmatpush.msra.mxu0 0.0
        %4908 = vmatpush.msra.mxu0 0.0
        %4909 = vmatpush.msra.mxu0 0.0
        %4910 = vmatpush.msra.mxu0 0.0
        %4911 = vmatpush.msra.mxu0 0.0
        %4912 = vmatpush.msra.mxu0 0.0
        %4913 = vmatpush.msra.mxu0 0.0
        %4914 = vmatpush.msra.mxu0 0.0
        %4915 = vmatpush.msra.mxu0 %v4762
        %4916 = vmatmul.f32.gmra.mxu0 %v4778
        %v4917 = vpop.f32.mrf.mxu0
        %v4918 = vadd.f32 0.0, %v4917
        %4919 = vdwg.mxu0
        %v4920 = vadd.f32 %v4740, %v4798
        %v4921 = vadd.f32 %v4741, %v4818
        %v4922 = vadd.f32 %v4742, %v4838
        %v4923 = vadd.f32 %v4743, %v4858
        %v4924 = vadd.f32 %v4744, %v4878
        %v4925 = vadd.f32 %v4745, %v4898
        %v4926 = vadd.f32 %v4746, %v4918
        %s4927 = scalar_lea.vmem %s1, 208
        %v4928 = vld [vmem:[%s4927] sm:$0xff]
        %4929 = vrot.lane.b32.xlu0 %v2924, 34
        %v4930 = vpop.permute.xlu0 %4929
        %4931 = vrot.lane.b32.xlu0 %v2925, 34
        %v4932 = vpop.permute.xlu0 %4931
        %4933 = vrot.lane.b32.xlu0 %v2926, 34
        %v4934 = vpop.permute.xlu0 %4933
        %4935 = vrot.lane.b32.xlu0 %v2927, 34
        %v4936 = vpop.permute.xlu0 %4935
        %4937 = vrot.lane.b32.xlu0 %v2928, 34
        %v4938 = vpop.permute.xlu0 %4937
        %4939 = vrot.lane.b32.xlu0 %v2929, 34
        %v4940 = vpop.permute.xlu0 %4939
        %4941 = vrot.lane.b32.xlu0 %v2930, 34
        %v4942 = vpop.permute.xlu0 %4941
        %vm4943 = vcmask 277504
        %v4944 = vsel %vm4943, %v4930, %v4932
        %v4945 = vsel %vm4943, %v4932, %v4934
        %v4946 = vsel %vm4943, %v4934, %v4936
        %v4947 = vsel %vm4943, %v4936, %v4938
        %v4948 = vsel %vm4943, %v4938, %v4940
        %v4949 = vsel %vm4943, %v4940, %v4942
        %v4958 = vsel %vm296, %v4928, 0
        %4960 = vmatpush.msra.mxu0 0.0
        %4961 = vmatpush.msra.mxu0 0.0
        %4962 = vmatpush.msra.mxu0 0.0
        %4963 = vmatpush.msra.mxu0 0.0
        %4964 = vmatpush.msra.mxu0 0.0
        %4965 = vmatpush.msra.mxu0 0.0
        %4966 = vmatpush.msra.mxu0 0.0
        %4967 = vmatpush.msra.mxu0 0.0
        %4968 = vmatpush.msra.mxu0 0.0
        %4969 = vmatpush.msra.mxu0 0.0
        %4970 = vmatpush.msra.mxu0 0.0
        %4971 = vmatpush.msra.mxu0 0.0
        %4972 = vmatpush.msra.mxu0 0.0
        %4973 = vmatpush.msra.mxu0 0.0
        %4974 = vmatpush.msra.mxu0 0.0
        %4975 = vmatpush.msra.mxu0 %v4944
        %4976 = vmatmul.f32.gmra.mxu0 %v4958
        %v4977 = vpop.f32.mrf.mxu0
        %v4978 = vadd.f32 0.0, %v4977
        %4979 = vdwg.mxu0
        %4980 = vmatpush.msra.mxu0 0.0
        %4981 = vmatpush.msra.mxu0 0.0
        %4982 = vmatpush.msra.mxu0 0.0
        %4983 = vmatpush.msra.mxu0 0.0
        %4984 = vmatpush.msra.mxu0 0.0
        %4985 = vmatpush.msra.mxu0 0.0
        %4986 = vmatpush.msra.mxu0 0.0
        %4987 = vmatpush.msra.mxu0 0.0
        %4988 = vmatpush.msra.mxu0 0.0
        %4989 = vmatpush.msra.mxu0 0.0
        %4990 = vmatpush.msra.mxu0 0.0
        %4991 = vmatpush.msra.mxu0 0.0
        %4992 = vmatpush.msra.mxu0 0.0
        %4993 = vmatpush.msra.mxu0 0.0
        %4994 = vmatpush.msra.mxu0 0.0
        %4995 = vmatpush.msra.mxu0 %v4945
        %4996 = vmatmul.f32.gmra.mxu0 %v4958
        %v4997 = vpop.f32.mrf.mxu0
        %v4998 = vadd.f32 0.0, %v4997
        %4999 = vdwg.mxu0
        %5000 = vmatpush.msra.mxu0 0.0
        %5001 = vmatpush.msra.mxu0 0.0
        %5002 = vmatpush.msra.mxu0 0.0
        %5003 = vmatpush.msra.mxu0 0.0
        %5004 = vmatpush.msra.mxu0 0.0
        %5005 = vmatpush.msra.mxu0 0.0
        %5006 = vmatpush.msra.mxu0 0.0
        %5007 = vmatpush.msra.mxu0 0.0
        %5008 = vmatpush.msra.mxu0 0.0
        %5009 = vmatpush.msra.mxu0 0.0
        %5010 = vmatpush.msra.mxu0 0.0
        %5011 = vmatpush.msra.mxu0 0.0
        %5012 = vmatpush.msra.mxu0 0.0
        %5013 = vmatpush.msra.mxu0 0.0
        %5014 = vmatpush.msra.mxu0 0.0
        %5015 = vmatpush.msra.mxu0 %v4946
        %5016 = vmatmul.f32.gmra.mxu0 %v4958
        %v5017 = vpop.f32.mrf.mxu0
        %v5018 = vadd.f32 0.0, %v5017
        %5019 = vdwg.mxu0
        %5020 = vmatpush.msra.mxu0 0.0
        %5021 = vmatpush.msra.mxu0 0.0
        %5022 = vmatpush.msra.mxu0 0.0
        %5023 = vmatpush.msra.mxu0 0.0
        %5024 = vmatpush.msra.mxu0 0.0
        %5025 = vmatpush.msra.mxu0 0.0
        %5026 = vmatpush.msra.mxu0 0.0
        %5027 = vmatpush.msra.mxu0 0.0
        %5028 = vmatpush.msra.mxu0 0.0
        %5029 = vmatpush.msra.mxu0 0.0
        %5030 = vmatpush.msra.mxu0 0.0
        %5031 = vmatpush.msra.mxu0 0.0
        %5032 = vmatpush.msra.mxu0 0.0
        %5033 = vmatpush.msra.mxu0 0.0
        %5034 = vmatpush.msra.mxu0 0.0
        %5035 = vmatpush.msra.mxu0 %v4947
        %5036 = vmatmul.f32.gmra.mxu0 %v4958
        %v5037 = vpop.f32.mrf.mxu0
        %v5038 = vadd.f32 0.0, %v5037
        %5039 = vdwg.mxu0
        %5040 = vmatpush.msra.mxu0 0.0
        %5041 = vmatpush.msra.mxu0 0.0
        %5042 = vmatpush.msra.mxu0 0.0
        %5043 = vmatpush.msra.mxu0 0.0
        %5044 = vmatpush.msra.mxu0 0.0
        %5045 = vmatpush.msra.mxu0 0.0
        %5046 = vmatpush.msra.mxu0 0.0
        %5047 = vmatpush.msra.mxu0 0.0
        %5048 = vmatpush.msra.mxu0 0.0
        %5049 = vmatpush.msra.mxu0 0.0
        %5050 = vmatpush.msra.mxu0 0.0
        %5051 = vmatpush.msra.mxu0 0.0
        %5052 = vmatpush.msra.mxu0 0.0
        %5053 = vmatpush.msra.mxu0 0.0
        %5054 = vmatpush.msra.mxu0 0.0
        %5055 = vmatpush.msra.mxu0 %v4948
        %5056 = vmatmul.f32.gmra.mxu0 %v4958
        %v5057 = vpop.f32.mrf.mxu0
        %v5058 = vadd.f32 0.0, %v5057
        %5059 = vdwg.mxu0
        %5060 = vmatpush.msra.mxu0 0.0
        %5061 = vmatpush.msra.mxu0 0.0
        %5062 = vmatpush.msra.mxu0 0.0
        %5063 = vmatpush.msra.mxu0 0.0
        %5064 = vmatpush.msra.mxu0 0.0
        %5065 = vmatpush.msra.mxu0 0.0
        %5066 = vmatpush.msra.mxu0 0.0
        %5067 = vmatpush.msra.mxu0 0.0
        %5068 = vmatpush.msra.mxu0 0.0
        %5069 = vmatpush.msra.mxu0 0.0
        %5070 = vmatpush.msra.mxu0 0.0
        %5071 = vmatpush.msra.mxu0 0.0
        %5072 = vmatpush.msra.mxu0 0.0
        %5073 = vmatpush.msra.mxu0 0.0
        %5074 = vmatpush.msra.mxu0 0.0
        %5075 = vmatpush.msra.mxu0 %v4949
        %5076 = vmatmul.f32.gmra.mxu0 %v4958
        %v5077 = vpop.f32.mrf.mxu0
        %v5078 = vadd.f32 0.0, %v5077
        %5079 = vdwg.mxu0
        %5080 = vmatpush.msra.mxu0 0.0
        %5081 = vmatpush.msra.mxu0 0.0
        %5082 = vmatpush.msra.mxu0 0.0
        %5083 = vmatpush.msra.mxu0 0.0
        %5084 = vmatpush.msra.mxu0 0.0
        %5085 = vmatpush.msra.mxu0 0.0
        %5086 = vmatpush.msra.mxu0 0.0
        %5087 = vmatpush.msra.mxu0 0.0
        %5088 = vmatpush.msra.mxu0 0.0
        %5089 = vmatpush.msra.mxu0 0.0
        %5090 = vmatpush.msra.mxu0 0.0
        %5091 = vmatpush.msra.mxu0 0.0
        %5092 = vmatpush.msra.mxu0 0.0
        %5093 = vmatpush.msra.mxu0 0.0
        %5094 = vmatpush.msra.mxu0 0.0
        %5095 = vmatpush.msra.mxu0 %v4942
        %5096 = vmatmul.f32.gmra.mxu0 %v4958
        %v5097 = vpop.f32.mrf.mxu0
        %v5098 = vadd.f32 0.0, %v5097
        %5099 = vdwg.mxu0
        %v5100 = vadd.f32 %v4920, %v4978
        %v5101 = vadd.f32 %v4921, %v4998
        %v5102 = vadd.f32 %v4922, %v5018
        %v5103 = vadd.f32 %v4923, %v5038
        %v5104 = vadd.f32 %v4924, %v5058
        %v5105 = vadd.f32 %v4925, %v5078
        %v5106 = vadd.f32 %v4926, %v5098
        %v5107 = vld [vmem:[%s2] sm:$0xff]
        %5109 = vset.pattern.permute.xlu0 0
        %5110 = vperm.xlu0 %5109, %v5107
        %v5111 = vpop.permute.xlu0 %5110
        %v5113 = vadd.f32 %v5100, %v5111
        %v5114 = vadd.f32 %v5101, %v5111
        %v5115 = vadd.f32 %v5102, %v5111
        %v5116 = vadd.f32 %v5103, %v5111
        %v5117 = vadd.f32 %v5104, %v5111
        %v5118 = vadd.f32 %v5105, %v5111
        %v5119 = vadd.f32 %v5106, %v5111
        %v5120 = vmax.f32 %v5113, 0.0
        %v5121 = vmax.f32 %v5114, 0.0
        %v5122 = vmax.f32 %v5115, 0.0
        %v5123 = vmax.f32 %v5116, 0.0
        %v5124 = vmax.f32 %v5117, 0.0
        %v5125 = vmax.f32 %v5118, 0.0
        %v5126 = vmax.f32 %v5119, 0.0
        %v5128 = vperm.slane %v250, 0
        %v5129 = vperm.slane %v250, 1
        %v5130 = vperm.slane %v250, 2
        %v5131 = vperm.slane %v250, 3
        %v5132 = vperm.slane %v250, 4
        %v5133 = vperm.slane %v250, 5
        %v5134 = vperm.slane %v250, 6
        %5135 = vrot.lane.b32.xlu0 %v5128, 17
        %v5136 = vpop.permute.xlu0 %5135
        %5137 = vrot.lane.b32.xlu0 %v5129, 17
        %v5138 = vpop.permute.xlu0 %5137
        %5139 = vrot.lane.b32.xlu0 %v5130, 17
        %v5140 = vpop.permute.xlu0 %5139
        %5141 = vrot.lane.b32.xlu0 %v5131, 17
        %v5142 = vpop.permute.xlu0 %5141
        %5143 = vrot.lane.b32.xlu0 %v5132, 17
        %v5144 = vpop.permute.xlu0 %5143
        %5145 = vrot.lane.b32.xlu0 %v5133, 17
        %v5146 = vpop.permute.xlu0 %5145
        %5147 = vrot.lane.b32.xlu0 %v5134, 17
        %v5148 = vpop.permute.xlu0 %5147
        %v5149 = vsel %vm2579, %v5136, %v5138
        %v5150 = vsel %vm2579, %v5138, %v5140
        %v5151 = vsel %vm2579, %v5140, %v5142
        %v5152 = vsel %vm2579, %v5142, %v5144
        %v5153 = vsel %vm2579, %v5144, %v5146
        %v5154 = vsel %vm2579, %v5146, %v5148
        %v5162 = vmul.f32 %v5120, %v5149
        %v5163 = vmul.f32 %v5121, %v5150
        %v5164 = vmul.f32 %v5122, %v5151
        %v5165 = vmul.f32 %v5123, %v5152
        %v5166 = vmul.f32 %v5124, %v5153
        %v5167 = vmul.f32 %v5125, %v5154
        %v5168 = vmul.f32 %v5126, %v5148
        %5169 = vst [vmem:[#allocation2] sm:$0xff] 0.0
        %5170 = vst [vmem:[#allocation2 + $0x8] sm:$0xff] 0.0
        %5171 = vst [vmem:[#allocation2 + $0x10] sm:$0xff] 0.0
        %5172 = vst [vmem:[#allocation2 + $0x18] sm:$0xff] 0.0
        %5173 = vst [vmem:[#allocation2 + $0x20] sm:$0xff] 0.0
        %5174 = vst [vmem:[#allocation2 + $0x28] sm:$0xff] 0.0
        %5175 = vst [vmem:[#allocation2 + $0x30] sm:$0xff] 0.0
        %vm5176 = vcmask 850944
        %5177 = vst.msk [vmem:[#allocation2 + $0x38] sm:$0xff] %vm5176, 0.0
        %5185 = vrot.lane.b32.xlu0 %v5162, 111
        %v5186 = vpop.permute.xlu0 %5185
        %5187 = vrot.lane.b32.xlu0 %v5163, 111
        %v5188 = vpop.permute.xlu0 %5187
        %5189 = vrot.lane.b32.xlu0 %v5164, 111
        %v5190 = vpop.permute.xlu0 %5189
        %5191 = vrot.lane.b32.xlu0 %v5165, 111
        %v5192 = vpop.permute.xlu0 %5191
        %5193 = vrot.lane.b32.xlu0 %v5166, 111
        %v5194 = vpop.permute.xlu0 %5193
        %5195 = vrot.lane.b32.xlu0 %v5167, 111
        %v5196 = vpop.permute.xlu0 %5195
        %5197 = vrot.lane.b32.xlu0 %v5168, 111
        %v5198 = vpop.permute.xlu0 %5197
        %vm5199 = vcmask 908288
        %v5200 = vsel %vm5199, %v5186, %v5188
        %v5201 = vsel %vm5199, %v5188, %v5190
        %v5202 = vsel %vm5199, %v5190, %v5192
        %v5203 = vsel %vm5199, %v5192, %v5194
        %v5204 = vsel %vm5199, %v5194, %v5196
        %v5205 = vsel %vm5199, %v5196, %v5198
        %vm5213 = vcmask 1048440
        %5214 = vst.msk [vmem:[#allocation2] sm:$0xff] %vm5213, %v5186
        %5215 = vst [vmem:[#allocation2 + $0x8] sm:$0xff] %v5200
        %5216 = vst [vmem:[#allocation2 + $0x10] sm:$0xff] %v5201
        %5217 = vst [vmem:[#allocation2 + $0x18] sm:$0xff] %v5202
        %5218 = vst [vmem:[#allocation2 + $0x20] sm:$0xff] %v5203
        %5219 = vst [vmem:[#allocation2 + $0x28] sm:$0xff] %v5204
        %vm5220 = vcmask 990208
        %5221 = vst.msk [vmem:[#allocation2 + $0x30] sm:$0xff] %vm5220, %v5205
        %v5222 = vld [vmem:[#allocation2] sm:$0xff]
        %v5223 = vld [vmem:[#allocation2 + $0x8] sm:$0xff]
        %v5224 = vld [vmem:[#allocation2 + $0x10] sm:$0xff]
        %v5225 = vld [vmem:[#allocation2 + $0x18] sm:$0xff]
        %v5226 = vld [vmem:[#allocation2 + $0x20] sm:$0xff]
        %v5227 = vld [vmem:[#allocation2 + $0x28] sm:$0xff]
        %v5228 = vld [vmem:[#allocation2 + $0x30] sm:$0xff]
        %v5229 = vld [vmem:[%s3] sm:$0xff]
        %s5230 = scalar_lea.vmem %s3, 8
        %v5231 = vld [vmem:[%s5230] sm:$0xff]
        %5239 = vrot.lane.b32.xlu0 %v5222, 127
        %v5240 = vpop.permute.xlu0 %5239
        %5241 = vrot.lane.b32.xlu0 %v5223, 127
        %v5242 = vpop.permute.xlu0 %5241
        %5243 = vrot.lane.b32.xlu0 %v5224, 127
        %v5244 = vpop.permute.xlu0 %5243
        %5245 = vrot.lane.b32.xlu0 %v5225, 127
        %v5246 = vpop.permute.xlu0 %5245
        %5247 = vrot.lane.b32.xlu0 %v5226, 127
        %v5248 = vpop.permute.xlu0 %5247
        %5249 = vrot.lane.b32.xlu0 %v5227, 127
        %v5250 = vpop.permute.xlu0 %5249
        %5251 = vrot.lane.b32.xlu0 %v5228, 127
        %v5252 = vpop.permute.xlu0 %5251
        %v5253 = vsel %vm282, %v5240, %v5242
        %v5254 = vsel %vm282, %v5242, %v5244
        %v5255 = vsel %vm282, %v5244, %v5246
        %v5256 = vsel %vm282, %v5246, %v5248
        %v5257 = vsel %vm282, %v5248, %v5250
        %v5258 = vsel %vm282, %v5250, %v5252
        %v5267 = vsel %vm296, %v5231, 0
        %5269 = vmatpush.msra.mxu0 0.0
        %5270 = vmatpush.msra.mxu0 0.0
        %5271 = vmatpush.msra.mxu0 0.0
        %5272 = vmatpush.msra.mxu0 0.0
        %5273 = vmatpush.msra.mxu0 0.0
        %5274 = vmatpush.msra.mxu0 0.0
        %5275 = vmatpush.msra.mxu0 0.0
        %5276 = vmatpush.msra.mxu0 0.0
        %5277 = vmatpush.msra.mxu0 0.0
        %5278 = vmatpush.msra.mxu0 0.0
        %5279 = vmatpush.msra.mxu0 0.0
        %5280 = vmatpush.msra.mxu0 0.0
        %5281 = vmatpush.msra.mxu0 0.0
        %5282 = vmatpush.msra.mxu0 0.0
        %5283 = vmatpush.msra.mxu0 0.0
        %5284 = vmatpush.msra.mxu0 %v5253
        %5285 = vmatmul.f32.gmra.mxu0 %v5267
        %v5286 = vpop.f32.mrf.mxu0
        %v5287 = vadd.f32 0.0, %v5286
        %5288 = vdwg.mxu0
        %5289 = vmatpush.msra.mxu0 0.0
        %5290 = vmatpush.msra.mxu0 0.0
        %5291 = vmatpush.msra.mxu0 0.0
        %5292 = vmatpush.msra.mxu0 0.0
        %5293 = vmatpush.msra.mxu0 0.0
        %5294 = vmatpush.msra.mxu0 0.0
        %5295 = vmatpush.msra.mxu0 0.0
        %5296 = vmatpush.msra.mxu0 0.0
        %5297 = vmatpush.msra.mxu0 0.0
        %5298 = vmatpush.msra.mxu0 0.0
        %5299 = vmatpush.msra.mxu0 0.0
        %5300 = vmatpush.msra.mxu0 0.0
        %5301 = vmatpush.msra.mxu0 0.0
        %5302 = vmatpush.msra.mxu0 0.0
        %5303 = vmatpush.msra.mxu0 0.0
        %5304 = vmatpush.msra.mxu0 %v5254
        %5305 = vmatmul.f32.gmra.mxu0 %v5267
        %v5306 = vpop.f32.mrf.mxu0
        %v5307 = vadd.f32 0.0, %v5306
        %5308 = vdwg.mxu0
        %5309 = vmatpush.msra.mxu0 0.0
        %5310 = vmatpush.msra.mxu0 0.0
        %5311 = vmatpush.msra.mxu0 0.0
        %5312 = vmatpush.msra.mxu0 0.0
        %5313 = vmatpush.msra.mxu0 0.0
        %5314 = vmatpush.msra.mxu0 0.0
        %5315 = vmatpush.msra.mxu0 0.0
        %5316 = vmatpush.msra.mxu0 0.0
        %5317 = vmatpush.msra.mxu0 0.0
        %5318 = vmatpush.msra.mxu0 0.0
        %5319 = vmatpush.msra.mxu0 0.0
        %5320 = vmatpush.msra.mxu0 0.0
        %5321 = vmatpush.msra.mxu0 0.0
        %5322 = vmatpush.msra.mxu0 0.0
        %5323 = vmatpush.msra.mxu0 0.0
        %5324 = vmatpush.msra.mxu0 %v5255
        %5325 = vmatmul.f32.gmra.mxu0 %v5267
        %v5326 = vpop.f32.mrf.mxu0
        %v5327 = vadd.f32 0.0, %v5326
        %5328 = vdwg.mxu0
        %5329 = vmatpush.msra.mxu0 0.0
        %5330 = vmatpush.msra.mxu0 0.0
        %5331 = vmatpush.msra.mxu0 0.0
        %5332 = vmatpush.msra.mxu0 0.0
        %5333 = vmatpush.msra.mxu0 0.0
        %5334 = vmatpush.msra.mxu0 0.0
        %5335 = vmatpush.msra.mxu0 0.0
        %5336 = vmatpush.msra.mxu0 0.0
        %5337 = vmatpush.msra.mxu0 0.0
        %5338 = vmatpush.msra.mxu0 0.0
        %5339 = vmatpush.msra.mxu0 0.0
        %5340 = vmatpush.msra.mxu0 0.0
        %5341 = vmatpush.msra.mxu0 0.0
        %5342 = vmatpush.msra.mxu0 0.0
        %5343 = vmatpush.msra.mxu0 0.0
        %5344 = vmatpush.msra.mxu0 %v5256
        %5345 = vmatmul.f32.gmra.mxu0 %v5267
        %v5346 = vpop.f32.mrf.mxu0
        %v5347 = vadd.f32 0.0, %v5346
        %5348 = vdwg.mxu0
        %5349 = vmatpush.msra.mxu0 0.0
        %5350 = vmatpush.msra.mxu0 0.0
        %5351 = vmatpush.msra.mxu0 0.0
        %5352 = vmatpush.msra.mxu0 0.0
        %5353 = vmatpush.msra.mxu0 0.0
        %5354 = vmatpush.msra.mxu0 0.0
        %5355 = vmatpush.msra.mxu0 0.0
        %5356 = vmatpush.msra.mxu0 0.0
        %5357 = vmatpush.msra.mxu0 0.0
        %5358 = vmatpush.msra.mxu0 0.0
        %5359 = vmatpush.msra.mxu0 0.0
        %5360 = vmatpush.msra.mxu0 0.0
        %5361 = vmatpush.msra.mxu0 0.0
        %5362 = vmatpush.msra.mxu0 0.0
        %5363 = vmatpush.msra.mxu0 0.0
        %5364 = vmatpush.msra.mxu0 %v5257
        %5365 = vmatmul.f32.gmra.mxu0 %v5267
        %v5366 = vpop.f32.mrf.mxu0
        %v5367 = vadd.f32 0.0, %v5366
        %5368 = vdwg.mxu0
        %5369 = vmatpush.msra.mxu0 0.0
        %5370 = vmatpush.msra.mxu0 0.0
        %5371 = vmatpush.msra.mxu0 0.0
        %5372 = vmatpush.msra.mxu0 0.0
        %5373 = vmatpush.msra.mxu0 0.0
        %5374 = vmatpush.msra.mxu0 0.0
        %5375 = vmatpush.msra.mxu0 0.0
        %5376 = vmatpush.msra.mxu0 0.0
        %5377 = vmatpush.msra.mxu0 0.0
        %5378 = vmatpush.msra.mxu0 0.0
        %5379 = vmatpush.msra.mxu0 0.0
        %5380 = vmatpush.msra.mxu0 0.0
        %5381 = vmatpush.msra.mxu0 0.0
        %5382 = vmatpush.msra.mxu0 0.0
        %5383 = vmatpush.msra.mxu0 0.0
        %5384 = vmatpush.msra.mxu0 %v5258
        %5385 = vmatmul.f32.gmra.mxu0 %v5267
        %v5386 = vpop.f32.mrf.mxu0
        %v5387 = vadd.f32 0.0, %v5386
        %5388 = vdwg.mxu0
        %5389 = vmatpush.msra.mxu0 0.0
        %5390 = vmatpush.msra.mxu0 0.0
        %5391 = vmatpush.msra.mxu0 0.0
        %5392 = vmatpush.msra.mxu0 0.0
        %5393 = vmatpush.msra.mxu0 0.0
        %5394 = vmatpush.msra.mxu0 0.0
        %5395 = vmatpush.msra.mxu0 0.0
        %5396 = vmatpush.msra.mxu0 0.0
        %5397 = vmatpush.msra.mxu0 0.0
        %5398 = vmatpush.msra.mxu0 0.0
        %5399 = vmatpush.msra.mxu0 0.0
        %5400 = vmatpush.msra.mxu0 0.0
        %5401 = vmatpush.msra.mxu0 0.0
        %5402 = vmatpush.msra.mxu0 0.0
        %5403 = vmatpush.msra.mxu0 0.0
        %5404 = vmatpush.msra.mxu0 %v5252
        %5405 = vmatmul.f32.gmra.mxu0 %v5267
        %v5406 = vpop.f32.mrf.mxu0
        %v5407 = vadd.f32 0.0, %v5406
        %5408 = vdwg.mxu0
        %v5410 = vsel %vm296, %v5229, 0
        %5412 = vmatpush.msra.mxu0 0.0
        %5413 = vmatpush.msra.mxu0 0.0
        %5414 = vmatpush.msra.mxu0 0.0
        %5415 = vmatpush.msra.mxu0 0.0
        %5416 = vmatpush.msra.mxu0 0.0
        %5417 = vmatpush.msra.mxu0 0.0
        %5418 = vmatpush.msra.mxu0 0.0
        %5419 = vmatpush.msra.mxu0 0.0
        %5420 = vmatpush.msra.mxu0 0.0
        %5421 = vmatpush.msra.mxu0 0.0
        %5422 = vmatpush.msra.mxu0 0.0
        %5423 = vmatpush.msra.mxu0 0.0
        %5424 = vmatpush.msra.mxu0 0.0
        %5425 = vmatpush.msra.mxu0 0.0
        %5426 = vmatpush.msra.mxu0 0.0
        %5427 = vmatpush.msra.mxu0 %v5222
        %5428 = vmatmul.f32.gmra.mxu0 %v5410
        %v5429 = vpop.f32.mrf.mxu0
        %v5430 = vadd.f32 %v5287, %v5429
        %5431 = vdwg.mxu0
        %5432 = vmatpush.msra.mxu0 0.0
        %5433 = vmatpush.msra.mxu0 0.0
        %5434 = vmatpush.msra.mxu0 0.0
        %5435 = vmatpush.msra.mxu0 0.0
        %5436 = vmatpush.msra.mxu0 0.0
        %5437 = vmatpush.msra.mxu0 0.0
        %5438 = vmatpush.msra.mxu0 0.0
        %5439 = vmatpush.msra.mxu0 0.0
        %5440 = vmatpush.msra.mxu0 0.0
        %5441 = vmatpush.msra.mxu0 0.0
        %5442 = vmatpush.msra.mxu0 0.0
        %5443 = vmatpush.msra.mxu0 0.0
        %5444 = vmatpush.msra.mxu0 0.0
        %5445 = vmatpush.msra.mxu0 0.0
        %5446 = vmatpush.msra.mxu0 0.0
        %5447 = vmatpush.msra.mxu0 %v5223
        %5448 = vmatmul.f32.gmra.mxu0 %v5410
        %v5449 = vpop.f32.mrf.mxu0
        %v5450 = vadd.f32 %v5307, %v5449
        %5451 = vdwg.mxu0
        %5452 = vmatpush.msra.mxu0 0.0
        %5453 = vmatpush.msra.mxu0 0.0
        %5454 = vmatpush.msra.mxu0 0.0
        %5455 = vmatpush.msra.mxu0 0.0
        %5456 = vmatpush.msra.mxu0 0.0
        %5457 = vmatpush.msra.mxu0 0.0
        %5458 = vmatpush.msra.mxu0 0.0
        %5459 = vmatpush.msra.mxu0 0.0
        %5460 = vmatpush.msra.mxu0 0.0
        %5461 = vmatpush.msra.mxu0 0.0
        %5462 = vmatpush.msra.mxu0 0.0
        %5463 = vmatpush.msra.mxu0 0.0
        %5464 = vmatpush.msra.mxu0 0.0
        %5465 = vmatpush.msra.mxu0 0.0
        %5466 = vmatpush.msra.mxu0 0.0
        %5467 = vmatpush.msra.mxu0 %v5224
        %5468 = vmatmul.f32.gmra.mxu0 %v5410
        %v5469 = vpop.f32.mrf.mxu0
        %v5470 = vadd.f32 %v5327, %v5469
        %5471 = vdwg.mxu0
        %5472 = vmatpush.msra.mxu0 0.0
        %5473 = vmatpush.msra.mxu0 0.0
        %5474 = vmatpush.msra.mxu0 0.0
        %5475 = vmatpush.msra.mxu0 0.0
        %5476 = vmatpush.msra.mxu0 0.0
        %5477 = vmatpush.msra.mxu0 0.0
        %5478 = vmatpush.msra.mxu0 0.0
        %5479 = vmatpush.msra.mxu0 0.0
        %5480 = vmatpush.msra.mxu0 0.0
        %5481 = vmatpush.msra.mxu0 0.0
        %5482 = vmatpush.msra.mxu0 0.0
        %5483 = vmatpush.msra.mxu0 0.0
        %5484 = vmatpush.msra.mxu0 0.0
        %5485 = vmatpush.msra.mxu0 0.0
        %5486 = vmatpush.msra.mxu0 0.0
        %5487 = vmatpush.msra.mxu0 %v5225
        %5488 = vmatmul.f32.gmra.mxu0 %v5410
        %v5489 = vpop.f32.mrf.mxu0
        %v5490 = vadd.f32 %v5347, %v5489
        %5491 = vdwg.mxu0
        %5492 = vmatpush.msra.mxu0 0.0
        %5493 = vmatpush.msra.mxu0 0.0
        %5494 = vmatpush.msra.mxu0 0.0
        %5495 = vmatpush.msra.mxu0 0.0
        %5496 = vmatpush.msra.mxu0 0.0
        %5497 = vmatpush.msra.mxu0 0.0
        %5498 = vmatpush.msra.mxu0 0.0
        %5499 = vmatpush.msra.mxu0 0.0
        %5500 = vmatpush.msra.mxu0 0.0
        %5501 = vmatpush.msra.mxu0 0.0
        %5502 = vmatpush.msra.mxu0 0.0
        %5503 = vmatpush.msra.mxu0 0.0
        %5504 = vmatpush.msra.mxu0 0.0
        %5505 = vmatpush.msra.mxu0 0.0
        %5506 = vmatpush.msra.mxu0 0.0
        %5507 = vmatpush.msra.mxu0 %v5226
        %5508 = vmatmul.f32.gmra.mxu0 %v5410
        %v5509 = vpop.f32.mrf.mxu0
        %v5510 = vadd.f32 %v5367, %v5509
        %5511 = vdwg.mxu0
        %5512 = vmatpush.msra.mxu0 0.0
        %5513 = vmatpush.msra.mxu0 0.0
        %5514 = vmatpush.msra.mxu0 0.0
        %5515 = vmatpush.msra.mxu0 0.0
        %5516 = vmatpush.msra.mxu0 0.0
        %5517 = vmatpush.msra.mxu0 0.0
        %5518 = vmatpush.msra.mxu0 0.0
        %5519 = vmatpush.msra.mxu0 0.0
        %5520 = vmatpush.msra.mxu0 0.0
        %5521 = vmatpush.msra.mxu0 0.0
        %5522 = vmatpush.msra.mxu0 0.0
        %5523 = vmatpush.msra.mxu0 0.0
        %5524 = vmatpush.msra.mxu0 0.0
        %5525 = vmatpush.msra.mxu0 0.0
        %5526 = vmatpush.msra.mxu0 0.0
        %5527 = vmatpush.msra.mxu0 %v5227
        %5528 = vmatmul.f32.gmra.mxu0 %v5410
        %v5529 = vpop.f32.mrf.mxu0
        %v5530 = vadd.f32 %v5387, %v5529
        %5531 = vdwg.mxu0
        %5532 = vmatpush.msra.mxu0 0.0
        %5533 = vmatpush.msra.mxu0 0.0
        %5534 = vmatpush.msra.mxu0 0.0
        %5535 = vmatpush.msra.mxu0 0.0
        %5536 = vmatpush.msra.mxu0 0.0
        %5537 = vmatpush.msra.mxu0 0.0
        %5538 = vmatpush.msra.mxu0 0.0
        %5539 = vmatpush.msra.mxu0 0.0
        %5540 = vmatpush.msra.mxu0 0.0
        %5541 = vmatpush.msra.mxu0 0.0
        %5542 = vmatpush.msra.mxu0 0.0
        %5543 = vmatpush.msra.mxu0 0.0
        %5544 = vmatpush.msra.mxu0 0.0
        %5545 = vmatpush.msra.mxu0 0.0
        %5546 = vmatpush.msra.mxu0 0.0
        %5547 = vmatpush.msra.mxu0 %v5228
        %5548 = vmatmul.f32.gmra.mxu0 %v5410
        %v5549 = vpop.f32.mrf.mxu0
        %v5550 = vadd.f32 %v5407, %v5549
        %5551 = vdwg.mxu0
        %s5552 = scalar_lea.vmem %s3, 16
        %v5553 = vld [vmem:[%s5552] sm:$0xff]
        %5554 = vrot.lane.b32.xlu0 %v5222, 126
        %v5555 = vpop.permute.xlu0 %5554
        %5556 = vrot.lane.b32.xlu0 %v5223, 126
        %v5557 = vpop.permute.xlu0 %5556
        %5558 = vrot.lane.b32.xlu0 %v5224, 126
        %v5559 = vpop.permute.xlu0 %5558
        %5560 = vrot.lane.b32.xlu0 %v5225, 126
        %v5561 = vpop.permute.xlu0 %5560
        %5562 = vrot.lane.b32.xlu0 %v5226, 126
        %v5563 = vpop.permute.xlu0 %5562
        %5564 = vrot.lane.b32.xlu0 %v5227, 126
        %v5565 = vpop.permute.xlu0 %5564
        %5566 = vrot.lane.b32.xlu0 %v5228, 126
        %v5567 = vpop.permute.xlu0 %5566
        %v5568 = vsel %vm599, %v5555, %v5557
        %v5569 = vsel %vm599, %v5557, %v5559
        %v5570 = vsel %vm599, %v5559, %v5561
        %v5571 = vsel %vm599, %v5561, %v5563
        %v5572 = vsel %vm599, %v5563, %v5565
        %v5573 = vsel %vm599, %v5565, %v5567
        %v5582 = vsel %vm296, %v5553, 0
        %5584 = vmatpush.msra.mxu0 0.0
        %5585 = vmatpush.msra.mxu0 0.0
        %5586 = vmatpush.msra.mxu0 0.0
        %5587 = vmatpush.msra.mxu0 0.0
        %5588 = vmatpush.msra.mxu0 0.0
        %5589 = vmatpush.msra.mxu0 0.0
        %5590 = vmatpush.msra.mxu0 0.0
        %5591 = vmatpush.msra.mxu0 0.0
        %5592 = vmatpush.msra.mxu0 0.0
        %5593 = vmatpush.msra.mxu0 0.0
        %5594 = vmatpush.msra.mxu0 0.0
        %5595 = vmatpush.msra.mxu0 0.0
        %5596 = vmatpush.msra.mxu0 0.0
        %5597 = vmatpush.msra.mxu0 0.0
        %5598 = vmatpush.msra.mxu0 0.0
        %5599 = vmatpush.msra.mxu0 %v5568
        %5600 = vmatmul.f32.gmra.mxu0 %v5582
        %v5601 = vpop.f32.mrf.mxu0
        %v5602 = vadd.f32 0.0, %v5601
        %5603 = vdwg.mxu0
        %5604 = vmatpush.msra.mxu0 0.0
        %5605 = vmatpush.msra.mxu0 0.0
        %5606 = vmatpush.msra.mxu0 0.0
        %5607 = vmatpush.msra.mxu0 0.0
        %5608 = vmatpush.msra.mxu0 0.0
        %5609 = vmatpush.msra.mxu0 0.0
        %5610 = vmatpush.msra.mxu0 0.0
        %5611 = vmatpush.msra.mxu0 0.0
        %5612 = vmatpush.msra.mxu0 0.0
        %5613 = vmatpush.msra.mxu0 0.0
        %5614 = vmatpush.msra.mxu0 0.0
        %5615 = vmatpush.msra.mxu0 0.0
        %5616 = vmatpush.msra.mxu0 0.0
        %5617 = vmatpush.msra.mxu0 0.0
        %5618 = vmatpush.msra.mxu0 0.0
        %5619 = vmatpush.msra.mxu0 %v5569
        %5620 = vmatmul.f32.gmra.mxu0 %v5582
        %v5621 = vpop.f32.mrf.mxu0
        %v5622 = vadd.f32 0.0, %v5621
        %5623 = vdwg.mxu0
        %5624 = vmatpush.msra.mxu0 0.0
        %5625 = vmatpush.msra.mxu0 0.0
        %5626 = vmatpush.msra.mxu0 0.0
        %5627 = vmatpush.msra.mxu0 0.0
        %5628 = vmatpush.msra.mxu0 0.0
        %5629 = vmatpush.msra.mxu0 0.0
        %5630 = vmatpush.msra.mxu0 0.0
        %5631 = vmatpush.msra.mxu0 0.0
        %5632 = vmatpush.msra.mxu0 0.0
        %5633 = vmatpush.msra.mxu0 0.0
        %5634 = vmatpush.msra.mxu0 0.0
        %5635 = vmatpush.msra.mxu0 0.0
        %5636 = vmatpush.msra.mxu0 0.0
        %5637 = vmatpush.msra.mxu0 0.0
        %5638 = vmatpush.msra.mxu0 0.0
        %5639 = vmatpush.msra.mxu0 %v5570
        %5640 = vmatmul.f32.gmra.mxu0 %v5582
        %v5641 = vpop.f32.mrf.mxu0
        %v5642 = vadd.f32 0.0, %v5641
        %5643 = vdwg.mxu0
        %5644 = vmatpush.msra.mxu0 0.0
        %5645 = vmatpush.msra.mxu0 0.0
        %5646 = vmatpush.msra.mxu0 0.0
        %5647 = vmatpush.msra.mxu0 0.0
        %5648 = vmatpush.msra.mxu0 0.0
        %5649 = vmatpush.msra.mxu0 0.0
        %5650 = vmatpush.msra.mxu0 0.0
        %5651 = vmatpush.msra.mxu0 0.0
        %5652 = vmatpush.msra.mxu0 0.0
        %5653 = vmatpush.msra.mxu0 0.0
        %5654 = vmatpush.msra.mxu0 0.0
        %5655 = vmatpush.msra.mxu0 0.0
        %5656 = vmatpush.msra.mxu0 0.0
        %5657 = vmatpush.msra.mxu0 0.0
        %5658 = vmatpush.msra.mxu0 0.0
        %5659 = vmatpush.msra.mxu0 %v5571
        %5660 = vmatmul.f32.gmra.mxu0 %v5582
        %v5661 = vpop.f32.mrf.mxu0
        %v5662 = vadd.f32 0.0, %v5661
        %5663 = vdwg.mxu0
        %5664 = vmatpush.msra.mxu0 0.0
        %5665 = vmatpush.msra.mxu0 0.0
        %5666 = vmatpush.msra.mxu0 0.0
        %5667 = vmatpush.msra.mxu0 0.0
        %5668 = vmatpush.msra.mxu0 0.0
        %5669 = vmatpush.msra.mxu0 0.0
        %5670 = vmatpush.msra.mxu0 0.0
        %5671 = vmatpush.msra.mxu0 0.0
        %5672 = vmatpush.msra.mxu0 0.0
        %5673 = vmatpush.msra.mxu0 0.0
        %5674 = vmatpush.msra.mxu0 0.0
        %5675 = vmatpush.msra.mxu0 0.0
        %5676 = vmatpush.msra.mxu0 0.0
        %5677 = vmatpush.msra.mxu0 0.0
        %5678 = vmatpush.msra.mxu0 0.0
        %5679 = vmatpush.msra.mxu0 %v5572
        %5680 = vmatmul.f32.gmra.mxu0 %v5582
        %v5681 = vpop.f32.mrf.mxu0
        %v5682 = vadd.f32 0.0, %v5681
        %5683 = vdwg.mxu0
        %5684 = vmatpush.msra.mxu0 0.0
        %5685 = vmatpush.msra.mxu0 0.0
        %5686 = vmatpush.msra.mxu0 0.0
        %5687 = vmatpush.msra.mxu0 0.0
        %5688 = vmatpush.msra.mxu0 0.0
        %5689 = vmatpush.msra.mxu0 0.0
        %5690 = vmatpush.msra.mxu0 0.0
        %5691 = vmatpush.msra.mxu0 0.0
        %5692 = vmatpush.msra.mxu0 0.0
        %5693 = vmatpush.msra.mxu0 0.0
        %5694 = vmatpush.msra.mxu0 0.0
        %5695 = vmatpush.msra.mxu0 0.0
        %5696 = vmatpush.msra.mxu0 0.0
        %5697 = vmatpush.msra.mxu0 0.0
        %5698 = vmatpush.msra.mxu0 0.0
        %5699 = vmatpush.msra.mxu0 %v5573
        %5700 = vmatmul.f32.gmra.mxu0 %v5582
        %v5701 = vpop.f32.mrf.mxu0
        %v5702 = vadd.f32 0.0, %v5701
        %5703 = vdwg.mxu0
        %5704 = vmatpush.msra.mxu0 0.0
        %5705 = vmatpush.msra.mxu0 0.0
        %5706 = vmatpush.msra.mxu0 0.0
        %5707 = vmatpush.msra.mxu0 0.0
        %5708 = vmatpush.msra.mxu0 0.0
        %5709 = vmatpush.msra.mxu0 0.0
        %5710 = vmatpush.msra.mxu0 0.0
        %5711 = vmatpush.msra.mxu0 0.0
        %5712 = vmatpush.msra.mxu0 0.0
        %5713 = vmatpush.msra.mxu0 0.0
        %5714 = vmatpush.msra.mxu0 0.0
        %5715 = vmatpush.msra.mxu0 0.0
        %5716 = vmatpush.msra.mxu0 0.0
        %5717 = vmatpush.msra.mxu0 0.0
        %5718 = vmatpush.msra.mxu0 0.0
        %5719 = vmatpush.msra.mxu0 %v5567
        %5720 = vmatmul.f32.gmra.mxu0 %v5582
        %v5721 = vpop.f32.mrf.mxu0
        %v5722 = vadd.f32 0.0, %v5721
        %5723 = vdwg.mxu0
        %v5724 = vadd.f32 %v5430, %v5602
        %v5725 = vadd.f32 %v5450, %v5622
        %v5726 = vadd.f32 %v5470, %v5642
        %v5727 = vadd.f32 %v5490, %v5662
        %v5728 = vadd.f32 %v5510, %v5682
        %v5729 = vadd.f32 %v5530, %v5702
        %v5730 = vadd.f32 %v5550, %v5722
        %s5731 = scalar_lea.vmem %s3, 24
        %v5732 = vld [vmem:[%s5731] sm:$0xff]
        %5733 = vrot.lane.b32.xlu0 %v5222, 118
        %v5734 = vpop.permute.xlu0 %5733
        %5735 = vrot.lane.b32.xlu0 %v5223, 118
        %v5736 = vpop.permute.xlu0 %5735
        %5737 = vrot.lane.b32.xlu0 %v5224, 118
        %v5738 = vpop.permute.xlu0 %5737
        %5739 = vrot.lane.b32.xlu0 %v5225, 118
        %v5740 = vpop.permute.xlu0 %5739
        %5741 = vrot.lane.b32.xlu0 %v5226, 118
        %v5742 = vpop.permute.xlu0 %5741
        %5743 = vrot.lane.b32.xlu0 %v5227, 118
        %v5744 = vpop.permute.xlu0 %5743
        %5745 = vrot.lane.b32.xlu0 %v5228, 118
        %v5746 = vpop.permute.xlu0 %5745
        %v5747 = vsel %vm779, %v5734, %v5736
        %v5748 = vsel %vm779, %v5736, %v5738
        %v5749 = vsel %vm779, %v5738, %v5740
        %v5750 = vsel %vm779, %v5740, %v5742
        %v5751 = vsel %vm779, %v5742, %v5744
        %v5752 = vsel %vm779, %v5744, %v5746
        %v5761 = vsel %vm296, %v5732, 0
        %5763 = vmatpush.msra.mxu0 0.0
        %5764 = vmatpush.msra.mxu0 0.0
        %5765 = vmatpush.msra.mxu0 0.0
        %5766 = vmatpush.msra.mxu0 0.0
        %5767 = vmatpush.msra.mxu0 0.0
        %5768 = vmatpush.msra.mxu0 0.0
        %5769 = vmatpush.msra.mxu0 0.0
        %5770 = vmatpush.msra.mxu0 0.0
        %5771 = vmatpush.msra.mxu0 0.0
        %5772 = vmatpush.msra.mxu0 0.0
        %5773 = vmatpush.msra.mxu0 0.0
        %5774 = vmatpush.msra.mxu0 0.0
        %5775 = vmatpush.msra.mxu0 0.0
        %5776 = vmatpush.msra.mxu0 0.0
        %5777 = vmatpush.msra.mxu0 0.0
        %5778 = vmatpush.msra.mxu0 %v5747
        %5779 = vmatmul.f32.gmra.mxu0 %v5761
        %v5780 = vpop.f32.mrf.mxu0
        %v5781 = vadd.f32 0.0, %v5780
        %5782 = vdwg.mxu0
        %5783 = vmatpush.msra.mxu0 0.0
        %5784 = vmatpush.msra.mxu0 0.0
        %5785 = vmatpush.msra.mxu0 0.0
        %5786 = vmatpush.msra.mxu0 0.0
        %5787 = vmatpush.msra.mxu0 0.0
        %5788 = vmatpush.msra.mxu0 0.0
        %5789 = vmatpush.msra.mxu0 0.0
        %5790 = vmatpush.msra.mxu0 0.0
        %5791 = vmatpush.msra.mxu0 0.0
        %5792 = vmatpush.msra.mxu0 0.0
        %5793 = vmatpush.msra.mxu0 0.0
        %5794 = vmatpush.msra.mxu0 0.0
        %5795 = vmatpush.msra.mxu0 0.0
        %5796 = vmatpush.msra.mxu0 0.0
        %5797 = vmatpush.msra.mxu0 0.0
        %5798 = vmatpush.msra.mxu0 %v5748
        %5799 = vmatmul.f32.gmra.mxu0 %v5761
        %v5800 = vpop.f32.mrf.mxu0
        %v5801 = vadd.f32 0.0, %v5800
        %5802 = vdwg.mxu0
        %5803 = vmatpush.msra.mxu0 0.0
        %5804 = vmatpush.msra.mxu0 0.0
        %5805 = vmatpush.msra.mxu0 0.0
        %5806 = vmatpush.msra.mxu0 0.0
        %5807 = vmatpush.msra.mxu0 0.0
        %5808 = vmatpush.msra.mxu0 0.0
        %5809 = vmatpush.msra.mxu0 0.0
        %5810 = vmatpush.msra.mxu0 0.0
        %5811 = vmatpush.msra.mxu0 0.0
        %5812 = vmatpush.msra.mxu0 0.0
        %5813 = vmatpush.msra.mxu0 0.0
        %5814 = vmatpush.msra.mxu0 0.0
        %5815 = vmatpush.msra.mxu0 0.0
        %5816 = vmatpush.msra.mxu0 0.0
        %5817 = vmatpush.msra.mxu0 0.0
        %5818 = vmatpush.msra.mxu0 %v5749
        %5819 = vmatmul.f32.gmra.mxu0 %v5761
        %v5820 = vpop.f32.mrf.mxu0
        %v5821 = vadd.f32 0.0, %v5820
        %5822 = vdwg.mxu0
        %5823 = vmatpush.msra.mxu0 0.0
        %5824 = vmatpush.msra.mxu0 0.0
        %5825 = vmatpush.msra.mxu0 0.0
        %5826 = vmatpush.msra.mxu0 0.0
        %5827 = vmatpush.msra.mxu0 0.0
        %5828 = vmatpush.msra.mxu0 0.0
        %5829 = vmatpush.msra.mxu0 0.0
        %5830 = vmatpush.msra.mxu0 0.0
        %5831 = vmatpush.msra.mxu0 0.0
        %5832 = vmatpush.msra.mxu0 0.0
        %5833 = vmatpush.msra.mxu0 0.0
        %5834 = vmatpush.msra.mxu0 0.0
        %5835 = vmatpush.msra.mxu0 0.0
        %5836 = vmatpush.msra.mxu0 0.0
        %5837 = vmatpush.msra.mxu0 0.0
        %5838 = vmatpush.msra.mxu0 %v5750
        %5839 = vmatmul.f32.gmra.mxu0 %v5761
        %v5840 = vpop.f32.mrf.mxu0
        %v5841 = vadd.f32 0.0, %v5840
        %5842 = vdwg.mxu0
        %5843 = vmatpush.msra.mxu0 0.0
        %5844 = vmatpush.msra.mxu0 0.0
        %5845 = vmatpush.msra.mxu0 0.0
        %5846 = vmatpush.msra.mxu0 0.0
        %5847 = vmatpush.msra.mxu0 0.0
        %5848 = vmatpush.msra.mxu0 0.0
        %5849 = vmatpush.msra.mxu0 0.0
        %5850 = vmatpush.msra.mxu0 0.0
        %5851 = vmatpush.msra.mxu0 0.0
        %5852 = vmatpush.msra.mxu0 0.0
        %5853 = vmatpush.msra.mxu0 0.0
        %5854 = vmatpush.msra.mxu0 0.0
        %5855 = vmatpush.msra.mxu0 0.0
        %5856 = vmatpush.msra.mxu0 0.0
        %5857 = vmatpush.msra.mxu0 0.0
        %5858 = vmatpush.msra.mxu0 %v5751
        %5859 = vmatmul.f32.gmra.mxu0 %v5761
        %v5860 = vpop.f32.mrf.mxu0
        %v5861 = vadd.f32 0.0, %v5860
        %5862 = vdwg.mxu0
        %5863 = vmatpush.msra.mxu0 0.0
        %5864 = vmatpush.msra.mxu0 0.0
        %5865 = vmatpush.msra.mxu0 0.0
        %5866 = vmatpush.msra.mxu0 0.0
        %5867 = vmatpush.msra.mxu0 0.0
        %5868 = vmatpush.msra.mxu0 0.0
        %5869 = vmatpush.msra.mxu0 0.0
        %5870 = vmatpush.msra.mxu0 0.0
        %5871 = vmatpush.msra.mxu0 0.0
        %5872 = vmatpush.msra.mxu0 0.0
        %5873 = vmatpush.msra.mxu0 0.0
        %5874 = vmatpush.msra.mxu0 0.0
        %5875 = vmatpush.msra.mxu0 0.0
        %5876 = vmatpush.msra.mxu0 0.0
        %5877 = vmatpush.msra.mxu0 0.0
        %5878 = vmatpush.msra.mxu0 %v5752
        %5879 = vmatmul.f32.gmra.mxu0 %v5761
        %v5880 = vpop.f32.mrf.mxu0
        %v5881 = vadd.f32 0.0, %v5880
        %5882 = vdwg.mxu0
        %5883 = vmatpush.msra.mxu0 0.0
        %5884 = vmatpush.msra.mxu0 0.0
        %5885 = vmatpush.msra.mxu0 0.0
        %5886 = vmatpush.msra.mxu0 0.0
        %5887 = vmatpush.msra.mxu0 0.0
        %5888 = vmatpush.msra.mxu0 0.0
        %5889 = vmatpush.msra.mxu0 0.0
        %5890 = vmatpush.msra.mxu0 0.0
        %5891 = vmatpush.msra.mxu0 0.0
        %5892 = vmatpush.msra.mxu0 0.0
        %5893 = vmatpush.msra.mxu0 0.0
        %5894 = vmatpush.msra.mxu0 0.0
        %5895 = vmatpush.msra.mxu0 0.0
        %5896 = vmatpush.msra.mxu0 0.0
        %5897 = vmatpush.msra.mxu0 0.0
        %5898 = vmatpush.msra.mxu0 %v5746
        %5899 = vmatmul.f32.gmra.mxu0 %v5761
        %v5900 = vpop.f32.mrf.mxu0
        %v5901 = vadd.f32 0.0, %v5900
        %5902 = vdwg.mxu0
        %v5903 = vadd.f32 %v5724, %v5781
        %v5904 = vadd.f32 %v5725, %v5801
        %v5905 = vadd.f32 %v5726, %v5821
        %v5906 = vadd.f32 %v5727, %v5841
        %v5907 = vadd.f32 %v5728, %v5861
        %v5908 = vadd.f32 %v5729, %v5881
        %v5909 = vadd.f32 %v5730, %v5901
        %s5910 = scalar_lea.vmem %s3, 32
        %v5911 = vld [vmem:[%s5910] sm:$0xff]
        %5912 = vrot.lane.b32.xlu0 %v5222, 117
        %v5913 = vpop.permute.xlu0 %5912
        %5914 = vrot.lane.b32.xlu0 %v5223, 117
        %v5915 = vpop.permute.xlu0 %5914
        %5916 = vrot.lane.b32.xlu0 %v5224, 117
        %v5917 = vpop.permute.xlu0 %5916
        %5918 = vrot.lane.b32.xlu0 %v5225, 117
        %v5919 = vpop.permute.xlu0 %5918
        %5920 = vrot.lane.b32.xlu0 %v5226, 117
        %v5921 = vpop.permute.xlu0 %5920
        %5922 = vrot.lane.b32.xlu0 %v5227, 117
        %v5923 = vpop.permute.xlu0 %5922
        %5924 = vrot.lane.b32.xlu0 %v5228, 117
        %v5925 = vpop.permute.xlu0 %5924
        %v5926 = vsel %vm959, %v5913, %v5915
        %v5927 = vsel %vm959, %v5915, %v5917
        %v5928 = vsel %vm959, %v5917, %v5919
        %v5929 = vsel %vm959, %v5919, %v5921
        %v5930 = vsel %vm959, %v5921, %v5923
        %v5931 = vsel %vm959, %v5923, %v5925
        %v5940 = vsel %vm296, %v5911, 0
        %5942 = vmatpush.msra.mxu0 0.0
        %5943 = vmatpush.msra.mxu0 0.0
        %5944 = vmatpush.msra.mxu0 0.0
        %5945 = vmatpush.msra.mxu0 0.0
        %5946 = vmatpush.msra.mxu0 0.0
        %5947 = vmatpush.msra.mxu0 0.0
        %5948 = vmatpush.msra.mxu0 0.0
        %5949 = vmatpush.msra.mxu0 0.0
        %5950 = vmatpush.msra.mxu0 0.0
        %5951 = vmatpush.msra.mxu0 0.0
        %5952 = vmatpush.msra.mxu0 0.0
        %5953 = vmatpush.msra.mxu0 0.0
        %5954 = vmatpush.msra.mxu0 0.0
        %5955 = vmatpush.msra.mxu0 0.0
        %5956 = vmatpush.msra.mxu0 0.0
        %5957 = vmatpush.msra.mxu0 %v5926
        %5958 = vmatmul.f32.gmra.mxu0 %v5940
        %v5959 = vpop.f32.mrf.mxu0
        %v5960 = vadd.f32 0.0, %v5959
        %5961 = vdwg.mxu0
        %5962 = vmatpush.msra.mxu0 0.0
        %5963 = vmatpush.msra.mxu0 0.0
        %5964 = vmatpush.msra.mxu0 0.0
        %5965 = vmatpush.msra.mxu0 0.0
        %5966 = vmatpush.msra.mxu0 0.0
        %5967 = vmatpush.msra.mxu0 0.0
        %5968 = vmatpush.msra.mxu0 0.0
        %5969 = vmatpush.msra.mxu0 0.0
        %5970 = vmatpush.msra.mxu0 0.0
        %5971 = vmatpush.msra.mxu0 0.0
        %5972 = vmatpush.msra.mxu0 0.0
        %5973 = vmatpush.msra.mxu0 0.0
        %5974 = vmatpush.msra.mxu0 0.0
        %5975 = vmatpush.msra.mxu0 0.0
        %5976 = vmatpush.msra.mxu0 0.0
        %5977 = vmatpush.msra.mxu0 %v5927
        %5978 = vmatmul.f32.gmra.mxu0 %v5940
        %v5979 = vpop.f32.mrf.mxu0
        %v5980 = vadd.f32 0.0, %v5979
        %5981 = vdwg.mxu0
        %5982 = vmatpush.msra.mxu0 0.0
        %5983 = vmatpush.msra.mxu0 0.0
        %5984 = vmatpush.msra.mxu0 0.0
        %5985 = vmatpush.msra.mxu0 0.0
        %5986 = vmatpush.msra.mxu0 0.0
        %5987 = vmatpush.msra.mxu0 0.0
        %5988 = vmatpush.msra.mxu0 0.0
        %5989 = vmatpush.msra.mxu0 0.0
        %5990 = vmatpush.msra.mxu0 0.0
        %5991 = vmatpush.msra.mxu0 0.0
        %5992 = vmatpush.msra.mxu0 0.0
        %5993 = vmatpush.msra.mxu0 0.0
        %5994 = vmatpush.msra.mxu0 0.0
        %5995 = vmatpush.msra.mxu0 0.0
        %5996 = vmatpush.msra.mxu0 0.0
        %5997 = vmatpush.msra.mxu0 %v5928
        %5998 = vmatmul.f32.gmra.mxu0 %v5940
        %v5999 = vpop.f32.mrf.mxu0
        %v6000 = vadd.f32 0.0, %v5999
        %6001 = vdwg.mxu0
        %6002 = vmatpush.msra.mxu0 0.0
        %6003 = vmatpush.msra.mxu0 0.0
        %6004 = vmatpush.msra.mxu0 0.0
        %6005 = vmatpush.msra.mxu0 0.0
        %6006 = vmatpush.msra.mxu0 0.0
        %6007 = vmatpush.msra.mxu0 0.0
        %6008 = vmatpush.msra.mxu0 0.0
        %6009 = vmatpush.msra.mxu0 0.0
        %6010 = vmatpush.msra.mxu0 0.0
        %6011 = vmatpush.msra.mxu0 0.0
        %6012 = vmatpush.msra.mxu0 0.0
        %6013 = vmatpush.msra.mxu0 0.0
        %6014 = vmatpush.msra.mxu0 0.0
        %6015 = vmatpush.msra.mxu0 0.0
        %6016 = vmatpush.msra.mxu0 0.0
        %6017 = vmatpush.msra.mxu0 %v5929
        %6018 = vmatmul.f32.gmra.mxu0 %v5940
        %v6019 = vpop.f32.mrf.mxu0
        %v6020 = vadd.f32 0.0, %v6019
        %6021 = vdwg.mxu0
        %6022 = vmatpush.msra.mxu0 0.0
        %6023 = vmatpush.msra.mxu0 0.0
        %6024 = vmatpush.msra.mxu0 0.0
        %6025 = vmatpush.msra.mxu0 0.0
        %6026 = vmatpush.msra.mxu0 0.0
        %6027 = vmatpush.msra.mxu0 0.0
        %6028 = vmatpush.msra.mxu0 0.0
        %6029 = vmatpush.msra.mxu0 0.0
        %6030 = vmatpush.msra.mxu0 0.0
        %6031 = vmatpush.msra.mxu0 0.0
        %6032 = vmatpush.msra.mxu0 0.0
        %6033 = vmatpush.msra.mxu0 0.0
        %6034 = vmatpush.msra.mxu0 0.0
        %6035 = vmatpush.msra.mxu0 0.0
        %6036 = vmatpush.msra.mxu0 0.0
        %6037 = vmatpush.msra.mxu0 %v5930
        %6038 = vmatmul.f32.gmra.mxu0 %v5940
        %v6039 = vpop.f32.mrf.mxu0
        %v6040 = vadd.f32 0.0, %v6039
        %6041 = vdwg.mxu0
        %6042 = vmatpush.msra.mxu0 0.0
        %6043 = vmatpush.msra.mxu0 0.0
        %6044 = vmatpush.msra.mxu0 0.0
        %6045 = vmatpush.msra.mxu0 0.0
        %6046 = vmatpush.msra.mxu0 0.0
        %6047 = vmatpush.msra.mxu0 0.0
        %6048 = vmatpush.msra.mxu0 0.0
        %6049 = vmatpush.msra.mxu0 0.0
        %6050 = vmatpush.msra.mxu0 0.0
        %6051 = vmatpush.msra.mxu0 0.0
        %6052 = vmatpush.msra.mxu0 0.0
        %6053 = vmatpush.msra.mxu0 0.0
        %6054 = vmatpush.msra.mxu0 0.0
        %6055 = vmatpush.msra.mxu0 0.0
        %6056 = vmatpush.msra.mxu0 0.0
        %6057 = vmatpush.msra.mxu0 %v5931
        %6058 = vmatmul.f32.gmra.mxu0 %v5940
        %v6059 = vpop.f32.mrf.mxu0
        %v6060 = vadd.f32 0.0, %v6059
        %6061 = vdwg.mxu0
        %6062 = vmatpush.msra.mxu0 0.0
        %6063 = vmatpush.msra.mxu0 0.0
        %6064 = vmatpush.msra.mxu0 0.0
        %6065 = vmatpush.msra.mxu0 0.0
        %6066 = vmatpush.msra.mxu0 0.0
        %6067 = vmatpush.msra.mxu0 0.0
        %6068 = vmatpush.msra.mxu0 0.0
        %6069 = vmatpush.msra.mxu0 0.0
        %6070 = vmatpush.msra.mxu0 0.0
        %6071 = vmatpush.msra.mxu0 0.0
        %6072 = vmatpush.msra.mxu0 0.0
        %6073 = vmatpush.msra.mxu0 0.0
        %6074 = vmatpush.msra.mxu0 0.0
        %6075 = vmatpush.msra.mxu0 0.0
        %6076 = vmatpush.msra.mxu0 0.0
        %6077 = vmatpush.msra.mxu0 %v5925
        %6078 = vmatmul.f32.gmra.mxu0 %v5940
        %v6079 = vpop.f32.mrf.mxu0
        %v6080 = vadd.f32 0.0, %v6079
        %6081 = vdwg.mxu0
        %v6082 = vadd.f32 %v5903, %v5960
        %v6083 = vadd.f32 %v5904, %v5980
        %v6084 = vadd.f32 %v5905, %v6000
        %v6085 = vadd.f32 %v5906, %v6020
        %v6086 = vadd.f32 %v5907, %v6040
        %v6087 = vadd.f32 %v5908, %v6060
        %v6088 = vadd.f32 %v5909, %v6080
        %s6089 = scalar_lea.vmem %s3, 40
        %v6090 = vld [vmem:[%s6089] sm:$0xff]
        %6091 = vrot.lane.b32.xlu0 %v5222, 116
        %v6092 = vpop.permute.xlu0 %6091
        %6093 = vrot.lane.b32.xlu0 %v5223, 116
        %v6094 = vpop.permute.xlu0 %6093
        %6095 = vrot.lane.b32.xlu0 %v5224, 116
        %v6096 = vpop.permute.xlu0 %6095
        %6097 = vrot.lane.b32.xlu0 %v5225, 116
        %v6098 = vpop.permute.xlu0 %6097
        %6099 = vrot.lane.b32.xlu0 %v5226, 116
        %v6100 = vpop.permute.xlu0 %6099
        %6101 = vrot.lane.b32.xlu0 %v5227, 116
        %v6102 = vpop.permute.xlu0 %6101
        %6103 = vrot.lane.b32.xlu0 %v5228, 116
        %v6104 = vpop.permute.xlu0 %6103
        %v6105 = vsel %vm1139, %v6092, %v6094
        %v6106 = vsel %vm1139, %v6094, %v6096
        %v6107 = vsel %vm1139, %v6096, %v6098
        %v6108 = vsel %vm1139, %v6098, %v6100
        %v6109 = vsel %vm1139, %v6100, %v6102
        %v6110 = vsel %vm1139, %v6102, %v6104
        %v6119 = vsel %vm296, %v6090, 0
        %6121 = vmatpush.msra.mxu0 0.0
        %6122 = vmatpush.msra.mxu0 0.0
        %6123 = vmatpush.msra.mxu0 0.0
        %6124 = vmatpush.msra.mxu0 0.0
        %6125 = vmatpush.msra.mxu0 0.0
        %6126 = vmatpush.msra.mxu0 0.0
        %6127 = vmatpush.msra.mxu0 0.0
        %6128 = vmatpush.msra.mxu0 0.0
        %6129 = vmatpush.msra.mxu0 0.0
        %6130 = vmatpush.msra.mxu0 0.0
        %6131 = vmatpush.msra.mxu0 0.0
        %6132 = vmatpush.msra.mxu0 0.0
        %6133 = vmatpush.msra.mxu0 0.0
        %6134 = vmatpush.msra.mxu0 0.0
        %6135 = vmatpush.msra.mxu0 0.0
        %6136 = vmatpush.msra.mxu0 %v6105
        %6137 = vmatmul.f32.gmra.mxu0 %v6119
        %v6138 = vpop.f32.mrf.mxu0
        %v6139 = vadd.f32 0.0, %v6138
        %6140 = vdwg.mxu0
        %6141 = vmatpush.msra.mxu0 0.0
        %6142 = vmatpush.msra.mxu0 0.0
        %6143 = vmatpush.msra.mxu0 0.0
        %6144 = vmatpush.msra.mxu0 0.0
        %6145 = vmatpush.msra.mxu0 0.0
        %6146 = vmatpush.msra.mxu0 0.0
        %6147 = vmatpush.msra.mxu0 0.0
        %6148 = vmatpush.msra.mxu0 0.0
        %6149 = vmatpush.msra.mxu0 0.0
        %6150 = vmatpush.msra.mxu0 0.0
        %6151 = vmatpush.msra.mxu0 0.0
        %6152 = vmatpush.msra.mxu0 0.0
        %6153 = vmatpush.msra.mxu0 0.0
        %6154 = vmatpush.msra.mxu0 0.0
        %6155 = vmatpush.msra.mxu0 0.0
        %6156 = vmatpush.msra.mxu0 %v6106
        %6157 = vmatmul.f32.gmra.mxu0 %v6119
        %v6158 = vpop.f32.mrf.mxu0
        %v6159 = vadd.f32 0.0, %v6158
        %6160 = vdwg.mxu0
        %6161 = vmatpush.msra.mxu0 0.0
        %6162 = vmatpush.msra.mxu0 0.0
        %6163 = vmatpush.msra.mxu0 0.0
        %6164 = vmatpush.msra.mxu0 0.0
        %6165 = vmatpush.msra.mxu0 0.0
        %6166 = vmatpush.msra.mxu0 0.0
        %6167 = vmatpush.msra.mxu0 0.0
        %6168 = vmatpush.msra.mxu0 0.0
        %6169 = vmatpush.msra.mxu0 0.0
        %6170 = vmatpush.msra.mxu0 0.0
        %6171 = vmatpush.msra.mxu0 0.0
        %6172 = vmatpush.msra.mxu0 0.0
        %6173 = vmatpush.msra.mxu0 0.0
        %6174 = vmatpush.msra.mxu0 0.0
        %6175 = vmatpush.msra.mxu0 0.0
        %6176 = vmatpush.msra.mxu0 %v6107
        %6177 = vmatmul.f32.gmra.mxu0 %v6119
        %v6178 = vpop.f32.mrf.mxu0
        %v6179 = vadd.f32 0.0, %v6178
        %6180 = vdwg.mxu0
        %6181 = vmatpush.msra.mxu0 0.0
        %6182 = vmatpush.msra.mxu0 0.0
        %6183 = vmatpush.msra.mxu0 0.0
        %6184 = vmatpush.msra.mxu0 0.0
        %6185 = vmatpush.msra.mxu0 0.0
        %6186 = vmatpush.msra.mxu0 0.0
        %6187 = vmatpush.msra.mxu0 0.0
        %6188 = vmatpush.msra.mxu0 0.0
        %6189 = vmatpush.msra.mxu0 0.0
        %6190 = vmatpush.msra.mxu0 0.0
        %6191 = vmatpush.msra.mxu0 0.0
        %6192 = vmatpush.msra.mxu0 0.0
        %6193 = vmatpush.msra.mxu0 0.0
        %6194 = vmatpush.msra.mxu0 0.0
        %6195 = vmatpush.msra.mxu0 0.0
        %6196 = vmatpush.msra.mxu0 %v6108
        %6197 = vmatmul.f32.gmra.mxu0 %v6119
        %v6198 = vpop.f32.mrf.mxu0
        %v6199 = vadd.f32 0.0, %v6198
        %6200 = vdwg.mxu0
        %6201 = vmatpush.msra.mxu0 0.0
        %6202 = vmatpush.msra.mxu0 0.0
        %6203 = vmatpush.msra.mxu0 0.0
        %6204 = vmatpush.msra.mxu0 0.0
        %6205 = vmatpush.msra.mxu0 0.0
        %6206 = vmatpush.msra.mxu0 0.0
        %6207 = vmatpush.msra.mxu0 0.0
        %6208 = vmatpush.msra.mxu0 0.0
        %6209 = vmatpush.msra.mxu0 0.0
        %6210 = vmatpush.msra.mxu0 0.0
        %6211 = vmatpush.msra.mxu0 0.0
        %6212 = vmatpush.msra.mxu0 0.0
        %6213 = vmatpush.msra.mxu0 0.0
        %6214 = vmatpush.msra.mxu0 0.0
        %6215 = vmatpush.msra.mxu0 0.0
        %6216 = vmatpush.msra.mxu0 %v6109
        %6217 = vmatmul.f32.gmra.mxu0 %v6119
        %v6218 = vpop.f32.mrf.mxu0
        %v6219 = vadd.f32 0.0, %v6218
        %6220 = vdwg.mxu0
        %6221 = vmatpush.msra.mxu0 0.0
        %6222 = vmatpush.msra.mxu0 0.0
        %6223 = vmatpush.msra.mxu0 0.0
        %6224 = vmatpush.msra.mxu0 0.0
        %6225 = vmatpush.msra.mxu0 0.0
        %6226 = vmatpush.msra.mxu0 0.0
        %6227 = vmatpush.msra.mxu0 0.0
        %6228 = vmatpush.msra.mxu0 0.0
        %6229 = vmatpush.msra.mxu0 0.0
        %6230 = vmatpush.msra.mxu0 0.0
        %6231 = vmatpush.msra.mxu0 0.0
        %6232 = vmatpush.msra.mxu0 0.0
        %6233 = vmatpush.msra.mxu0 0.0
        %6234 = vmatpush.msra.mxu0 0.0
        %6235 = vmatpush.msra.mxu0 0.0
        %6236 = vmatpush.msra.mxu0 %v6110
        %6237 = vmatmul.f32.gmra.mxu0 %v6119
        %v6238 = vpop.f32.mrf.mxu0
        %v6239 = vadd.f32 0.0, %v6238
        %6240 = vdwg.mxu0
        %6241 = vmatpush.msra.mxu0 0.0
        %6242 = vmatpush.msra.mxu0 0.0
        %6243 = vmatpush.msra.mxu0 0.0
        %6244 = vmatpush.msra.mxu0 0.0
        %6245 = vmatpush.msra.mxu0 0.0
        %6246 = vmatpush.msra.mxu0 0.0
        %6247 = vmatpush.msra.mxu0 0.0
        %6248 = vmatpush.msra.mxu0 0.0
        %6249 = vmatpush.msra.mxu0 0.0
        %6250 = vmatpush.msra.mxu0 0.0
        %6251 = vmatpush.msra.mxu0 0.0
        %6252 = vmatpush.msra.mxu0 0.0
        %6253 = vmatpush.msra.mxu0 0.0
        %6254 = vmatpush.msra.mxu0 0.0
        %6255 = vmatpush.msra.mxu0 0.0
        %6256 = vmatpush.msra.mxu0 %v6104
        %6257 = vmatmul.f32.gmra.mxu0 %v6119
        %v6258 = vpop.f32.mrf.mxu0
        %v6259 = vadd.f32 0.0, %v6258
        %6260 = vdwg.mxu0
        %v6261 = vadd.f32 %v6082, %v6139
        %v6262 = vadd.f32 %v6083, %v6159
        %v6263 = vadd.f32 %v6084, %v6179
        %v6264 = vadd.f32 %v6085, %v6199
        %v6265 = vadd.f32 %v6086, %v6219
        %v6266 = vadd.f32 %v6087, %v6239
        %v6267 = vadd.f32 %v6088, %v6259
        %s6268 = scalar_lea.vmem %s3, 48
        %v6269 = vld [vmem:[%s6268] sm:$0xff]
        %6270 = vrot.lane.b32.xlu0 %v5222, 108
        %v6271 = vpop.permute.xlu0 %6270
        %6272 = vrot.lane.b32.xlu0 %v5223, 108
        %v6273 = vpop.permute.xlu0 %6272
        %6274 = vrot.lane.b32.xlu0 %v5224, 108
        %v6275 = vpop.permute.xlu0 %6274
        %6276 = vrot.lane.b32.xlu0 %v5225, 108
        %v6277 = vpop.permute.xlu0 %6276
        %6278 = vrot.lane.b32.xlu0 %v5226, 108
        %v6279 = vpop.permute.xlu0 %6278
        %6280 = vrot.lane.b32.xlu0 %v5227, 108
        %v6281 = vpop.permute.xlu0 %6280
        %6282 = vrot.lane.b32.xlu0 %v5228, 108
        %v6283 = vpop.permute.xlu0 %6282
        %v6284 = vsel %vm1319, %v6271, %v6273
        %v6285 = vsel %vm1319, %v6273, %v6275
        %v6286 = vsel %vm1319, %v6275, %v6277
        %v6287 = vsel %vm1319, %v6277, %v6279
        %v6288 = vsel %vm1319, %v6279, %v6281
        %v6289 = vsel %vm1319, %v6281, %v6283
        %v6298 = vsel %vm296, %v6269, 0
        %6300 = vmatpush.msra.mxu0 0.0
        %6301 = vmatpush.msra.mxu0 0.0
        %6302 = vmatpush.msra.mxu0 0.0
        %6303 = vmatpush.msra.mxu0 0.0
        %6304 = vmatpush.msra.mxu0 0.0
        %6305 = vmatpush.msra.mxu0 0.0
        %6306 = vmatpush.msra.mxu0 0.0
        %6307 = vmatpush.msra.mxu0 0.0
        %6308 = vmatpush.msra.mxu0 0.0
        %6309 = vmatpush.msra.mxu0 0.0
        %6310 = vmatpush.msra.mxu0 0.0
        %6311 = vmatpush.msra.mxu0 0.0
        %6312 = vmatpush.msra.mxu0 0.0
        %6313 = vmatpush.msra.mxu0 0.0
        %6314 = vmatpush.msra.mxu0 0.0
        %6315 = vmatpush.msra.mxu0 %v6284
        %6316 = vmatmul.f32.gmra.mxu0 %v6298
        %v6317 = vpop.f32.mrf.mxu0
        %v6318 = vadd.f32 0.0, %v6317
        %6319 = vdwg.mxu0
        %6320 = vmatpush.msra.mxu0 0.0
        %6321 = vmatpush.msra.mxu0 0.0
        %6322 = vmatpush.msra.mxu0 0.0
        %6323 = vmatpush.msra.mxu0 0.0
        %6324 = vmatpush.msra.mxu0 0.0
        %6325 = vmatpush.msra.mxu0 0.0
        %6326 = vmatpush.msra.mxu0 0.0
        %6327 = vmatpush.msra.mxu0 0.0
        %6328 = vmatpush.msra.mxu0 0.0
        %6329 = vmatpush.msra.mxu0 0.0
        %6330 = vmatpush.msra.mxu0 0.0
        %6331 = vmatpush.msra.mxu0 0.0
        %6332 = vmatpush.msra.mxu0 0.0
        %6333 = vmatpush.msra.mxu0 0.0
        %6334 = vmatpush.msra.mxu0 0.0
        %6335 = vmatpush.msra.mxu0 %v6285
        %6336 = vmatmul.f32.gmra.mxu0 %v6298
        %v6337 = vpop.f32.mrf.mxu0
        %v6338 = vadd.f32 0.0, %v6337
        %6339 = vdwg.mxu0
        %6340 = vmatpush.msra.mxu0 0.0
        %6341 = vmatpush.msra.mxu0 0.0
        %6342 = vmatpush.msra.mxu0 0.0
        %6343 = vmatpush.msra.mxu0 0.0
        %6344 = vmatpush.msra.mxu0 0.0
        %6345 = vmatpush.msra.mxu0 0.0
        %6346 = vmatpush.msra.mxu0 0.0
        %6347 = vmatpush.msra.mxu0 0.0
        %6348 = vmatpush.msra.mxu0 0.0
        %6349 = vmatpush.msra.mxu0 0.0
        %6350 = vmatpush.msra.mxu0 0.0
        %6351 = vmatpush.msra.mxu0 0.0
        %6352 = vmatpush.msra.mxu0 0.0
        %6353 = vmatpush.msra.mxu0 0.0
        %6354 = vmatpush.msra.mxu0 0.0
        %6355 = vmatpush.msra.mxu0 %v6286
        %6356 = vmatmul.f32.gmra.mxu0 %v6298
        %v6357 = vpop.f32.mrf.mxu0
        %v6358 = vadd.f32 0.0, %v6357
        %6359 = vdwg.mxu0
        %6360 = vmatpush.msra.mxu0 0.0
        %6361 = vmatpush.msra.mxu0 0.0
        %6362 = vmatpush.msra.mxu0 0.0
        %6363 = vmatpush.msra.mxu0 0.0
        %6364 = vmatpush.msra.mxu0 0.0
        %6365 = vmatpush.msra.mxu0 0.0
        %6366 = vmatpush.msra.mxu0 0.0
        %6367 = vmatpush.msra.mxu0 0.0
        %6368 = vmatpush.msra.mxu0 0.0
        %6369 = vmatpush.msra.mxu0 0.0
        %6370 = vmatpush.msra.mxu0 0.0
        %6371 = vmatpush.msra.mxu0 0.0
        %6372 = vmatpush.msra.mxu0 0.0
        %6373 = vmatpush.msra.mxu0 0.0
        %6374 = vmatpush.msra.mxu0 0.0
        %6375 = vmatpush.msra.mxu0 %v6287
        %6376 = vmatmul.f32.gmra.mxu0 %v6298
        %v6377 = vpop.f32.mrf.mxu0
        %v6378 = vadd.f32 0.0, %v6377
        %6379 = vdwg.mxu0
        %6380 = vmatpush.msra.mxu0 0.0
        %6381 = vmatpush.msra.mxu0 0.0
        %6382 = vmatpush.msra.mxu0 0.0
        %6383 = vmatpush.msra.mxu0 0.0
        %6384 = vmatpush.msra.mxu0 0.0
        %6385 = vmatpush.msra.mxu0 0.0
        %6386 = vmatpush.msra.mxu0 0.0
        %6387 = vmatpush.msra.mxu0 0.0
        %6388 = vmatpush.msra.mxu0 0.0
        %6389 = vmatpush.msra.mxu0 0.0
        %6390 = vmatpush.msra.mxu0 0.0
        %6391 = vmatpush.msra.mxu0 0.0
        %6392 = vmatpush.msra.mxu0 0.0
        %6393 = vmatpush.msra.mxu0 0.0
        %6394 = vmatpush.msra.mxu0 0.0
        %6395 = vmatpush.msra.mxu0 %v6288
        %6396 = vmatmul.f32.gmra.mxu0 %v6298
        %v6397 = vpop.f32.mrf.mxu0
        %v6398 = vadd.f32 0.0, %v6397
        %6399 = vdwg.mxu0
        %6400 = vmatpush.msra.mxu0 0.0
        %6401 = vmatpush.msra.mxu0 0.0
        %6402 = vmatpush.msra.mxu0 0.0
        %6403 = vmatpush.msra.mxu0 0.0
        %6404 = vmatpush.msra.mxu0 0.0
        %6405 = vmatpush.msra.mxu0 0.0
        %6406 = vmatpush.msra.mxu0 0.0
        %6407 = vmatpush.msra.mxu0 0.0
        %6408 = vmatpush.msra.mxu0 0.0
        %6409 = vmatpush.msra.mxu0 0.0
        %6410 = vmatpush.msra.mxu0 0.0
        %6411 = vmatpush.msra.mxu0 0.0
        %6412 = vmatpush.msra.mxu0 0.0
        %6413 = vmatpush.msra.mxu0 0.0
        %6414 = vmatpush.msra.mxu0 0.0
        %6415 = vmatpush.msra.mxu0 %v6289
        %6416 = vmatmul.f32.gmra.mxu0 %v6298
        %v6417 = vpop.f32.mrf.mxu0
        %v6418 = vadd.f32 0.0, %v6417
        %6419 = vdwg.mxu0
        %6420 = vmatpush.msra.mxu0 0.0
        %6421 = vmatpush.msra.mxu0 0.0
        %6422 = vmatpush.msra.mxu0 0.0
        %6423 = vmatpush.msra.mxu0 0.0
        %6424 = vmatpush.msra.mxu0 0.0
        %6425 = vmatpush.msra.mxu0 0.0
        %6426 = vmatpush.msra.mxu0 0.0
        %6427 = vmatpush.msra.mxu0 0.0
        %6428 = vmatpush.msra.mxu0 0.0
        %6429 = vmatpush.msra.mxu0 0.0
        %6430 = vmatpush.msra.mxu0 0.0
        %6431 = vmatpush.msra.mxu0 0.0
        %6432 = vmatpush.msra.mxu0 0.0
        %6433 = vmatpush.msra.mxu0 0.0
        %6434 = vmatpush.msra.mxu0 0.0
        %6435 = vmatpush.msra.mxu0 %v6283
        %6436 = vmatmul.f32.gmra.mxu0 %v6298
        %v6437 = vpop.f32.mrf.mxu0
        %v6438 = vadd.f32 0.0, %v6437
        %6439 = vdwg.mxu0
        %v6440 = vadd.f32 %v6261, %v6318
        %v6441 = vadd.f32 %v6262, %v6338
        %v6442 = vadd.f32 %v6263, %v6358
        %v6443 = vadd.f32 %v6264, %v6378
        %v6444 = vadd.f32 %v6265, %v6398
        %v6445 = vadd.f32 %v6266, %v6418
        %v6446 = vadd.f32 %v6267, %v6438
        %s6447 = scalar_lea.vmem %s3, 56
        %v6448 = vld [vmem:[%s6447] sm:$0xff]
        %6449 = vrot.lane.b32.xlu0 %v5222, 107
        %v6450 = vpop.permute.xlu0 %6449
        %6451 = vrot.lane.b32.xlu0 %v5223, 107
        %v6452 = vpop.permute.xlu0 %6451
        %6453 = vrot.lane.b32.xlu0 %v5224, 107
        %v6454 = vpop.permute.xlu0 %6453
        %6455 = vrot.lane.b32.xlu0 %v5225, 107
        %v6456 = vpop.permute.xlu0 %6455
        %6457 = vrot.lane.b32.xlu0 %v5226, 107
        %v6458 = vpop.permute.xlu0 %6457
        %6459 = vrot.lane.b32.xlu0 %v5227, 107
        %v6460 = vpop.permute.xlu0 %6459
        %6461 = vrot.lane.b32.xlu0 %v5228, 107
        %v6462 = vpop.permute.xlu0 %6461
        %v6463 = vsel %vm1499, %v6450, %v6452
        %v6464 = vsel %vm1499, %v6452, %v6454
        %v6465 = vsel %vm1499, %v6454, %v6456
        %v6466 = vsel %vm1499, %v6456, %v6458
        %v6467 = vsel %vm1499, %v6458, %v6460
        %v6468 = vsel %vm1499, %v6460, %v6462
        %v6477 = vsel %vm296, %v6448, 0
        %6479 = vmatpush.msra.mxu0 0.0
        %6480 = vmatpush.msra.mxu0 0.0
        %6481 = vmatpush.msra.mxu0 0.0
        %6482 = vmatpush.msra.mxu0 0.0
        %6483 = vmatpush.msra.mxu0 0.0
        %6484 = vmatpush.msra.mxu0 0.0
        %6485 = vmatpush.msra.mxu0 0.0
        %6486 = vmatpush.msra.mxu0 0.0
        %6487 = vmatpush.msra.mxu0 0.0
        %6488 = vmatpush.msra.mxu0 0.0
        %6489 = vmatpush.msra.mxu0 0.0
        %6490 = vmatpush.msra.mxu0 0.0
        %6491 = vmatpush.msra.mxu0 0.0
        %6492 = vmatpush.msra.mxu0 0.0
        %6493 = vmatpush.msra.mxu0 0.0
        %6494 = vmatpush.msra.mxu0 %v6463
        %6495 = vmatmul.f32.gmra.mxu0 %v6477
        %v6496 = vpop.f32.mrf.mxu0
        %v6497 = vadd.f32 0.0, %v6496
        %6498 = vdwg.mxu0
        %6499 = vmatpush.msra.mxu0 0.0
        %6500 = vmatpush.msra.mxu0 0.0
        %6501 = vmatpush.msra.mxu0 0.0
        %6502 = vmatpush.msra.mxu0 0.0
        %6503 = vmatpush.msra.mxu0 0.0
        %6504 = vmatpush.msra.mxu0 0.0
        %6505 = vmatpush.msra.mxu0 0.0
        %6506 = vmatpush.msra.mxu0 0.0
        %6507 = vmatpush.msra.mxu0 0.0
        %6508 = vmatpush.msra.mxu0 0.0
        %6509 = vmatpush.msra.mxu0 0.0
        %6510 = vmatpush.msra.mxu0 0.0
        %6511 = vmatpush.msra.mxu0 0.0
        %6512 = vmatpush.msra.mxu0 0.0
        %6513 = vmatpush.msra.mxu0 0.0
        %6514 = vmatpush.msra.mxu0 %v6464
        %6515 = vmatmul.f32.gmra.mxu0 %v6477
        %v6516 = vpop.f32.mrf.mxu0
        %v6517 = vadd.f32 0.0, %v6516
        %6518 = vdwg.mxu0
        %6519 = vmatpush.msra.mxu0 0.0
        %6520 = vmatpush.msra.mxu0 0.0
        %6521 = vmatpush.msra.mxu0 0.0
        %6522 = vmatpush.msra.mxu0 0.0
        %6523 = vmatpush.msra.mxu0 0.0
        %6524 = vmatpush.msra.mxu0 0.0
        %6525 = vmatpush.msra.mxu0 0.0
        %6526 = vmatpush.msra.mxu0 0.0
        %6527 = vmatpush.msra.mxu0 0.0
        %6528 = vmatpush.msra.mxu0 0.0
        %6529 = vmatpush.msra.mxu0 0.0
        %6530 = vmatpush.msra.mxu0 0.0
        %6531 = vmatpush.msra.mxu0 0.0
        %6532 = vmatpush.msra.mxu0 0.0
        %6533 = vmatpush.msra.mxu0 0.0
        %6534 = vmatpush.msra.mxu0 %v6465
        %6535 = vmatmul.f32.gmra.mxu0 %v6477
        %v6536 = vpop.f32.mrf.mxu0
        %v6537 = vadd.f32 0.0, %v6536
        %6538 = vdwg.mxu0
        %6539 = vmatpush.msra.mxu0 0.0
        %6540 = vmatpush.msra.mxu0 0.0
        %6541 = vmatpush.msra.mxu0 0.0
        %6542 = vmatpush.msra.mxu0 0.0
        %6543 = vmatpush.msra.mxu0 0.0
        %6544 = vmatpush.msra.mxu0 0.0
        %6545 = vmatpush.msra.mxu0 0.0
        %6546 = vmatpush.msra.mxu0 0.0
        %6547 = vmatpush.msra.mxu0 0.0
        %6548 = vmatpush.msra.mxu0 0.0
        %6549 = vmatpush.msra.mxu0 0.0
        %6550 = vmatpush.msra.mxu0 0.0
        %6551 = vmatpush.msra.mxu0 0.0
        %6552 = vmatpush.msra.mxu0 0.0
        %6553 = vmatpush.msra.mxu0 0.0
        %6554 = vmatpush.msra.mxu0 %v6466
        %6555 = vmatmul.f32.gmra.mxu0 %v6477
        %v6556 = vpop.f32.mrf.mxu0
        %v6557 = vadd.f32 0.0, %v6556
        %6558 = vdwg.mxu0
        %6559 = vmatpush.msra.mxu0 0.0
        %6560 = vmatpush.msra.mxu0 0.0
        %6561 = vmatpush.msra.mxu0 0.0
        %6562 = vmatpush.msra.mxu0 0.0
        %6563 = vmatpush.msra.mxu0 0.0
        %6564 = vmatpush.msra.mxu0 0.0
        %6565 = vmatpush.msra.mxu0 0.0
        %6566 = vmatpush.msra.mxu0 0.0
        %6567 = vmatpush.msra.mxu0 0.0
        %6568 = vmatpush.msra.mxu0 0.0
        %6569 = vmatpush.msra.mxu0 0.0
        %6570 = vmatpush.msra.mxu0 0.0
        %6571 = vmatpush.msra.mxu0 0.0
        %6572 = vmatpush.msra.mxu0 0.0
        %6573 = vmatpush.msra.mxu0 0.0
        %6574 = vmatpush.msra.mxu0 %v6467
        %6575 = vmatmul.f32.gmra.mxu0 %v6477
        %v6576 = vpop.f32.mrf.mxu0
        %v6577 = vadd.f32 0.0, %v6576
        %6578 = vdwg.mxu0
        %6579 = vmatpush.msra.mxu0 0.0
        %6580 = vmatpush.msra.mxu0 0.0
        %6581 = vmatpush.msra.mxu0 0.0
        %6582 = vmatpush.msra.mxu0 0.0
        %6583 = vmatpush.msra.mxu0 0.0
        %6584 = vmatpush.msra.mxu0 0.0
        %6585 = vmatpush.msra.mxu0 0.0
        %6586 = vmatpush.msra.mxu0 0.0
        %6587 = vmatpush.msra.mxu0 0.0
        %6588 = vmatpush.msra.mxu0 0.0
        %6589 = vmatpush.msra.mxu0 0.0
        %6590 = vmatpush.msra.mxu0 0.0
        %6591 = vmatpush.msra.mxu0 0.0
        %6592 = vmatpush.msra.mxu0 0.0
        %6593 = vmatpush.msra.mxu0 0.0
        %6594 = vmatpush.msra.mxu0 %v6468
        %6595 = vmatmul.f32.gmra.mxu0 %v6477
        %v6596 = vpop.f32.mrf.mxu0
        %v6597 = vadd.f32 0.0, %v6596
        %6598 = vdwg.mxu0
        %6599 = vmatpush.msra.mxu0 0.0
        %6600 = vmatpush.msra.mxu0 0.0
        %6601 = vmatpush.msra.mxu0 0.0
        %6602 = vmatpush.msra.mxu0 0.0
        %6603 = vmatpush.msra.mxu0 0.0
        %6604 = vmatpush.msra.mxu0 0.0
        %6605 = vmatpush.msra.mxu0 0.0
        %6606 = vmatpush.msra.mxu0 0.0
        %6607 = vmatpush.msra.mxu0 0.0
        %6608 = vmatpush.msra.mxu0 0.0
        %6609 = vmatpush.msra.mxu0 0.0
        %6610 = vmatpush.msra.mxu0 0.0
        %6611 = vmatpush.msra.mxu0 0.0
        %6612 = vmatpush.msra.mxu0 0.0
        %6613 = vmatpush.msra.mxu0 0.0
        %6614 = vmatpush.msra.mxu0 %v6462
        %6615 = vmatmul.f32.gmra.mxu0 %v6477
        %v6616 = vpop.f32.mrf.mxu0
        %v6617 = vadd.f32 0.0, %v6616
        %6618 = vdwg.mxu0
        %v6619 = vadd.f32 %v6440, %v6497
        %v6620 = vadd.f32 %v6441, %v6517
        %v6621 = vadd.f32 %v6442, %v6537
        %v6622 = vadd.f32 %v6443, %v6557
        %v6623 = vadd.f32 %v6444, %v6577
        %v6624 = vadd.f32 %v6445, %v6597
        %v6625 = vadd.f32 %v6446, %v6617
        %s6626 = scalar_lea.vmem %s3, 64
        %v6627 = vld [vmem:[%s6626] sm:$0xff]
        %6628 = vrot.lane.b32.xlu0 %v5222, 106
        %v6629 = vpop.permute.xlu0 %6628
        %6630 = vrot.lane.b32.xlu0 %v5223, 106
        %v6631 = vpop.permute.xlu0 %6630
        %6632 = vrot.lane.b32.xlu0 %v5224, 106
        %v6633 = vpop.permute.xlu0 %6632
        %6634 = vrot.lane.b32.xlu0 %v5225, 106
        %v6635 = vpop.permute.xlu0 %6634
        %6636 = vrot.lane.b32.xlu0 %v5226, 106
        %v6637 = vpop.permute.xlu0 %6636
        %6638 = vrot.lane.b32.xlu0 %v5227, 106
        %v6639 = vpop.permute.xlu0 %6638
        %6640 = vrot.lane.b32.xlu0 %v5228, 106
        %v6641 = vpop.permute.xlu0 %6640
        %v6642 = vsel %vm1679, %v6629, %v6631
        %v6643 = vsel %vm1679, %v6631, %v6633
        %v6644 = vsel %vm1679, %v6633, %v6635
        %v6645 = vsel %vm1679, %v6635, %v6637
        %v6646 = vsel %vm1679, %v6637, %v6639
        %v6647 = vsel %vm1679, %v6639, %v6641
        %v6656 = vsel %vm296, %v6627, 0
        %6658 = vmatpush.msra.mxu0 0.0
        %6659 = vmatpush.msra.mxu0 0.0
        %6660 = vmatpush.msra.mxu0 0.0
        %6661 = vmatpush.msra.mxu0 0.0
        %6662 = vmatpush.msra.mxu0 0.0
        %6663 = vmatpush.msra.mxu0 0.0
        %6664 = vmatpush.msra.mxu0 0.0
        %6665 = vmatpush.msra.mxu0 0.0
        %6666 = vmatpush.msra.mxu0 0.0
        %6667 = vmatpush.msra.mxu0 0.0
        %6668 = vmatpush.msra.mxu0 0.0
        %6669 = vmatpush.msra.mxu0 0.0
        %6670 = vmatpush.msra.mxu0 0.0
        %6671 = vmatpush.msra.mxu0 0.0
        %6672 = vmatpush.msra.mxu0 0.0
        %6673 = vmatpush.msra.mxu0 %v6642
        %6674 = vmatmul.f32.gmra.mxu0 %v6656
        %v6675 = vpop.f32.mrf.mxu0
        %v6676 = vadd.f32 0.0, %v6675
        %6677 = vdwg.mxu0
        %6678 = vmatpush.msra.mxu0 0.0
        %6679 = vmatpush.msra.mxu0 0.0
        %6680 = vmatpush.msra.mxu0 0.0
        %6681 = vmatpush.msra.mxu0 0.0
        %6682 = vmatpush.msra.mxu0 0.0
        %6683 = vmatpush.msra.mxu0 0.0
        %6684 = vmatpush.msra.mxu0 0.0
        %6685 = vmatpush.msra.mxu0 0.0
        %6686 = vmatpush.msra.mxu0 0.0
        %6687 = vmatpush.msra.mxu0 0.0
        %6688 = vmatpush.msra.mxu0 0.0
        %6689 = vmatpush.msra.mxu0 0.0
        %6690 = vmatpush.msra.mxu0 0.0
        %6691 = vmatpush.msra.mxu0 0.0
        %6692 = vmatpush.msra.mxu0 0.0
        %6693 = vmatpush.msra.mxu0 %v6643
        %6694 = vmatmul.f32.gmra.mxu0 %v6656
        %v6695 = vpop.f32.mrf.mxu0
        %v6696 = vadd.f32 0.0, %v6695
        %6697 = vdwg.mxu0
        %6698 = vmatpush.msra.mxu0 0.0
        %6699 = vmatpush.msra.mxu0 0.0
        %6700 = vmatpush.msra.mxu0 0.0
        %6701 = vmatpush.msra.mxu0 0.0
        %6702 = vmatpush.msra.mxu0 0.0
        %6703 = vmatpush.msra.mxu0 0.0
        %6704 = vmatpush.msra.mxu0 0.0
        %6705 = vmatpush.msra.mxu0 0.0
        %6706 = vmatpush.msra.mxu0 0.0
        %6707 = vmatpush.msra.mxu0 0.0
        %6708 = vmatpush.msra.mxu0 0.0
        %6709 = vmatpush.msra.mxu0 0.0
        %6710 = vmatpush.msra.mxu0 0.0
        %6711 = vmatpush.msra.mxu0 0.0
        %6712 = vmatpush.msra.mxu0 0.0
        %6713 = vmatpush.msra.mxu0 %v6644
        %6714 = vmatmul.f32.gmra.mxu0 %v6656
        %v6715 = vpop.f32.mrf.mxu0
        %v6716 = vadd.f32 0.0, %v6715
        %6717 = vdwg.mxu0
        %6718 = vmatpush.msra.mxu0 0.0
        %6719 = vmatpush.msra.mxu0 0.0
        %6720 = vmatpush.msra.mxu0 0.0
        %6721 = vmatpush.msra.mxu0 0.0
        %6722 = vmatpush.msra.mxu0 0.0
        %6723 = vmatpush.msra.mxu0 0.0
        %6724 = vmatpush.msra.mxu0 0.0
        %6725 = vmatpush.msra.mxu0 0.0
        %6726 = vmatpush.msra.mxu0 0.0
        %6727 = vmatpush.msra.mxu0 0.0
        %6728 = vmatpush.msra.mxu0 0.0
        %6729 = vmatpush.msra.mxu0 0.0
        %6730 = vmatpush.msra.mxu0 0.0
        %6731 = vmatpush.msra.mxu0 0.0
        %6732 = vmatpush.msra.mxu0 0.0
        %6733 = vmatpush.msra.mxu0 %v6645
        %6734 = vmatmul.f32.gmra.mxu0 %v6656
        %v6735 = vpop.f32.mrf.mxu0
        %v6736 = vadd.f32 0.0, %v6735
        %6737 = vdwg.mxu0
        %6738 = vmatpush.msra.mxu0 0.0
        %6739 = vmatpush.msra.mxu0 0.0
        %6740 = vmatpush.msra.mxu0 0.0
        %6741 = vmatpush.msra.mxu0 0.0
        %6742 = vmatpush.msra.mxu0 0.0
        %6743 = vmatpush.msra.mxu0 0.0
        %6744 = vmatpush.msra.mxu0 0.0
        %6745 = vmatpush.msra.mxu0 0.0
        %6746 = vmatpush.msra.mxu0 0.0
        %6747 = vmatpush.msra.mxu0 0.0
        %6748 = vmatpush.msra.mxu0 0.0
        %6749 = vmatpush.msra.mxu0 0.0
        %6750 = vmatpush.msra.mxu0 0.0
        %6751 = vmatpush.msra.mxu0 0.0
        %6752 = vmatpush.msra.mxu0 0.0
        %6753 = vmatpush.msra.mxu0 %v6646
        %6754 = vmatmul.f32.gmra.mxu0 %v6656
        %v6755 = vpop.f32.mrf.mxu0
        %v6756 = vadd.f32 0.0, %v6755
        %6757 = vdwg.mxu0
        %6758 = vmatpush.msra.mxu0 0.0
        %6759 = vmatpush.msra.mxu0 0.0
        %6760 = vmatpush.msra.mxu0 0.0
        %6761 = vmatpush.msra.mxu0 0.0
        %6762 = vmatpush.msra.mxu0 0.0
        %6763 = vmatpush.msra.mxu0 0.0
        %6764 = vmatpush.msra.mxu0 0.0
        %6765 = vmatpush.msra.mxu0 0.0
        %6766 = vmatpush.msra.mxu0 0.0
        %6767 = vmatpush.msra.mxu0 0.0
        %6768 = vmatpush.msra.mxu0 0.0
        %6769 = vmatpush.msra.mxu0 0.0
        %6770 = vmatpush.msra.mxu0 0.0
        %6771 = vmatpush.msra.mxu0 0.0
        %6772 = vmatpush.msra.mxu0 0.0
        %6773 = vmatpush.msra.mxu0 %v6647
        %6774 = vmatmul.f32.gmra.mxu0 %v6656
        %v6775 = vpop.f32.mrf.mxu0
        %v6776 = vadd.f32 0.0, %v6775
        %6777 = vdwg.mxu0
        %6778 = vmatpush.msra.mxu0 0.0
        %6779 = vmatpush.msra.mxu0 0.0
        %6780 = vmatpush.msra.mxu0 0.0
        %6781 = vmatpush.msra.mxu0 0.0
        %6782 = vmatpush.msra.mxu0 0.0
        %6783 = vmatpush.msra.mxu0 0.0
        %6784 = vmatpush.msra.mxu0 0.0
        %6785 = vmatpush.msra.mxu0 0.0
        %6786 = vmatpush.msra.mxu0 0.0
        %6787 = vmatpush.msra.mxu0 0.0
        %6788 = vmatpush.msra.mxu0 0.0
        %6789 = vmatpush.msra.mxu0 0.0
        %6790 = vmatpush.msra.mxu0 0.0
        %6791 = vmatpush.msra.mxu0 0.0
        %6792 = vmatpush.msra.mxu0 0.0
        %6793 = vmatpush.msra.mxu0 %v6641
        %6794 = vmatmul.f32.gmra.mxu0 %v6656
        %v6795 = vpop.f32.mrf.mxu0
        %v6796 = vadd.f32 0.0, %v6795
        %6797 = vdwg.mxu0
        %v6798 = vadd.f32 %v6619, %v6676
        %v6799 = vadd.f32 %v6620, %v6696
        %v6800 = vadd.f32 %v6621, %v6716
        %v6801 = vadd.f32 %v6622, %v6736
        %v6802 = vadd.f32 %v6623, %v6756
        %v6803 = vadd.f32 %v6624, %v6776
        %v6804 = vadd.f32 %v6625, %v6796
        %s6805 = scalar_lea.vmem %s3, 72
        %v6806 = vld [vmem:[%s6805] sm:$0xff]
        %6807 = vrot.lane.b32.xlu0 %v5222, 28
        %v6808 = vpop.permute.xlu0 %6807
        %6809 = vrot.lane.b32.xlu0 %v5223, 28
        %v6810 = vpop.permute.xlu0 %6809
        %6811 = vrot.lane.b32.xlu0 %v5224, 28
        %v6812 = vpop.permute.xlu0 %6811
        %6813 = vrot.lane.b32.xlu0 %v5225, 28
        %v6814 = vpop.permute.xlu0 %6813
        %6815 = vrot.lane.b32.xlu0 %v5226, 28
        %v6816 = vpop.permute.xlu0 %6815
        %6817 = vrot.lane.b32.xlu0 %v5227, 28
        %v6818 = vpop.permute.xlu0 %6817
        %6819 = vrot.lane.b32.xlu0 %v5228, 28
        %v6820 = vpop.permute.xlu0 %6819
        %v6821 = vsel %vm1859, %v6808, %v6810
        %v6822 = vsel %vm1859, %v6810, %v6812
        %v6823 = vsel %vm1859, %v6812, %v6814
        %v6824 = vsel %vm1859, %v6814, %v6816
        %v6825 = vsel %vm1859, %v6816, %v6818
        %v6826 = vsel %vm1859, %v6818, %v6820
        %v6835 = vsel %vm296, %v6806, 0
        %6837 = vmatpush.msra.mxu0 0.0
        %6838 = vmatpush.msra.mxu0 0.0
        %6839 = vmatpush.msra.mxu0 0.0
        %6840 = vmatpush.msra.mxu0 0.0
        %6841 = vmatpush.msra.mxu0 0.0
        %6842 = vmatpush.msra.mxu0 0.0
        %6843 = vmatpush.msra.mxu0 0.0
        %6844 = vmatpush.msra.mxu0 0.0
        %6845 = vmatpush.msra.mxu0 0.0
        %6846 = vmatpush.msra.mxu0 0.0
        %6847 = vmatpush.msra.mxu0 0.0
        %6848 = vmatpush.msra.mxu0 0.0
        %6849 = vmatpush.msra.mxu0 0.0
        %6850 = vmatpush.msra.mxu0 0.0
        %6851 = vmatpush.msra.mxu0 0.0
        %6852 = vmatpush.msra.mxu0 %v6821
        %6853 = vmatmul.f32.gmra.mxu0 %v6835
        %v6854 = vpop.f32.mrf.mxu0
        %v6855 = vadd.f32 0.0, %v6854
        %6856 = vdwg.mxu0
        %6857 = vmatpush.msra.mxu0 0.0
        %6858 = vmatpush.msra.mxu0 0.0
        %6859 = vmatpush.msra.mxu0 0.0
        %6860 = vmatpush.msra.mxu0 0.0
        %6861 = vmatpush.msra.mxu0 0.0
        %6862 = vmatpush.msra.mxu0 0.0
        %6863 = vmatpush.msra.mxu0 0.0
        %6864 = vmatpush.msra.mxu0 0.0
        %6865 = vmatpush.msra.mxu0 0.0
        %6866 = vmatpush.msra.mxu0 0.0
        %6867 = vmatpush.msra.mxu0 0.0
        %6868 = vmatpush.msra.mxu0 0.0
        %6869 = vmatpush.msra.mxu0 0.0
        %6870 = vmatpush.msra.mxu0 0.0
        %6871 = vmatpush.msra.mxu0 0.0
        %6872 = vmatpush.msra.mxu0 %v6822
        %6873 = vmatmul.f32.gmra.mxu0 %v6835
        %v6874 = vpop.f32.mrf.mxu0
        %v6875 = vadd.f32 0.0, %v6874
        %6876 = vdwg.mxu0
        %6877 = vmatpush.msra.mxu0 0.0
        %6878 = vmatpush.msra.mxu0 0.0
        %6879 = vmatpush.msra.mxu0 0.0
        %6880 = vmatpush.msra.mxu0 0.0
        %6881 = vmatpush.msra.mxu0 0.0
        %6882 = vmatpush.msra.mxu0 0.0
        %6883 = vmatpush.msra.mxu0 0.0
        %6884 = vmatpush.msra.mxu0 0.0
        %6885 = vmatpush.msra.mxu0 0.0
        %6886 = vmatpush.msra.mxu0 0.0
        %6887 = vmatpush.msra.mxu0 0.0
        %6888 = vmatpush.msra.mxu0 0.0
        %6889 = vmatpush.msra.mxu0 0.0
        %6890 = vmatpush.msra.mxu0 0.0
        %6891 = vmatpush.msra.mxu0 0.0
        %6892 = vmatpush.msra.mxu0 %v6823
        %6893 = vmatmul.f32.gmra.mxu0 %v6835
        %v6894 = vpop.f32.mrf.mxu0
        %v6895 = vadd.f32 0.0, %v6894
        %6896 = vdwg.mxu0
        %6897 = vmatpush.msra.mxu0 0.0
        %6898 = vmatpush.msra.mxu0 0.0
        %6899 = vmatpush.msra.mxu0 0.0
        %6900 = vmatpush.msra.mxu0 0.0
        %6901 = vmatpush.msra.mxu0 0.0
        %6902 = vmatpush.msra.mxu0 0.0
        %6903 = vmatpush.msra.mxu0 0.0
        %6904 = vmatpush.msra.mxu0 0.0
        %6905 = vmatpush.msra.mxu0 0.0
        %6906 = vmatpush.msra.mxu0 0.0
        %6907 = vmatpush.msra.mxu0 0.0
        %6908 = vmatpush.msra.mxu0 0.0
        %6909 = vmatpush.msra.mxu0 0.0
        %6910 = vmatpush.msra.mxu0 0.0
        %6911 = vmatpush.msra.mxu0 0.0
        %6912 = vmatpush.msra.mxu0 %v6824
        %6913 = vmatmul.f32.gmra.mxu0 %v6835
        %v6914 = vpop.f32.mrf.mxu0
        %v6915 = vadd.f32 0.0, %v6914
        %6916 = vdwg.mxu0
        %6917 = vmatpush.msra.mxu0 0.0
        %6918 = vmatpush.msra.mxu0 0.0
        %6919 = vmatpush.msra.mxu0 0.0
        %6920 = vmatpush.msra.mxu0 0.0
        %6921 = vmatpush.msra.mxu0 0.0
        %6922 = vmatpush.msra.mxu0 0.0
        %6923 = vmatpush.msra.mxu0 0.0
        %6924 = vmatpush.msra.mxu0 0.0
        %6925 = vmatpush.msra.mxu0 0.0
        %6926 = vmatpush.msra.mxu0 0.0
        %6927 = vmatpush.msra.mxu0 0.0
        %6928 = vmatpush.msra.mxu0 0.0
        %6929 = vmatpush.msra.mxu0 0.0
        %6930 = vmatpush.msra.mxu0 0.0
        %6931 = vmatpush.msra.mxu0 0.0
        %6932 = vmatpush.msra.mxu0 %v6825
        %6933 = vmatmul.f32.gmra.mxu0 %v6835
        %v6934 = vpop.f32.mrf.mxu0
        %v6935 = vadd.f32 0.0, %v6934
        %6936 = vdwg.mxu0
        %6937 = vmatpush.msra.mxu0 0.0
        %6938 = vmatpush.msra.mxu0 0.0
        %6939 = vmatpush.msra.mxu0 0.0
        %6940 = vmatpush.msra.mxu0 0.0
        %6941 = vmatpush.msra.mxu0 0.0
        %6942 = vmatpush.msra.mxu0 0.0
        %6943 = vmatpush.msra.mxu0 0.0
        %6944 = vmatpush.msra.mxu0 0.0
        %6945 = vmatpush.msra.mxu0 0.0
        %6946 = vmatpush.msra.mxu0 0.0
        %6947 = vmatpush.msra.mxu0 0.0
        %6948 = vmatpush.msra.mxu0 0.0
        %6949 = vmatpush.msra.mxu0 0.0
        %6950 = vmatpush.msra.mxu0 0.0
        %6951 = vmatpush.msra.mxu0 0.0
        %6952 = vmatpush.msra.mxu0 %v6826
        %6953 = vmatmul.f32.gmra.mxu0 %v6835
        %v6954 = vpop.f32.mrf.mxu0
        %v6955 = vadd.f32 0.0, %v6954
        %6956 = vdwg.mxu0
        %6957 = vmatpush.msra.mxu0 0.0
        %6958 = vmatpush.msra.mxu0 0.0
        %6959 = vmatpush.msra.mxu0 0.0
        %6960 = vmatpush.msra.mxu0 0.0
        %6961 = vmatpush.msra.mxu0 0.0
        %6962 = vmatpush.msra.mxu0 0.0
        %6963 = vmatpush.msra.mxu0 0.0
        %6964 = vmatpush.msra.mxu0 0.0
        %6965 = vmatpush.msra.mxu0 0.0
        %6966 = vmatpush.msra.mxu0 0.0
        %6967 = vmatpush.msra.mxu0 0.0
        %6968 = vmatpush.msra.mxu0 0.0
        %6969 = vmatpush.msra.mxu0 0.0
        %6970 = vmatpush.msra.mxu0 0.0
        %6971 = vmatpush.msra.mxu0 0.0
        %6972 = vmatpush.msra.mxu0 %v6820
        %6973 = vmatmul.f32.gmra.mxu0 %v6835
        %v6974 = vpop.f32.mrf.mxu0
        %v6975 = vadd.f32 0.0, %v6974
        %6976 = vdwg.mxu0
        %v6977 = vadd.f32 %v6798, %v6855
        %v6978 = vadd.f32 %v6799, %v6875
        %v6979 = vadd.f32 %v6800, %v6895
        %v6980 = vadd.f32 %v6801, %v6915
        %v6981 = vadd.f32 %v6802, %v6935
        %v6982 = vadd.f32 %v6803, %v6955
        %v6983 = vadd.f32 %v6804, %v6975
        %s6984 = scalar_lea.vmem %s3, 80
        %v6985 = vld [vmem:[%s6984] sm:$0xff]
        %6986 = vrot.lane.b32.xlu0 %v5222, 27
        %v6987 = vpop.permute.xlu0 %6986
        %6988 = vrot.lane.b32.xlu0 %v5223, 27
        %v6989 = vpop.permute.xlu0 %6988
        %6990 = vrot.lane.b32.xlu0 %v5224, 27
        %v6991 = vpop.permute.xlu0 %6990
        %6992 = vrot.lane.b32.xlu0 %v5225, 27
        %v6993 = vpop.permute.xlu0 %6992
        %6994 = vrot.lane.b32.xlu0 %v5226, 27
        %v6995 = vpop.permute.xlu0 %6994
        %6996 = vrot.lane.b32.xlu0 %v5227, 27
        %v6997 = vpop.permute.xlu0 %6996
        %6998 = vrot.lane.b32.xlu0 %v5228, 27
        %v6999 = vpop.permute.xlu0 %6998
        %v7000 = vsel %vm2039, %v6987, %v6989
        %v7001 = vsel %vm2039, %v6989, %v6991
        %v7002 = vsel %vm2039, %v6991, %v6993
        %v7003 = vsel %vm2039, %v6993, %v6995
        %v7004 = vsel %vm2039, %v6995, %v6997
        %v7005 = vsel %vm2039, %v6997, %v6999
        %v7014 = vsel %vm296, %v6985, 0
        %7016 = vmatpush.msra.mxu0 0.0
        %7017 = vmatpush.msra.mxu0 0.0
        %7018 = vmatpush.msra.mxu0 0.0
        %7019 = vmatpush.msra.mxu0 0.0
        %7020 = vmatpush.msra.mxu0 0.0
        %7021 = vmatpush.msra.mxu0 0.0
        %7022 = vmatpush.msra.mxu0 0.0
        %7023 = vmatpush.msra.mxu0 0.0
        %7024 = vmatpush.msra.mxu0 0.0
        %7025 = vmatpush.msra.mxu0 0.0
        %7026 = vmatpush.msra.mxu0 0.0
        %7027 = vmatpush.msra.mxu0 0.0
        %7028 = vmatpush.msra.mxu0 0.0
        %7029 = vmatpush.msra.mxu0 0.0
        %7030 = vmatpush.msra.mxu0 0.0
        %7031 = vmatpush.msra.mxu0 %v7000
        %7032 = vmatmul.f32.gmra.mxu0 %v7014
        %v7033 = vpop.f32.mrf.mxu0
        %v7034 = vadd.f32 0.0, %v7033
        %7035 = vdwg.mxu0
        %7036 = vmatpush.msra.mxu0 0.0
        %7037 = vmatpush.msra.mxu0 0.0
        %7038 = vmatpush.msra.mxu0 0.0
        %7039 = vmatpush.msra.mxu0 0.0
        %7040 = vmatpush.msra.mxu0 0.0
        %7041 = vmatpush.msra.mxu0 0.0
        %7042 = vmatpush.msra.mxu0 0.0
        %7043 = vmatpush.msra.mxu0 0.0
        %7044 = vmatpush.msra.mxu0 0.0
        %7045 = vmatpush.msra.mxu0 0.0
        %7046 = vmatpush.msra.mxu0 0.0
        %7047 = vmatpush.msra.mxu0 0.0
        %7048 = vmatpush.msra.mxu0 0.0
        %7049 = vmatpush.msra.mxu0 0.0
        %7050 = vmatpush.msra.mxu0 0.0
        %7051 = vmatpush.msra.mxu0 %v7001
        %7052 = vmatmul.f32.gmra.mxu0 %v7014
        %v7053 = vpop.f32.mrf.mxu0
        %v7054 = vadd.f32 0.0, %v7053
        %7055 = vdwg.mxu0
        %7056 = vmatpush.msra.mxu0 0.0
        %7057 = vmatpush.msra.mxu0 0.0
        %7058 = vmatpush.msra.mxu0 0.0
        %7059 = vmatpush.msra.mxu0 0.0
        %7060 = vmatpush.msra.mxu0 0.0
        %7061 = vmatpush.msra.mxu0 0.0
        %7062 = vmatpush.msra.mxu0 0.0
        %7063 = vmatpush.msra.mxu0 0.0
        %7064 = vmatpush.msra.mxu0 0.0
        %7065 = vmatpush.msra.mxu0 0.0
        %7066 = vmatpush.msra.mxu0 0.0
        %7067 = vmatpush.msra.mxu0 0.0
        %7068 = vmatpush.msra.mxu0 0.0
        %7069 = vmatpush.msra.mxu0 0.0
        %7070 = vmatpush.msra.mxu0 0.0
        %7071 = vmatpush.msra.mxu0 %v7002
        %7072 = vmatmul.f32.gmra.mxu0 %v7014
        %v7073 = vpop.f32.mrf.mxu0
        %v7074 = vadd.f32 0.0, %v7073
        %7075 = vdwg.mxu0
        %7076 = vmatpush.msra.mxu0 0.0
        %7077 = vmatpush.msra.mxu0 0.0
        %7078 = vmatpush.msra.mxu0 0.0
        %7079 = vmatpush.msra.mxu0 0.0
        %7080 = vmatpush.msra.mxu0 0.0
        %7081 = vmatpush.msra.mxu0 0.0
        %7082 = vmatpush.msra.mxu0 0.0
        %7083 = vmatpush.msra.mxu0 0.0
        %7084 = vmatpush.msra.mxu0 0.0
        %7085 = vmatpush.msra.mxu0 0.0
        %7086 = vmatpush.msra.mxu0 0.0
        %7087 = vmatpush.msra.mxu0 0.0
        %7088 = vmatpush.msra.mxu0 0.0
        %7089 = vmatpush.msra.mxu0 0.0
        %7090 = vmatpush.msra.mxu0 0.0
        %7091 = vmatpush.msra.mxu0 %v7003
        %7092 = vmatmul.f32.gmra.mxu0 %v7014
        %v7093 = vpop.f32.mrf.mxu0
        %v7094 = vadd.f32 0.0, %v7093
        %7095 = vdwg.mxu0
        %7096 = vmatpush.msra.mxu0 0.0
        %7097 = vmatpush.msra.mxu0 0.0
        %7098 = vmatpush.msra.mxu0 0.0
        %7099 = vmatpush.msra.mxu0 0.0
        %7100 = vmatpush.msra.mxu0 0.0
        %7101 = vmatpush.msra.mxu0 0.0
        %7102 = vmatpush.msra.mxu0 0.0
        %7103 = vmatpush.msra.mxu0 0.0
        %7104 = vmatpush.msra.mxu0 0.0
        %7105 = vmatpush.msra.mxu0 0.0
        %7106 = vmatpush.msra.mxu0 0.0
        %7107 = vmatpush.msra.mxu0 0.0
        %7108 = vmatpush.msra.mxu0 0.0
        %7109 = vmatpush.msra.mxu0 0.0
        %7110 = vmatpush.msra.mxu0 0.0
        %7111 = vmatpush.msra.mxu0 %v7004
        %7112 = vmatmul.f32.gmra.mxu0 %v7014
        %v7113 = vpop.f32.mrf.mxu0
        %v7114 = vadd.f32 0.0, %v7113
        %7115 = vdwg.mxu0
        %7116 = vmatpush.msra.mxu0 0.0
        %7117 = vmatpush.msra.mxu0 0.0
        %7118 = vmatpush.msra.mxu0 0.0
        %7119 = vmatpush.msra.mxu0 0.0
        %7120 = vmatpush.msra.mxu0 0.0
        %7121 = vmatpush.msra.mxu0 0.0
        %7122 = vmatpush.msra.mxu0 0.0
        %7123 = vmatpush.msra.mxu0 0.0
        %7124 = vmatpush.msra.mxu0 0.0
        %7125 = vmatpush.msra.mxu0 0.0
        %7126 = vmatpush.msra.mxu0 0.0
        %7127 = vmatpush.msra.mxu0 0.0
        %7128 = vmatpush.msra.mxu0 0.0
        %7129 = vmatpush.msra.mxu0 0.0
        %7130 = vmatpush.msra.mxu0 0.0
        %7131 = vmatpush.msra.mxu0 %v7005
        %7132 = vmatmul.f32.gmra.mxu0 %v7014
        %v7133 = vpop.f32.mrf.mxu0
        %v7134 = vadd.f32 0.0, %v7133
        %7135 = vdwg.mxu0
        %7136 = vmatpush.msra.mxu0 0.0
        %7137 = vmatpush.msra.mxu0 0.0
        %7138 = vmatpush.msra.mxu0 0.0
        %7139 = vmatpush.msra.mxu0 0.0
        %7140 = vmatpush.msra.mxu0 0.0
        %7141 = vmatpush.msra.mxu0 0.0
        %7142 = vmatpush.msra.mxu0 0.0
        %7143 = vmatpush.msra.mxu0 0.0
        %7144 = vmatpush.msra.mxu0 0.0
        %7145 = vmatpush.msra.mxu0 0.0
        %7146 = vmatpush.msra.mxu0 0.0
        %7147 = vmatpush.msra.mxu0 0.0
        %7148 = vmatpush.msra.mxu0 0.0
        %7149 = vmatpush.msra.mxu0 0.0
        %7150 = vmatpush.msra.mxu0 0.0
        %7151 = vmatpush.msra.mxu0 %v6999
        %7152 = vmatmul.f32.gmra.mxu0 %v7014
        %v7153 = vpop.f32.mrf.mxu0
        %v7154 = vadd.f32 0.0, %v7153
        %7155 = vdwg.mxu0
        %v7156 = vadd.f32 %v6977, %v7034
        %v7157 = vadd.f32 %v6978, %v7054
        %v7158 = vadd.f32 %v6979, %v7074
        %v7159 = vadd.f32 %v6980, %v7094
        %v7160 = vadd.f32 %v6981, %v7114
        %v7161 = vadd.f32 %v6982, %v7134
        %v7162 = vadd.f32 %v6983, %v7154
        %s7163 = scalar_lea.vmem %s3, 88
        %v7164 = vld [vmem:[%s7163] sm:$0xff]
        %7165 = vrot.lane.b32.xlu0 %v5222, 26
        %v7166 = vpop.permute.xlu0 %7165
        %7167 = vrot.lane.b32.xlu0 %v5223, 26
        %v7168 = vpop.permute.xlu0 %7167
        %7169 = vrot.lane.b32.xlu0 %v5224, 26
        %v7170 = vpop.permute.xlu0 %7169
        %7171 = vrot.lane.b32.xlu0 %v5225, 26
        %v7172 = vpop.permute.xlu0 %7171
        %7173 = vrot.lane.b32.xlu0 %v5226, 26
        %v7174 = vpop.permute.xlu0 %7173
        %7175 = vrot.lane.b32.xlu0 %v5227, 26
        %v7176 = vpop.permute.xlu0 %7175
        %7177 = vrot.lane.b32.xlu0 %v5228, 26
        %v7178 = vpop.permute.xlu0 %7177
        %v7179 = vsel %vm2219, %v7166, %v7168
        %v7180 = vsel %vm2219, %v7168, %v7170
        %v7181 = vsel %vm2219, %v7170, %v7172
        %v7182 = vsel %vm2219, %v7172, %v7174
        %v7183 = vsel %vm2219, %v7174, %v7176
        %v7184 = vsel %vm2219, %v7176, %v7178
        %v7193 = vsel %vm296, %v7164, 0
        %7195 = vmatpush.msra.mxu0 0.0
        %7196 = vmatpush.msra.mxu0 0.0
        %7197 = vmatpush.msra.mxu0 0.0
        %7198 = vmatpush.msra.mxu0 0.0
        %7199 = vmatpush.msra.mxu0 0.0
        %7200 = vmatpush.msra.mxu0 0.0
        %7201 = vmatpush.msra.mxu0 0.0
        %7202 = vmatpush.msra.mxu0 0.0
        %7203 = vmatpush.msra.mxu0 0.0
        %7204 = vmatpush.msra.mxu0 0.0
        %7205 = vmatpush.msra.mxu0 0.0
        %7206 = vmatpush.msra.mxu0 0.0
        %7207 = vmatpush.msra.mxu0 0.0
        %7208 = vmatpush.msra.mxu0 0.0
        %7209 = vmatpush.msra.mxu0 0.0
        %7210 = vmatpush.msra.mxu0 %v7179
        %7211 = vmatmul.f32.gmra.mxu0 %v7193
        %v7212 = vpop.f32.mrf.mxu0
        %v7213 = vadd.f32 0.0, %v7212
        %7214 = vdwg.mxu0
        %7215 = vmatpush.msra.mxu0 0.0
        %7216 = vmatpush.msra.mxu0 0.0
        %7217 = vmatpush.msra.mxu0 0.0
        %7218 = vmatpush.msra.mxu0 0.0
        %7219 = vmatpush.msra.mxu0 0.0
        %7220 = vmatpush.msra.mxu0 0.0
        %7221 = vmatpush.msra.mxu0 0.0
        %7222 = vmatpush.msra.mxu0 0.0
        %7223 = vmatpush.msra.mxu0 0.0
        %7224 = vmatpush.msra.mxu0 0.0
        %7225 = vmatpush.msra.mxu0 0.0
        %7226 = vmatpush.msra.mxu0 0.0
        %7227 = vmatpush.msra.mxu0 0.0
        %7228 = vmatpush.msra.mxu0 0.0
        %7229 = vmatpush.msra.mxu0 0.0
        %7230 = vmatpush.msra.mxu0 %v7180
        %7231 = vmatmul.f32.gmra.mxu0 %v7193
        %v7232 = vpop.f32.mrf.mxu0
        %v7233 = vadd.f32 0.0, %v7232
        %7234 = vdwg.mxu0
        %7235 = vmatpush.msra.mxu0 0.0
        %7236 = vmatpush.msra.mxu0 0.0
        %7237 = vmatpush.msra.mxu0 0.0
        %7238 = vmatpush.msra.mxu0 0.0
        %7239 = vmatpush.msra.mxu0 0.0
        %7240 = vmatpush.msra.mxu0 0.0
        %7241 = vmatpush.msra.mxu0 0.0
        %7242 = vmatpush.msra.mxu0 0.0
        %7243 = vmatpush.msra.mxu0 0.0
        %7244 = vmatpush.msra.mxu0 0.0
        %7245 = vmatpush.msra.mxu0 0.0
        %7246 = vmatpush.msra.mxu0 0.0
        %7247 = vmatpush.msra.mxu0 0.0
        %7248 = vmatpush.msra.mxu0 0.0
        %7249 = vmatpush.msra.mxu0 0.0
        %7250 = vmatpush.msra.mxu0 %v7181
        %7251 = vmatmul.f32.gmra.mxu0 %v7193
        %v7252 = vpop.f32.mrf.mxu0
        %v7253 = vadd.f32 0.0, %v7252
        %7254 = vdwg.mxu0
        %7255 = vmatpush.msra.mxu0 0.0
        %7256 = vmatpush.msra.mxu0 0.0
        %7257 = vmatpush.msra.mxu0 0.0
        %7258 = vmatpush.msra.mxu0 0.0
        %7259 = vmatpush.msra.mxu0 0.0
        %7260 = vmatpush.msra.mxu0 0.0
        %7261 = vmatpush.msra.mxu0 0.0
        %7262 = vmatpush.msra.mxu0 0.0
        %7263 = vmatpush.msra.mxu0 0.0
        %7264 = vmatpush.msra.mxu0 0.0
        %7265 = vmatpush.msra.mxu0 0.0
        %7266 = vmatpush.msra.mxu0 0.0
        %7267 = vmatpush.msra.mxu0 0.0
        %7268 = vmatpush.msra.mxu0 0.0
        %7269 = vmatpush.msra.mxu0 0.0
        %7270 = vmatpush.msra.mxu0 %v7182
        %7271 = vmatmul.f32.gmra.mxu0 %v7193
        %v7272 = vpop.f32.mrf.mxu0
        %v7273 = vadd.f32 0.0, %v7272
        %7274 = vdwg.mxu0
        %7275 = vmatpush.msra.mxu0 0.0
        %7276 = vmatpush.msra.mxu0 0.0
        %7277 = vmatpush.msra.mxu0 0.0
        %7278 = vmatpush.msra.mxu0 0.0
        %7279 = vmatpush.msra.mxu0 0.0
        %7280 = vmatpush.msra.mxu0 0.0
        %7281 = vmatpush.msra.mxu0 0.0
        %7282 = vmatpush.msra.mxu0 0.0
        %7283 = vmatpush.msra.mxu0 0.0
        %7284 = vmatpush.msra.mxu0 0.0
        %7285 = vmatpush.msra.mxu0 0.0
        %7286 = vmatpush.msra.mxu0 0.0
        %7287 = vmatpush.msra.mxu0 0.0
        %7288 = vmatpush.msra.mxu0 0.0
        %7289 = vmatpush.msra.mxu0 0.0
        %7290 = vmatpush.msra.mxu0 %v7183
        %7291 = vmatmul.f32.gmra.mxu0 %v7193
        %v7292 = vpop.f32.mrf.mxu0
        %v7293 = vadd.f32 0.0, %v7292
        %7294 = vdwg.mxu0
        %7295 = vmatpush.msra.mxu0 0.0
        %7296 = vmatpush.msra.mxu0 0.0
        %7297 = vmatpush.msra.mxu0 0.0
        %7298 = vmatpush.msra.mxu0 0.0
        %7299 = vmatpush.msra.mxu0 0.0
        %7300 = vmatpush.msra.mxu0 0.0
        %7301 = vmatpush.msra.mxu0 0.0
        %7302 = vmatpush.msra.mxu0 0.0
        %7303 = vmatpush.msra.mxu0 0.0
        %7304 = vmatpush.msra.mxu0 0.0
        %7305 = vmatpush.msra.mxu0 0.0
        %7306 = vmatpush.msra.mxu0 0.0
        %7307 = vmatpush.msra.mxu0 0.0
        %7308 = vmatpush.msra.mxu0 0.0
        %7309 = vmatpush.msra.mxu0 0.0
        %7310 = vmatpush.msra.mxu0 %v7184
        %7311 = vmatmul.f32.gmra.mxu0 %v7193
        %v7312 = vpop.f32.mrf.mxu0
        %v7313 = vadd.f32 0.0, %v7312
        %7314 = vdwg.mxu0
        %7315 = vmatpush.msra.mxu0 0.0
        %7316 = vmatpush.msra.mxu0 0.0
        %7317 = vmatpush.msra.mxu0 0.0
        %7318 = vmatpush.msra.mxu0 0.0
        %7319 = vmatpush.msra.mxu0 0.0
        %7320 = vmatpush.msra.mxu0 0.0
        %7321 = vmatpush.msra.mxu0 0.0
        %7322 = vmatpush.msra.mxu0 0.0
        %7323 = vmatpush.msra.mxu0 0.0
        %7324 = vmatpush.msra.mxu0 0.0
        %7325 = vmatpush.msra.mxu0 0.0
        %7326 = vmatpush.msra.mxu0 0.0
        %7327 = vmatpush.msra.mxu0 0.0
        %7328 = vmatpush.msra.mxu0 0.0
        %7329 = vmatpush.msra.mxu0 0.0
        %7330 = vmatpush.msra.mxu0 %v7178
        %7331 = vmatmul.f32.gmra.mxu0 %v7193
        %v7332 = vpop.f32.mrf.mxu0
        %v7333 = vadd.f32 0.0, %v7332
        %7334 = vdwg.mxu0
        %v7335 = vadd.f32 %v7156, %v7213
        %v7336 = vadd.f32 %v7157, %v7233
        %v7337 = vadd.f32 %v7158, %v7253
        %v7338 = vadd.f32 %v7159, %v7273
        %v7339 = vadd.f32 %v7160, %v7293
        %v7340 = vadd.f32 %v7161, %v7313
        %v7341 = vadd.f32 %v7162, %v7333
        %s7342 = scalar_lea.vmem %s3, 96
        %v7343 = vld [vmem:[%s7342] sm:$0xff]
        %7344 = vrot.lane.b32.xlu0 %v5222, 18
        %v7345 = vpop.permute.xlu0 %7344
        %7346 = vrot.lane.b32.xlu0 %v5223, 18
        %v7347 = vpop.permute.xlu0 %7346
        %7348 = vrot.lane.b32.xlu0 %v5224, 18
        %v7349 = vpop.permute.xlu0 %7348
        %7350 = vrot.lane.b32.xlu0 %v5225, 18
        %v7351 = vpop.permute.xlu0 %7350
        %7352 = vrot.lane.b32.xlu0 %v5226, 18
        %v7353 = vpop.permute.xlu0 %7352
        %7354 = vrot.lane.b32.xlu0 %v5227, 18
        %v7355 = vpop.permute.xlu0 %7354
        %7356 = vrot.lane.b32.xlu0 %v5228, 18
        %v7357 = vpop.permute.xlu0 %7356
        %v7358 = vsel %vm2399, %v7345, %v7347
        %v7359 = vsel %vm2399, %v7347, %v7349
        %v7360 = vsel %vm2399, %v7349, %v7351
        %v7361 = vsel %vm2399, %v7351, %v7353
        %v7362 = vsel %vm2399, %v7353, %v7355
        %v7363 = vsel %vm2399, %v7355, %v7357
        %v7372 = vsel %vm296, %v7343, 0
        %7374 = vmatpush.msra.mxu0 0.0
        %7375 = vmatpush.msra.mxu0 0.0
        %7376 = vmatpush.msra.mxu0 0.0
        %7377 = vmatpush.msra.mxu0 0.0
        %7378 = vmatpush.msra.mxu0 0.0
        %7379 = vmatpush.msra.mxu0 0.0
        %7380 = vmatpush.msra.mxu0 0.0
        %7381 = vmatpush.msra.mxu0 0.0
        %7382 = vmatpush.msra.mxu0 0.0
        %7383 = vmatpush.msra.mxu0 0.0
        %7384 = vmatpush.msra.mxu0 0.0
        %7385 = vmatpush.msra.mxu0 0.0
        %7386 = vmatpush.msra.mxu0 0.0
        %7387 = vmatpush.msra.mxu0 0.0
        %7388 = vmatpush.msra.mxu0 0.0
        %7389 = vmatpush.msra.mxu0 %v7358
        %7390 = vmatmul.f32.gmra.mxu0 %v7372
        %v7391 = vpop.f32.mrf.mxu0
        %v7392 = vadd.f32 0.0, %v7391
        %7393 = vdwg.mxu0
        %7394 = vmatpush.msra.mxu0 0.0
        %7395 = vmatpush.msra.mxu0 0.0
        %7396 = vmatpush.msra.mxu0 0.0
        %7397 = vmatpush.msra.mxu0 0.0
        %7398 = vmatpush.msra.mxu0 0.0
        %7399 = vmatpush.msra.mxu0 0.0
        %7400 = vmatpush.msra.mxu0 0.0
        %7401 = vmatpush.msra.mxu0 0.0
        %7402 = vmatpush.msra.mxu0 0.0
        %7403 = vmatpush.msra.mxu0 0.0
        %7404 = vmatpush.msra.mxu0 0.0
        %7405 = vmatpush.msra.mxu0 0.0
        %7406 = vmatpush.msra.mxu0 0.0
        %7407 = vmatpush.msra.mxu0 0.0
        %7408 = vmatpush.msra.mxu0 0.0
        %7409 = vmatpush.msra.mxu0 %v7359
        %7410 = vmatmul.f32.gmra.mxu0 %v7372
        %v7411 = vpop.f32.mrf.mxu0
        %v7412 = vadd.f32 0.0, %v7411
        %7413 = vdwg.mxu0
        %7414 = vmatpush.msra.mxu0 0.0
        %7415 = vmatpush.msra.mxu0 0.0
        %7416 = vmatpush.msra.mxu0 0.0
        %7417 = vmatpush.msra.mxu0 0.0
        %7418 = vmatpush.msra.mxu0 0.0
        %7419 = vmatpush.msra.mxu0 0.0
        %7420 = vmatpush.msra.mxu0 0.0
        %7421 = vmatpush.msra.mxu0 0.0
        %7422 = vmatpush.msra.mxu0 0.0
        %7423 = vmatpush.msra.mxu0 0.0
        %7424 = vmatpush.msra.mxu0 0.0
        %7425 = vmatpush.msra.mxu0 0.0
        %7426 = vmatpush.msra.mxu0 0.0
        %7427 = vmatpush.msra.mxu0 0.0
        %7428 = vmatpush.msra.mxu0 0.0
        %7429 = vmatpush.msra.mxu0 %v7360
        %7430 = vmatmul.f32.gmra.mxu0 %v7372
        %v7431 = vpop.f32.mrf.mxu0
        %v7432 = vadd.f32 0.0, %v7431
        %7433 = vdwg.mxu0
        %7434 = vmatpush.msra.mxu0 0.0
        %7435 = vmatpush.msra.mxu0 0.0
        %7436 = vmatpush.msra.mxu0 0.0
        %7437 = vmatpush.msra.mxu0 0.0
        %7438 = vmatpush.msra.mxu0 0.0
        %7439 = vmatpush.msra.mxu0 0.0
        %7440 = vmatpush.msra.mxu0 0.0
        %7441 = vmatpush.msra.mxu0 0.0
        %7442 = vmatpush.msra.mxu0 0.0
        %7443 = vmatpush.msra.mxu0 0.0
        %7444 = vmatpush.msra.mxu0 0.0
        %7445 = vmatpush.msra.mxu0 0.0
        %7446 = vmatpush.msra.mxu0 0.0
        %7447 = vmatpush.msra.mxu0 0.0
        %7448 = vmatpush.msra.mxu0 0.0
        %7449 = vmatpush.msra.mxu0 %v7361
        %7450 = vmatmul.f32.gmra.mxu0 %v7372
        %v7451 = vpop.f32.mrf.mxu0
        %v7452 = vadd.f32 0.0, %v7451
        %7453 = vdwg.mxu0
        %7454 = vmatpush.msra.mxu0 0.0
        %7455 = vmatpush.msra.mxu0 0.0
        %7456 = vmatpush.msra.mxu0 0.0
        %7457 = vmatpush.msra.mxu0 0.0
        %7458 = vmatpush.msra.mxu0 0.0
        %7459 = vmatpush.msra.mxu0 0.0
        %7460 = vmatpush.msra.mxu0 0.0
        %7461 = vmatpush.msra.mxu0 0.0
        %7462 = vmatpush.msra.mxu0 0.0
        %7463 = vmatpush.msra.mxu0 0.0
        %7464 = vmatpush.msra.mxu0 0.0
        %7465 = vmatpush.msra.mxu0 0.0
        %7466 = vmatpush.msra.mxu0 0.0
        %7467 = vmatpush.msra.mxu0 0.0
        %7468 = vmatpush.msra.mxu0 0.0
        %7469 = vmatpush.msra.mxu0 %v7362
        %7470 = vmatmul.f32.gmra.mxu0 %v7372
        %v7471 = vpop.f32.mrf.mxu0
        %v7472 = vadd.f32 0.0, %v7471
        %7473 = vdwg.mxu0
        %7474 = vmatpush.msra.mxu0 0.0
        %7475 = vmatpush.msra.mxu0 0.0
        %7476 = vmatpush.msra.mxu0 0.0
        %7477 = vmatpush.msra.mxu0 0.0
        %7478 = vmatpush.msra.mxu0 0.0
        %7479 = vmatpush.msra.mxu0 0.0
        %7480 = vmatpush.msra.mxu0 0.0
        %7481 = vmatpush.msra.mxu0 0.0
        %7482 = vmatpush.msra.mxu0 0.0
        %7483 = vmatpush.msra.mxu0 0.0
        %7484 = vmatpush.msra.mxu0 0.0
        %7485 = vmatpush.msra.mxu0 0.0
        %7486 = vmatpush.msra.mxu0 0.0
        %7487 = vmatpush.msra.mxu0 0.0
        %7488 = vmatpush.msra.mxu0 0.0
        %7489 = vmatpush.msra.mxu0 %v7363
        %7490 = vmatmul.f32.gmra.mxu0 %v7372
        %v7491 = vpop.f32.mrf.mxu0
        %v7492 = vadd.f32 0.0, %v7491
        %7493 = vdwg.mxu0
        %7494 = vmatpush.msra.mxu0 0.0
        %7495 = vmatpush.msra.mxu0 0.0
        %7496 = vmatpush.msra.mxu0 0.0
        %7497 = vmatpush.msra.mxu0 0.0
        %7498 = vmatpush.msra.mxu0 0.0
        %7499 = vmatpush.msra.mxu0 0.0
        %7500 = vmatpush.msra.mxu0 0.0
        %7501 = vmatpush.msra.mxu0 0.0
        %7502 = vmatpush.msra.mxu0 0.0
        %7503 = vmatpush.msra.mxu0 0.0
        %7504 = vmatpush.msra.mxu0 0.0
        %7505 = vmatpush.msra.mxu0 0.0
        %7506 = vmatpush.msra.mxu0 0.0
        %7507 = vmatpush.msra.mxu0 0.0
        %7508 = vmatpush.msra.mxu0 0.0
        %7509 = vmatpush.msra.mxu0 %v7357
        %7510 = vmatmul.f32.gmra.mxu0 %v7372
        %v7511 = vpop.f32.mrf.mxu0
        %v7512 = vadd.f32 0.0, %v7511
        %7513 = vdwg.mxu0
        %v7514 = vadd.f32 %v7335, %v7392
        %v7515 = vadd.f32 %v7336, %v7412
        %v7516 = vadd.f32 %v7337, %v7432
        %v7517 = vadd.f32 %v7338, %v7452
        %v7518 = vadd.f32 %v7339, %v7472
        %v7519 = vadd.f32 %v7340, %v7492
        %v7520 = vadd.f32 %v7341, %v7512
        %s7521 = scalar_lea.vmem %s3, 104
        %v7522 = vld [vmem:[%s7521] sm:$0xff]
        %7523 = vrot.lane.b32.xlu0 %v5222, 17
        %v7524 = vpop.permute.xlu0 %7523
        %7525 = vrot.lane.b32.xlu0 %v5223, 17
        %v7526 = vpop.permute.xlu0 %7525
        %7527 = vrot.lane.b32.xlu0 %v5224, 17
        %v7528 = vpop.permute.xlu0 %7527
        %7529 = vrot.lane.b32.xlu0 %v5225, 17
        %v7530 = vpop.permute.xlu0 %7529
        %7531 = vrot.lane.b32.xlu0 %v5226, 17
        %v7532 = vpop.permute.xlu0 %7531
        %7533 = vrot.lane.b32.xlu0 %v5227, 17
        %v7534 = vpop.permute.xlu0 %7533
        %7535 = vrot.lane.b32.xlu0 %v5228, 17
        %v7536 = vpop.permute.xlu0 %7535
        %v7537 = vsel %vm2579, %v7524, %v7526
        %v7538 = vsel %vm2579, %v7526, %v7528
        %v7539 = vsel %vm2579, %v7528, %v7530
        %v7540 = vsel %vm2579, %v7530, %v7532
        %v7541 = vsel %vm2579, %v7532, %v7534
        %v7542 = vsel %vm2579, %v7534, %v7536
        %v7551 = vsel %vm296, %v7522, 0
        %7553 = vmatpush.msra.mxu0 0.0
        %7554 = vmatpush.msra.mxu0 0.0
        %7555 = vmatpush.msra.mxu0 0.0
        %7556 = vmatpush.msra.mxu0 0.0
        %7557 = vmatpush.msra.mxu0 0.0
        %7558 = vmatpush.msra.mxu0 0.0
        %7559 = vmatpush.msra.mxu0 0.0
        %7560 = vmatpush.msra.mxu0 0.0
        %7561 = vmatpush.msra.mxu0 0.0
        %7562 = vmatpush.msra.mxu0 0.0
        %7563 = vmatpush.msra.mxu0 0.0
        %7564 = vmatpush.msra.mxu0 0.0
        %7565 = vmatpush.msra.mxu0 0.0
        %7566 = vmatpush.msra.mxu0 0.0
        %7567 = vmatpush.msra.mxu0 0.0
        %7568 = vmatpush.msra.mxu0 %v7537
        %7569 = vmatmul.f32.gmra.mxu0 %v7551
        %v7570 = vpop.f32.mrf.mxu0
        %v7571 = vadd.f32 0.0, %v7570
        %7572 = vdwg.mxu0
        %7573 = vmatpush.msra.mxu0 0.0
        %7574 = vmatpush.msra.mxu0 0.0
        %7575 = vmatpush.msra.mxu0 0.0
        %7576 = vmatpush.msra.mxu0 0.0
        %7577 = vmatpush.msra.mxu0 0.0
        %7578 = vmatpush.msra.mxu0 0.0
        %7579 = vmatpush.msra.mxu0 0.0
        %7580 = vmatpush.msra.mxu0 0.0
        %7581 = vmatpush.msra.mxu0 0.0
        %7582 = vmatpush.msra.mxu0 0.0
        %7583 = vmatpush.msra.mxu0 0.0
        %7584 = vmatpush.msra.mxu0 0.0
        %7585 = vmatpush.msra.mxu0 0.0
        %7586 = vmatpush.msra.mxu0 0.0
        %7587 = vmatpush.msra.mxu0 0.0
        %7588 = vmatpush.msra.mxu0 %v7538
        %7589 = vmatmul.f32.gmra.mxu0 %v7551
        %v7590 = vpop.f32.mrf.mxu0
        %v7591 = vadd.f32 0.0, %v7590
        %7592 = vdwg.mxu0
        %7593 = vmatpush.msra.mxu0 0.0
        %7594 = vmatpush.msra.mxu0 0.0
        %7595 = vmatpush.msra.mxu0 0.0
        %7596 = vmatpush.msra.mxu0 0.0
        %7597 = vmatpush.msra.mxu0 0.0
        %7598 = vmatpush.msra.mxu0 0.0
        %7599 = vmatpush.msra.mxu0 0.0
        %7600 = vmatpush.msra.mxu0 0.0
        %7601 = vmatpush.msra.mxu0 0.0
        %7602 = vmatpush.msra.mxu0 0.0
        %7603 = vmatpush.msra.mxu0 0.0
        %7604 = vmatpush.msra.mxu0 0.0
        %7605 = vmatpush.msra.mxu0 0.0
        %7606 = vmatpush.msra.mxu0 0.0
        %7607 = vmatpush.msra.mxu0 0.0
        %7608 = vmatpush.msra.mxu0 %v7539
        %7609 = vmatmul.f32.gmra.mxu0 %v7551
        %v7610 = vpop.f32.mrf.mxu0
        %v7611 = vadd.f32 0.0, %v7610
        %7612 = vdwg.mxu0
        %7613 = vmatpush.msra.mxu0 0.0
        %7614 = vmatpush.msra.mxu0 0.0
        %7615 = vmatpush.msra.mxu0 0.0
        %7616 = vmatpush.msra.mxu0 0.0
        %7617 = vmatpush.msra.mxu0 0.0
        %7618 = vmatpush.msra.mxu0 0.0
        %7619 = vmatpush.msra.mxu0 0.0
        %7620 = vmatpush.msra.mxu0 0.0
        %7621 = vmatpush.msra.mxu0 0.0
        %7622 = vmatpush.msra.mxu0 0.0
        %7623 = vmatpush.msra.mxu0 0.0
        %7624 = vmatpush.msra.mxu0 0.0
        %7625 = vmatpush.msra.mxu0 0.0
        %7626 = vmatpush.msra.mxu0 0.0
        %7627 = vmatpush.msra.mxu0 0.0
        %7628 = vmatpush.msra.mxu0 %v7540
        %7629 = vmatmul.f32.gmra.mxu0 %v7551
        %v7630 = vpop.f32.mrf.mxu0
        %v7631 = vadd.f32 0.0, %v7630
        %7632 = vdwg.mxu0
        %7633 = vmatpush.msra.mxu0 0.0
        %7634 = vmatpush.msra.mxu0 0.0
        %7635 = vmatpush.msra.mxu0 0.0
        %7636 = vmatpush.msra.mxu0 0.0
        %7637 = vmatpush.msra.mxu0 0.0
        %7638 = vmatpush.msra.mxu0 0.0
        %7639 = vmatpush.msra.mxu0 0.0
        %7640 = vmatpush.msra.mxu0 0.0
        %7641 = vmatpush.msra.mxu0 0.0
        %7642 = vmatpush.msra.mxu0 0.0
        %7643 = vmatpush.msra.mxu0 0.0
        %7644 = vmatpush.msra.mxu0 0.0
        %7645 = vmatpush.msra.mxu0 0.0
        %7646 = vmatpush.msra.mxu0 0.0
        %7647 = vmatpush.msra.mxu0 0.0
        %7648 = vmatpush.msra.mxu0 %v7541
        %7649 = vmatmul.f32.gmra.mxu0 %v7551
        %v7650 = vpop.f32.mrf.mxu0
        %v7651 = vadd.f32 0.0, %v7650
        %7652 = vdwg.mxu0
        %7653 = vmatpush.msra.mxu0 0.0
        %7654 = vmatpush.msra.mxu0 0.0
        %7655 = vmatpush.msra.mxu0 0.0
        %7656 = vmatpush.msra.mxu0 0.0
        %7657 = vmatpush.msra.mxu0 0.0
        %7658 = vmatpush.msra.mxu0 0.0
        %7659 = vmatpush.msra.mxu0 0.0
        %7660 = vmatpush.msra.mxu0 0.0
        %7661 = vmatpush.msra.mxu0 0.0
        %7662 = vmatpush.msra.mxu0 0.0
        %7663 = vmatpush.msra.mxu0 0.0
        %7664 = vmatpush.msra.mxu0 0.0
        %7665 = vmatpush.msra.mxu0 0.0
        %7666 = vmatpush.msra.mxu0 0.0
        %7667 = vmatpush.msra.mxu0 0.0
        %7668 = vmatpush.msra.mxu0 %v7542
        %7669 = vmatmul.f32.gmra.mxu0 %v7551
        %v7670 = vpop.f32.mrf.mxu0
        %v7671 = vadd.f32 0.0, %v7670
        %7672 = vdwg.mxu0
        %7673 = vmatpush.msra.mxu0 0.0
        %7674 = vmatpush.msra.mxu0 0.0
        %7675 = vmatpush.msra.mxu0 0.0
        %7676 = vmatpush.msra.mxu0 0.0
        %7677 = vmatpush.msra.mxu0 0.0
        %7678 = vmatpush.msra.mxu0 0.0
        %7679 = vmatpush.msra.mxu0 0.0
        %7680 = vmatpush.msra.mxu0 0.0
        %7681 = vmatpush.msra.mxu0 0.0
        %7682 = vmatpush.msra.mxu0 0.0
        %7683 = vmatpush.msra.mxu0 0.0
        %7684 = vmatpush.msra.mxu0 0.0
        %7685 = vmatpush.msra.mxu0 0.0
        %7686 = vmatpush.msra.mxu0 0.0
        %7687 = vmatpush.msra.mxu0 0.0
        %7688 = vmatpush.msra.mxu0 %v7536
        %7689 = vmatmul.f32.gmra.mxu0 %v7551
        %v7690 = vpop.f32.mrf.mxu0
        %v7691 = vadd.f32 0.0, %v7690
        %7692 = vdwg.mxu0
        %v7693 = vadd.f32 %v7514, %v7571
        %v7694 = vadd.f32 %v7515, %v7591
        %v7695 = vadd.f32 %v7516, %v7611
        %v7696 = vadd.f32 %v7517, %v7631
        %v7697 = vadd.f32 %v7518, %v7651
        %v7698 = vadd.f32 %v7519, %v7671
        %v7699 = vadd.f32 %v7520, %v7691
        %s7700 = scalar_lea.vmem %s3, 112
        %v7701 = vld [vmem:[%s7700] sm:$0xff]
        %7702 = vrot.lane.b32.xlu0 %v5222, 16
        %v7703 = vpop.permute.xlu0 %7702
        %7704 = vrot.lane.b32.xlu0 %v5223, 16
        %v7705 = vpop.permute.xlu0 %7704
        %7706 = vrot.lane.b32.xlu0 %v5224, 16
        %v7707 = vpop.permute.xlu0 %7706
        %7708 = vrot.lane.b32.xlu0 %v5225, 16
        %v7709 = vpop.permute.xlu0 %7708
        %7710 = vrot.lane.b32.xlu0 %v5226, 16
        %v7711 = vpop.permute.xlu0 %7710
        %7712 = vrot.lane.b32.xlu0 %v5227, 16
        %v7713 = vpop.permute.xlu0 %7712
        %7714 = vrot.lane.b32.xlu0 %v5228, 16
        %v7715 = vpop.permute.xlu0 %7714
        %v7716 = vsel %vm2759, %v7703, %v7705
        %v7717 = vsel %vm2759, %v7705, %v7707
        %v7718 = vsel %vm2759, %v7707, %v7709
        %v7719 = vsel %vm2759, %v7709, %v7711
        %v7720 = vsel %vm2759, %v7711, %v7713
        %v7721 = vsel %vm2759, %v7713, %v7715
        %v7730 = vsel %vm296, %v7701, 0
        %7732 = vmatpush.msra.mxu0 0.0
        %7733 = vmatpush.msra.mxu0 0.0
        %7734 = vmatpush.msra.mxu0 0.0
        %7735 = vmatpush.msra.mxu0 0.0
        %7736 = vmatpush.msra.mxu0 0.0
        %7737 = vmatpush.msra.mxu0 0.0
        %7738 = vmatpush.msra.mxu0 0.0
        %7739 = vmatpush.msra.mxu0 0.0
        %7740 = vmatpush.msra.mxu0 0.0
        %7741 = vmatpush.msra.mxu0 0.0
        %7742 = vmatpush.msra.mxu0 0.0
        %7743 = vmatpush.msra.mxu0 0.0
        %7744 = vmatpush.msra.mxu0 0.0
        %7745 = vmatpush.msra.mxu0 0.0
        %7746 = vmatpush.msra.mxu0 0.0
        %7747 = vmatpush.msra.mxu0 %v7716
        %7748 = vmatmul.f32.gmra.mxu0 %v7730
        %v7749 = vpop.f32.mrf.mxu0
        %v7750 = vadd.f32 0.0, %v7749
        %7751 = vdwg.mxu0
        %7752 = vmatpush.msra.mxu0 0.0
        %7753 = vmatpush.msra.mxu0 0.0
        %7754 = vmatpush.msra.mxu0 0.0
        %7755 = vmatpush.msra.mxu0 0.0
        %7756 = vmatpush.msra.mxu0 0.0
        %7757 = vmatpush.msra.mxu0 0.0
        %7758 = vmatpush.msra.mxu0 0.0
        %7759 = vmatpush.msra.mxu0 0.0
        %7760 = vmatpush.msra.mxu0 0.0
        %7761 = vmatpush.msra.mxu0 0.0
        %7762 = vmatpush.msra.mxu0 0.0
        %7763 = vmatpush.msra.mxu0 0.0
        %7764 = vmatpush.msra.mxu0 0.0
        %7765 = vmatpush.msra.mxu0 0.0
        %7766 = vmatpush.msra.mxu0 0.0
        %7767 = vmatpush.msra.mxu0 %v7717
        %7768 = vmatmul.f32.gmra.mxu0 %v7730
        %v7769 = vpop.f32.mrf.mxu0
        %v7770 = vadd.f32 0.0, %v7769
        %7771 = vdwg.mxu0
        %7772 = vmatpush.msra.mxu0 0.0
        %7773 = vmatpush.msra.mxu0 0.0
        %7774 = vmatpush.msra.mxu0 0.0
        %7775 = vmatpush.msra.mxu0 0.0
        %7776 = vmatpush.msra.mxu0 0.0
        %7777 = vmatpush.msra.mxu0 0.0
        %7778 = vmatpush.msra.mxu0 0.0
        %7779 = vmatpush.msra.mxu0 0.0
        %7780 = vmatpush.msra.mxu0 0.0
        %7781 = vmatpush.msra.mxu0 0.0
        %7782 = vmatpush.msra.mxu0 0.0
        %7783 = vmatpush.msra.mxu0 0.0
        %7784 = vmatpush.msra.mxu0 0.0
        %7785 = vmatpush.msra.mxu0 0.0
        %7786 = vmatpush.msra.mxu0 0.0
        %7787 = vmatpush.msra.mxu0 %v7718
        %7788 = vmatmul.f32.gmra.mxu0 %v7730
        %v7789 = vpop.f32.mrf.mxu0
        %v7790 = vadd.f32 0.0, %v7789
        %7791 = vdwg.mxu0
        %7792 = vmatpush.msra.mxu0 0.0
        %7793 = vmatpush.msra.mxu0 0.0
        %7794 = vmatpush.msra.mxu0 0.0
        %7795 = vmatpush.msra.mxu0 0.0
        %7796 = vmatpush.msra.mxu0 0.0
        %7797 = vmatpush.msra.mxu0 0.0
        %7798 = vmatpush.msra.mxu0 0.0
        %7799 = vmatpush.msra.mxu0 0.0
        %7800 = vmatpush.msra.mxu0 0.0
        %7801 = vmatpush.msra.mxu0 0.0
        %7802 = vmatpush.msra.mxu0 0.0
        %7803 = vmatpush.msra.mxu0 0.0
        %7804 = vmatpush.msra.mxu0 0.0
        %7805 = vmatpush.msra.mxu0 0.0
        %7806 = vmatpush.msra.mxu0 0.0
        %7807 = vmatpush.msra.mxu0 %v7719
        %7808 = vmatmul.f32.gmra.mxu0 %v7730
        %v7809 = vpop.f32.mrf.mxu0
        %v7810 = vadd.f32 0.0, %v7809
        %7811 = vdwg.mxu0
        %7812 = vmatpush.msra.mxu0 0.0
        %7813 = vmatpush.msra.mxu0 0.0
        %7814 = vmatpush.msra.mxu0 0.0
        %7815 = vmatpush.msra.mxu0 0.0
        %7816 = vmatpush.msra.mxu0 0.0
        %7817 = vmatpush.msra.mxu0 0.0
        %7818 = vmatpush.msra.mxu0 0.0
        %7819 = vmatpush.msra.mxu0 0.0
        %7820 = vmatpush.msra.mxu0 0.0
        %7821 = vmatpush.msra.mxu0 0.0
        %7822 = vmatpush.msra.mxu0 0.0
        %7823 = vmatpush.msra.mxu0 0.0
        %7824 = vmatpush.msra.mxu0 0.0
        %7825 = vmatpush.msra.mxu0 0.0
        %7826 = vmatpush.msra.mxu0 0.0
        %7827 = vmatpush.msra.mxu0 %v7720
        %7828 = vmatmul.f32.gmra.mxu0 %v7730
        %v7829 = vpop.f32.mrf.mxu0
        %v7830 = vadd.f32 0.0, %v7829
        %7831 = vdwg.mxu0
        %7832 = vmatpush.msra.mxu0 0.0
        %7833 = vmatpush.msra.mxu0 0.0
        %7834 = vmatpush.msra.mxu0 0.0
        %7835 = vmatpush.msra.mxu0 0.0
        %7836 = vmatpush.msra.mxu0 0.0
        %7837 = vmatpush.msra.mxu0 0.0
        %7838 = vmatpush.msra.mxu0 0.0
        %7839 = vmatpush.msra.mxu0 0.0
        %7840 = vmatpush.msra.mxu0 0.0
        %7841 = vmatpush.msra.mxu0 0.0
        %7842 = vmatpush.msra.mxu0 0.0
        %7843 = vmatpush.msra.mxu0 0.0
        %7844 = vmatpush.msra.mxu0 0.0
        %7845 = vmatpush.msra.mxu0 0.0
        %7846 = vmatpush.msra.mxu0 0.0
        %7847 = vmatpush.msra.mxu0 %v7721
        %7848 = vmatmul.f32.gmra.mxu0 %v7730
        %v7849 = vpop.f32.mrf.mxu0
        %v7850 = vadd.f32 0.0, %v7849
        %7851 = vdwg.mxu0
        %7852 = vmatpush.msra.mxu0 0.0
        %7853 = vmatpush.msra.mxu0 0.0
        %7854 = vmatpush.msra.mxu0 0.0
        %7855 = vmatpush.msra.mxu0 0.0
        %7856 = vmatpush.msra.mxu0 0.0
        %7857 = vmatpush.msra.mxu0 0.0
        %7858 = vmatpush.msra.mxu0 0.0
        %7859 = vmatpush.msra.mxu0 0.0
        %7860 = vmatpush.msra.mxu0 0.0
        %7861 = vmatpush.msra.mxu0 0.0
        %7862 = vmatpush.msra.mxu0 0.0
        %7863 = vmatpush.msra.mxu0 0.0
        %7864 = vmatpush.msra.mxu0 0.0
        %7865 = vmatpush.msra.mxu0 0.0
        %7866 = vmatpush.msra.mxu0 0.0
        %7867 = vmatpush.msra.mxu0 %v7715
        %7868 = vmatmul.f32.gmra.mxu0 %v7730
        %v7869 = vpop.f32.mrf.mxu0
        %v7870 = vadd.f32 0.0, %v7869
        %7871 = vdwg.mxu0
        %v7872 = vadd.f32 %v7693, %v7750
        %v7873 = vadd.f32 %v7694, %v7770
        %v7874 = vadd.f32 %v7695, %v7790
        %v7875 = vadd.f32 %v7696, %v7810
        %v7876 = vadd.f32 %v7697, %v7830
        %v7877 = vadd.f32 %v7698, %v7850
        %v7878 = vadd.f32 %v7699, %v7870
        %v7879 = vld [vmem:[#allocation2] sm:$0xff]
        %v7880 = vld [vmem:[#allocation2 + $0x8] sm:$0xff]
        %v7881 = vld [vmem:[#allocation2 + $0x10] sm:$0xff]
        %v7882 = vld [vmem:[#allocation2 + $0x18] sm:$0xff]
        %v7883 = vld [vmem:[#allocation2 + $0x20] sm:$0xff]
        %v7884 = vld [vmem:[#allocation2 + $0x28] sm:$0xff]
        %v7885 = vld [vmem:[#allocation2 + $0x30] sm:$0xff]
        %v7886 = vld [vmem:[#allocation2 + $0x38] sm:$0xff]
        %s7887 = scalar_lea.vmem %s3, 120
        %v7888 = vld [vmem:[%s7887] sm:$0xff]
        %7897 = vrot.lane.b32.xlu0 %v7879, 8
        %v7898 = vpop.permute.xlu0 %7897
        %7899 = vrot.lane.b32.xlu0 %v7880, 8
        %v7900 = vpop.permute.xlu0 %7899
        %7901 = vrot.lane.b32.xlu0 %v7881, 8
        %v7902 = vpop.permute.xlu0 %7901
        %7903 = vrot.lane.b32.xlu0 %v7882, 8
        %v7904 = vpop.permute.xlu0 %7903
        %7905 = vrot.lane.b32.xlu0 %v7883, 8
        %v7906 = vpop.permute.xlu0 %7905
        %7907 = vrot.lane.b32.xlu0 %v7884, 8
        %v7908 = vpop.permute.xlu0 %7907
        %7909 = vrot.lane.b32.xlu0 %v7885, 8
        %v7910 = vpop.permute.xlu0 %7909
        %7911 = vrot.lane.b32.xlu0 %v7886, 8
        %v7912 = vpop.permute.xlu0 %7911
        %v7913 = vsel %vm296, %v7898, %v7900
        %v7914 = vsel %vm296, %v7900, %v7902
        %v7915 = vsel %vm296, %v7902, %v7904
        %v7916 = vsel %vm296, %v7904, %v7906
        %v7917 = vsel %vm296, %v7906, %v7908
        %v7918 = vsel %vm296, %v7908, %v7910
        %v7919 = vsel %vm296, %v7910, %v7912
        %v7928 = vsel %vm296, %v7888, 0
        %7930 = vmatpush.msra.mxu0 0.0
        %7931 = vmatpush.msra.mxu0 0.0
        %7932 = vmatpush.msra.mxu0 0.0
        %7933 = vmatpush.msra.mxu0 0.0
        %7934 = vmatpush.msra.mxu0 0.0
        %7935 = vmatpush.msra.mxu0 0.0
        %7936 = vmatpush.msra.mxu0 0.0
        %7937 = vmatpush.msra.mxu0 0.0
        %7938 = vmatpush.msra.mxu0 0.0
        %7939 = vmatpush.msra.mxu0 0.0
        %7940 = vmatpush.msra.mxu0 0.0
        %7941 = vmatpush.msra.mxu0 0.0
        %7942 = vmatpush.msra.mxu0 0.0
        %7943 = vmatpush.msra.mxu0 0.0
        %7944 = vmatpush.msra.mxu0 0.0
        %7945 = vmatpush.msra.mxu0 %v7913
        %7946 = vmatmul.f32.gmra.mxu0 %v7928
        %v7947 = vpop.f32.mrf.mxu0
        %v7948 = vadd.f32 0.0, %v7947
        %7949 = vdwg.mxu0
        %7950 = vmatpush.msra.mxu0 0.0
        %7951 = vmatpush.msra.mxu0 0.0
        %7952 = vmatpush.msra.mxu0 0.0
        %7953 = vmatpush.msra.mxu0 0.0
        %7954 = vmatpush.msra.mxu0 0.0
        %7955 = vmatpush.msra.mxu0 0.0
        %7956 = vmatpush.msra.mxu0 0.0
        %7957 = vmatpush.msra.mxu0 0.0
        %7958 = vmatpush.msra.mxu0 0.0
        %7959 = vmatpush.msra.mxu0 0.0
        %7960 = vmatpush.msra.mxu0 0.0
        %7961 = vmatpush.msra.mxu0 0.0
        %7962 = vmatpush.msra.mxu0 0.0
        %7963 = vmatpush.msra.mxu0 0.0
        %7964 = vmatpush.msra.mxu0 0.0
        %7965 = vmatpush.msra.mxu0 %v7914
        %7966 = vmatmul.f32.gmra.mxu0 %v7928
        %v7967 = vpop.f32.mrf.mxu0
        %v7968 = vadd.f32 0.0, %v7967
        %7969 = vdwg.mxu0
        %7970 = vmatpush.msra.mxu0 0.0
        %7971 = vmatpush.msra.mxu0 0.0
        %7972 = vmatpush.msra.mxu0 0.0
        %7973 = vmatpush.msra.mxu0 0.0
        %7974 = vmatpush.msra.mxu0 0.0
        %7975 = vmatpush.msra.mxu0 0.0
        %7976 = vmatpush.msra.mxu0 0.0
        %7977 = vmatpush.msra.mxu0 0.0
        %7978 = vmatpush.msra.mxu0 0.0
        %7979 = vmatpush.msra.mxu0 0.0
        %7980 = vmatpush.msra.mxu0 0.0
        %7981 = vmatpush.msra.mxu0 0.0
        %7982 = vmatpush.msra.mxu0 0.0
        %7983 = vmatpush.msra.mxu0 0.0
        %7984 = vmatpush.msra.mxu0 0.0
        %7985 = vmatpush.msra.mxu0 %v7915
        %7986 = vmatmul.f32.gmra.mxu0 %v7928
        %v7987 = vpop.f32.mrf.mxu0
        %v7988 = vadd.f32 0.0, %v7987
        %7989 = vdwg.mxu0
        %7990 = vmatpush.msra.mxu0 0.0
        %7991 = vmatpush.msra.mxu0 0.0
        %7992 = vmatpush.msra.mxu0 0.0
        %7993 = vmatpush.msra.mxu0 0.0
        %7994 = vmatpush.msra.mxu0 0.0
        %7995 = vmatpush.msra.mxu0 0.0
        %7996 = vmatpush.msra.mxu0 0.0
        %7997 = vmatpush.msra.mxu0 0.0
        %7998 = vmatpush.msra.mxu0 0.0
        %7999 = vmatpush.msra.mxu0 0.0
        %8000 = vmatpush.msra.mxu0 0.0
        %8001 = vmatpush.msra.mxu0 0.0
        %8002 = vmatpush.msra.mxu0 0.0
        %8003 = vmatpush.msra.mxu0 0.0
        %8004 = vmatpush.msra.mxu0 0.0
        %8005 = vmatpush.msra.mxu0 %v7916
        %8006 = vmatmul.f32.gmra.mxu0 %v7928
        %v8007 = vpop.f32.mrf.mxu0
        %v8008 = vadd.f32 0.0, %v8007
        %8009 = vdwg.mxu0
        %8010 = vmatpush.msra.mxu0 0.0
        %8011 = vmatpush.msra.mxu0 0.0
        %8012 = vmatpush.msra.mxu0 0.0
        %8013 = vmatpush.msra.mxu0 0.0
        %8014 = vmatpush.msra.mxu0 0.0
        %8015 = vmatpush.msra.mxu0 0.0
        %8016 = vmatpush.msra.mxu0 0.0
        %8017 = vmatpush.msra.mxu0 0.0
        %8018 = vmatpush.msra.mxu0 0.0
        %8019 = vmatpush.msra.mxu0 0.0
        %8020 = vmatpush.msra.mxu0 0.0
        %8021 = vmatpush.msra.mxu0 0.0
        %8022 = vmatpush.msra.mxu0 0.0
        %8023 = vmatpush.msra.mxu0 0.0
        %8024 = vmatpush.msra.mxu0 0.0
        %8025 = vmatpush.msra.mxu0 %v7917
        %8026 = vmatmul.f32.gmra.mxu0 %v7928
        %v8027 = vpop.f32.mrf.mxu0
        %v8028 = vadd.f32 0.0, %v8027
        %8029 = vdwg.mxu0
        %8030 = vmatpush.msra.mxu0 0.0
        %8031 = vmatpush.msra.mxu0 0.0
        %8032 = vmatpush.msra.mxu0 0.0
        %8033 = vmatpush.msra.mxu0 0.0
        %8034 = vmatpush.msra.mxu0 0.0
        %8035 = vmatpush.msra.mxu0 0.0
        %8036 = vmatpush.msra.mxu0 0.0
        %8037 = vmatpush.msra.mxu0 0.0
        %8038 = vmatpush.msra.mxu0 0.0
        %8039 = vmatpush.msra.mxu0 0.0
        %8040 = vmatpush.msra.mxu0 0.0
        %8041 = vmatpush.msra.mxu0 0.0
        %8042 = vmatpush.msra.mxu0 0.0
        %8043 = vmatpush.msra.mxu0 0.0
        %8044 = vmatpush.msra.mxu0 0.0
        %8045 = vmatpush.msra.mxu0 %v7918
        %8046 = vmatmul.f32.gmra.mxu0 %v7928
        %v8047 = vpop.f32.mrf.mxu0
        %v8048 = vadd.f32 0.0, %v8047
        %8049 = vdwg.mxu0
        %8050 = vmatpush.msra.mxu0 0.0
        %8051 = vmatpush.msra.mxu0 0.0
        %8052 = vmatpush.msra.mxu0 0.0
        %8053 = vmatpush.msra.mxu0 0.0
        %8054 = vmatpush.msra.mxu0 0.0
        %8055 = vmatpush.msra.mxu0 0.0
        %8056 = vmatpush.msra.mxu0 0.0
        %8057 = vmatpush.msra.mxu0 0.0
        %8058 = vmatpush.msra.mxu0 0.0
        %8059 = vmatpush.msra.mxu0 0.0
        %8060 = vmatpush.msra.mxu0 0.0
        %8061 = vmatpush.msra.mxu0 0.0
        %8062 = vmatpush.msra.mxu0 0.0
        %8063 = vmatpush.msra.mxu0 0.0
        %8064 = vmatpush.msra.mxu0 0.0
        %8065 = vmatpush.msra.mxu0 %v7919
        %8066 = vmatmul.f32.gmra.mxu0 %v7928
        %v8067 = vpop.f32.mrf.mxu0
        %v8068 = vadd.f32 0.0, %v8067
        %8069 = vdwg.mxu0
        %v8070 = vadd.f32 %v7872, %v7948
        %v8071 = vadd.f32 %v7873, %v7968
        %v8072 = vadd.f32 %v7874, %v7988
        %v8073 = vadd.f32 %v7875, %v8008
        %v8074 = vadd.f32 %v7876, %v8028
        %v8075 = vadd.f32 %v7877, %v8048
        %v8076 = vadd.f32 %v7878, %v8068
        %s8077 = scalar_lea.vmem %s3, 128
        %v8078 = vld [vmem:[%s8077] sm:$0xff]
        %8079 = vrot.lane.b32.xlu0 %v7879, 7
        %v8080 = vpop.permute.xlu0 %8079
        %8081 = vrot.lane.b32.xlu0 %v7880, 7
        %v8082 = vpop.permute.xlu0 %8081
        %8083 = vrot.lane.b32.xlu0 %v7881, 7
        %v8084 = vpop.permute.xlu0 %8083
        %8085 = vrot.lane.b32.xlu0 %v7882, 7
        %v8086 = vpop.permute.xlu0 %8085
        %8087 = vrot.lane.b32.xlu0 %v7883, 7
        %v8088 = vpop.permute.xlu0 %8087
        %8089 = vrot.lane.b32.xlu0 %v7884, 7
        %v8090 = vpop.permute.xlu0 %8089
        %8091 = vrot.lane.b32.xlu0 %v7885, 7
        %v8092 = vpop.permute.xlu0 %8091
        %8093 = vrot.lane.b32.xlu0 %v7886, 7
        %v8094 = vpop.permute.xlu0 %8093
        %v8095 = vsel %vm3139, %v8080, %v8082
        %v8096 = vsel %vm3139, %v8082, %v8084
        %v8097 = vsel %vm3139, %v8084, %v8086
        %v8098 = vsel %vm3139, %v8086, %v8088
        %v8099 = vsel %vm3139, %v8088, %v8090
        %v8100 = vsel %vm3139, %v8090, %v8092
        %v8101 = vsel %vm3139, %v8092, %v8094
        %v8110 = vsel %vm296, %v8078, 0
        %8112 = vmatpush.msra.mxu0 0.0
        %8113 = vmatpush.msra.mxu0 0.0
        %8114 = vmatpush.msra.mxu0 0.0
        %8115 = vmatpush.msra.mxu0 0.0
        %8116 = vmatpush.msra.mxu0 0.0
        %8117 = vmatpush.msra.mxu0 0.0
        %8118 = vmatpush.msra.mxu0 0.0
        %8119 = vmatpush.msra.mxu0 0.0
        %8120 = vmatpush.msra.mxu0 0.0
        %8121 = vmatpush.msra.mxu0 0.0
        %8122 = vmatpush.msra.mxu0 0.0
        %8123 = vmatpush.msra.mxu0 0.0
        %8124 = vmatpush.msra.mxu0 0.0
        %8125 = vmatpush.msra.mxu0 0.0
        %8126 = vmatpush.msra.mxu0 0.0
        %8127 = vmatpush.msra.mxu0 %v8095
        %8128 = vmatmul.f32.gmra.mxu0 %v8110
        %v8129 = vpop.f32.mrf.mxu0
        %v8130 = vadd.f32 0.0, %v8129
        %8131 = vdwg.mxu0
        %8132 = vmatpush.msra.mxu0 0.0
        %8133 = vmatpush.msra.mxu0 0.0
        %8134 = vmatpush.msra.mxu0 0.0
        %8135 = vmatpush.msra.mxu0 0.0
        %8136 = vmatpush.msra.mxu0 0.0
        %8137 = vmatpush.msra.mxu0 0.0
        %8138 = vmatpush.msra.mxu0 0.0
        %8139 = vmatpush.msra.mxu0 0.0
        %8140 = vmatpush.msra.mxu0 0.0
        %8141 = vmatpush.msra.mxu0 0.0
        %8142 = vmatpush.msra.mxu0 0.0
        %8143 = vmatpush.msra.mxu0 0.0
        %8144 = vmatpush.msra.mxu0 0.0
        %8145 = vmatpush.msra.mxu0 0.0
        %8146 = vmatpush.msra.mxu0 0.0
        %8147 = vmatpush.msra.mxu0 %v8096
        %8148 = vmatmul.f32.gmra.mxu0 %v8110
        %v8149 = vpop.f32.mrf.mxu0
        %v8150 = vadd.f32 0.0, %v8149
        %8151 = vdwg.mxu0
        %8152 = vmatpush.msra.mxu0 0.0
        %8153 = vmatpush.msra.mxu0 0.0
        %8154 = vmatpush.msra.mxu0 0.0
        %8155 = vmatpush.msra.mxu0 0.0
        %8156 = vmatpush.msra.mxu0 0.0
        %8157 = vmatpush.msra.mxu0 0.0
        %8158 = vmatpush.msra.mxu0 0.0
        %8159 = vmatpush.msra.mxu0 0.0
        %8160 = vmatpush.msra.mxu0 0.0
        %8161 = vmatpush.msra.mxu0 0.0
        %8162 = vmatpush.msra.mxu0 0.0
        %8163 = vmatpush.msra.mxu0 0.0
        %8164 = vmatpush.msra.mxu0 0.0
        %8165 = vmatpush.msra.mxu0 0.0
        %8166 = vmatpush.msra.mxu0 0.0
        %8167 = vmatpush.msra.mxu0 %v8097
        %8168 = vmatmul.f32.gmra.mxu0 %v8110
        %v8169 = vpop.f32.mrf.mxu0
        %v8170 = vadd.f32 0.0, %v8169
        %8171 = vdwg.mxu0
        %8172 = vmatpush.msra.mxu0 0.0
        %8173 = vmatpush.msra.mxu0 0.0
        %8174 = vmatpush.msra.mxu0 0.0
        %8175 = vmatpush.msra.mxu0 0.0
        %8176 = vmatpush.msra.mxu0 0.0
        %8177 = vmatpush.msra.mxu0 0.0
        %8178 = vmatpush.msra.mxu0 0.0
        %8179 = vmatpush.msra.mxu0 0.0
        %8180 = vmatpush.msra.mxu0 0.0
        %8181 = vmatpush.msra.mxu0 0.0
        %8182 = vmatpush.msra.mxu0 0.0
        %8183 = vmatpush.msra.mxu0 0.0
        %8184 = vmatpush.msra.mxu0 0.0
        %8185 = vmatpush.msra.mxu0 0.0
        %8186 = vmatpush.msra.mxu0 0.0
        %8187 = vmatpush.msra.mxu0 %v8098
        %8188 = vmatmul.f32.gmra.mxu0 %v8110
        %v8189 = vpop.f32.mrf.mxu0
        %v8190 = vadd.f32 0.0, %v8189
        %8191 = vdwg.mxu0
        %8192 = vmatpush.msra.mxu0 0.0
        %8193 = vmatpush.msra.mxu0 0.0
        %8194 = vmatpush.msra.mxu0 0.0
        %8195 = vmatpush.msra.mxu0 0.0
        %8196 = vmatpush.msra.mxu0 0.0
        %8197 = vmatpush.msra.mxu0 0.0
        %8198 = vmatpush.msra.mxu0 0.0
        %8199 = vmatpush.msra.mxu0 0.0
        %8200 = vmatpush.msra.mxu0 0.0
        %8201 = vmatpush.msra.mxu0 0.0
        %8202 = vmatpush.msra.mxu0 0.0
        %8203 = vmatpush.msra.mxu0 0.0
        %8204 = vmatpush.msra.mxu0 0.0
        %8205 = vmatpush.msra.mxu0 0.0
        %8206 = vmatpush.msra.mxu0 0.0
        %8207 = vmatpush.msra.mxu0 %v8099
        %8208 = vmatmul.f32.gmra.mxu0 %v8110
        %v8209 = vpop.f32.mrf.mxu0
        %v8210 = vadd.f32 0.0, %v8209
        %8211 = vdwg.mxu0
        %8212 = vmatpush.msra.mxu0 0.0
        %8213 = vmatpush.msra.mxu0 0.0
        %8214 = vmatpush.msra.mxu0 0.0
        %8215 = vmatpush.msra.mxu0 0.0
        %8216 = vmatpush.msra.mxu0 0.0
        %8217 = vmatpush.msra.mxu0 0.0
        %8218 = vmatpush.msra.mxu0 0.0
        %8219 = vmatpush.msra.mxu0 0.0
        %8220 = vmatpush.msra.mxu0 0.0
        %8221 = vmatpush.msra.mxu0 0.0
        %8222 = vmatpush.msra.mxu0 0.0
        %8223 = vmatpush.msra.mxu0 0.0
        %8224 = vmatpush.msra.mxu0 0.0
        %8225 = vmatpush.msra.mxu0 0.0
        %8226 = vmatpush.msra.mxu0 0.0
        %8227 = vmatpush.msra.mxu0 %v8100
        %8228 = vmatmul.f32.gmra.mxu0 %v8110
        %v8229 = vpop.f32.mrf.mxu0
        %v8230 = vadd.f32 0.0, %v8229
        %8231 = vdwg.mxu0
        %8232 = vmatpush.msra.mxu0 0.0
        %8233 = vmatpush.msra.mxu0 0.0
        %8234 = vmatpush.msra.mxu0 0.0
        %8235 = vmatpush.msra.mxu0 0.0
        %8236 = vmatpush.msra.mxu0 0.0
        %8237 = vmatpush.msra.mxu0 0.0
        %8238 = vmatpush.msra.mxu0 0.0
        %8239 = vmatpush.msra.mxu0 0.0
        %8240 = vmatpush.msra.mxu0 0.0
        %8241 = vmatpush.msra.mxu0 0.0
        %8242 = vmatpush.msra.mxu0 0.0
        %8243 = vmatpush.msra.mxu0 0.0
        %8244 = vmatpush.msra.mxu0 0.0
        %8245 = vmatpush.msra.mxu0 0.0
        %8246 = vmatpush.msra.mxu0 0.0
        %8247 = vmatpush.msra.mxu0 %v8101
        %8248 = vmatmul.f32.gmra.mxu0 %v8110
        %v8249 = vpop.f32.mrf.mxu0
        %v8250 = vadd.f32 0.0, %v8249
        %8251 = vdwg.mxu0
        %v8252 = vadd.f32 %v8070, %v8130
        %v8253 = vadd.f32 %v8071, %v8150
        %v8254 = vadd.f32 %v8072, %v8170
        %v8255 = vadd.f32 %v8073, %v8190
        %v8256 = vadd.f32 %v8074, %v8210
        %v8257 = vadd.f32 %v8075, %v8230
        %v8258 = vadd.f32 %v8076, %v8250
        %s8259 = scalar_lea.vmem %s3, 136
        %v8260 = vld [vmem:[%s8259] sm:$0xff]
        %8261 = vrot.lane.b32.xlu0 %v7879, 6
        %v8262 = vpop.permute.xlu0 %8261
        %8263 = vrot.lane.b32.xlu0 %v7880, 6
        %v8264 = vpop.permute.xlu0 %8263
        %8265 = vrot.lane.b32.xlu0 %v7881, 6
        %v8266 = vpop.permute.xlu0 %8265
        %8267 = vrot.lane.b32.xlu0 %v7882, 6
        %v8268 = vpop.permute.xlu0 %8267
        %8269 = vrot.lane.b32.xlu0 %v7883, 6
        %v8270 = vpop.permute.xlu0 %8269
        %8271 = vrot.lane.b32.xlu0 %v7884, 6
        %v8272 = vpop.permute.xlu0 %8271
        %8273 = vrot.lane.b32.xlu0 %v7885, 6
        %v8274 = vpop.permute.xlu0 %8273
        %8275 = vrot.lane.b32.xlu0 %v7886, 6
        %v8276 = vpop.permute.xlu0 %8275
        %v8277 = vsel %vm3322, %v8262, %v8264
        %v8278 = vsel %vm3322, %v8264, %v8266
        %v8279 = vsel %vm3322, %v8266, %v8268
        %v8280 = vsel %vm3322, %v8268, %v8270
        %v8281 = vsel %vm3322, %v8270, %v8272
        %v8282 = vsel %vm3322, %v8272, %v8274
        %v8283 = vsel %vm3322, %v8274, %v8276
        %v8292 = vsel %vm296, %v8260, 0
        %8294 = vmatpush.msra.mxu0 0.0
        %8295 = vmatpush.msra.mxu0 0.0
        %8296 = vmatpush.msra.mxu0 0.0
        %8297 = vmatpush.msra.mxu0 0.0
        %8298 = vmatpush.msra.mxu0 0.0
        %8299 = vmatpush.msra.mxu0 0.0
        %8300 = vmatpush.msra.mxu0 0.0
        %8301 = vmatpush.msra.mxu0 0.0
        %8302 = vmatpush.msra.mxu0 0.0
        %8303 = vmatpush.msra.mxu0 0.0
        %8304 = vmatpush.msra.mxu0 0.0
        %8305 = vmatpush.msra.mxu0 0.0
        %8306 = vmatpush.msra.mxu0 0.0
        %8307 = vmatpush.msra.mxu0 0.0
        %8308 = vmatpush.msra.mxu0 0.0
        %8309 = vmatpush.msra.mxu0 %v8277
        %8310 = vmatmul.f32.gmra.mxu0 %v8292
        %v8311 = vpop.f32.mrf.mxu0
        %v8312 = vadd.f32 0.0, %v8311
        %8313 = vdwg.mxu0
        %8314 = vmatpush.msra.mxu0 0.0
        %8315 = vmatpush.msra.mxu0 0.0
        %8316 = vmatpush.msra.mxu0 0.0
        %8317 = vmatpush.msra.mxu0 0.0
        %8318 = vmatpush.msra.mxu0 0.0
        %8319 = vmatpush.msra.mxu0 0.0
        %8320 = vmatpush.msra.mxu0 0.0
        %8321 = vmatpush.msra.mxu0 0.0
        %8322 = vmatpush.msra.mxu0 0.0
        %8323 = vmatpush.msra.mxu0 0.0
        %8324 = vmatpush.msra.mxu0 0.0
        %8325 = vmatpush.msra.mxu0 0.0
        %8326 = vmatpush.msra.mxu0 0.0
        %8327 = vmatpush.msra.mxu0 0.0
        %8328 = vmatpush.msra.mxu0 0.0
        %8329 = vmatpush.msra.mxu0 %v8278
        %8330 = vmatmul.f32.gmra.mxu0 %v8292
        %v8331 = vpop.f32.mrf.mxu0
        %v8332 = vadd.f32 0.0, %v8331
        %8333 = vdwg.mxu0
        %8334 = vmatpush.msra.mxu0 0.0
        %8335 = vmatpush.msra.mxu0 0.0
        %8336 = vmatpush.msra.mxu0 0.0
        %8337 = vmatpush.msra.mxu0 0.0
        %8338 = vmatpush.msra.mxu0 0.0
        %8339 = vmatpush.msra.mxu0 0.0
        %8340 = vmatpush.msra.mxu0 0.0
        %8341 = vmatpush.msra.mxu0 0.0
        %8342 = vmatpush.msra.mxu0 0.0
        %8343 = vmatpush.msra.mxu0 0.0
        %8344 = vmatpush.msra.mxu0 0.0
        %8345 = vmatpush.msra.mxu0 0.0
        %8346 = vmatpush.msra.mxu0 0.0
        %8347 = vmatpush.msra.mxu0 0.0
        %8348 = vmatpush.msra.mxu0 0.0
        %8349 = vmatpush.msra.mxu0 %v8279
        %8350 = vmatmul.f32.gmra.mxu0 %v8292
        %v8351 = vpop.f32.mrf.mxu0
        %v8352 = vadd.f32 0.0, %v8351
        %8353 = vdwg.mxu0
        %8354 = vmatpush.msra.mxu0 0.0
        %8355 = vmatpush.msra.mxu0 0.0
        %8356 = vmatpush.msra.mxu0 0.0
        %8357 = vmatpush.msra.mxu0 0.0
        %8358 = vmatpush.msra.mxu0 0.0
        %8359 = vmatpush.msra.mxu0 0.0
        %8360 = vmatpush.msra.mxu0 0.0
        %8361 = vmatpush.msra.mxu0 0.0
        %8362 = vmatpush.msra.mxu0 0.0
        %8363 = vmatpush.msra.mxu0 0.0
        %8364 = vmatpush.msra.mxu0 0.0
        %8365 = vmatpush.msra.mxu0 0.0
        %8366 = vmatpush.msra.mxu0 0.0
        %8367 = vmatpush.msra.mxu0 0.0
        %8368 = vmatpush.msra.mxu0 0.0
        %8369 = vmatpush.msra.mxu0 %v8280
        %8370 = vmatmul.f32.gmra.mxu0 %v8292
        %v8371 = vpop.f32.mrf.mxu0
        %v8372 = vadd.f32 0.0, %v8371
        %8373 = vdwg.mxu0
        %8374 = vmatpush.msra.mxu0 0.0
        %8375 = vmatpush.msra.mxu0 0.0
        %8376 = vmatpush.msra.mxu0 0.0
        %8377 = vmatpush.msra.mxu0 0.0
        %8378 = vmatpush.msra.mxu0 0.0
        %8379 = vmatpush.msra.mxu0 0.0
        %8380 = vmatpush.msra.mxu0 0.0
        %8381 = vmatpush.msra.mxu0 0.0
        %8382 = vmatpush.msra.mxu0 0.0
        %8383 = vmatpush.msra.mxu0 0.0
        %8384 = vmatpush.msra.mxu0 0.0
        %8385 = vmatpush.msra.mxu0 0.0
        %8386 = vmatpush.msra.mxu0 0.0
        %8387 = vmatpush.msra.mxu0 0.0
        %8388 = vmatpush.msra.mxu0 0.0
        %8389 = vmatpush.msra.mxu0 %v8281
        %8390 = vmatmul.f32.gmra.mxu0 %v8292
        %v8391 = vpop.f32.mrf.mxu0
        %v8392 = vadd.f32 0.0, %v8391
        %8393 = vdwg.mxu0
        %8394 = vmatpush.msra.mxu0 0.0
        %8395 = vmatpush.msra.mxu0 0.0
        %8396 = vmatpush.msra.mxu0 0.0
        %8397 = vmatpush.msra.mxu0 0.0
        %8398 = vmatpush.msra.mxu0 0.0
        %8399 = vmatpush.msra.mxu0 0.0
        %8400 = vmatpush.msra.mxu0 0.0
        %8401 = vmatpush.msra.mxu0 0.0
        %8402 = vmatpush.msra.mxu0 0.0
        %8403 = vmatpush.msra.mxu0 0.0
        %8404 = vmatpush.msra.mxu0 0.0
        %8405 = vmatpush.msra.mxu0 0.0
        %8406 = vmatpush.msra.mxu0 0.0
        %8407 = vmatpush.msra.mxu0 0.0
        %8408 = vmatpush.msra.mxu0 0.0
        %8409 = vmatpush.msra.mxu0 %v8282
        %8410 = vmatmul.f32.gmra.mxu0 %v8292
        %v8411 = vpop.f32.mrf.mxu0
        %v8412 = vadd.f32 0.0, %v8411
        %8413 = vdwg.mxu0
        %8414 = vmatpush.msra.mxu0 0.0
        %8415 = vmatpush.msra.mxu0 0.0
        %8416 = vmatpush.msra.mxu0 0.0
        %8417 = vmatpush.msra.mxu0 0.0
        %8418 = vmatpush.msra.mxu0 0.0
        %8419 = vmatpush.msra.mxu0 0.0
        %8420 = vmatpush.msra.mxu0 0.0
        %8421 = vmatpush.msra.mxu0 0.0
        %8422 = vmatpush.msra.mxu0 0.0
        %8423 = vmatpush.msra.mxu0 0.0
        %8424 = vmatpush.msra.mxu0 0.0
        %8425 = vmatpush.msra.mxu0 0.0
        %8426 = vmatpush.msra.mxu0 0.0
        %8427 = vmatpush.msra.mxu0 0.0
        %8428 = vmatpush.msra.mxu0 0.0
        %8429 = vmatpush.msra.mxu0 %v8283
        %8430 = vmatmul.f32.gmra.mxu0 %v8292
        %v8431 = vpop.f32.mrf.mxu0
        %v8432 = vadd.f32 0.0, %v8431
        %8433 = vdwg.mxu0
        %v8434 = vadd.f32 %v8252, %v8312
        %v8435 = vadd.f32 %v8253, %v8332
        %v8436 = vadd.f32 %v8254, %v8352
        %v8437 = vadd.f32 %v8255, %v8372
        %v8438 = vadd.f32 %v8256, %v8392
        %v8439 = vadd.f32 %v8257, %v8412
        %v8440 = vadd.f32 %v8258, %v8432
        %s8441 = scalar_lea.vmem %s3, 144
        %v8442 = vld [vmem:[%s8441] sm:$0xff]
        %8443 = vrot.lane.b32.xlu0 %v7880, 56
        %v8444 = vpop.permute.xlu0 %8443
        %8445 = vrot.lane.b32.xlu0 %v7881, 56
        %v8446 = vpop.permute.xlu0 %8445
        %8447 = vrot.lane.b32.xlu0 %v7882, 56
        %v8448 = vpop.permute.xlu0 %8447
        %8449 = vrot.lane.b32.xlu0 %v7883, 56
        %v8450 = vpop.permute.xlu0 %8449
        %8451 = vrot.lane.b32.xlu0 %v7884, 56
        %v8452 = vpop.permute.xlu0 %8451
        %8453 = vrot.lane.b32.xlu0 %v7885, 56
        %v8454 = vpop.permute.xlu0 %8453
        %8455 = vrot.lane.b32.xlu0 %v7886, 56
        %v8456 = vpop.permute.xlu0 %8455
        %v8457 = vsel %vm3503, %v8444, %v8446
        %v8458 = vsel %vm3503, %v8446, %v8448
        %v8459 = vsel %vm3503, %v8448, %v8450
        %v8460 = vsel %vm3503, %v8450, %v8452
        %v8461 = vsel %vm3503, %v8452, %v8454
        %v8462 = vsel %vm3503, %v8454, %v8456
        %v8471 = vsel %vm296, %v8442, 0
        %8473 = vmatpush.msra.mxu0 0.0
        %8474 = vmatpush.msra.mxu0 0.0
        %8475 = vmatpush.msra.mxu0 0.0
        %8476 = vmatpush.msra.mxu0 0.0
        %8477 = vmatpush.msra.mxu0 0.0
        %8478 = vmatpush.msra.mxu0 0.0
        %8479 = vmatpush.msra.mxu0 0.0
        %8480 = vmatpush.msra.mxu0 0.0
        %8481 = vmatpush.msra.mxu0 0.0
        %8482 = vmatpush.msra.mxu0 0.0
        %8483 = vmatpush.msra.mxu0 0.0
        %8484 = vmatpush.msra.mxu0 0.0
        %8485 = vmatpush.msra.mxu0 0.0
        %8486 = vmatpush.msra.mxu0 0.0
        %8487 = vmatpush.msra.mxu0 0.0
        %8488 = vmatpush.msra.mxu0 %v8457
        %8489 = vmatmul.f32.gmra.mxu0 %v8471
        %v8490 = vpop.f32.mrf.mxu0
        %v8491 = vadd.f32 0.0, %v8490
        %8492 = vdwg.mxu0
        %8493 = vmatpush.msra.mxu0 0.0
        %8494 = vmatpush.msra.mxu0 0.0
        %8495 = vmatpush.msra.mxu0 0.0
        %8496 = vmatpush.msra.mxu0 0.0
        %8497 = vmatpush.msra.mxu0 0.0
        %8498 = vmatpush.msra.mxu0 0.0
        %8499 = vmatpush.msra.mxu0 0.0
        %8500 = vmatpush.msra.mxu0 0.0
        %8501 = vmatpush.msra.mxu0 0.0
        %8502 = vmatpush.msra.mxu0 0.0
        %8503 = vmatpush.msra.mxu0 0.0
        %8504 = vmatpush.msra.mxu0 0.0
        %8505 = vmatpush.msra.mxu0 0.0
        %8506 = vmatpush.msra.mxu0 0.0
        %8507 = vmatpush.msra.mxu0 0.0
        %8508 = vmatpush.msra.mxu0 %v8458
        %8509 = vmatmul.f32.gmra.mxu0 %v8471
        %v8510 = vpop.f32.mrf.mxu0
        %v8511 = vadd.f32 0.0, %v8510
        %8512 = vdwg.mxu0
        %8513 = vmatpush.msra.mxu0 0.0
        %8514 = vmatpush.msra.mxu0 0.0
        %8515 = vmatpush.msra.mxu0 0.0
        %8516 = vmatpush.msra.mxu0 0.0
        %8517 = vmatpush.msra.mxu0 0.0
        %8518 = vmatpush.msra.mxu0 0.0
        %8519 = vmatpush.msra.mxu0 0.0
        %8520 = vmatpush.msra.mxu0 0.0
        %8521 = vmatpush.msra.mxu0 0.0
        %8522 = vmatpush.msra.mxu0 0.0
        %8523 = vmatpush.msra.mxu0 0.0
        %8524 = vmatpush.msra.mxu0 0.0
        %8525 = vmatpush.msra.mxu0 0.0
        %8526 = vmatpush.msra.mxu0 0.0
        %8527 = vmatpush.msra.mxu0 0.0
        %8528 = vmatpush.msra.mxu0 %v8459
        %8529 = vmatmul.f32.gmra.mxu0 %v8471
        %v8530 = vpop.f32.mrf.mxu0
        %v8531 = vadd.f32 0.0, %v8530
        %8532 = vdwg.mxu0
        %8533 = vmatpush.msra.mxu0 0.0
        %8534 = vmatpush.msra.mxu0 0.0
        %8535 = vmatpush.msra.mxu0 0.0
        %8536 = vmatpush.msra.mxu0 0.0
        %8537 = vmatpush.msra.mxu0 0.0
        %8538 = vmatpush.msra.mxu0 0.0
        %8539 = vmatpush.msra.mxu0 0.0
        %8540 = vmatpush.msra.mxu0 0.0
        %8541 = vmatpush.msra.mxu0 0.0
        %8542 = vmatpush.msra.mxu0 0.0
        %8543 = vmatpush.msra.mxu0 0.0
        %8544 = vmatpush.msra.mxu0 0.0
        %8545 = vmatpush.msra.mxu0 0.0
        %8546 = vmatpush.msra.mxu0 0.0
        %8547 = vmatpush.msra.mxu0 0.0
        %8548 = vmatpush.msra.mxu0 %v8460
        %8549 = vmatmul.f32.gmra.mxu0 %v8471
        %v8550 = vpop.f32.mrf.mxu0
        %v8551 = vadd.f32 0.0, %v8550
        %8552 = vdwg.mxu0
        %8553 = vmatpush.msra.mxu0 0.0
        %8554 = vmatpush.msra.mxu0 0.0
        %8555 = vmatpush.msra.mxu0 0.0
        %8556 = vmatpush.msra.mxu0 0.0
        %8557 = vmatpush.msra.mxu0 0.0
        %8558 = vmatpush.msra.mxu0 0.0
        %8559 = vmatpush.msra.mxu0 0.0
        %8560 = vmatpush.msra.mxu0 0.0
        %8561 = vmatpush.msra.mxu0 0.0
        %8562 = vmatpush.msra.mxu0 0.0
        %8563 = vmatpush.msra.mxu0 0.0
        %8564 = vmatpush.msra.mxu0 0.0
        %8565 = vmatpush.msra.mxu0 0.0
        %8566 = vmatpush.msra.mxu0 0.0
        %8567 = vmatpush.msra.mxu0 0.0
        %8568 = vmatpush.msra.mxu0 %v8461
        %8569 = vmatmul.f32.gmra.mxu0 %v8471
        %v8570 = vpop.f32.mrf.mxu0
        %v8571 = vadd.f32 0.0, %v8570
        %8572 = vdwg.mxu0
        %8573 = vmatpush.msra.mxu0 0.0
        %8574 = vmatpush.msra.mxu0 0.0
        %8575 = vmatpush.msra.mxu0 0.0
        %8576 = vmatpush.msra.mxu0 0.0
        %8577 = vmatpush.msra.mxu0 0.0
        %8578 = vmatpush.msra.mxu0 0.0
        %8579 = vmatpush.msra.mxu0 0.0
        %8580 = vmatpush.msra.mxu0 0.0
        %8581 = vmatpush.msra.mxu0 0.0
        %8582 = vmatpush.msra.mxu0 0.0
        %8583 = vmatpush.msra.mxu0 0.0
        %8584 = vmatpush.msra.mxu0 0.0
        %8585 = vmatpush.msra.mxu0 0.0
        %8586 = vmatpush.msra.mxu0 0.0
        %8587 = vmatpush.msra.mxu0 0.0
        %8588 = vmatpush.msra.mxu0 %v8462
        %8589 = vmatmul.f32.gmra.mxu0 %v8471
        %v8590 = vpop.f32.mrf.mxu0
        %v8591 = vadd.f32 0.0, %v8590
        %8592 = vdwg.mxu0
        %8593 = vmatpush.msra.mxu0 0.0
        %8594 = vmatpush.msra.mxu0 0.0
        %8595 = vmatpush.msra.mxu0 0.0
        %8596 = vmatpush.msra.mxu0 0.0
        %8597 = vmatpush.msra.mxu0 0.0
        %8598 = vmatpush.msra.mxu0 0.0
        %8599 = vmatpush.msra.mxu0 0.0
        %8600 = vmatpush.msra.mxu0 0.0
        %8601 = vmatpush.msra.mxu0 0.0
        %8602 = vmatpush.msra.mxu0 0.0
        %8603 = vmatpush.msra.mxu0 0.0
        %8604 = vmatpush.msra.mxu0 0.0
        %8605 = vmatpush.msra.mxu0 0.0
        %8606 = vmatpush.msra.mxu0 0.0
        %8607 = vmatpush.msra.mxu0 0.0
        %8608 = vmatpush.msra.mxu0 %v8456
        %8609 = vmatmul.f32.gmra.mxu0 %v8471
        %v8610 = vpop.f32.mrf.mxu0
        %v8611 = vadd.f32 0.0, %v8610
        %8612 = vdwg.mxu0
        %v8613 = vadd.f32 %v8434, %v8491
        %v8614 = vadd.f32 %v8435, %v8511
        %v8615 = vadd.f32 %v8436, %v8531
        %v8616 = vadd.f32 %v8437, %v8551
        %v8617 = vadd.f32 %v8438, %v8571
        %v8618 = vadd.f32 %v8439, %v8591
        %v8619 = vadd.f32 %v8440, %v8611
        %s8620 = scalar_lea.vmem %s3, 152
        %v8621 = vld [vmem:[%s8620] sm:$0xff]
        %8622 = vrot.lane.b32.xlu0 %v7880, 55
        %v8623 = vpop.permute.xlu0 %8622
        %8624 = vrot.lane.b32.xlu0 %v7881, 55
        %v8625 = vpop.permute.xlu0 %8624
        %8626 = vrot.lane.b32.xlu0 %v7882, 55
        %v8627 = vpop.permute.xlu0 %8626
        %8628 = vrot.lane.b32.xlu0 %v7883, 55
        %v8629 = vpop.permute.xlu0 %8628
        %8630 = vrot.lane.b32.xlu0 %v7884, 55
        %v8631 = vpop.permute.xlu0 %8630
        %8632 = vrot.lane.b32.xlu0 %v7885, 55
        %v8633 = vpop.permute.xlu0 %8632
        %8634 = vrot.lane.b32.xlu0 %v7886, 55
        %v8635 = vpop.permute.xlu0 %8634
        %v8636 = vsel %vm3683, %v8623, %v8625
        %v8637 = vsel %vm3683, %v8625, %v8627
        %v8638 = vsel %vm3683, %v8627, %v8629
        %v8639 = vsel %vm3683, %v8629, %v8631
        %v8640 = vsel %vm3683, %v8631, %v8633
        %v8641 = vsel %vm3683, %v8633, %v8635
        %v8650 = vsel %vm296, %v8621, 0
        %8652 = vmatpush.msra.mxu0 0.0
        %8653 = vmatpush.msra.mxu0 0.0
        %8654 = vmatpush.msra.mxu0 0.0
        %8655 = vmatpush.msra.mxu0 0.0
        %8656 = vmatpush.msra.mxu0 0.0
        %8657 = vmatpush.msra.mxu0 0.0
        %8658 = vmatpush.msra.mxu0 0.0
        %8659 = vmatpush.msra.mxu0 0.0
        %8660 = vmatpush.msra.mxu0 0.0
        %8661 = vmatpush.msra.mxu0 0.0
        %8662 = vmatpush.msra.mxu0 0.0
        %8663 = vmatpush.msra.mxu0 0.0
        %8664 = vmatpush.msra.mxu0 0.0
        %8665 = vmatpush.msra.mxu0 0.0
        %8666 = vmatpush.msra.mxu0 0.0
        %8667 = vmatpush.msra.mxu0 %v8636
        %8668 = vmatmul.f32.gmra.mxu0 %v8650
        %v8669 = vpop.f32.mrf.mxu0
        %v8670 = vadd.f32 0.0, %v8669
        %8671 = vdwg.mxu0
        %8672 = vmatpush.msra.mxu0 0.0
        %8673 = vmatpush.msra.mxu0 0.0
        %8674 = vmatpush.msra.mxu0 0.0
        %8675 = vmatpush.msra.mxu0 0.0
        %8676 = vmatpush.msra.mxu0 0.0
        %8677 = vmatpush.msra.mxu0 0.0
        %8678 = vmatpush.msra.mxu0 0.0
        %8679 = vmatpush.msra.mxu0 0.0
        %8680 = vmatpush.msra.mxu0 0.0
        %8681 = vmatpush.msra.mxu0 0.0
        %8682 = vmatpush.msra.mxu0 0.0
        %8683 = vmatpush.msra.mxu0 0.0
        %8684 = vmatpush.msra.mxu0 0.0
        %8685 = vmatpush.msra.mxu0 0.0
        %8686 = vmatpush.msra.mxu0 0.0
        %8687 = vmatpush.msra.mxu0 %v8637
        %8688 = vmatmul.f32.gmra.mxu0 %v8650
        %v8689 = vpop.f32.mrf.mxu0
        %v8690 = vadd.f32 0.0, %v8689
        %8691 = vdwg.mxu0
        %8692 = vmatpush.msra.mxu0 0.0
        %8693 = vmatpush.msra.mxu0 0.0
        %8694 = vmatpush.msra.mxu0 0.0
        %8695 = vmatpush.msra.mxu0 0.0
        %8696 = vmatpush.msra.mxu0 0.0
        %8697 = vmatpush.msra.mxu0 0.0
        %8698 = vmatpush.msra.mxu0 0.0
        %8699 = vmatpush.msra.mxu0 0.0
        %8700 = vmatpush.msra.mxu0 0.0
        %8701 = vmatpush.msra.mxu0 0.0
        %8702 = vmatpush.msra.mxu0 0.0
        %8703 = vmatpush.msra.mxu0 0.0
        %8704 = vmatpush.msra.mxu0 0.0
        %8705 = vmatpush.msra.mxu0 0.0
        %8706 = vmatpush.msra.mxu0 0.0
        %8707 = vmatpush.msra.mxu0 %v8638
        %8708 = vmatmul.f32.gmra.mxu0 %v8650
        %v8709 = vpop.f32.mrf.mxu0
        %v8710 = vadd.f32 0.0, %v8709
        %8711 = vdwg.mxu0
        %8712 = vmatpush.msra.mxu0 0.0
        %8713 = vmatpush.msra.mxu0 0.0
        %8714 = vmatpush.msra.mxu0 0.0
        %8715 = vmatpush.msra.mxu0 0.0
        %8716 = vmatpush.msra.mxu0 0.0
        %8717 = vmatpush.msra.mxu0 0.0
        %8718 = vmatpush.msra.mxu0 0.0
        %8719 = vmatpush.msra.mxu0 0.0
        %8720 = vmatpush.msra.mxu0 0.0
        %8721 = vmatpush.msra.mxu0 0.0
        %8722 = vmatpush.msra.mxu0 0.0
        %8723 = vmatpush.msra.mxu0 0.0
        %8724 = vmatpush.msra.mxu0 0.0
        %8725 = vmatpush.msra.mxu0 0.0
        %8726 = vmatpush.msra.mxu0 0.0
        %8727 = vmatpush.msra.mxu0 %v8639
        %8728 = vmatmul.f32.gmra.mxu0 %v8650
        %v8729 = vpop.f32.mrf.mxu0
        %v8730 = vadd.f32 0.0, %v8729
        %8731 = vdwg.mxu0
        %8732 = vmatpush.msra.mxu0 0.0
        %8733 = vmatpush.msra.mxu0 0.0
        %8734 = vmatpush.msra.mxu0 0.0
        %8735 = vmatpush.msra.mxu0 0.0
        %8736 = vmatpush.msra.mxu0 0.0
        %8737 = vmatpush.msra.mxu0 0.0
        %8738 = vmatpush.msra.mxu0 0.0
        %8739 = vmatpush.msra.mxu0 0.0
        %8740 = vmatpush.msra.mxu0 0.0
        %8741 = vmatpush.msra.mxu0 0.0
        %8742 = vmatpush.msra.mxu0 0.0
        %8743 = vmatpush.msra.mxu0 0.0
        %8744 = vmatpush.msra.mxu0 0.0
        %8745 = vmatpush.msra.mxu0 0.0
        %8746 = vmatpush.msra.mxu0 0.0
        %8747 = vmatpush.msra.mxu0 %v8640
        %8748 = vmatmul.f32.gmra.mxu0 %v8650
        %v8749 = vpop.f32.mrf.mxu0
        %v8750 = vadd.f32 0.0, %v8749
        %8751 = vdwg.mxu0
        %8752 = vmatpush.msra.mxu0 0.0
        %8753 = vmatpush.msra.mxu0 0.0
        %8754 = vmatpush.msra.mxu0 0.0
        %8755 = vmatpush.msra.mxu0 0.0
        %8756 = vmatpush.msra.mxu0 0.0
        %8757 = vmatpush.msra.mxu0 0.0
        %8758 = vmatpush.msra.mxu0 0.0
        %8759 = vmatpush.msra.mxu0 0.0
        %8760 = vmatpush.msra.mxu0 0.0
        %8761 = vmatpush.msra.mxu0 0.0
        %8762 = vmatpush.msra.mxu0 0.0
        %8763 = vmatpush.msra.mxu0 0.0
        %8764 = vmatpush.msra.mxu0 0.0
        %8765 = vmatpush.msra.mxu0 0.0
        %8766 = vmatpush.msra.mxu0 0.0
        %8767 = vmatpush.msra.mxu0 %v8641
        %8768 = vmatmul.f32.gmra.mxu0 %v8650
        %v8769 = vpop.f32.mrf.mxu0
        %v8770 = vadd.f32 0.0, %v8769
        %8771 = vdwg.mxu0
        %8772 = vmatpush.msra.mxu0 0.0
        %8773 = vmatpush.msra.mxu0 0.0
        %8774 = vmatpush.msra.mxu0 0.0
        %8775 = vmatpush.msra.mxu0 0.0
        %8776 = vmatpush.msra.mxu0 0.0
        %8777 = vmatpush.msra.mxu0 0.0
        %8778 = vmatpush.msra.mxu0 0.0
        %8779 = vmatpush.msra.mxu0 0.0
        %8780 = vmatpush.msra.mxu0 0.0
        %8781 = vmatpush.msra.mxu0 0.0
        %8782 = vmatpush.msra.mxu0 0.0
        %8783 = vmatpush.msra.mxu0 0.0
        %8784 = vmatpush.msra.mxu0 0.0
        %8785 = vmatpush.msra.mxu0 0.0
        %8786 = vmatpush.msra.mxu0 0.0
        %8787 = vmatpush.msra.mxu0 %v8635
        %8788 = vmatmul.f32.gmra.mxu0 %v8650
        %v8789 = vpop.f32.mrf.mxu0
        %v8790 = vadd.f32 0.0, %v8789
        %8791 = vdwg.mxu0
        %v8792 = vadd.f32 %v8613, %v8670
        %v8793 = vadd.f32 %v8614, %v8690
        %v8794 = vadd.f32 %v8615, %v8710
        %v8795 = vadd.f32 %v8616, %v8730
        %v8796 = vadd.f32 %v8617, %v8750
        %v8797 = vadd.f32 %v8618, %v8770
        %v8798 = vadd.f32 %v8619, %v8790
        %s8799 = scalar_lea.vmem %s3, 160
        %v8800 = vld [vmem:[%s8799] sm:$0xff]
        %8801 = vrot.lane.b32.xlu0 %v7880, 54
        %v8802 = vpop.permute.xlu0 %8801
        %8803 = vrot.lane.b32.xlu0 %v7881, 54
        %v8804 = vpop.permute.xlu0 %8803
        %8805 = vrot.lane.b32.xlu0 %v7882, 54
        %v8806 = vpop.permute.xlu0 %8805
        %8807 = vrot.lane.b32.xlu0 %v7883, 54
        %v8808 = vpop.permute.xlu0 %8807
        %8809 = vrot.lane.b32.xlu0 %v7884, 54
        %v8810 = vpop.permute.xlu0 %8809
        %8811 = vrot.lane.b32.xlu0 %v7885, 54
        %v8812 = vpop.permute.xlu0 %8811
        %8813 = vrot.lane.b32.xlu0 %v7886, 54
        %v8814 = vpop.permute.xlu0 %8813
        %v8815 = vsel %vm3863, %v8802, %v8804
        %v8816 = vsel %vm3863, %v8804, %v8806
        %v8817 = vsel %vm3863, %v8806, %v8808
        %v8818 = vsel %vm3863, %v8808, %v8810
        %v8819 = vsel %vm3863, %v8810, %v8812
        %v8820 = vsel %vm3863, %v8812, %v8814
        %v8829 = vsel %vm296, %v8800, 0
        %8831 = vmatpush.msra.mxu0 0.0
        %8832 = vmatpush.msra.mxu0 0.0
        %8833 = vmatpush.msra.mxu0 0.0
        %8834 = vmatpush.msra.mxu0 0.0
        %8835 = vmatpush.msra.mxu0 0.0
        %8836 = vmatpush.msra.mxu0 0.0
        %8837 = vmatpush.msra.mxu0 0.0
        %8838 = vmatpush.msra.mxu0 0.0
        %8839 = vmatpush.msra.mxu0 0.0
        %8840 = vmatpush.msra.mxu0 0.0
        %8841 = vmatpush.msra.mxu0 0.0
        %8842 = vmatpush.msra.mxu0 0.0
        %8843 = vmatpush.msra.mxu0 0.0
        %8844 = vmatpush.msra.mxu0 0.0
        %8845 = vmatpush.msra.mxu0 0.0
        %8846 = vmatpush.msra.mxu0 %v8815
        %8847 = vmatmul.f32.gmra.mxu0 %v8829
        %v8848 = vpop.f32.mrf.mxu0
        %v8849 = vadd.f32 0.0, %v8848
        %8850 = vdwg.mxu0
        %8851 = vmatpush.msra.mxu0 0.0
        %8852 = vmatpush.msra.mxu0 0.0
        %8853 = vmatpush.msra.mxu0 0.0
        %8854 = vmatpush.msra.mxu0 0.0
        %8855 = vmatpush.msra.mxu0 0.0
        %8856 = vmatpush.msra.mxu0 0.0
        %8857 = vmatpush.msra.mxu0 0.0
        %8858 = vmatpush.msra.mxu0 0.0
        %8859 = vmatpush.msra.mxu0 0.0
        %8860 = vmatpush.msra.mxu0 0.0
        %8861 = vmatpush.msra.mxu0 0.0
        %8862 = vmatpush.msra.mxu0 0.0
        %8863 = vmatpush.msra.mxu0 0.0
        %8864 = vmatpush.msra.mxu0 0.0
        %8865 = vmatpush.msra.mxu0 0.0
        %8866 = vmatpush.msra.mxu0 %v8816
        %8867 = vmatmul.f32.gmra.mxu0 %v8829
        %v8868 = vpop.f32.mrf.mxu0
        %v8869 = vadd.f32 0.0, %v8868
        %8870 = vdwg.mxu0
        %8871 = vmatpush.msra.mxu0 0.0
        %8872 = vmatpush.msra.mxu0 0.0
        %8873 = vmatpush.msra.mxu0 0.0
        %8874 = vmatpush.msra.mxu0 0.0
        %8875 = vmatpush.msra.mxu0 0.0
        %8876 = vmatpush.msra.mxu0 0.0
        %8877 = vmatpush.msra.mxu0 0.0
        %8878 = vmatpush.msra.mxu0 0.0
        %8879 = vmatpush.msra.mxu0 0.0
        %8880 = vmatpush.msra.mxu0 0.0
        %8881 = vmatpush.msra.mxu0 0.0
        %8882 = vmatpush.msra.mxu0 0.0
        %8883 = vmatpush.msra.mxu0 0.0
        %8884 = vmatpush.msra.mxu0 0.0
        %8885 = vmatpush.msra.mxu0 0.0
        %8886 = vmatpush.msra.mxu0 %v8817
        %8887 = vmatmul.f32.gmra.mxu0 %v8829
        %v8888 = vpop.f32.mrf.mxu0
        %v8889 = vadd.f32 0.0, %v8888
        %8890 = vdwg.mxu0
        %8891 = vmatpush.msra.mxu0 0.0
        %8892 = vmatpush.msra.mxu0 0.0
        %8893 = vmatpush.msra.mxu0 0.0
        %8894 = vmatpush.msra.mxu0 0.0
        %8895 = vmatpush.msra.mxu0 0.0
        %8896 = vmatpush.msra.mxu0 0.0
        %8897 = vmatpush.msra.mxu0 0.0
        %8898 = vmatpush.msra.mxu0 0.0
        %8899 = vmatpush.msra.mxu0 0.0
        %8900 = vmatpush.msra.mxu0 0.0
        %8901 = vmatpush.msra.mxu0 0.0
        %8902 = vmatpush.msra.mxu0 0.0
        %8903 = vmatpush.msra.mxu0 0.0
        %8904 = vmatpush.msra.mxu0 0.0
        %8905 = vmatpush.msra.mxu0 0.0
        %8906 = vmatpush.msra.mxu0 %v8818
        %8907 = vmatmul.f32.gmra.mxu0 %v8829
        %v8908 = vpop.f32.mrf.mxu0
        %v8909 = vadd.f32 0.0, %v8908
        %8910 = vdwg.mxu0
        %8911 = vmatpush.msra.mxu0 0.0
        %8912 = vmatpush.msra.mxu0 0.0
        %8913 = vmatpush.msra.mxu0 0.0
        %8914 = vmatpush.msra.mxu0 0.0
        %8915 = vmatpush.msra.mxu0 0.0
        %8916 = vmatpush.msra.mxu0 0.0
        %8917 = vmatpush.msra.mxu0 0.0
        %8918 = vmatpush.msra.mxu0 0.0
        %8919 = vmatpush.msra.mxu0 0.0
        %8920 = vmatpush.msra.mxu0 0.0
        %8921 = vmatpush.msra.mxu0 0.0
        %8922 = vmatpush.msra.mxu0 0.0
        %8923 = vmatpush.msra.mxu0 0.0
        %8924 = vmatpush.msra.mxu0 0.0
        %8925 = vmatpush.msra.mxu0 0.0
        %8926 = vmatpush.msra.mxu0 %v8819
        %8927 = vmatmul.f32.gmra.mxu0 %v8829
        %v8928 = vpop.f32.mrf.mxu0
        %v8929 = vadd.f32 0.0, %v8928
        %8930 = vdwg.mxu0
        %8931 = vmatpush.msra.mxu0 0.0
        %8932 = vmatpush.msra.mxu0 0.0
        %8933 = vmatpush.msra.mxu0 0.0
        %8934 = vmatpush.msra.mxu0 0.0
        %8935 = vmatpush.msra.mxu0 0.0
        %8936 = vmatpush.msra.mxu0 0.0
        %8937 = vmatpush.msra.mxu0 0.0
        %8938 = vmatpush.msra.mxu0 0.0
        %8939 = vmatpush.msra.mxu0 0.0
        %8940 = vmatpush.msra.mxu0 0.0
        %8941 = vmatpush.msra.mxu0 0.0
        %8942 = vmatpush.msra.mxu0 0.0
        %8943 = vmatpush.msra.mxu0 0.0
        %8944 = vmatpush.msra.mxu0 0.0
        %8945 = vmatpush.msra.mxu0 0.0
        %8946 = vmatpush.msra.mxu0 %v8820
        %8947 = vmatmul.f32.gmra.mxu0 %v8829
        %v8948 = vpop.f32.mrf.mxu0
        %v8949 = vadd.f32 0.0, %v8948
        %8950 = vdwg.mxu0
        %8951 = vmatpush.msra.mxu0 0.0
        %8952 = vmatpush.msra.mxu0 0.0
        %8953 = vmatpush.msra.mxu0 0.0
        %8954 = vmatpush.msra.mxu0 0.0
        %8955 = vmatpush.msra.mxu0 0.0
        %8956 = vmatpush.msra.mxu0 0.0
        %8957 = vmatpush.msra.mxu0 0.0
        %8958 = vmatpush.msra.mxu0 0.0
        %8959 = vmatpush.msra.mxu0 0.0
        %8960 = vmatpush.msra.mxu0 0.0
        %8961 = vmatpush.msra.mxu0 0.0
        %8962 = vmatpush.msra.mxu0 0.0
        %8963 = vmatpush.msra.mxu0 0.0
        %8964 = vmatpush.msra.mxu0 0.0
        %8965 = vmatpush.msra.mxu0 0.0
        %8966 = vmatpush.msra.mxu0 %v8814
        %8967 = vmatmul.f32.gmra.mxu0 %v8829
        %v8968 = vpop.f32.mrf.mxu0
        %v8969 = vadd.f32 0.0, %v8968
        %8970 = vdwg.mxu0
        %v8971 = vadd.f32 %v8792, %v8849
        %v8972 = vadd.f32 %v8793, %v8869
        %v8973 = vadd.f32 %v8794, %v8889
        %v8974 = vadd.f32 %v8795, %v8909
        %v8975 = vadd.f32 %v8796, %v8929
        %v8976 = vadd.f32 %v8797, %v8949
        %v8977 = vadd.f32 %v8798, %v8969
        %s8978 = scalar_lea.vmem %s3, 168
        %v8979 = vld [vmem:[%s8978] sm:$0xff]
        %8980 = vrot.lane.b32.xlu0 %v7880, 46
        %v8981 = vpop.permute.xlu0 %8980
        %8982 = vrot.lane.b32.xlu0 %v7881, 46
        %v8983 = vpop.permute.xlu0 %8982
        %8984 = vrot.lane.b32.xlu0 %v7882, 46
        %v8985 = vpop.permute.xlu0 %8984
        %8986 = vrot.lane.b32.xlu0 %v7883, 46
        %v8987 = vpop.permute.xlu0 %8986
        %8988 = vrot.lane.b32.xlu0 %v7884, 46
        %v8989 = vpop.permute.xlu0 %8988
        %8990 = vrot.lane.b32.xlu0 %v7885, 46
        %v8991 = vpop.permute.xlu0 %8990
        %8992 = vrot.lane.b32.xlu0 %v7886, 46
        %v8993 = vpop.permute.xlu0 %8992
        %v8994 = vsel %vm4043, %v8981, %v8983
        %v8995 = vsel %vm4043, %v8983, %v8985
        %v8996 = vsel %vm4043, %v8985, %v8987
        %v8997 = vsel %vm4043, %v8987, %v8989
        %v8998 = vsel %vm4043, %v8989, %v8991
        %v8999 = vsel %vm4043, %v8991, %v8993
        %v9008 = vsel %vm296, %v8979, 0
        %9010 = vmatpush.msra.mxu0 0.0
        %9011 = vmatpush.msra.mxu0 0.0
        %9012 = vmatpush.msra.mxu0 0.0
        %9013 = vmatpush.msra.mxu0 0.0
        %9014 = vmatpush.msra.mxu0 0.0
        %9015 = vmatpush.msra.mxu0 0.0
        %9016 = vmatpush.msra.mxu0 0.0
        %9017 = vmatpush.msra.mxu0 0.0
        %9018 = vmatpush.msra.mxu0 0.0
        %9019 = vmatpush.msra.mxu0 0.0
        %9020 = vmatpush.msra.mxu0 0.0
        %9021 = vmatpush.msra.mxu0 0.0
        %9022 = vmatpush.msra.mxu0 0.0
        %9023 = vmatpush.msra.mxu0 0.0
        %9024 = vmatpush.msra.mxu0 0.0
        %9025 = vmatpush.msra.mxu0 %v8994
        %9026 = vmatmul.f32.gmra.mxu0 %v9008
        %v9027 = vpop.f32.mrf.mxu0
        %v9028 = vadd.f32 0.0, %v9027
        %9029 = vdwg.mxu0
        %9030 = vmatpush.msra.mxu0 0.0
        %9031 = vmatpush.msra.mxu0 0.0
        %9032 = vmatpush.msra.mxu0 0.0
        %9033 = vmatpush.msra.mxu0 0.0
        %9034 = vmatpush.msra.mxu0 0.0
        %9035 = vmatpush.msra.mxu0 0.0
        %9036 = vmatpush.msra.mxu0 0.0
        %9037 = vmatpush.msra.mxu0 0.0
        %9038 = vmatpush.msra.mxu0 0.0
        %9039 = vmatpush.msra.mxu0 0.0
        %9040 = vmatpush.msra.mxu0 0.0
        %9041 = vmatpush.msra.mxu0 0.0
        %9042 = vmatpush.msra.mxu0 0.0
        %9043 = vmatpush.msra.mxu0 0.0
        %9044 = vmatpush.msra.mxu0 0.0
        %9045 = vmatpush.msra.mxu0 %v8995
        %9046 = vmatmul.f32.gmra.mxu0 %v9008
        %v9047 = vpop.f32.mrf.mxu0
        %v9048 = vadd.f32 0.0, %v9047
        %9049 = vdwg.mxu0
        %9050 = vmatpush.msra.mxu0 0.0
        %9051 = vmatpush.msra.mxu0 0.0
        %9052 = vmatpush.msra.mxu0 0.0
        %9053 = vmatpush.msra.mxu0 0.0
        %9054 = vmatpush.msra.mxu0 0.0
        %9055 = vmatpush.msra.mxu0 0.0
        %9056 = vmatpush.msra.mxu0 0.0
        %9057 = vmatpush.msra.mxu0 0.0
        %9058 = vmatpush.msra.mxu0 0.0
        %9059 = vmatpush.msra.mxu0 0.0
        %9060 = vmatpush.msra.mxu0 0.0
        %9061 = vmatpush.msra.mxu0 0.0
        %9062 = vmatpush.msra.mxu0 0.0
        %9063 = vmatpush.msra.mxu0 0.0
        %9064 = vmatpush.msra.mxu0 0.0
        %9065 = vmatpush.msra.mxu0 %v8996
        %9066 = vmatmul.f32.gmra.mxu0 %v9008
        %v9067 = vpop.f32.mrf.mxu0
        %v9068 = vadd.f32 0.0, %v9067
        %9069 = vdwg.mxu0
        %9070 = vmatpush.msra.mxu0 0.0
        %9071 = vmatpush.msra.mxu0 0.0
        %9072 = vmatpush.msra.mxu0 0.0
        %9073 = vmatpush.msra.mxu0 0.0
        %9074 = vmatpush.msra.mxu0 0.0
        %9075 = vmatpush.msra.mxu0 0.0
        %9076 = vmatpush.msra.mxu0 0.0
        %9077 = vmatpush.msra.mxu0 0.0
        %9078 = vmatpush.msra.mxu0 0.0
        %9079 = vmatpush.msra.mxu0 0.0
        %9080 = vmatpush.msra.mxu0 0.0
        %9081 = vmatpush.msra.mxu0 0.0
        %9082 = vmatpush.msra.mxu0 0.0
        %9083 = vmatpush.msra.mxu0 0.0
        %9084 = vmatpush.msra.mxu0 0.0
        %9085 = vmatpush.msra.mxu0 %v8997
        %9086 = vmatmul.f32.gmra.mxu0 %v9008
        %v9087 = vpop.f32.mrf.mxu0
        %v9088 = vadd.f32 0.0, %v9087
        %9089 = vdwg.mxu0
        %9090 = vmatpush.msra.mxu0 0.0
        %9091 = vmatpush.msra.mxu0 0.0
        %9092 = vmatpush.msra.mxu0 0.0
        %9093 = vmatpush.msra.mxu0 0.0
        %9094 = vmatpush.msra.mxu0 0.0
        %9095 = vmatpush.msra.mxu0 0.0
        %9096 = vmatpush.msra.mxu0 0.0
        %9097 = vmatpush.msra.mxu0 0.0
        %9098 = vmatpush.msra.mxu0 0.0
        %9099 = vmatpush.msra.mxu0 0.0
        %9100 = vmatpush.msra.mxu0 0.0
        %9101 = vmatpush.msra.mxu0 0.0
        %9102 = vmatpush.msra.mxu0 0.0
        %9103 = vmatpush.msra.mxu0 0.0
        %9104 = vmatpush.msra.mxu0 0.0
        %9105 = vmatpush.msra.mxu0 %v8998
        %9106 = vmatmul.f32.gmra.mxu0 %v9008
        %v9107 = vpop.f32.mrf.mxu0
        %v9108 = vadd.f32 0.0, %v9107
        %9109 = vdwg.mxu0
        %9110 = vmatpush.msra.mxu0 0.0
        %9111 = vmatpush.msra.mxu0 0.0
        %9112 = vmatpush.msra.mxu0 0.0
        %9113 = vmatpush.msra.mxu0 0.0
        %9114 = vmatpush.msra.mxu0 0.0
        %9115 = vmatpush.msra.mxu0 0.0
        %9116 = vmatpush.msra.mxu0 0.0
        %9117 = vmatpush.msra.mxu0 0.0
        %9118 = vmatpush.msra.mxu0 0.0
        %9119 = vmatpush.msra.mxu0 0.0
        %9120 = vmatpush.msra.mxu0 0.0
        %9121 = vmatpush.msra.mxu0 0.0
        %9122 = vmatpush.msra.mxu0 0.0
        %9123 = vmatpush.msra.mxu0 0.0
        %9124 = vmatpush.msra.mxu0 0.0
        %9125 = vmatpush.msra.mxu0 %v8999
        %9126 = vmatmul.f32.gmra.mxu0 %v9008
        %v9127 = vpop.f32.mrf.mxu0
        %v9128 = vadd.f32 0.0, %v9127
        %9129 = vdwg.mxu0
        %9130 = vmatpush.msra.mxu0 0.0
        %9131 = vmatpush.msra.mxu0 0.0
        %9132 = vmatpush.msra.mxu0 0.0
        %9133 = vmatpush.msra.mxu0 0.0
        %9134 = vmatpush.msra.mxu0 0.0
        %9135 = vmatpush.msra.mxu0 0.0
        %9136 = vmatpush.msra.mxu0 0.0
        %9137 = vmatpush.msra.mxu0 0.0
        %9138 = vmatpush.msra.mxu0 0.0
        %9139 = vmatpush.msra.mxu0 0.0
        %9140 = vmatpush.msra.mxu0 0.0
        %9141 = vmatpush.msra.mxu0 0.0
        %9142 = vmatpush.msra.mxu0 0.0
        %9143 = vmatpush.msra.mxu0 0.0
        %9144 = vmatpush.msra.mxu0 0.0
        %9145 = vmatpush.msra.mxu0 %v8993
        %9146 = vmatmul.f32.gmra.mxu0 %v9008
        %v9147 = vpop.f32.mrf.mxu0
        %v9148 = vadd.f32 0.0, %v9147
        %9149 = vdwg.mxu0
        %v9150 = vadd.f32 %v8971, %v9028
        %v9151 = vadd.f32 %v8972, %v9048
        %v9152 = vadd.f32 %v8973, %v9068
        %v9153 = vadd.f32 %v8974, %v9088
        %v9154 = vadd.f32 %v8975, %v9108
        %v9155 = vadd.f32 %v8976, %v9128
        %v9156 = vadd.f32 %v8977, %v9148
        %s9157 = scalar_lea.vmem %s3, 176
        %v9158 = vld [vmem:[%s9157] sm:$0xff]
        %9159 = vrot.lane.b32.xlu0 %v7880, 45
        %v9160 = vpop.permute.xlu0 %9159
        %9161 = vrot.lane.b32.xlu0 %v7881, 45
        %v9162 = vpop.permute.xlu0 %9161
        %9163 = vrot.lane.b32.xlu0 %v7882, 45
        %v9164 = vpop.permute.xlu0 %9163
        %9165 = vrot.lane.b32.xlu0 %v7883, 45
        %v9166 = vpop.permute.xlu0 %9165
        %9167 = vrot.lane.b32.xlu0 %v7884, 45
        %v9168 = vpop.permute.xlu0 %9167
        %9169 = vrot.lane.b32.xlu0 %v7885, 45
        %v9170 = vpop.permute.xlu0 %9169
        %9171 = vrot.lane.b32.xlu0 %v7886, 45
        %v9172 = vpop.permute.xlu0 %9171
        %v9173 = vsel %vm4223, %v9160, %v9162
        %v9174 = vsel %vm4223, %v9162, %v9164
        %v9175 = vsel %vm4223, %v9164, %v9166
        %v9176 = vsel %vm4223, %v9166, %v9168
        %v9177 = vsel %vm4223, %v9168, %v9170
        %v9178 = vsel %vm4223, %v9170, %v9172
        %v9187 = vsel %vm296, %v9158, 0
        %9189 = vmatpush.msra.mxu0 0.0
        %9190 = vmatpush.msra.mxu0 0.0
        %9191 = vmatpush.msra.mxu0 0.0
        %9192 = vmatpush.msra.mxu0 0.0
        %9193 = vmatpush.msra.mxu0 0.0
        %9194 = vmatpush.msra.mxu0 0.0
        %9195 = vmatpush.msra.mxu0 0.0
        %9196 = vmatpush.msra.mxu0 0.0
        %9197 = vmatpush.msra.mxu0 0.0
        %9198 = vmatpush.msra.mxu0 0.0
        %9199 = vmatpush.msra.mxu0 0.0
        %9200 = vmatpush.msra.mxu0 0.0
        %9201 = vmatpush.msra.mxu0 0.0
        %9202 = vmatpush.msra.mxu0 0.0
        %9203 = vmatpush.msra.mxu0 0.0
        %9204 = vmatpush.msra.mxu0 %v9173
        %9205 = vmatmul.f32.gmra.mxu0 %v9187
        %v9206 = vpop.f32.mrf.mxu0
        %v9207 = vadd.f32 0.0, %v9206
        %9208 = vdwg.mxu0
        %9209 = vmatpush.msra.mxu0 0.0
        %9210 = vmatpush.msra.mxu0 0.0
        %9211 = vmatpush.msra.mxu0 0.0
        %9212 = vmatpush.msra.mxu0 0.0
        %9213 = vmatpush.msra.mxu0 0.0
        %9214 = vmatpush.msra.mxu0 0.0
        %9215 = vmatpush.msra.mxu0 0.0
        %9216 = vmatpush.msra.mxu0 0.0
        %9217 = vmatpush.msra.mxu0 0.0
        %9218 = vmatpush.msra.mxu0 0.0
        %9219 = vmatpush.msra.mxu0 0.0
        %9220 = vmatpush.msra.mxu0 0.0
        %9221 = vmatpush.msra.mxu0 0.0
        %9222 = vmatpush.msra.mxu0 0.0
        %9223 = vmatpush.msra.mxu0 0.0
        %9224 = vmatpush.msra.mxu0 %v9174
        %9225 = vmatmul.f32.gmra.mxu0 %v9187
        %v9226 = vpop.f32.mrf.mxu0
        %v9227 = vadd.f32 0.0, %v9226
        %9228 = vdwg.mxu0
        %9229 = vmatpush.msra.mxu0 0.0
        %9230 = vmatpush.msra.mxu0 0.0
        %9231 = vmatpush.msra.mxu0 0.0
        %9232 = vmatpush.msra.mxu0 0.0
        %9233 = vmatpush.msra.mxu0 0.0
        %9234 = vmatpush.msra.mxu0 0.0
        %9235 = vmatpush.msra.mxu0 0.0
        %9236 = vmatpush.msra.mxu0 0.0
        %9237 = vmatpush.msra.mxu0 0.0
        %9238 = vmatpush.msra.mxu0 0.0
        %9239 = vmatpush.msra.mxu0 0.0
        %9240 = vmatpush.msra.mxu0 0.0
        %9241 = vmatpush.msra.mxu0 0.0
        %9242 = vmatpush.msra.mxu0 0.0
        %9243 = vmatpush.msra.mxu0 0.0
        %9244 = vmatpush.msra.mxu0 %v9175
        %9245 = vmatmul.f32.gmra.mxu0 %v9187
        %v9246 = vpop.f32.mrf.mxu0
        %v9247 = vadd.f32 0.0, %v9246
        %9248 = vdwg.mxu0
        %9249 = vmatpush.msra.mxu0 0.0
        %9250 = vmatpush.msra.mxu0 0.0
        %9251 = vmatpush.msra.mxu0 0.0
        %9252 = vmatpush.msra.mxu0 0.0
        %9253 = vmatpush.msra.mxu0 0.0
        %9254 = vmatpush.msra.mxu0 0.0
        %9255 = vmatpush.msra.mxu0 0.0
        %9256 = vmatpush.msra.mxu0 0.0
        %9257 = vmatpush.msra.mxu0 0.0
        %9258 = vmatpush.msra.mxu0 0.0
        %9259 = vmatpush.msra.mxu0 0.0
        %9260 = vmatpush.msra.mxu0 0.0
        %9261 = vmatpush.msra.mxu0 0.0
        %9262 = vmatpush.msra.mxu0 0.0
        %9263 = vmatpush.msra.mxu0 0.0
        %9264 = vmatpush.msra.mxu0 %v9176
        %9265 = vmatmul.f32.gmra.mxu0 %v9187
        %v9266 = vpop.f32.mrf.mxu0
        %v9267 = vadd.f32 0.0, %v9266
        %9268 = vdwg.mxu0
        %9269 = vmatpush.msra.mxu0 0.0
        %9270 = vmatpush.msra.mxu0 0.0
        %9271 = vmatpush.msra.mxu0 0.0
        %9272 = vmatpush.msra.mxu0 0.0
        %9273 = vmatpush.msra.mxu0 0.0
        %9274 = vmatpush.msra.mxu0 0.0
        %9275 = vmatpush.msra.mxu0 0.0
        %9276 = vmatpush.msra.mxu0 0.0
        %9277 = vmatpush.msra.mxu0 0.0
        %9278 = vmatpush.msra.mxu0 0.0
        %9279 = vmatpush.msra.mxu0 0.0
        %9280 = vmatpush.msra.mxu0 0.0
        %9281 = vmatpush.msra.mxu0 0.0
        %9282 = vmatpush.msra.mxu0 0.0
        %9283 = vmatpush.msra.mxu0 0.0
        %9284 = vmatpush.msra.mxu0 %v9177
        %9285 = vmatmul.f32.gmra.mxu0 %v9187
        %v9286 = vpop.f32.mrf.mxu0
        %v9287 = vadd.f32 0.0, %v9286
        %9288 = vdwg.mxu0
        %9289 = vmatpush.msra.mxu0 0.0
        %9290 = vmatpush.msra.mxu0 0.0
        %9291 = vmatpush.msra.mxu0 0.0
        %9292 = vmatpush.msra.mxu0 0.0
        %9293 = vmatpush.msra.mxu0 0.0
        %9294 = vmatpush.msra.mxu0 0.0
        %9295 = vmatpush.msra.mxu0 0.0
        %9296 = vmatpush.msra.mxu0 0.0
        %9297 = vmatpush.msra.mxu0 0.0
        %9298 = vmatpush.msra.mxu0 0.0
        %9299 = vmatpush.msra.mxu0 0.0
        %9300 = vmatpush.msra.mxu0 0.0
        %9301 = vmatpush.msra.mxu0 0.0
        %9302 = vmatpush.msra.mxu0 0.0
        %9303 = vmatpush.msra.mxu0 0.0
        %9304 = vmatpush.msra.mxu0 %v9178
        %9305 = vmatmul.f32.gmra.mxu0 %v9187
        %v9306 = vpop.f32.mrf.mxu0
        %v9307 = vadd.f32 0.0, %v9306
        %9308 = vdwg.mxu0
        %9309 = vmatpush.msra.mxu0 0.0
        %9310 = vmatpush.msra.mxu0 0.0
        %9311 = vmatpush.msra.mxu0 0.0
        %9312 = vmatpush.msra.mxu0 0.0
        %9313 = vmatpush.msra.mxu0 0.0
        %9314 = vmatpush.msra.mxu0 0.0
        %9315 = vmatpush.msra.mxu0 0.0
        %9316 = vmatpush.msra.mxu0 0.0
        %9317 = vmatpush.msra.mxu0 0.0
        %9318 = vmatpush.msra.mxu0 0.0
        %9319 = vmatpush.msra.mxu0 0.0
        %9320 = vmatpush.msra.mxu0 0.0
        %9321 = vmatpush.msra.mxu0 0.0
        %9322 = vmatpush.msra.mxu0 0.0
        %9323 = vmatpush.msra.mxu0 0.0
        %9324 = vmatpush.msra.mxu0 %v9172
        %9325 = vmatmul.f32.gmra.mxu0 %v9187
        %v9326 = vpop.f32.mrf.mxu0
        %v9327 = vadd.f32 0.0, %v9326
        %9328 = vdwg.mxu0
        %v9329 = vadd.f32 %v9150, %v9207
        %v9330 = vadd.f32 %v9151, %v9227
        %v9331 = vadd.f32 %v9152, %v9247
        %v9332 = vadd.f32 %v9153, %v9267
        %v9333 = vadd.f32 %v9154, %v9287
        %v9334 = vadd.f32 %v9155, %v9307
        %v9335 = vadd.f32 %v9156, %v9327
        %s9336 = scalar_lea.vmem %s3, 184
        %v9337 = vld [vmem:[%s9336] sm:$0xff]
        %9338 = vrot.lane.b32.xlu0 %v7880, 44
        %v9339 = vpop.permute.xlu0 %9338
        %9340 = vrot.lane.b32.xlu0 %v7881, 44
        %v9341 = vpop.permute.xlu0 %9340
        %9342 = vrot.lane.b32.xlu0 %v7882, 44
        %v9343 = vpop.permute.xlu0 %9342
        %9344 = vrot.lane.b32.xlu0 %v7883, 44
        %v9345 = vpop.permute.xlu0 %9344
        %9346 = vrot.lane.b32.xlu0 %v7884, 44
        %v9347 = vpop.permute.xlu0 %9346
        %9348 = vrot.lane.b32.xlu0 %v7885, 44
        %v9349 = vpop.permute.xlu0 %9348
        %9350 = vrot.lane.b32.xlu0 %v7886, 44
        %v9351 = vpop.permute.xlu0 %9350
        %v9352 = vsel %vm4403, %v9339, %v9341
        %v9353 = vsel %vm4403, %v9341, %v9343
        %v9354 = vsel %vm4403, %v9343, %v9345
        %v9355 = vsel %vm4403, %v9345, %v9347
        %v9356 = vsel %vm4403, %v9347, %v9349
        %v9357 = vsel %vm4403, %v9349, %v9351
        %v9366 = vsel %vm296, %v9337, 0
        %9368 = vmatpush.msra.mxu0 0.0
        %9369 = vmatpush.msra.mxu0 0.0
        %9370 = vmatpush.msra.mxu0 0.0
        %9371 = vmatpush.msra.mxu0 0.0
        %9372 = vmatpush.msra.mxu0 0.0
        %9373 = vmatpush.msra.mxu0 0.0
        %9374 = vmatpush.msra.mxu0 0.0
        %9375 = vmatpush.msra.mxu0 0.0
        %9376 = vmatpush.msra.mxu0 0.0
        %9377 = vmatpush.msra.mxu0 0.0
        %9378 = vmatpush.msra.mxu0 0.0
        %9379 = vmatpush.msra.mxu0 0.0
        %9380 = vmatpush.msra.mxu0 0.0
        %9381 = vmatpush.msra.mxu0 0.0
        %9382 = vmatpush.msra.mxu0 0.0
        %9383 = vmatpush.msra.mxu0 %v9352
        %9384 = vmatmul.f32.gmra.mxu0 %v9366
        %v9385 = vpop.f32.mrf.mxu0
        %v9386 = vadd.f32 0.0, %v9385
        %9387 = vdwg.mxu0
        %9388 = vmatpush.msra.mxu0 0.0
        %9389 = vmatpush.msra.mxu0 0.0
        %9390 = vmatpush.msra.mxu0 0.0
        %9391 = vmatpush.msra.mxu0 0.0
        %9392 = vmatpush.msra.mxu0 0.0
        %9393 = vmatpush.msra.mxu0 0.0
        %9394 = vmatpush.msra.mxu0 0.0
        %9395 = vmatpush.msra.mxu0 0.0
        %9396 = vmatpush.msra.mxu0 0.0
        %9397 = vmatpush.msra.mxu0 0.0
        %9398 = vmatpush.msra.mxu0 0.0
        %9399 = vmatpush.msra.mxu0 0.0
        %9400 = vmatpush.msra.mxu0 0.0
        %9401 = vmatpush.msra.mxu0 0.0
        %9402 = vmatpush.msra.mxu0 0.0
        %9403 = vmatpush.msra.mxu0 %v9353
        %9404 = vmatmul.f32.gmra.mxu0 %v9366
        %v9405 = vpop.f32.mrf.mxu0
        %v9406 = vadd.f32 0.0, %v9405
        %9407 = vdwg.mxu0
        %9408 = vmatpush.msra.mxu0 0.0
        %9409 = vmatpush.msra.mxu0 0.0
        %9410 = vmatpush.msra.mxu0 0.0
        %9411 = vmatpush.msra.mxu0 0.0
        %9412 = vmatpush.msra.mxu0 0.0
        %9413 = vmatpush.msra.mxu0 0.0
        %9414 = vmatpush.msra.mxu0 0.0
        %9415 = vmatpush.msra.mxu0 0.0
        %9416 = vmatpush.msra.mxu0 0.0
        %9417 = vmatpush.msra.mxu0 0.0
        %9418 = vmatpush.msra.mxu0 0.0
        %9419 = vmatpush.msra.mxu0 0.0
        %9420 = vmatpush.msra.mxu0 0.0
        %9421 = vmatpush.msra.mxu0 0.0
        %9422 = vmatpush.msra.mxu0 0.0
        %9423 = vmatpush.msra.mxu0 %v9354
        %9424 = vmatmul.f32.gmra.mxu0 %v9366
        %v9425 = vpop.f32.mrf.mxu0
        %v9426 = vadd.f32 0.0, %v9425
        %9427 = vdwg.mxu0
        %9428 = vmatpush.msra.mxu0 0.0
        %9429 = vmatpush.msra.mxu0 0.0
        %9430 = vmatpush.msra.mxu0 0.0
        %9431 = vmatpush.msra.mxu0 0.0
        %9432 = vmatpush.msra.mxu0 0.0
        %9433 = vmatpush.msra.mxu0 0.0
        %9434 = vmatpush.msra.mxu0 0.0
        %9435 = vmatpush.msra.mxu0 0.0
        %9436 = vmatpush.msra.mxu0 0.0
        %9437 = vmatpush.msra.mxu0 0.0
        %9438 = vmatpush.msra.mxu0 0.0
        %9439 = vmatpush.msra.mxu0 0.0
        %9440 = vmatpush.msra.mxu0 0.0
        %9441 = vmatpush.msra.mxu0 0.0
        %9442 = vmatpush.msra.mxu0 0.0
        %9443 = vmatpush.msra.mxu0 %v9355
        %9444 = vmatmul.f32.gmra.mxu0 %v9366
        %v9445 = vpop.f32.mrf.mxu0
        %v9446 = vadd.f32 0.0, %v9445
        %9447 = vdwg.mxu0
        %9448 = vmatpush.msra.mxu0 0.0
        %9449 = vmatpush.msra.mxu0 0.0
        %9450 = vmatpush.msra.mxu0 0.0
        %9451 = vmatpush.msra.mxu0 0.0
        %9452 = vmatpush.msra.mxu0 0.0
        %9453 = vmatpush.msra.mxu0 0.0
        %9454 = vmatpush.msra.mxu0 0.0
        %9455 = vmatpush.msra.mxu0 0.0
        %9456 = vmatpush.msra.mxu0 0.0
        %9457 = vmatpush.msra.mxu0 0.0
        %9458 = vmatpush.msra.mxu0 0.0
        %9459 = vmatpush.msra.mxu0 0.0
        %9460 = vmatpush.msra.mxu0 0.0
        %9461 = vmatpush.msra.mxu0 0.0
        %9462 = vmatpush.msra.mxu0 0.0
        %9463 = vmatpush.msra.mxu0 %v9356
        %9464 = vmatmul.f32.gmra.mxu0 %v9366
        %v9465 = vpop.f32.mrf.mxu0
        %v9466 = vadd.f32 0.0, %v9465
        %9467 = vdwg.mxu0
        %9468 = vmatpush.msra.mxu0 0.0
        %9469 = vmatpush.msra.mxu0 0.0
        %9470 = vmatpush.msra.mxu0 0.0
        %9471 = vmatpush.msra.mxu0 0.0
        %9472 = vmatpush.msra.mxu0 0.0
        %9473 = vmatpush.msra.mxu0 0.0
        %9474 = vmatpush.msra.mxu0 0.0
        %9475 = vmatpush.msra.mxu0 0.0
        %9476 = vmatpush.msra.mxu0 0.0
        %9477 = vmatpush.msra.mxu0 0.0
        %9478 = vmatpush.msra.mxu0 0.0
        %9479 = vmatpush.msra.mxu0 0.0
        %9480 = vmatpush.msra.mxu0 0.0
        %9481 = vmatpush.msra.mxu0 0.0
        %9482 = vmatpush.msra.mxu0 0.0
        %9483 = vmatpush.msra.mxu0 %v9357
        %9484 = vmatmul.f32.gmra.mxu0 %v9366
        %v9485 = vpop.f32.mrf.mxu0
        %v9486 = vadd.f32 0.0, %v9485
        %9487 = vdwg.mxu0
        %9488 = vmatpush.msra.mxu0 0.0
        %9489 = vmatpush.msra.mxu0 0.0
        %9490 = vmatpush.msra.mxu0 0.0
        %9491 = vmatpush.msra.mxu0 0.0
        %9492 = vmatpush.msra.mxu0 0.0
        %9493 = vmatpush.msra.mxu0 0.0
        %9494 = vmatpush.msra.mxu0 0.0
        %9495 = vmatpush.msra.mxu0 0.0
        %9496 = vmatpush.msra.mxu0 0.0
        %9497 = vmatpush.msra.mxu0 0.0
        %9498 = vmatpush.msra.mxu0 0.0
        %9499 = vmatpush.msra.mxu0 0.0
        %9500 = vmatpush.msra.mxu0 0.0
        %9501 = vmatpush.msra.mxu0 0.0
        %9502 = vmatpush.msra.mxu0 0.0
        %9503 = vmatpush.msra.mxu0 %v9351
        %9504 = vmatmul.f32.gmra.mxu0 %v9366
        %v9505 = vpop.f32.mrf.mxu0
        %v9506 = vadd.f32 0.0, %v9505
        %9507 = vdwg.mxu0
        %v9508 = vadd.f32 %v9329, %v9386
        %v9509 = vadd.f32 %v9330, %v9406
        %v9510 = vadd.f32 %v9331, %v9426
        %v9511 = vadd.f32 %v9332, %v9446
        %v9512 = vadd.f32 %v9333, %v9466
        %v9513 = vadd.f32 %v9334, %v9486
        %v9514 = vadd.f32 %v9335, %v9506
        %s9515 = scalar_lea.vmem %s3, 192
        %v9516 = vld [vmem:[%s9515] sm:$0xff]
        %9517 = vrot.lane.b32.xlu0 %v7880, 36
        %v9518 = vpop.permute.xlu0 %9517
        %9519 = vrot.lane.b32.xlu0 %v7881, 36
        %v9520 = vpop.permute.xlu0 %9519
        %9521 = vrot.lane.b32.xlu0 %v7882, 36
        %v9522 = vpop.permute.xlu0 %9521
        %9523 = vrot.lane.b32.xlu0 %v7883, 36
        %v9524 = vpop.permute.xlu0 %9523
        %9525 = vrot.lane.b32.xlu0 %v7884, 36
        %v9526 = vpop.permute.xlu0 %9525
        %9527 = vrot.lane.b32.xlu0 %v7885, 36
        %v9528 = vpop.permute.xlu0 %9527
        %9529 = vrot.lane.b32.xlu0 %v7886, 36
        %v9530 = vpop.permute.xlu0 %9529
        %v9531 = vsel %vm4583, %v9518, %v9520
        %v9532 = vsel %vm4583, %v9520, %v9522
        %v9533 = vsel %vm4583, %v9522, %v9524
        %v9534 = vsel %vm4583, %v9524, %v9526
        %v9535 = vsel %vm4583, %v9526, %v9528
        %v9536 = vsel %vm4583, %v9528, %v9530
        %v9545 = vsel %vm296, %v9516, 0
        %9547 = vmatpush.msra.mxu0 0.0
        %9548 = vmatpush.msra.mxu0 0.0
        %9549 = vmatpush.msra.mxu0 0.0
        %9550 = vmatpush.msra.mxu0 0.0
        %9551 = vmatpush.msra.mxu0 0.0
        %9552 = vmatpush.msra.mxu0 0.0
        %9553 = vmatpush.msra.mxu0 0.0
        %9554 = vmatpush.msra.mxu0 0.0
        %9555 = vmatpush.msra.mxu0 0.0
        %9556 = vmatpush.msra.mxu0 0.0
        %9557 = vmatpush.msra.mxu0 0.0
        %9558 = vmatpush.msra.mxu0 0.0
        %9559 = vmatpush.msra.mxu0 0.0
        %9560 = vmatpush.msra.mxu0 0.0
        %9561 = vmatpush.msra.mxu0 0.0
        %9562 = vmatpush.msra.mxu0 %v9531
        %9563 = vmatmul.f32.gmra.mxu0 %v9545
        %v9564 = vpop.f32.mrf.mxu0
        %v9565 = vadd.f32 0.0, %v9564
        %9566 = vdwg.mxu0
        %9567 = vmatpush.msra.mxu0 0.0
        %9568 = vmatpush.msra.mxu0 0.0
        %9569 = vmatpush.msra.mxu0 0.0
        %9570 = vmatpush.msra.mxu0 0.0
        %9571 = vmatpush.msra.mxu0 0.0
        %9572 = vmatpush.msra.mxu0 0.0
        %9573 = vmatpush.msra.mxu0 0.0
        %9574 = vmatpush.msra.mxu0 0.0
        %9575 = vmatpush.msra.mxu0 0.0
        %9576 = vmatpush.msra.mxu0 0.0
        %9577 = vmatpush.msra.mxu0 0.0
        %9578 = vmatpush.msra.mxu0 0.0
        %9579 = vmatpush.msra.mxu0 0.0
        %9580 = vmatpush.msra.mxu0 0.0
        %9581 = vmatpush.msra.mxu0 0.0
        %9582 = vmatpush.msra.mxu0 %v9532
        %9583 = vmatmul.f32.gmra.mxu0 %v9545
        %v9584 = vpop.f32.mrf.mxu0
        %v9585 = vadd.f32 0.0, %v9584
        %9586 = vdwg.mxu0
        %9587 = vmatpush.msra.mxu0 0.0
        %9588 = vmatpush.msra.mxu0 0.0
        %9589 = vmatpush.msra.mxu0 0.0
        %9590 = vmatpush.msra.mxu0 0.0
        %9591 = vmatpush.msra.mxu0 0.0
        %9592 = vmatpush.msra.mxu0 0.0
        %9593 = vmatpush.msra.mxu0 0.0
        %9594 = vmatpush.msra.mxu0 0.0
        %9595 = vmatpush.msra.mxu0 0.0
        %9596 = vmatpush.msra.mxu0 0.0
        %9597 = vmatpush.msra.mxu0 0.0
        %9598 = vmatpush.msra.mxu0 0.0
        %9599 = vmatpush.msra.mxu0 0.0
        %9600 = vmatpush.msra.mxu0 0.0
        %9601 = vmatpush.msra.mxu0 0.0
        %9602 = vmatpush.msra.mxu0 %v9533
        %9603 = vmatmul.f32.gmra.mxu0 %v9545
        %v9604 = vpop.f32.mrf.mxu0
        %v9605 = vadd.f32 0.0, %v9604
        %9606 = vdwg.mxu0
        %9607 = vmatpush.msra.mxu0 0.0
        %9608 = vmatpush.msra.mxu0 0.0
        %9609 = vmatpush.msra.mxu0 0.0
        %9610 = vmatpush.msra.mxu0 0.0
        %9611 = vmatpush.msra.mxu0 0.0
        %9612 = vmatpush.msra.mxu0 0.0
        %9613 = vmatpush.msra.mxu0 0.0
        %9614 = vmatpush.msra.mxu0 0.0
        %9615 = vmatpush.msra.mxu0 0.0
        %9616 = vmatpush.msra.mxu0 0.0
        %9617 = vmatpush.msra.mxu0 0.0
        %9618 = vmatpush.msra.mxu0 0.0
        %9619 = vmatpush.msra.mxu0 0.0
        %9620 = vmatpush.msra.mxu0 0.0
        %9621 = vmatpush.msra.mxu0 0.0
        %9622 = vmatpush.msra.mxu0 %v9534
        %9623 = vmatmul.f32.gmra.mxu0 %v9545
        %v9624 = vpop.f32.mrf.mxu0
        %v9625 = vadd.f32 0.0, %v9624
        %9626 = vdwg.mxu0
        %9627 = vmatpush.msra.mxu0 0.0
        %9628 = vmatpush.msra.mxu0 0.0
        %9629 = vmatpush.msra.mxu0 0.0
        %9630 = vmatpush.msra.mxu0 0.0
        %9631 = vmatpush.msra.mxu0 0.0
        %9632 = vmatpush.msra.mxu0 0.0
        %9633 = vmatpush.msra.mxu0 0.0
        %9634 = vmatpush.msra.mxu0 0.0
        %9635 = vmatpush.msra.mxu0 0.0
        %9636 = vmatpush.msra.mxu0 0.0
        %9637 = vmatpush.msra.mxu0 0.0
        %9638 = vmatpush.msra.mxu0 0.0
        %9639 = vmatpush.msra.mxu0 0.0
        %9640 = vmatpush.msra.mxu0 0.0
        %9641 = vmatpush.msra.mxu0 0.0
        %9642 = vmatpush.msra.mxu0 %v9535
        %9643 = vmatmul.f32.gmra.mxu0 %v9545
        %v9644 = vpop.f32.mrf.mxu0
        %v9645 = vadd.f32 0.0, %v9644
        %9646 = vdwg.mxu0
        %9647 = vmatpush.msra.mxu0 0.0
        %9648 = vmatpush.msra.mxu0 0.0
        %9649 = vmatpush.msra.mxu0 0.0
        %9650 = vmatpush.msra.mxu0 0.0
        %9651 = vmatpush.msra.mxu0 0.0
        %9652 = vmatpush.msra.mxu0 0.0
        %9653 = vmatpush.msra.mxu0 0.0
        %9654 = vmatpush.msra.mxu0 0.0
        %9655 = vmatpush.msra.mxu0 0.0
        %9656 = vmatpush.msra.mxu0 0.0
        %9657 = vmatpush.msra.mxu0 0.0
        %9658 = vmatpush.msra.mxu0 0.0
        %9659 = vmatpush.msra.mxu0 0.0
        %9660 = vmatpush.msra.mxu0 0.0
        %9661 = vmatpush.msra.mxu0 0.0
        %9662 = vmatpush.msra.mxu0 %v9536
        %9663 = vmatmul.f32.gmra.mxu0 %v9545
        %v9664 = vpop.f32.mrf.mxu0
        %v9665 = vadd.f32 0.0, %v9664
        %9666 = vdwg.mxu0
        %9667 = vmatpush.msra.mxu0 0.0
        %9668 = vmatpush.msra.mxu0 0.0
        %9669 = vmatpush.msra.mxu0 0.0
        %9670 = vmatpush.msra.mxu0 0.0
        %9671 = vmatpush.msra.mxu0 0.0
        %9672 = vmatpush.msra.mxu0 0.0
        %9673 = vmatpush.msra.mxu0 0.0
        %9674 = vmatpush.msra.mxu0 0.0
        %9675 = vmatpush.msra.mxu0 0.0
        %9676 = vmatpush.msra.mxu0 0.0
        %9677 = vmatpush.msra.mxu0 0.0
        %9678 = vmatpush.msra.mxu0 0.0
        %9679 = vmatpush.msra.mxu0 0.0
        %9680 = vmatpush.msra.mxu0 0.0
        %9681 = vmatpush.msra.mxu0 0.0
        %9682 = vmatpush.msra.mxu0 %v9530
        %9683 = vmatmul.f32.gmra.mxu0 %v9545
        %v9684 = vpop.f32.mrf.mxu0
        %v9685 = vadd.f32 0.0, %v9684
        %9686 = vdwg.mxu0
        %v9687 = vadd.f32 %v9508, %v9565
        %v9688 = vadd.f32 %v9509, %v9585
        %v9689 = vadd.f32 %v9510, %v9605
        %v9690 = vadd.f32 %v9511, %v9625
        %v9691 = vadd.f32 %v9512, %v9645
        %v9692 = vadd.f32 %v9513, %v9665
        %v9693 = vadd.f32 %v9514, %v9685
        %s9694 = scalar_lea.vmem %s3, 200
        %v9695 = vld [vmem:[%s9694] sm:$0xff]
        %9696 = vrot.lane.b32.xlu0 %v7880, 35
        %v9697 = vpop.permute.xlu0 %9696
        %9698 = vrot.lane.b32.xlu0 %v7881, 35
        %v9699 = vpop.permute.xlu0 %9698
        %9700 = vrot.lane.b32.xlu0 %v7882, 35
        %v9701 = vpop.permute.xlu0 %9700
        %9702 = vrot.lane.b32.xlu0 %v7883, 35
        %v9703 = vpop.permute.xlu0 %9702
        %9704 = vrot.lane.b32.xlu0 %v7884, 35
        %v9705 = vpop.permute.xlu0 %9704
        %9706 = vrot.lane.b32.xlu0 %v7885, 35
        %v9707 = vpop.permute.xlu0 %9706
        %9708 = vrot.lane.b32.xlu0 %v7886, 35
        %v9709 = vpop.permute.xlu0 %9708
        %v9710 = vsel %vm4763, %v9697, %v9699
        %v9711 = vsel %vm4763, %v9699, %v9701
        %v9712 = vsel %vm4763, %v9701, %v9703
        %v9713 = vsel %vm4763, %v9703, %v9705
        %v9714 = vsel %vm4763, %v9705, %v9707
        %v9715 = vsel %vm4763, %v9707, %v9709
        %v9724 = vsel %vm296, %v9695, 0
        %9726 = vmatpush.msra.mxu0 0.0
        %9727 = vmatpush.msra.mxu0 0.0
        %9728 = vmatpush.msra.mxu0 0.0
        %9729 = vmatpush.msra.mxu0 0.0
        %9730 = vmatpush.msra.mxu0 0.0
        %9731 = vmatpush.msra.mxu0 0.0
        %9732 = vmatpush.msra.mxu0 0.0
        %9733 = vmatpush.msra.mxu0 0.0
        %9734 = vmatpush.msra.mxu0 0.0
        %9735 = vmatpush.msra.mxu0 0.0
        %9736 = vmatpush.msra.mxu0 0.0
        %9737 = vmatpush.msra.mxu0 0.0
        %9738 = vmatpush.msra.mxu0 0.0
        %9739 = vmatpush.msra.mxu0 0.0
        %9740 = vmatpush.msra.mxu0 0.0
        %9741 = vmatpush.msra.mxu0 %v9710
        %9742 = vmatmul.f32.gmra.mxu0 %v9724
        %v9743 = vpop.f32.mrf.mxu0
        %v9744 = vadd.f32 0.0, %v9743
        %9745 = vdwg.mxu0
        %9746 = vmatpush.msra.mxu0 0.0
        %9747 = vmatpush.msra.mxu0 0.0
        %9748 = vmatpush.msra.mxu0 0.0
        %9749 = vmatpush.msra.mxu0 0.0
        %9750 = vmatpush.msra.mxu0 0.0
        %9751 = vmatpush.msra.mxu0 0.0
        %9752 = vmatpush.msra.mxu0 0.0
        %9753 = vmatpush.msra.mxu0 0.0
        %9754 = vmatpush.msra.mxu0 0.0
        %9755 = vmatpush.msra.mxu0 0.0
        %9756 = vmatpush.msra.mxu0 0.0
        %9757 = vmatpush.msra.mxu0 0.0
        %9758 = vmatpush.msra.mxu0 0.0
        %9759 = vmatpush.msra.mxu0 0.0
        %9760 = vmatpush.msra.mxu0 0.0
        %9761 = vmatpush.msra.mxu0 %v9711
        %9762 = vmatmul.f32.gmra.mxu0 %v9724
        %v9763 = vpop.f32.mrf.mxu0
        %v9764 = vadd.f32 0.0, %v9763
        %9765 = vdwg.mxu0
        %9766 = vmatpush.msra.mxu0 0.0
        %9767 = vmatpush.msra.mxu0 0.0
        %9768 = vmatpush.msra.mxu0 0.0
        %9769 = vmatpush.msra.mxu0 0.0
        %9770 = vmatpush.msra.mxu0 0.0
        %9771 = vmatpush.msra.mxu0 0.0
        %9772 = vmatpush.msra.mxu0 0.0
        %9773 = vmatpush.msra.mxu0 0.0
        %9774 = vmatpush.msra.mxu0 0.0
        %9775 = vmatpush.msra.mxu0 0.0
        %9776 = vmatpush.msra.mxu0 0.0
        %9777 = vmatpush.msra.mxu0 0.0
        %9778 = vmatpush.msra.mxu0 0.0
        %9779 = vmatpush.msra.mxu0 0.0
        %9780 = vmatpush.msra.mxu0 0.0
        %9781 = vmatpush.msra.mxu0 %v9712
        %9782 = vmatmul.f32.gmra.mxu0 %v9724
        %v9783 = vpop.f32.mrf.mxu0
        %v9784 = vadd.f32 0.0, %v9783
        %9785 = vdwg.mxu0
        %9786 = vmatpush.msra.mxu0 0.0
        %9787 = vmatpush.msra.mxu0 0.0
        %9788 = vmatpush.msra.mxu0 0.0
        %9789 = vmatpush.msra.mxu0 0.0
        %9790 = vmatpush.msra.mxu0 0.0
        %9791 = vmatpush.msra.mxu0 0.0
        %9792 = vmatpush.msra.mxu0 0.0
        %9793 = vmatpush.msra.mxu0 0.0
        %9794 = vmatpush.msra.mxu0 0.0
        %9795 = vmatpush.msra.mxu0 0.0
        %9796 = vmatpush.msra.mxu0 0.0
        %9797 = vmatpush.msra.mxu0 0.0
        %9798 = vmatpush.msra.mxu0 0.0
        %9799 = vmatpush.msra.mxu0 0.0
        %9800 = vmatpush.msra.mxu0 0.0
        %9801 = vmatpush.msra.mxu0 %v9713
        %9802 = vmatmul.f32.gmra.mxu0 %v9724
        %v9803 = vpop.f32.mrf.mxu0
        %v9804 = vadd.f32 0.0, %v9803
        %9805 = vdwg.mxu0
        %9806 = vmatpush.msra.mxu0 0.0
        %9807 = vmatpush.msra.mxu0 0.0
        %9808 = vmatpush.msra.mxu0 0.0
        %9809 = vmatpush.msra.mxu0 0.0
        %9810 = vmatpush.msra.mxu0 0.0
        %9811 = vmatpush.msra.mxu0 0.0
        %9812 = vmatpush.msra.mxu0 0.0
        %9813 = vmatpush.msra.mxu0 0.0
        %9814 = vmatpush.msra.mxu0 0.0
        %9815 = vmatpush.msra.mxu0 0.0
        %9816 = vmatpush.msra.mxu0 0.0
        %9817 = vmatpush.msra.mxu0 0.0
        %9818 = vmatpush.msra.mxu0 0.0
        %9819 = vmatpush.msra.mxu0 0.0
        %9820 = vmatpush.msra.mxu0 0.0
        %9821 = vmatpush.msra.mxu0 %v9714
        %9822 = vmatmul.f32.gmra.mxu0 %v9724
        %v9823 = vpop.f32.mrf.mxu0
        %v9824 = vadd.f32 0.0, %v9823
        %9825 = vdwg.mxu0
        %9826 = vmatpush.msra.mxu0 0.0
        %9827 = vmatpush.msra.mxu0 0.0
        %9828 = vmatpush.msra.mxu0 0.0
        %9829 = vmatpush.msra.mxu0 0.0
        %9830 = vmatpush.msra.mxu0 0.0
        %9831 = vmatpush.msra.mxu0 0.0
        %9832 = vmatpush.msra.mxu0 0.0
        %9833 = vmatpush.msra.mxu0 0.0
        %9834 = vmatpush.msra.mxu0 0.0
        %9835 = vmatpush.msra.mxu0 0.0
        %9836 = vmatpush.msra.mxu0 0.0
        %9837 = vmatpush.msra.mxu0 0.0
        %9838 = vmatpush.msra.mxu0 0.0
        %9839 = vmatpush.msra.mxu0 0.0
        %9840 = vmatpush.msra.mxu0 0.0
        %9841 = vmatpush.msra.mxu0 %v9715
        %9842 = vmatmul.f32.gmra.mxu0 %v9724
        %v9843 = vpop.f32.mrf.mxu0
        %v9844 = vadd.f32 0.0, %v9843
        %9845 = vdwg.mxu0
        %9846 = vmatpush.msra.mxu0 0.0
        %9847 = vmatpush.msra.mxu0 0.0
        %9848 = vmatpush.msra.mxu0 0.0
        %9849 = vmatpush.msra.mxu0 0.0
        %9850 = vmatpush.msra.mxu0 0.0
        %9851 = vmatpush.msra.mxu0 0.0
        %9852 = vmatpush.msra.mxu0 0.0
        %9853 = vmatpush.msra.mxu0 0.0
        %9854 = vmatpush.msra.mxu0 0.0
        %9855 = vmatpush.msra.mxu0 0.0
        %9856 = vmatpush.msra.mxu0 0.0
        %9857 = vmatpush.msra.mxu0 0.0
        %9858 = vmatpush.msra.mxu0 0.0
        %9859 = vmatpush.msra.mxu0 0.0
        %9860 = vmatpush.msra.mxu0 0.0
        %9861 = vmatpush.msra.mxu0 %v9709
        %9862 = vmatmul.f32.gmra.mxu0 %v9724
        %v9863 = vpop.f32.mrf.mxu0
        %v9864 = vadd.f32 0.0, %v9863
        %9865 = vdwg.mxu0
        %v9866 = vadd.f32 %v9687, %v9744
        %v9867 = vadd.f32 %v9688, %v9764
        %v9868 = vadd.f32 %v9689, %v9784
        %v9869 = vadd.f32 %v9690, %v9804
        %v9870 = vadd.f32 %v9691, %v9824
        %v9871 = vadd.f32 %v9692, %v9844
        %v9872 = vadd.f32 %v9693, %v9864
        %s9873 = scalar_lea.vmem %s3, 208
        %v9874 = vld [vmem:[%s9873] sm:$0xff]
        %9875 = vrot.lane.b32.xlu0 %v7880, 34
        %v9876 = vpop.permute.xlu0 %9875
        %9877 = vrot.lane.b32.xlu0 %v7881, 34
        %v9878 = vpop.permute.xlu0 %9877
        %9879 = vrot.lane.b32.xlu0 %v7882, 34
        %v9880 = vpop.permute.xlu0 %9879
        %9881 = vrot.lane.b32.xlu0 %v7883, 34
        %v9882 = vpop.permute.xlu0 %9881
        %9883 = vrot.lane.b32.xlu0 %v7884, 34
        %v9884 = vpop.permute.xlu0 %9883
        %9885 = vrot.lane.b32.xlu0 %v7885, 34
        %v9886 = vpop.permute.xlu0 %9885
        %9887 = vrot.lane.b32.xlu0 %v7886, 34
        %v9888 = vpop.permute.xlu0 %9887
        %v9889 = vsel %vm4943, %v9876, %v9878
        %v9890 = vsel %vm4943, %v9878, %v9880
        %v9891 = vsel %vm4943, %v9880, %v9882
        %v9892 = vsel %vm4943, %v9882, %v9884
        %v9893 = vsel %vm4943, %v9884, %v9886
        %v9894 = vsel %vm4943, %v9886, %v9888
        %v9903 = vsel %vm296, %v9874, 0
        %9905 = vmatpush.msra.mxu0 0.0
        %9906 = vmatpush.msra.mxu0 0.0
        %9907 = vmatpush.msra.mxu0 0.0
        %9908 = vmatpush.msra.mxu0 0.0
        %9909 = vmatpush.msra.mxu0 0.0
        %9910 = vmatpush.msra.mxu0 0.0
        %9911 = vmatpush.msra.mxu0 0.0
        %9912 = vmatpush.msra.mxu0 0.0
        %9913 = vmatpush.msra.mxu0 0.0
        %9914 = vmatpush.msra.mxu0 0.0
        %9915 = vmatpush.msra.mxu0 0.0
        %9916 = vmatpush.msra.mxu0 0.0
        %9917 = vmatpush.msra.mxu0 0.0
        %9918 = vmatpush.msra.mxu0 0.0
        %9919 = vmatpush.msra.mxu0 0.0
        %9920 = vmatpush.msra.mxu0 %v9889
        %9921 = vmatmul.f32.gmra.mxu0 %v9903
        %v9922 = vpop.f32.mrf.mxu0
        %v9923 = vadd.f32 0.0, %v9922
        %9924 = vdwg.mxu0
        %9925 = vmatpush.msra.mxu0 0.0
        %9926 = vmatpush.msra.mxu0 0.0
        %9927 = vmatpush.msra.mxu0 0.0
        %9928 = vmatpush.msra.mxu0 0.0
        %9929 = vmatpush.msra.mxu0 0.0
        %9930 = vmatpush.msra.mxu0 0.0
        %9931 = vmatpush.msra.mxu0 0.0
        %9932 = vmatpush.msra.mxu0 0.0
        %9933 = vmatpush.msra.mxu0 0.0
        %9934 = vmatpush.msra.mxu0 0.0
        %9935 = vmatpush.msra.mxu0 0.0
        %9936 = vmatpush.msra.mxu0 0.0
        %9937 = vmatpush.msra.mxu0 0.0
        %9938 = vmatpush.msra.mxu0 0.0
        %9939 = vmatpush.msra.mxu0 0.0
        %9940 = vmatpush.msra.mxu0 %v9890
        %9941 = vmatmul.f32.gmra.mxu0 %v9903
        %v9942 = vpop.f32.mrf.mxu0
        %v9943 = vadd.f32 0.0, %v9942
        %9944 = vdwg.mxu0
        %9945 = vmatpush.msra.mxu0 0.0
        %9946 = vmatpush.msra.mxu0 0.0
        %9947 = vmatpush.msra.mxu0 0.0
        %9948 = vmatpush.msra.mxu0 0.0
        %9949 = vmatpush.msra.mxu0 0.0
        %9950 = vmatpush.msra.mxu0 0.0
        %9951 = vmatpush.msra.mxu0 0.0
        %9952 = vmatpush.msra.mxu0 0.0
        %9953 = vmatpush.msra.mxu0 0.0
        %9954 = vmatpush.msra.mxu0 0.0
        %9955 = vmatpush.msra.mxu0 0.0
        %9956 = vmatpush.msra.mxu0 0.0
        %9957 = vmatpush.msra.mxu0 0.0
        %9958 = vmatpush.msra.mxu0 0.0
        %9959 = vmatpush.msra.mxu0 0.0
        %9960 = vmatpush.msra.mxu0 %v9891
        %9961 = vmatmul.f32.gmra.mxu0 %v9903
        %v9962 = vpop.f32.mrf.mxu0
        %v9963 = vadd.f32 0.0, %v9962
        %9964 = vdwg.mxu0
        %9965 = vmatpush.msra.mxu0 0.0
        %9966 = vmatpush.msra.mxu0 0.0
        %9967 = vmatpush.msra.mxu0 0.0
        %9968 = vmatpush.msra.mxu0 0.0
        %9969 = vmatpush.msra.mxu0 0.0
        %9970 = vmatpush.msra.mxu0 0.0
        %9971 = vmatpush.msra.mxu0 0.0
        %9972 = vmatpush.msra.mxu0 0.0
        %9973 = vmatpush.msra.mxu0 0.0
        %9974 = vmatpush.msra.mxu0 0.0
        %9975 = vmatpush.msra.mxu0 0.0
        %9976 = vmatpush.msra.mxu0 0.0
        %9977 = vmatpush.msra.mxu0 0.0
        %9978 = vmatpush.msra.mxu0 0.0
        %9979 = vmatpush.msra.mxu0 0.0
        %9980 = vmatpush.msra.mxu0 %v9892
        %9981 = vmatmul.f32.gmra.mxu0 %v9903
        %v9982 = vpop.f32.mrf.mxu0
        %v9983 = vadd.f32 0.0, %v9982
        %9984 = vdwg.mxu0
        %9985 = vmatpush.msra.mxu0 0.0
        %9986 = vmatpush.msra.mxu0 0.0
        %9987 = vmatpush.msra.mxu0 0.0
        %9988 = vmatpush.msra.mxu0 0.0
        %9989 = vmatpush.msra.mxu0 0.0
        %9990 = vmatpush.msra.mxu0 0.0
        %9991 = vmatpush.msra.mxu0 0.0
        %9992 = vmatpush.msra.mxu0 0.0
        %9993 = vmatpush.msra.mxu0 0.0
        %9994 = vmatpush.msra.mxu0 0.0
        %9995 = vmatpush.msra.mxu0 0.0
        %9996 = vmatpush.msra.mxu0 0.0
        %9997 = vmatpush.msra.mxu0 0.0
        %9998 = vmatpush.msra.mxu0 0.0
        %9999 = vmatpush.msra.mxu0 0.0
        %10000 = vmatpush.msra.mxu0 %v9893
        %10001 = vmatmul.f32.gmra.mxu0 %v9903
        %v10002 = vpop.f32.mrf.mxu0
        %v10003 = vadd.f32 0.0, %v10002
        %10004 = vdwg.mxu0
        %10005 = vmatpush.msra.mxu0 0.0
        %10006 = vmatpush.msra.mxu0 0.0
        %10007 = vmatpush.msra.mxu0 0.0
        %10008 = vmatpush.msra.mxu0 0.0
        %10009 = vmatpush.msra.mxu0 0.0
        %10010 = vmatpush.msra.mxu0 0.0
        %10011 = vmatpush.msra.mxu0 0.0
        %10012 = vmatpush.msra.mxu0 0.0
        %10013 = vmatpush.msra.mxu0 0.0
        %10014 = vmatpush.msra.mxu0 0.0
        %10015 = vmatpush.msra.mxu0 0.0
        %10016 = vmatpush.msra.mxu0 0.0
        %10017 = vmatpush.msra.mxu0 0.0
        %10018 = vmatpush.msra.mxu0 0.0
        %10019 = vmatpush.msra.mxu0 0.0
        %10020 = vmatpush.msra.mxu0 %v9894
        %10021 = vmatmul.f32.gmra.mxu0 %v9903
        %v10022 = vpop.f32.mrf.mxu0
        %v10023 = vadd.f32 0.0, %v10022
        %10024 = vdwg.mxu0
        %10025 = vmatpush.msra.mxu0 0.0
        %10026 = vmatpush.msra.mxu0 0.0
        %10027 = vmatpush.msra.mxu0 0.0
        %10028 = vmatpush.msra.mxu0 0.0
        %10029 = vmatpush.msra.mxu0 0.0
        %10030 = vmatpush.msra.mxu0 0.0
        %10031 = vmatpush.msra.mxu0 0.0
        %10032 = vmatpush.msra.mxu0 0.0
        %10033 = vmatpush.msra.mxu0 0.0
        %10034 = vmatpush.msra.mxu0 0.0
        %10035 = vmatpush.msra.mxu0 0.0
        %10036 = vmatpush.msra.mxu0 0.0
        %10037 = vmatpush.msra.mxu0 0.0
        %10038 = vmatpush.msra.mxu0 0.0
        %10039 = vmatpush.msra.mxu0 0.0
        %10040 = vmatpush.msra.mxu0 %v9888
        %10041 = vmatmul.f32.gmra.mxu0 %v9903
        %v10042 = vpop.f32.mrf.mxu0
        %v10043 = vadd.f32 0.0, %v10042
        %10044 = vdwg.mxu0
        %v10045 = vadd.f32 %v9866, %v9923
        %v10046 = vadd.f32 %v9867, %v9943
        %v10047 = vadd.f32 %v9868, %v9963
        %v10048 = vadd.f32 %v9869, %v9983
        %v10049 = vadd.f32 %v9870, %v10003
        %v10050 = vadd.f32 %v9871, %v10023
        %v10051 = vadd.f32 %v9872, %v10043
        %v10052 = vld [vmem:[%s4] sm:$0xff]
        %10054 = vset.pattern.permute.xlu0 0
        %10055 = vperm.xlu0 %10054, %v10052
        %v10056 = vpop.permute.xlu0 %10055
        %v10058 = vadd.f32 %v10045, %v10056
        %v10059 = vadd.f32 %v10046, %v10056
        %v10060 = vadd.f32 %v10047, %v10056
        %v10061 = vadd.f32 %v10048, %v10056
        %v10062 = vadd.f32 %v10049, %v10056
        %v10063 = vadd.f32 %v10050, %v10056
        %v10064 = vadd.f32 %v10051, %v10056
        %v10065 = vmax.f32 %v10058, 0.0
        %v10066 = vmax.f32 %v10059, 0.0
        %v10067 = vmax.f32 %v10060, 0.0
        %v10068 = vmax.f32 %v10061, 0.0
        %v10069 = vmax.f32 %v10062, 0.0
        %v10070 = vmax.f32 %v10063, 0.0
        %v10071 = vmax.f32 %v10064, 0.0
        %10072 = vst [vmem:[%s244] sm:$0xff] 0.0
        %10073 = vst [vmem:[%s244 + $0x8] sm:$0xff] 0.0
        %10074 = vst [vmem:[%s244 + $0x10] sm:$0xff] 0.0
        %10075 = vst [vmem:[%s244 + $0x18] sm:$0xff] 0.0
        %10076 = vst [vmem:[%s244 + $0x20] sm:$0xff] 0.0
        %10077 = vst [vmem:[%s244 + $0x28] sm:$0xff] 0.0
        %10078 = vst [vmem:[%s244 + $0x30] sm:$0xff] 0.0
        %10079 = vst.msk [vmem:[%s244 + $0x38] sm:$0xff] %vm5176, 0.0
        %10087 = vrot.lane.b32.xlu0 %v10065, 111
        %v10088 = vpop.permute.xlu0 %10087
        %10089 = vrot.lane.b32.xlu0 %v10066, 111
        %v10090 = vpop.permute.xlu0 %10089
        %10091 = vrot.lane.b32.xlu0 %v10067, 111
        %v10092 = vpop.permute.xlu0 %10091
        %10093 = vrot.lane.b32.xlu0 %v10068, 111
        %v10094 = vpop.permute.xlu0 %10093
        %10095 = vrot.lane.b32.xlu0 %v10069, 111
        %v10096 = vpop.permute.xlu0 %10095
        %10097 = vrot.lane.b32.xlu0 %v10070, 111
        %v10098 = vpop.permute.xlu0 %10097
        %10099 = vrot.lane.b32.xlu0 %v10071, 111
        %v10100 = vpop.permute.xlu0 %10099
        %v10101 = vsel %vm5199, %v10088, %v10090
        %v10102 = vsel %vm5199, %v10090, %v10092
        %v10103 = vsel %vm5199, %v10092, %v10094
        %v10104 = vsel %vm5199, %v10094, %v10096
        %v10105 = vsel %vm5199, %v10096, %v10098
        %v10106 = vsel %vm5199, %v10098, %v10100
        %10114 = vst.msk [vmem:[%s244] sm:$0xff] %vm5213, %v10088
        %10115 = vst [vmem:[%s244 + $0x8] sm:$0xff] %v10101
        %10116 = vst [vmem:[%s244 + $0x10] sm:$0xff] %v10102
        %10117 = vst [vmem:[%s244 + $0x18] sm:$0xff] %v10103
        %10118 = vst [vmem:[%s244 + $0x20] sm:$0xff] %v10104
        %10119 = vst [vmem:[%s244 + $0x28] sm:$0xff] %v10105
        %10120 = vst.msk [vmem:[%s244 + $0x30] sm:$0xff] %vm5220, %v10106
        %s10121 = sand.u32 %s159, 1
        %s10122 = scalar_lea.sflag [#allocation4], %s10121
        %s10123 = sand.u32 %s159, 1
        %s10124 = smul.addr %s10123, 64
        %s10125 = scalar_lea.vmem [#allocation3], %s10124
        // Predicated region
        $region45: #{tpu_custom_call.1} parent=43 // pred_check
          %p10126 = pneg %p169
        $region46: #{tpu_custom_call.1} parent=43 // pred_check_branch
          %10128 = sbr.rel (%p10126) target = $region48
        $region47: #{tpu_custom_call.1} parent=43 // pred_region
          %10130 = vsyncadd %s10122, 0
          %s10131 = smul.addr %s20, 8
          %s10132 = smul.addr %s10131, 8
          %s10133 = scalar_lea.hbm %s6, %s10132
          %s10135 = sshll.u32 %s10125, 4
          %s10136 = int_to_ptr.vmem [resolvable:$true] %s10135
          %s10137 = sshll.u32 %s10133, 4
          %s10138 = int_to_ptr.hbm [resolvable:$true] %s10137
          %10140 = dma.vmem_to_hbm [thread:$0]  %s10136, 1024, %s10138, %s10122
        $region48: #{tpu_custom_call.1} parent=43 // pred_fallthru
          _
      $region44: #{tpu_custom_call.1} parent=5 // pred_fallthru
        _
      %p10141 = scmp.le.s32.totalorder 2, %s15
      // Predicated region
      $region49: #{tpu_custom_call.1} parent=5 // pred_check
        %p10142 = pneg %p10141
      $region50: #{tpu_custom_call.1} parent=5 // pred_check_branch
        %10144 = sbr.rel (%p10142) target = $region52
      $region51: #{tpu_custom_call.1} parent=5 // pred_region
        %s10145 = ssub.s32 %s15, 2
        // Predicated region
        $region53: #{tpu_custom_call.1} parent=51 // pred_check
          %p10146 = pneg %p175
        $region54: #{tpu_custom_call.1} parent=51 // pred_check_branch
          %10148 = sbr.rel (%p10146) target = $region56
        $region55: #{tpu_custom_call.1} parent=51 // pred_region
          %s10149 = sand.u32 %s160, 1
          %s10150 = scalar_lea.sflag [#allocation4], %s10149
          %s10151 = sand.u32 %s160, 1
          %s10152 = smul.addr %s10151, 64
          %s10153 = scalar_lea.vmem [#allocation3], %s10152
          %10155 = dma.done %s10150, 1024
        $region56: #{tpu_custom_call.1} parent=51 // pred_fallthru
          _
      $region52: #{tpu_custom_call.1} parent=5 // pred_fallthru
        _
    $region6: #{tpu_custom_call.1} parent=1 // loop_footer
      %s19 = sadd.s32 1, %s15
    $region7: #{tpu_custom_call.1} parent=1 // loop_footer_branch
      %14 = sbr.rel target = $region3
    $region8: #{tpu_custom_call.1} parent=1 // loop_exit
      _
    %10156 = vsyncpa [#allocation4], 1
    %s10157 = scalar_lea.sflag [#allocation4], 1
    %10158 = vsyncpa %s10157, 1

</llo_original>
